<compile_context>
chip_gen: v5e
topology: v5e:2x2
jax: 0.10.0
libtpu: 0.0.40
codegen_flags: <defaults>
</compile_context>

<pallas_src>
import numpy as np
import jax
import jax.numpy as jnp
from jax import lax
from jax.experimental import pallas as pl
from jax.experimental.pallas import tpu as pltpu

BN_EPS = 1e-5


def _round_up(x, m):
    return -(-x // m) * m


# --------------------------- parameter construction --------------------------

def init_params(key, *, in_channels, base_filters, first_kernel_size, kernel_size,
                stride, n_block, output_size, downsample_gap, increasefilter_gap):
    def conv_init(k, cout, cin, ksize):
        kw, kb = jax.random.split(k)
        fan_in = cin * ksize
        w = jax.random.normal(kw, (cout, cin, ksize), jnp.float32) / jnp.sqrt(fan_in)
        b = 0.01 * jax.random.normal(kb, (cout,), jnp.float32)
        return (w, b)

    def bn_init(k, c):
        k1, k2, k3, k4 = jax.random.split(k, 4)
        return dict(
            gamma=1.0 + 0.1 * jax.random.normal(k1, (c,), jnp.float32),
            beta=0.1 * jax.random.normal(k2, (c,), jnp.float32),
            mean=0.1 * jax.random.normal(k3, (c,), jnp.float32),
            var=1.0 + 0.1 * jax.random.uniform(k4, (c,), jnp.float32),
        )

    keys = iter(jax.random.split(key, 4 + 4 * n_block + 4))
    params = {
        "first_conv": conv_init(next(keys), base_filters, in_channels, first_kernel_size),
        "first_bn": bn_init(next(keys), base_filters),
        "blocks": [],
    }
    out_channels = base_filters
    for i_block in range(n_block):
        is_first_block = (i_block == 0)
        downsample = (i_block % downsample_gap == 1)
        if is_first_block:
            in_ch = base_filters
            out_channels = in_ch
        else:
            in_ch = int(base_filters * 2 ** ((i_block - 1) // increasefilter_gap))
            if i_block % increasefilter_gap == 0 and i_block != 0:
                out_channels = in_ch * 2
            else:
                out_channels = in_ch
        blk = dict(
            in_channels=in_ch, out_channels=out_channels,
            is_first_block=is_first_block, downsample=downsample,
            stride=stride if downsample else 1,
            bn1=bn_init(next(keys), in_ch),
            conv1=conv_init(next(keys), out_channels, in_ch, kernel_size),
            bn2=bn_init(next(keys), out_channels),
            conv2=conv_init(next(keys), out_channels, out_channels, kernel_size),
        )
        params["blocks"].append(blk)
    params["final_bn"] = bn_init(next(keys), out_channels)
    kw, kb = jax.random.split(next(keys))
    params["clf_w"] = jax.random.normal(kw, (output_size, out_channels), jnp.float32) / jnp.sqrt(out_channels)
    params["clf_b"] = 0.01 * jax.random.normal(kb, (output_size,), jnp.float32)
    return params


def _bn_fold(bn):
    g = np.asarray(bn["gamma"], np.float32)
    b = np.asarray(bn["beta"], np.float32)
    mu = np.asarray(bn["mean"], np.float32)
    v = np.asarray(bn["var"], np.float32)
    scale = g / np.sqrt(v + BN_EPS)
    shift = b - mu * scale
    return scale, shift


# --------------------------- pure-JAX reference (for the tolerance test) -----

def reference_forward(params, cfg, x):
    def conv_same(x, w, b, stride):
        K = w.shape[-1]
        L_in = x.shape[-1]
        L_out = -(-L_in // stride)
        p = max(0, (L_out - 1) * stride + K - L_in)
        pl_, pr_ = p // 2, p - p // 2
        y = lax.conv_general_dilated(x, w, (stride,), [(pl_, pr_)],
                                     dimension_numbers=("NCH", "OIH", "NCH"))
        return y + b[None, :, None]

    def bn_eval(x, bn):
        s = bn["gamma"] / jnp.sqrt(bn["var"] + BN_EPS)
        return x * s[None, :, None] + (bn["beta"] - bn["mean"] * s)[None, :, None]

    def pool_same(x, k):
        if k <= 1:
            return x
        p = k - 1
        xpad = jnp.pad(x, ((0, 0), (0, 0), (p // 2, p - p // 2)))  # constant-0 pad (as in module)
        return lax.reduce_window(xpad, -jnp.inf, lax.max, (1, 1, k), (1, 1, k), "VALID")

    stride = cfg["stride"]
    w, b = params["first_conv"]
    out = conv_same(x, w, b, 1)
    out = jax.nn.relu(bn_eval(out, params["first_bn"]))
    out = pool_same(out, stride)
    for blk in params["blocks"]:
        identity = out
        h = out
        if not blk["is_first_block"]:
            h = jax.nn.relu(bn_eval(h, blk["bn1"]))
        w1, b1 = blk["conv1"]
        h = conv_same(h, w1, b1, blk["stride"])
        h = jax.nn.relu(bn_eval(h, blk["bn2"]))
        w2, b2 = blk["conv2"]
        h = conv_same(h, w2, b2, 1)
        if blk["downsample"]:
            identity = pool_same(identity, blk["stride"])
        if blk["out_channels"] != blk["in_channels"]:
            ch1 = (blk["out_channels"] - blk["in_channels"]) // 2
            ch2 = blk["out_channels"] - blk["in_channels"] - ch1
            identity = jnp.pad(identity, ((0, 0), (ch1, ch2), (0, 0)))
        out = h + identity
    out = jax.nn.relu(bn_eval(out, params["final_bn"]))
    h = out.mean(-1)
    return h @ params["clf_w"].T + params["clf_b"]


# --------------------------- fused forward builder ----------------------------

def build_forward(params, cfg, *, B, L, groups=2):
    assert B % groups == 0
    Bg = B // groups
    stride = cfg["stride"]
    O = int(params["clf_w"].shape[0])
    C_last = int(params["clf_w"].shape[1])
    Cin0 = int(params["first_conv"][0].shape[1])

    # ---- prep-time const packing ----
    w_slices = []          # small 2-D weight matrices packed into one bf16 array
    vec_cols = []          # per-channel vectors packed into one f32 array
    decims = []            # one 0/1 decimation matrix per distinct (L_in, stride)
    decim_cache = {}
    flops = [0]

    def add_w(mat):
        w_slices.append(np.asarray(mat, np.float32))
        return len(w_slices) - 1

    def add_vec(v):
        vec_cols.append(np.asarray(v, np.float32).reshape(-1))
        return len(vec_cols) - 1

    def add_decim(L_in, s):
        key = (L_in, s)
        if key not in decim_cache:
            L_out = -(-L_in // s)
            D = np.zeros((Bg * L_in, Bg * L_out), np.float32)
            for b in range(Bg):
                for l in range(L_out):
                    D[b * L_in + l * s, b * L_out + l] = 1.0
            decims.append(D)
            decim_cache[key] = len(decims) - 1
        return decim_cache[key]

    def prep_conv(conv_p, post_bn, L_in, s, relu):
        """MyConv1dPadSame; optional output-BN folded into the weights; ReLU fused."""
        w = np.asarray(conv_p[0], np.float32)
        b = np.asarray(conv_p[1], np.float32)
        if post_bn is not None:
            sc, sh = _bn_fold(post_bn)
            w = w * sc[:, None, None]
            b = b * sc + sh
        Cout, Cin, K = w.shape
        Cpad = _round_up(Cin, 8)                       # sublane-aligned tap chunks
        Wf = np.zeros((Cout, K * Cpad), np.float32)    # fused deep-contraction weight
        for k in range(K):
            Wf[:, k * Cpad:k * Cpad + Cin] = w[:, :, k]
        L_out = -(-L_in // s)
        p = max(0, (L_out - 1) * s + K - L_in)
        cv = dict(K=K, Cin=Cin, Cpad=Cpad, Cout=Cout, L_in=L_in, N_in=Bg * L_in,
                  N_out=Bg * L_out, pad_left=p // 2, relu=relu,
                  w_idx=add_w(Wf), b_col=add_vec(b),
                  decim=(add_decim(L_in, s) if s > 1 else None))
        flops[0] += 2 * Cout * (K * Cpad) * cv["N_in"]
        if s > 1:
            flops[0] += 2 * Cout * cv["N_in"] * cv["N_out"]
        return cv, L_out

    def prep_pool(C, L_in, k):
        """MyMaxPool1dPadSame (padding computed with the stride=1 quirk, constant-0 pad)."""
        p = k - 1
        L_out = (L_in + p - k) // k + 1
        pv = dict(k=k, L_in=L_in, N_in=Bg * L_in, N_out=Bg * L_out,
                  pad_left=p // 2, decim=add_decim(L_in, k))
        flops[0] += 2 * C * pv["N_in"] * pv["N_out"]
        return pv, L_out

    # ---- first block: conv (+ folded first_bn) + ReLU + maxpool(stride) ----
    first_conv, L_cur = prep_conv(params["first_conv"], params["first_bn"], L, 1, relu=True)
    first_pool = None
    if stride > 1:
        first_pool, L_cur = prep_pool(first_conv["Cout"], L_cur, stride)

    # ---- basic blocks ----
    blocks_meta = []
    for blk in params["blocks"]:
        in_ch, out_ch, s = blk["in_channels"], blk["out_channels"], blk["stride"]
        m = dict(is_first=blk["is_first_block"], in_ch=in_ch, out_ch=out_ch)
        if not blk["is_first_block"]:
            sc1, sh1 = _bn_fold(blk["bn1"])
            m["bn1_s"] = add_vec(sc1)
            m["bn1_b"] = add_vec(sh1)
        m["conv1"], L_mid = prep_conv(blk["conv1"], blk["bn2"], L_cur, s, relu=True)
        m["conv2"], _ = prep_conv(blk["conv2"], None, L_mid, 1, relu=False)
        if blk["downsample"] and s > 1:
            m["idpool"], Lp = prep_pool(in_ch, L_cur, s)
            assert Lp == L_mid
        if out_ch != in_ch:
            ch1 = (out_ch - in_ch) // 2
            P = np.zeros((out_ch, in_ch), np.float32)
            P[ch1:ch1 + in_ch, :] = np.eye(in_ch, dtype=np.float32)
            m["chpad_idx"] = add_w(P)
            flops[0] += 2 * out_ch * in_ch * Bg * L_mid
        blocks_meta.append(m)
        L_cur = L_mid

    # ---- head: final_bn + ReLU + mean(L) + Linear ----
    scf, shf = _bn_fold(params["final_bn"])
    S = np.zeros((Bg * L_cur, Bg), np.float32)        # per-sample column-sum matrix
    for b in range(Bg):
        S[b * L_cur:(b + 1) * L_cur, b] = 1.0
    head = dict(C=C_last, O=O, inv_L=1.0 / float(L_cur),
                s_col=add_vec(scf), b_col=add_vec(shf),
                w_idx=add_w(np.asarray(params["clf_w"], np.float32)),
                bias_col=add_vec(np.asarray(params["clf_b"], np.float32)))
    flops[0] += 2 * C_last * (Bg * L_cur) * Bg + 2 * O * C_last * Bg

    # ---- pack the consts (few large DMAs instead of ~45 tiny ones) ----
    CW = max(sl.shape[0] for sl in w_slices)
    R_PAD = _round_up(max(sl.shape[1] for sl in w_slices), 8)
    w_all = np.zeros((len(w_slices), CW, R_PAD), np.float32)
    for i, sl in enumerate(w_slices):
        w_all[i, :sl.shape[0], :sl.shape[1]] = sl
    CV = max(v.shape[0] for v in vec_cols)
    vecs = np.zeros((CV, len(vec_cols)), np.float32)
    for i, v in enumerate(vec_cols):
        vecs[:v.shape[0], i] = v

    w_all_j = jnp.asarray(w_all, jnp.bfloat16)
    vecs_j = jnp.asarray(vecs, jnp.float32)
    decims_j = [jnp.asarray(D, jnp.bfloat16) for D in decims]
    sum_j = jnp.asarray(S, jnp.bfloat16)
    const_arrays = (w_all_j, vecs_j, *decims_j, sum_j)
    n_decim = len(decims_j)
    N_MAX = Bg * L

    # ---------------------------- the fused kernel ----------------------------
    def kernel(*refs):
        sig_ref = refs[0]
        w_ref = refs[1]
        vec_ref = refs[2]
        decim_refs = refs[3:3 + n_decim]
        sum_ref = refs[3 + n_decim]
        out_ref = refs[4 + n_decim]
        taps_ref = refs[5 + n_decim]                 # (R_PAD, N_MAX) bf16 scratch

        # Never-written pad rows must stay finite (they only meet zero weight columns).
        taps_ref[...] = jnp.zeros_like(taps_ref)

        pos_cache = {}

        def pos_for(L_s, N):
            if (L_s, N) not in pos_cache:
                i = lax.broadcasted_iota(jnp.int32, (1, N), 1)
                pos_cache[(L_s, N)] = i % L_s        # position within each length-L_s sample
            return pos_cache[(L_s, N)]

        def vec(col, C):
            return vec_ref[0:C, col:col + 1]          # (C, 1) f32

        def tap(x, o, L_s):
            """tap[:, m] = x[:, m + o] within each length-L_s sample, 0 outside (zero pad).
            Roll goes to the XLU, the boundary mask to the VPU (no gather matmuls)."""
            if o == 0:
                return x
            N = x.shape[-1]
            t = pltpu.roll(x, shift=(-o) % N, axis=1)
            p = pos_for(L_s, N)
            valid = (p >= max(-o, 0)) & (p < L_s - max(o, 0))
            return jnp.where(valid, t, jnp.zeros_like(t))

        def conv(x, cv):
            # x: (Cin, N_in) f32 -> (Cout, N_out) f32; one deep-contraction bf16 matmul.
            N = cv["N_in"]
            for k in range(cv["K"]):
                t = tap(x, k - cv["pad_left"], cv["L_in"])
                taps_ref[k * cv["Cpad"]:k * cv["Cpad"] + cv["Cin"], 0:N] = t.astype(jnp.bfloat16)
            w = w_ref[cv["w_idx"]][0:cv["Cout"], :]                      # (Cout, R_PAD) bf16
            acc = jnp.dot(w, taps_ref[:, 0:N], preferred_element_type=jnp.float32)
            if cv["decim"] is not None:                                  # strided conv: pick every s-th column
                acc = jnp.dot(acc.astype(jnp.bfloat16), decim_refs[cv["decim"]][...],
                              preferred_element_type=jnp.float32)
            acc = acc + vec(cv["b_col"], cv["Cout"])
            if cv["relu"]:
                acc = jnp.maximum(acc, 0.0)
            return acc

        def maxpool(x, pv):
            m = None
            for w in range(pv["k"]):
                t = tap(x, w - pv["pad_left"], pv["L_in"])
                m = t if m is None else jnp.maximum(m, t)
            return jnp.dot(m.astype(jnp.bfloat16), decim_refs[pv["decim"]][...],
                           preferred_element_type=jnp.float32)

        a = sig_ref[...]                                # (Cin, Bg*L) f32, lane-dense
        a = conv(a, first_conv)                         # first conv (+ folded BN) + ReLU
        if first_pool is not None:
            a = maxpool(a, first_pool)

        for m in blocks_meta:
            identity = a
            h = a
            if not m["is_first"]:
                h = jnp.maximum(h * vec(m["bn1_s"], m["in_ch"]) + vec(m["bn1_b"], m["in_ch"]), 0.0)
                # TODO(synk): Dropout(p=0.5) is identity in eval mode; training-mode dropout not implemented.
            h = conv(h, m["conv1"])                     # conv1 (+ folded bn2) + ReLU (+ decimation if strided)
            h = conv(h, m["conv2"])                     # conv2 (stride 1, no activation)
            if "idpool" in m:
                identity = maxpool(identity, m["idpool"])
            if "chpad_idx" in m:
                P = w_ref[m["chpad_idx"]][0:m["out_ch"], 0:m["in_ch"]]
                identity = jnp.dot(P, identity.astype(jnp.bfloat16),
                                   preferred_element_type=jnp.float32)
            a = h + identity

        # head: final_bn + ReLU + mean over L + Linear
        a = jnp.maximum(a * vec(head["s_col"], head["C"]) + vec(head["b_col"], head["C"]), 0.0)
        hmean = jnp.dot(a.astype(jnp.bfloat16), sum_ref[...],
                        preferred_element_type=jnp.float32) * head["inv_L"]       # (C, Bg)
        w_clf = w_ref[head["w_idx"]][0:head["O"], 0:head["C"]]
        logits = jnp.dot(w_clf, hmean.astype(jnp.bfloat16),
                         preferred_element_type=jnp.float32) + vec(head["bias_col"], head["O"])
        out_ref[...] = logits                            # (O, Bg)

    # ---------------------------- pallas_call plumbing ------------------------
    def _const_spec(arr):
        n = arr.ndim
        return pl.BlockSpec(arr.shape, lambda g, n=n: (0,) * n)     # resident across the grid

    in_specs = [pl.BlockSpec((Cin0, Bg * L), lambda g: (0, g))]      # signal: one batch group per step
    in_specs += [_const_spec(a) for a in const_arrays]
    out_spec = pl.BlockSpec((None, O, Bg), lambda g: (g, 0, 0))

    bytes_accessed = (B * Cin0 * L * 4
                      + sum(int(np.prod(a.shape)) * a.dtype.itemsize for a in const_arrays)
                      + groups * O * Bg * 4)
    cost = pl.CostEstimate(flops=int(groups * flops[0]), transcendentals=0,
                           bytes_accessed=int(bytes_accessed))

    call = pl.pallas_call(
        kernel,
        out_shape=jax.ShapeDtypeStruct((groups, O, Bg), jnp.float32),
        grid_spec=pltpu.PrefetchScalarGridSpec(
            num_scalar_prefetch=0,
            grid=(groups,),
            in_specs=in_specs,
            out_specs=out_spec,
            scratch_shapes=[pltpu.VMEM((R_PAD, N_MAX), jnp.bfloat16)],
        ),
        compiler_params=pltpu.CompilerParams(dimension_semantics=("parallel",)),
        cost_estimate=cost,
    )

    @jax.jit
    def forward(signal):
        # (B, Cin, L) -> lane-dense (Cin, B*L); fused kernel over batch groups; unpack logits.
        a0 = jnp.transpose(signal, (1, 0, 2)).reshape(Cin0, B * L).astype(jnp.float32)
        out = call(a0, *const_arrays)                        # (groups, O, Bg)
        return jnp.transpose(out, (0, 2, 1)).reshape(B, O)

    return forward


# ------------------------------------ main ------------------------------------

if __name__ == "__main__":
    B, C_IN, L = 32, 4, 64          # B*L stays >= 128 lanes even after 3 downsamples per group
    cfg = dict(
        in_channels=C_IN, base_filters=8, first_kernel_size=7, kernel_size=3,
        stride=2, n_block=4, output_size=5,
        downsample_gap=2, increasefilter_gap=2,
    )
    key = jax.random.PRNGKey(0)
    k_par, k_sig = jax.random.split(key)
    params = init_params(k_par, **cfg)
    signal = jax.random.normal(k_sig, (B, C_IN, L), jnp.float32)   # x['signal']: (n_samples, n_channel, n_length)

    forward = build_forward(params, cfg, B=B, L=L, groups=2)
    out = jax.block_until_ready(forward(signal))

    assert out.shape == (B, cfg["output_size"]), out.shape
    assert bool(jnp.all(jnp.isfinite(out)))

    # tolerance test vs. a pure-JAX f32 reference (kernel uses bf16 matmul operands)
    ref = reference_forward(params, cfg, signal)
    np.testing.assert_allclose(np.asarray(out), np.asarray(ref), rtol=0.05, atol=0.15)

    print("KERNEL_OK")
</pallas_src>

<mosaic_0001>
module attributes {stable_mosaic.version = 11 : i64} {
  func.func @kernel(%arg0: i32, %arg1: memref<4x1024xf32, #tpu.memory_space<vmem>>, %arg2: memref<11x16x56xbf16, #tpu.memory_space<vmem>>, %arg3: memref<16x18xf32, #tpu.memory_space<vmem>>, %arg4: memref<1024x512xbf16, #tpu.memory_space<vmem>>, %arg5: memref<512x256xbf16, #tpu.memory_space<vmem>>, %arg6: memref<256x128xbf16, #tpu.memory_space<vmem>>, %arg7: memref<128x16xbf16, #tpu.memory_space<vmem>>, %arg8: memref<1x5x16xf32, #tpu.memory_space<vmem>>, %arg9: memref<56x1024xbf16, #tpu.memory_space<vmem>>) attributes {dimension_semantics = [#tpu.dimension_semantics<parallel>], iteration_bounds = array<i64: 2>, scalar_prefetch = 0 : i64, scratch_operands = 1 : i64, tpu.core_type = #tpu.core_type<tc>, window_params = [{transform_indices = @transform_0, window_bounds = array<i64: 4, 1024>}, {pipeline_mode = #tpu.pipeline_mode<synchronous>, transform_indices = @transform_1, window_bounds = array<i64: 11, 16, 56>}, {pipeline_mode = #tpu.pipeline_mode<synchronous>, transform_indices = @transform_2, window_bounds = array<i64: 16, 18>}, {pipeline_mode = #tpu.pipeline_mode<synchronous>, transform_indices = @transform_3, window_bounds = array<i64: 1024, 512>}, {pipeline_mode = #tpu.pipeline_mode<synchronous>, transform_indices = @transform_4, window_bounds = array<i64: 512, 256>}, {pipeline_mode = #tpu.pipeline_mode<synchronous>, transform_indices = @transform_5, window_bounds = array<i64: 256, 128>}, {pipeline_mode = #tpu.pipeline_mode<synchronous>, transform_indices = @transform_6, window_bounds = array<i64: 128, 16>}, {transform_indices = @transform_7, window_bounds = array<i64: 1, 5, 16>}]} {
    %cst = arith.constant 0.000000e+00 : bf16
    %0 = vector.broadcast %cst : bf16 to vector<56x1024xbf16>
    %c0 = arith.constant 0 : index
    %c0_0 = arith.constant 0 : index
    %1 = vector.load %arg9[%c0, %c0_0] : memref<56x1024xbf16, #tpu.memory_space<vmem>>, vector<56x1024xbf16>
    tpu.vector_store %arg9[%c0, %c0_0], %0 {strides = array<i32>} : memref<56x1024xbf16, #tpu.memory_space<vmem>>, vector<56x1024xbf16>,
    %c0_1 = arith.constant 0 : index
    %c0_2 = arith.constant 0 : index
    %2 = vector.load %arg1[%c0_1, %c0_2] : memref<4x1024xf32, #tpu.memory_space<vmem>>, vector<4x1024xf32>
    %c3_i32 = arith.constant 3 : i32
    %3 = tpu.dynamic_rotate %2 by %c3_i32 dim 1 : vector<4x1024xf32>, i32 -> vector<4x1024xf32>
    %4 = tpu.iota {dimensions = array<i32: 1>} : vector<1x1024xi32>
    %c64_i32 = arith.constant 64 : i32
    %c0_i32 = arith.constant 0 : i32
    %5 = arith.cmpi eq, %c64_i32, %c0_i32 : i32
    %c1_i32 = arith.constant 1 : i32
    %6 = arith.select %5, %c1_i32, %c64_i32 : i32
    %7 = vector.broadcast %6 : i32 to vector<1x1024xi32>
    %8 = arith.remsi %4, %7 : vector<1x1024xi32>
    %c0_i32_3 = arith.constant 0 : i32
    %9 = vector.broadcast %c0_i32_3 : i32 to vector<1x1024xi32>
    %10 = arith.cmpi ne, %8, %9 : vector<1x1024xi32>
    %c0_i32_4 = arith.constant 0 : i32
    %11 = vector.broadcast %c0_i32_4 : i32 to vector<1x1024xi32>
    %12 = arith.cmpi slt, %8, %11 : vector<1x1024xi32>
    %c0_i32_5 = arith.constant 0 : i32
    %13 = arith.cmpi slt, %6, %c0_i32_5 : i32
    %14 = vector.broadcast %13 : i1 to vector<1x1024xi1>
    %15 = vector.broadcast %14 : vector<1x1024xi1> to vector<1x1024xi1>
    %16 = arith.xori %12, %15 : vector<1x1024xi1>
    %17 = arith.andi %16, %10 : vector<1x1024xi1>
    %18 = vector.broadcast %6 : i32 to vector<1x1024xi32>
    %19 = arith.addi %8, %18 : vector<1x1024xi32>
    %20 = arith.select %17, %19, %8 : vector<1x1024xi1>, vector<1x1024xi32>
    %c3_i32_6 = arith.constant 3 : i32
    %21 = vector.broadcast %c3_i32_6 : i32 to vector<1x1024xi32>
    %22 = arith.cmpi sge, %20, %21 : vector<1x1024xi32>
    %c64_i32_7 = arith.constant 64 : i32
    %23 = vector.broadcast %c64_i32_7 : i32 to vector<1x1024xi32>
    %24 = arith.cmpi slt, %20, %23 : vector<1x1024xi32>
    %25 = arith.andi %22, %24 : vector<1x1024xi1>
    %cst_8 = arith.constant 0.000000e+00 : f32
    %26 = vector.broadcast %cst_8 : f32 to vector<4x1024xf32>
    %27 = vector.shape_cast %25 : vector<1x1024xi1> to vector<1x1024xi1>
    %28 = vector.broadcast %27 : vector<1x1024xi1> to vector<4x1024xi1>
    %29 = arith.select %28, %3, %26 : vector<4x1024xi1>, vector<4x1024xf32>
    %30 = arith.truncf %29 : vector<4x1024xf32> to vector<4x1024xbf16>
    %c0_9 = arith.constant 0 : index
    %c0_10 = arith.constant 0 : index
    %31 = vector.load %arg9[%c0_9, %c0_10] : memref<56x1024xbf16, #tpu.memory_space<vmem>>, vector<4x1024xbf16>
    tpu.vector_store %arg9[%c0_9, %c0_10], %30 {strides = array<i32>} : memref<56x1024xbf16, #tpu.memory_space<vmem>>, vector<4x1024xbf16>,
    %c2_i32 = arith.constant 2 : i32
    %32 = tpu.dynamic_rotate %2 by %c2_i32 dim 1 : vector<4x1024xf32>, i32 -> vector<4x1024xf32>
    %c2_i32_11 = arith.constant 2 : i32
    %33 = vector.broadcast %c2_i32_11 : i32 to vector<1x1024xi32>
    %34 = arith.cmpi sge, %20, %33 : vector<1x1024xi32>
    %c64_i32_12 = arith.constant 64 : i32
    %35 = vector.broadcast %c64_i32_12 : i32 to vector<1x1024xi32>
    %36 = arith.cmpi slt, %20, %35 : vector<1x1024xi32>
    %37 = arith.andi %34, %36 : vector<1x1024xi1>
    %cst_13 = arith.constant 0.000000e+00 : f32
    %38 = vector.broadcast %cst_13 : f32 to vector<4x1024xf32>
    %39 = vector.shape_cast %37 : vector<1x1024xi1> to vector<1x1024xi1>
    %40 = vector.broadcast %39 : vector<1x1024xi1> to vector<4x1024xi1>
    %41 = arith.select %40, %32, %38 : vector<4x1024xi1>, vector<4x1024xf32>
    %42 = arith.truncf %41 : vector<4x1024xf32> to vector<4x1024xbf16>
    %c8 = arith.constant 8 : index
    %c0_14 = arith.constant 0 : index
    %43 = vector.load %arg9[%c8, %c0_14] : memref<56x1024xbf16, #tpu.memory_space<vmem>>, vector<4x1024xbf16>
    tpu.vector_store %arg9[%c8, %c0_14], %42 {strides = array<i32>} : memref<56x1024xbf16, #tpu.memory_space<vmem>>, vector<4x1024xbf16>,
    %c1_i32_15 = arith.constant 1 : i32
    %44 = tpu.dynamic_rotate %2 by %c1_i32_15 dim 1 : vector<4x1024xf32>, i32 -> vector<4x1024xf32>
    %c1_i32_16 = arith.constant 1 : i32
    %45 = vector.broadcast %c1_i32_16 : i32 to vector<1x1024xi32>
    %46 = arith.cmpi sge, %20, %45 : vector<1x1024xi32>
    %c64_i32_17 = arith.constant 64 : i32
    %47 = vector.broadcast %c64_i32_17 : i32 to vector<1x1024xi32>
    %48 = arith.cmpi slt, %20, %47 : vector<1x1024xi32>
    %49 = arith.andi %46, %48 : vector<1x1024xi1>
    %cst_18 = arith.constant 0.000000e+00 : f32
    %50 = vector.broadcast %cst_18 : f32 to vector<4x1024xf32>
    %51 = vector.shape_cast %49 : vector<1x1024xi1> to vector<1x1024xi1>
    %52 = vector.broadcast %51 : vector<1x1024xi1> to vector<4x1024xi1>
    %53 = arith.select %52, %44, %50 : vector<4x1024xi1>, vector<4x1024xf32>
    %54 = arith.truncf %53 : vector<4x1024xf32> to vector<4x1024xbf16>
    %c16 = arith.constant 16 : index
    %c0_19 = arith.constant 0 : index
    %55 = vector.load %arg9[%c16, %c0_19] : memref<56x1024xbf16, #tpu.memory_space<vmem>>, vector<4x1024xbf16>
    tpu.vector_store %arg9[%c16, %c0_19], %54 {strides = array<i32>} : memref<56x1024xbf16, #tpu.memory_space<vmem>>, vector<4x1024xbf16>,
    %56 = arith.truncf %2 : vector<4x1024xf32> to vector<4x1024xbf16>
    %c24 = arith.constant 24 : index
    %c0_20 = arith.constant 0 : index
    %57 = vector.load %arg9[%c24, %c0_20] : memref<56x1024xbf16, #tpu.memory_space<vmem>>, vector<4x1024xbf16>
    tpu.vector_store %arg9[%c24, %c0_20], %56 {strides = array<i32>} : memref<56x1024xbf16, #tpu.memory_space<vmem>>, vector<4x1024xbf16>,
    %c1023_i32 = arith.constant 1023 : i32
    %58 = tpu.dynamic_rotate %2 by %c1023_i32 dim 1 : vector<4x1024xf32>, i32 -> vector<4x1024xf32>
    %c0_i32_21 = arith.constant 0 : i32
    %59 = vector.broadcast %c0_i32_21 : i32 to vector<1x1024xi32>
    %60 = arith.cmpi sge, %20, %59 : vector<1x1024xi32>
    %c63_i32 = arith.constant 63 : i32
    %61 = vector.broadcast %c63_i32 : i32 to vector<1x1024xi32>
    %62 = arith.cmpi slt, %20, %61 : vector<1x1024xi32>
    %63 = arith.andi %60, %62 : vector<1x1024xi1>
    %cst_22 = arith.constant 0.000000e+00 : f32
    %64 = vector.broadcast %cst_22 : f32 to vector<4x1024xf32>
    %65 = vector.shape_cast %63 : vector<1x1024xi1> to vector<1x1024xi1>
    %66 = vector.broadcast %65 : vector<1x1024xi1> to vector<4x1024xi1>
    %67 = arith.select %66, %58, %64 : vector<4x1024xi1>, vector<4x1024xf32>
    %68 = arith.truncf %67 : vector<4x1024xf32> to vector<4x1024xbf16>
    %c32 = arith.constant 32 : index
    %c0_23 = arith.constant 0 : index
    %69 = vector.load %arg9[%c32, %c0_23] : memref<56x1024xbf16, #tpu.memory_space<vmem>>, vector<4x1024xbf16>
    tpu.vector_store %arg9[%c32, %c0_23], %68 {strides = array<i32>} : memref<56x1024xbf16, #tpu.memory_space<vmem>>, vector<4x1024xbf16>,
    %c1022_i32 = arith.constant 1022 : i32
    %70 = tpu.dynamic_rotate %2 by %c1022_i32 dim 1 : vector<4x1024xf32>, i32 -> vector<4x1024xf32>
    %c0_i32_24 = arith.constant 0 : i32
    %71 = vector.broadcast %c0_i32_24 : i32 to vector<1x1024xi32>
    %72 = arith.cmpi sge, %20, %71 : vector<1x1024xi32>
    %c62_i32 = arith.constant 62 : i32
    %73 = vector.broadcast %c62_i32 : i32 to vector<1x1024xi32>
    %74 = arith.cmpi slt, %20, %73 : vector<1x1024xi32>
    %75 = arith.andi %72, %74 : vector<1x1024xi1>
    %cst_25 = arith.constant 0.000000e+00 : f32
    %76 = vector.broadcast %cst_25 : f32 to vector<4x1024xf32>
    %77 = vector.shape_cast %75 : vector<1x1024xi1> to vector<1x1024xi1>
    %78 = vector.broadcast %77 : vector<1x1024xi1> to vector<4x1024xi1>
    %79 = arith.select %78, %70, %76 : vector<4x1024xi1>, vector<4x1024xf32>
    %80 = arith.truncf %79 : vector<4x1024xf32> to vector<4x1024xbf16>
    %c40 = arith.constant 40 : index
    %c0_26 = arith.constant 0 : index
    %81 = vector.load %arg9[%c40, %c0_26] : memref<56x1024xbf16, #tpu.memory_space<vmem>>, vector<4x1024xbf16>
    tpu.vector_store %arg9[%c40, %c0_26], %80 {strides = array<i32>} : memref<56x1024xbf16, #tpu.memory_space<vmem>>, vector<4x1024xbf16>,
    %c1021_i32 = arith.constant 1021 : i32
    %82 = tpu.dynamic_rotate %2 by %c1021_i32 dim 1 : vector<4x1024xf32>, i32 -> vector<4x1024xf32>
    %c0_i32_27 = arith.constant 0 : i32
    %83 = vector.broadcast %c0_i32_27 : i32 to vector<1x1024xi32>
    %84 = arith.cmpi sge, %20, %83 : vector<1x1024xi32>
    %c61_i32 = arith.constant 61 : i32
    %85 = vector.broadcast %c61_i32 : i32 to vector<1x1024xi32>
    %86 = arith.cmpi slt, %20, %85 : vector<1x1024xi32>
    %87 = arith.andi %84, %86 : vector<1x1024xi1>
    %cst_28 = arith.constant 0.000000e+00 : f32
    %88 = vector.broadcast %cst_28 : f32 to vector<4x1024xf32>
    %89 = vector.shape_cast %87 : vector<1x1024xi1> to vector<1x1024xi1>
    %90 = vector.broadcast %89 : vector<1x1024xi1> to vector<4x1024xi1>
    %91 = arith.select %90, %82, %88 : vector<4x1024xi1>, vector<4x1024xf32>
    %92 = arith.truncf %91 : vector<4x1024xf32> to vector<4x1024xbf16>
    %c48 = arith.constant 48 : index
    %c0_29 = arith.constant 0 : index
    %93 = vector.load %arg9[%c48, %c0_29] : memref<56x1024xbf16, #tpu.memory_space<vmem>>, vector<4x1024xbf16>
    tpu.vector_store %arg9[%c48, %c0_29], %92 {strides = array<i32>} : memref<56x1024xbf16, #tpu.memory_space<vmem>>, vector<4x1024xbf16>,
    %c0_30 = arith.constant 0 : index
    %c0_31 = arith.constant 0 : index
    %c0_32 = arith.constant 0 : index
    %94 = vector.load %arg2[%c0_30, %c0_31, %c0_32] : memref<11x16x56xbf16, #tpu.memory_space<vmem>>, vector<1x16x56xbf16>
    %95 = vector.shape_cast %94 : vector<1x16x56xbf16> to vector<16x56xbf16>
    %96 = vector.extract_strided_slice %95 {offsets = [0, 0], sizes = [8, 56], strides = [1, 1]} : vector<16x56xbf16> to vector<8x56xbf16>
    %c0_33 = arith.constant 0 : index
    %c0_34 = arith.constant 0 : index
    %97 = vector.load %arg9[%c0_33, %c0_34] : memref<56x1024xbf16, #tpu.memory_space<vmem>>, vector<56x1024xbf16>
    %cst_35 = arith.constant dense<0.000000e+00> : vector<8x1024xf32>
    %98 = tpu.matmul %96, %97, %cst_35 {dimension_numbers = #tpu.dot_dimension_numbers<[1], [0], [0], [1], [0, 0, 1, 1], [], []>} : vector<8x56xbf16>, vector<56x1024xbf16>, vector<8x1024xf32> -> vector<8x1024xf32>
    %c0_36 = arith.constant 0 : index
    %c0_37 = arith.constant 0 : index
    %99 = vector.load %arg3[%c0_36, %c0_37] : memref<16x18xf32, #tpu.memory_space<vmem>>, vector<8x1xf32>
    %100 = vector.broadcast %99 : vector<8x1xf32> to vector<8x1024xf32>
    %101 = arith.addf %98, %100 : vector<8x1024xf32>
    %cst_38 = arith.constant 0.000000e+00 : f32
    %102 = vector.broadcast %cst_38 : f32 to vector<8x1024xf32>
    %103 = arith.maximumf %101, %102 : vector<8x1024xf32>
    %c1023_i32_39 = arith.constant 1023 : i32
    %104 = tpu.dynamic_rotate %103 by %c1023_i32_39 dim 1 : vector<8x1024xf32>, i32 -> vector<8x1024xf32>
    %c0_i32_40 = arith.constant 0 : i32
    %105 = vector.broadcast %c0_i32_40 : i32 to vector<1x1024xi32>
    %106 = arith.cmpi sge, %20, %105 : vector<1x1024xi32>
    %c63_i32_41 = arith.constant 63 : i32
    %107 = vector.broadcast %c63_i32_41 : i32 to vector<1x1024xi32>
    %108 = arith.cmpi slt, %20, %107 : vector<1x1024xi32>
    %109 = arith.andi %106, %108 : vector<1x1024xi1>
    %cst_42 = arith.constant 0.000000e+00 : f32
    %110 = vector.broadcast %cst_42 : f32 to vector<8x1024xf32>
    %111 = vector.shape_cast %109 : vector<1x1024xi1> to vector<1x1024xi1>
    %112 = vector.broadcast %111 : vector<1x1024xi1> to vector<8x1024xi1>
    %113 = arith.select %112, %104, %110 : vector<8x1024xi1>, vector<8x1024xf32>
    %114 = arith.maximumf %103, %113 : vector<8x1024xf32>
    %115 = arith.truncf %114 : vector<8x1024xf32> to vector<8x1024xbf16>
    %c0_43 = arith.constant 0 : index
    %c0_44 = arith.constant 0 : index
    %116 = vector.load %arg4[%c0_43, %c0_44] : memref<1024x512xbf16, #tpu.memory_space<vmem>>, vector<1024x512xbf16>
    %cst_45 = arith.constant dense<0.000000e+00> : vector<8x512xf32>
    %117 = tpu.matmul %115, %116, %cst_45 {dimension_numbers = #tpu.dot_dimension_numbers<[1], [0], [0], [1], [0, 0, 1, 1], [], []>} : vector<8x1024xbf16>, vector<1024x512xbf16>, vector<8x512xf32> -> vector<8x512xf32>
    %c1_i32_46 = arith.constant 1 : i32
    %118 = tpu.dynamic_rotate %117 by %c1_i32_46 dim 1 : vector<8x512xf32>, i32 -> vector<8x512xf32>
    %119 = tpu.iota {dimensions = array<i32: 1>} : vector<1x512xi32>
    %c32_i32 = arith.constant 32 : i32
    %c0_i32_47 = arith.constant 0 : i32
    %120 = arith.cmpi eq, %c32_i32, %c0_i32_47 : i32
    %c1_i32_48 = arith.constant 1 : i32
    %121 = arith.select %120, %c1_i32_48, %c32_i32 : i32
    %122 = vector.broadcast %121 : i32 to vector<1x512xi32>
    %123 = arith.remsi %119, %122 : vector<1x512xi32>
    %c0_i32_49 = arith.constant 0 : i32
    %124 = vector.broadcast %c0_i32_49 : i32 to vector<1x512xi32>
    %125 = arith.cmpi ne, %123, %124 : vector<1x512xi32>
    %c0_i32_50 = arith.constant 0 : i32
    %126 = vector.broadcast %c0_i32_50 : i32 to vector<1x512xi32>
    %127 = arith.cmpi slt, %123, %126 : vector<1x512xi32>
    %c0_i32_51 = arith.constant 0 : i32
    %128 = arith.cmpi slt, %121, %c0_i32_51 : i32
    %129 = vector.broadcast %128 : i1 to vector<1x512xi1>
    %130 = vector.broadcast %129 : vector<1x512xi1> to vector<1x512xi1>
    %131 = arith.xori %127, %130 : vector<1x512xi1>
    %132 = arith.andi %131, %125 : vector<1x512xi1>
    %133 = vector.broadcast %121 : i32 to vector<1x512xi32>
    %134 = arith.addi %123, %133 : vector<1x512xi32>
    %135 = arith.select %132, %134, %123 : vector<1x512xi1>, vector<1x512xi32>
    %c1_i32_52 = arith.constant 1 : i32
    %136 = vector.broadcast %c1_i32_52 : i32 to vector<1x512xi32>
    %137 = arith.cmpi sge, %135, %136 : vector<1x512xi32>
    %c32_i32_53 = arith.constant 32 : i32
    %138 = vector.broadcast %c32_i32_53 : i32 to vector<1x512xi32>
    %139 = arith.cmpi slt, %135, %138 : vector<1x512xi32>
    %140 = arith.andi %137, %139 : vector<1x512xi1>
    %cst_54 = arith.constant 0.000000e+00 : f32
    %141 = vector.broadcast %cst_54 : f32 to vector<8x512xf32>
    %142 = vector.shape_cast %140 : vector<1x512xi1> to vector<1x512xi1>
    %143 = vector.broadcast %142 : vector<1x512xi1> to vector<8x512xi1>
    %144 = arith.select %143, %118, %141 : vector<8x512xi1>, vector<8x512xf32>
    %145 = arith.truncf %144 : vector<8x512xf32> to vector<8x512xbf16>
    %c0_55 = arith.constant 0 : index
    %c0_56 = arith.constant 0 : index
    %146 = vector.load %arg9[%c0_55, %c0_56] : memref<56x1024xbf16, #tpu.memory_space<vmem>>, vector<8x512xbf16>
    tpu.vector_store %arg9[%c0_55, %c0_56], %145 {strides = array<i32>} : memref<56x1024xbf16, #tpu.memory_space<vmem>>, vector<8x512xbf16>,
    %147 = arith.truncf %117 : vector<8x512xf32> to vector<8x512xbf16>
    %c8_57 = arith.constant 8 : index
    %c0_58 = arith.constant 0 : index
    %148 = vector.load %arg9[%c8_57, %c0_58] : memref<56x1024xbf16, #tpu.memory_space<vmem>>, vector<8x512xbf16>
    tpu.vector_store %arg9[%c8_57, %c0_58], %147 {strides = array<i32>} : memref<56x1024xbf16, #tpu.memory_space<vmem>>, vector<8x512xbf16>,
    %c511_i32 = arith.constant 511 : i32
    %149 = tpu.dynamic_rotate %117 by %c511_i32 dim 1 : vector<8x512xf32>, i32 -> vector<8x512xf32>
    %c0_i32_59 = arith.constant 0 : i32
    %150 = vector.broadcast %c0_i32_59 : i32 to vector<1x512xi32>
    %151 = arith.cmpi sge, %135, %150 : vector<1x512xi32>
    %c31_i32 = arith.constant 31 : i32
    %152 = vector.broadcast %c31_i32 : i32 to vector<1x512xi32>
    %153 = arith.cmpi slt, %135, %152 : vector<1x512xi32>
    %154 = arith.andi %151, %153 : vector<1x512xi1>
    %cst_60 = arith.constant 0.000000e+00 : f32
    %155 = vector.broadcast %cst_60 : f32 to vector<8x512xf32>
    %156 = vector.shape_cast %154 : vector<1x512xi1> to vector<1x512xi1>
    %157 = vector.broadcast %156 : vector<1x512xi1> to vector<8x512xi1>
    %158 = arith.select %157, %149, %155 : vector<8x512xi1>, vector<8x512xf32>
    %159 = arith.truncf %158 : vector<8x512xf32> to vector<8x512xbf16>
    %c16_61 = arith.constant 16 : index
    %c0_62 = arith.constant 0 : index
    %160 = vector.load %arg9[%c16_61, %c0_62] : memref<56x1024xbf16, #tpu.memory_space<vmem>>, vector<8x512xbf16>
    tpu.vector_store %arg9[%c16_61, %c0_62], %159 {strides = array<i32>} : memref<56x1024xbf16, #tpu.memory_space<vmem>>, vector<8x512xbf16>,
    %c1 = arith.constant 1 : index
    %c0_63 = arith.constant 0 : index
    %c0_64 = arith.constant 0 : index
    %161 = vector.load %arg2[%c1, %c0_63, %c0_64] : memref<11x16x56xbf16, #tpu.memory_space<vmem>>, vector<1x16x56xbf16>
    %162 = vector.shape_cast %161 : vector<1x16x56xbf16> to vector<16x56xbf16>
    %163 = vector.extract_strided_slice %162 {offsets = [0, 0], sizes = [8, 56], strides = [1, 1]} : vector<16x56xbf16> to vector<8x56xbf16>
    %c0_65 = arith.constant 0 : index
    %c0_66 = arith.constant 0 : index
    %164 = vector.load %arg9[%c0_65, %c0_66] : memref<56x1024xbf16, #tpu.memory_space<vmem>>, vector<56x512xbf16>
    %cst_67 = arith.constant dense<0.000000e+00> : vector<8x512xf32>
    %165 = tpu.matmul %163, %164, %cst_67 {dimension_numbers = #tpu.dot_dimension_numbers<[1], [0], [0], [1], [0, 0, 1, 1], [], []>} : vector<8x56xbf16>, vector<56x512xbf16>, vector<8x512xf32> -> vector<8x512xf32>
    %c0_68 = arith.constant 0 : index
    %c1_69 = arith.constant 1 : index
    %166 = vector.load %arg3[%c0_68, %c1_69] : memref<16x18xf32, #tpu.memory_space<vmem>>, vector<8x1xf32>
    %167 = vector.broadcast %166 : vector<8x1xf32> to vector<8x512xf32>
    %168 = arith.addf %165, %167 : vector<8x512xf32>
    %cst_70 = arith.constant 0.000000e+00 : f32
    %169 = vector.broadcast %cst_70 : f32 to vector<8x512xf32>
    %170 = arith.maximumf %168, %169 : vector<8x512xf32>
    %c1_i32_71 = arith.constant 1 : i32
    %171 = tpu.dynamic_rotate %170 by %c1_i32_71 dim 1 : vector<8x512xf32>, i32 -> vector<8x512xf32>
    %c1_i32_72 = arith.constant 1 : i32
    %172 = vector.broadcast %c1_i32_72 : i32 to vector<1x512xi32>
    %173 = arith.cmpi sge, %135, %172 : vector<1x512xi32>
    %c32_i32_73 = arith.constant 32 : i32
    %174 = vector.broadcast %c32_i32_73 : i32 to vector<1x512xi32>
    %175 = arith.cmpi slt, %135, %174 : vector<1x512xi32>
    %176 = arith.andi %173, %175 : vector<1x512xi1>
    %cst_74 = arith.constant 0.000000e+00 : f32
    %177 = vector.broadcast %cst_74 : f32 to vector<8x512xf32>
    %178 = vector.shape_cast %176 : vector<1x512xi1> to vector<1x512xi1>
    %179 = vector.broadcast %178 : vector<1x512xi1> to vector<8x512xi1>
    %180 = arith.select %179, %171, %177 : vector<8x512xi1>, vector<8x512xf32>
    %181 = arith.truncf %180 : vector<8x512xf32> to vector<8x512xbf16>
    %c0_75 = arith.constant 0 : index
    %c0_76 = arith.constant 0 : index
    %182 = vector.load %arg9[%c0_75, %c0_76] : memref<56x1024xbf16, #tpu.memory_space<vmem>>, vector<8x512xbf16>
    tpu.vector_store %arg9[%c0_75, %c0_76], %181 {strides = array<i32>} : memref<56x1024xbf16, #tpu.memory_space<vmem>>, vector<8x512xbf16>,
    %183 = arith.truncf %170 : vector<8x512xf32> to vector<8x512xbf16>
    %c8_77 = arith.constant 8 : index
    %c0_78 = arith.constant 0 : index
    %184 = vector.load %arg9[%c8_77, %c0_78] : memref<56x1024xbf16, #tpu.memory_space<vmem>>, vector<8x512xbf16>
    tpu.vector_store %arg9[%c8_77, %c0_78], %183 {strides = array<i32>} : memref<56x1024xbf16, #tpu.memory_space<vmem>>, vector<8x512xbf16>,
    %c511_i32_79 = arith.constant 511 : i32
    %185 = tpu.dynamic_rotate %170 by %c511_i32_79 dim 1 : vector<8x512xf32>, i32 -> vector<8x512xf32>
    %c0_i32_80 = arith.constant 0 : i32
    %186 = vector.broadcast %c0_i32_80 : i32 to vector<1x512xi32>
    %187 = arith.cmpi sge, %135, %186 : vector<1x512xi32>
    %c31_i32_81 = arith.constant 31 : i32
    %188 = vector.broadcast %c31_i32_81 : i32 to vector<1x512xi32>
    %189 = arith.cmpi slt, %135, %188 : vector<1x512xi32>
    %190 = arith.andi %187, %189 : vector<1x512xi1>
    %cst_82 = arith.constant 0.000000e+00 : f32
    %191 = vector.broadcast %cst_82 : f32 to vector<8x512xf32>
    %192 = vector.shape_cast %190 : vector<1x512xi1> to vector<1x512xi1>
    %193 = vector.broadcast %192 : vector<1x512xi1> to vector<8x512xi1>
    %194 = arith.select %193, %185, %191 : vector<8x512xi1>, vector<8x512xf32>
    %195 = arith.truncf %194 : vector<8x512xf32> to vector<8x512xbf16>
    %c16_83 = arith.constant 16 : index
    %c0_84 = arith.constant 0 : index
    %196 = vector.load %arg9[%c16_83, %c0_84] : memref<56x1024xbf16, #tpu.memory_space<vmem>>, vector<8x512xbf16>
    tpu.vector_store %arg9[%c16_83, %c0_84], %195 {strides = array<i32>} : memref<56x1024xbf16, #tpu.memory_space<vmem>>, vector<8x512xbf16>,
    %c2 = arith.constant 2 : index
    %c0_85 = arith.constant 0 : index
    %c0_86 = arith.constant 0 : index
    %197 = vector.load %arg2[%c2, %c0_85, %c0_86] : memref<11x16x56xbf16, #tpu.memory_space<vmem>>, vector<1x16x56xbf16>
    %198 = vector.shape_cast %197 : vector<1x16x56xbf16> to vector<16x56xbf16>
    %199 = vector.extract_strided_slice %198 {offsets = [0, 0], sizes = [8, 56], strides = [1, 1]} : vector<16x56xbf16> to vector<8x56xbf16>
    %c0_87 = arith.constant 0 : index
    %c0_88 = arith.constant 0 : index
    %200 = vector.load %arg9[%c0_87, %c0_88] : memref<56x1024xbf16, #tpu.memory_space<vmem>>, vector<56x512xbf16>
    %cst_89 = arith.constant dense<0.000000e+00> : vector<8x512xf32>
    %201 = tpu.matmul %199, %200, %cst_89 {dimension_numbers = #tpu.dot_dimension_numbers<[1], [0], [0], [1], [0, 0, 1, 1], [], []>} : vector<8x56xbf16>, vector<56x512xbf16>, vector<8x512xf32> -> vector<8x512xf32>
    %c0_90 = arith.constant 0 : index
    %c2_91 = arith.constant 2 : index
    %202 = vector.load %arg3[%c0_90, %c2_91] : memref<16x18xf32, #tpu.memory_space<vmem>>, vector<8x1xf32>
    %203 = vector.broadcast %202 : vector<8x1xf32> to vector<8x512xf32>
    %204 = arith.addf %201, %203 : vector<8x512xf32>
    %205 = arith.addf %204, %117 : vector<8x512xf32>
    %c0_92 = arith.constant 0 : index
    %c3 = arith.constant 3 : index
    %206 = vector.load %arg3[%c0_92, %c3] : memref<16x18xf32, #tpu.memory_space<vmem>>, vector<8x1xf32>
    %207 = vector.broadcast %206 : vector<8x1xf32> to vector<8x512xf32>
    %208 = arith.mulf %205, %207 : vector<8x512xf32>
    %c0_93 = arith.constant 0 : index
    %c4 = arith.constant 4 : index
    %209 = vector.load %arg3[%c0_93, %c4] : memref<16x18xf32, #tpu.memory_space<vmem>>, vector<8x1xf32>
    %210 = vector.broadcast %209 : vector<8x1xf32> to vector<8x512xf32>
    %211 = arith.addf %208, %210 : vector<8x512xf32>
    %cst_94 = arith.constant 0.000000e+00 : f32
    %212 = vector.broadcast %cst_94 : f32 to vector<8x512xf32>
    %213 = arith.maximumf %211, %212 : vector<8x512xf32>
    %214 = arith.truncf %213 : vector<8x512xf32> to vector<8x512xbf16>
    %c0_95 = arith.constant 0 : index
    %c0_96 = arith.constant 0 : index
    %215 = vector.load %arg9[%c0_95, %c0_96] : memref<56x1024xbf16, #tpu.memory_space<vmem>>, vector<8x512xbf16>
    tpu.vector_store %arg9[%c0_95, %c0_96], %214 {strides = array<i32>} : memref<56x1024xbf16, #tpu.memory_space<vmem>>, vector<8x512xbf16>,
    %c511_i32_97 = arith.constant 511 : i32
    %216 = tpu.dynamic_rotate %213 by %c511_i32_97 dim 1 : vector<8x512xf32>, i32 -> vector<8x512xf32>
    %c0_i32_98 = arith.constant 0 : i32
    %217 = vector.broadcast %c0_i32_98 : i32 to vector<1x512xi32>
    %218 = arith.cmpi sge, %135, %217 : vector<1x512xi32>
    %c31_i32_99 = arith.constant 31 : i32
    %219 = vector.broadcast %c31_i32_99 : i32 to vector<1x512xi32>
    %220 = arith.cmpi slt, %135, %219 : vector<1x512xi32>
    %221 = arith.andi %218, %220 : vector<1x512xi1>
    %cst_100 = arith.constant 0.000000e+00 : f32
    %222 = vector.broadcast %cst_100 : f32 to vector<8x512xf32>
    %223 = vector.shape_cast %221 : vector<1x512xi1> to vector<1x512xi1>
    %224 = vector.broadcast %223 : vector<1x512xi1> to vector<8x512xi1>
    %225 = arith.select %224, %216, %222 : vector<8x512xi1>, vector<8x512xf32>
    %226 = arith.truncf %225 : vector<8x512xf32> to vector<8x512xbf16>
    %c8_101 = arith.constant 8 : index
    %c0_102 = arith.constant 0 : index
    %227 = vector.load %arg9[%c8_101, %c0_102] : memref<56x1024xbf16, #tpu.memory_space<vmem>>, vector<8x512xbf16>
    tpu.vector_store %arg9[%c8_101, %c0_102], %226 {strides = array<i32>} : memref<56x1024xbf16, #tpu.memory_space<vmem>>, vector<8x512xbf16>,
    %c510_i32 = arith.constant 510 : i32
    %228 = tpu.dynamic_rotate %213 by %c510_i32 dim 1 : vector<8x512xf32>, i32 -> vector<8x512xf32>
    %c0_i32_103 = arith.constant 0 : i32
    %229 = vector.broadcast %c0_i32_103 : i32 to vector<1x512xi32>
    %230 = arith.cmpi sge, %135, %229 : vector<1x512xi32>
    %c30_i32 = arith.constant 30 : i32
    %231 = vector.broadcast %c30_i32 : i32 to vector<1x512xi32>
    %232 = arith.cmpi slt, %135, %231 : vector<1x512xi32>
    %233 = arith.andi %230, %232 : vector<1x512xi1>
    %cst_104 = arith.constant 0.000000e+00 : f32
    %234 = vector.broadcast %cst_104 : f32 to vector<8x512xf32>
    %235 = vector.shape_cast %233 : vector<1x512xi1> to vector<1x512xi1>
    %236 = vector.broadcast %235 : vector<1x512xi1> to vector<8x512xi1>
    %237 = arith.select %236, %228, %234 : vector<8x512xi1>, vector<8x512xf32>
    %238 = arith.truncf %237 : vector<8x512xf32> to vector<8x512xbf16>
    %c16_105 = arith.constant 16 : index
    %c0_106 = arith.constant 0 : index
    %239 = vector.load %arg9[%c16_105, %c0_106] : memref<56x1024xbf16, #tpu.memory_space<vmem>>, vector<8x512xbf16>
    tpu.vector_store %arg9[%c16_105, %c0_106], %238 {strides = array<i32>} : memref<56x1024xbf16, #tpu.memory_space<vmem>>, vector<8x512xbf16>,
    %c3_107 = arith.constant 3 : index
    %c0_108 = arith.constant 0 : index
    %c0_109 = arith.constant 0 : index
    %240 = vector.load %arg2[%c3_107, %c0_108, %c0_109] : memref<11x16x56xbf16, #tpu.memory_space<vmem>>, vector<1x16x56xbf16>
    %241 = vector.shape_cast %240 : vector<1x16x56xbf16> to vector<16x56xbf16>
    %242 = vector.extract_strided_slice %241 {offsets = [0, 0], sizes = [8, 56], strides = [1, 1]} : vector<16x56xbf16> to vector<8x56xbf16>
    %c0_110 = arith.constant 0 : index
    %c0_111 = arith.constant 0 : index
    %243 = vector.load %arg9[%c0_110, %c0_111] : memref<56x1024xbf16, #tpu.memory_space<vmem>>, vector<56x512xbf16>
    %cst_112 = arith.constant dense<0.000000e+00> : vector<8x512xf32>
    %244 = tpu.matmul %242, %243, %cst_112 {dimension_numbers = #tpu.dot_dimension_numbers<[1], [0], [0], [1], [0, 0, 1, 1], [], []>} : vector<8x56xbf16>, vector<56x512xbf16>, vector<8x512xf32> -> vector<8x512xf32>
    %245 = arith.truncf %244 : vector<8x512xf32> to vector<8x512xbf16>
    %c0_113 = arith.constant 0 : index
    %c0_114 = arith.constant 0 : index
    %246 = vector.load %arg5[%c0_113, %c0_114] : memref<512x256xbf16, #tpu.memory_space<vmem>>, vector<512x256xbf16>
    %cst_115 = arith.constant dense<0.000000e+00> : vector<8x256xf32>
    %247 = tpu.matmul %245, %246, %cst_115 {dimension_numbers = #tpu.dot_dimension_numbers<[1], [0], [0], [1], [0, 0, 1, 1], [], []>} : vector<8x512xbf16>, vector<512x256xbf16>, vector<8x256xf32> -> vector<8x256xf32>
    %c0_116 = arith.constant 0 : index
    %c5 = arith.constant 5 : index
    %248 = vector.load %arg3[%c0_116, %c5] : memref<16x18xf32, #tpu.memory_space<vmem>>, vector<8x1xf32>
    %249 = vector.broadcast %248 : vector<8x1xf32> to vector<8x256xf32>
    %250 = arith.addf %247, %249 : vector<8x256xf32>
    %cst_117 = arith.constant 0.000000e+00 : f32
    %251 = vector.broadcast %cst_117 : f32 to vector<8x256xf32>
    %252 = arith.maximumf %250, %251 : vector<8x256xf32>
    %c1_i32_118 = arith.constant 1 : i32
    %253 = tpu.dynamic_rotate %252 by %c1_i32_118 dim 1 : vector<8x256xf32>, i32 -> vector<8x256xf32>
    %254 = tpu.iota {dimensions = array<i32: 1>} : vector<1x256xi32>
    %c16_i32 = arith.constant 16 : i32
    %c0_i32_119 = arith.constant 0 : i32
    %255 = arith.cmpi eq, %c16_i32, %c0_i32_119 : i32
    %c1_i32_120 = arith.constant 1 : i32
    %256 = arith.select %255, %c1_i32_120, %c16_i32 : i32
    %257 = vector.broadcast %256 : i32 to vector<1x256xi32>
    %258 = arith.remsi %254, %257 : vector<1x256xi32>
    %c0_i32_121 = arith.constant 0 : i32
    %259 = vector.broadcast %c0_i32_121 : i32 to vector<1x256xi32>
    %260 = arith.cmpi ne, %258, %259 : vector<1x256xi32>
    %c0_i32_122 = arith.constant 0 : i32
    %261 = vector.broadcast %c0_i32_122 : i32 to vector<1x256xi32>
    %262 = arith.cmpi slt, %258, %261 : vector<1x256xi32>
    %c0_i32_123 = arith.constant 0 : i32
    %263 = arith.cmpi slt, %256, %c0_i32_123 : i32
    %264 = vector.broadcast %263 : i1 to vector<1x256xi1>
    %265 = vector.broadcast %264 : vector<1x256xi1> to vector<1x256xi1>
    %266 = arith.xori %262, %265 : vector<1x256xi1>
    %267 = arith.andi %266, %260 : vector<1x256xi1>
    %268 = vector.broadcast %256 : i32 to vector<1x256xi32>
    %269 = arith.addi %258, %268 : vector<1x256xi32>
    %270 = arith.select %267, %269, %258 : vector<1x256xi1>, vector<1x256xi32>
    %c1_i32_124 = arith.constant 1 : i32
    %271 = vector.broadcast %c1_i32_124 : i32 to vector<1x256xi32>
    %272 = arith.cmpi sge, %270, %271 : vector<1x256xi32>
    %c16_i32_125 = arith.constant 16 : i32
    %273 = vector.broadcast %c16_i32_125 : i32 to vector<1x256xi32>
    %274 = arith.cmpi slt, %270, %273 : vector<1x256xi32>
    %275 = arith.andi %272, %274 : vector<1x256xi1>
    %cst_126 = arith.constant 0.000000e+00 : f32
    %276 = vector.broadcast %cst_126 : f32 to vector<8x256xf32>
    %277 = vector.shape_cast %275 : vector<1x256xi1> to vector<1x256xi1>
    %278 = vector.broadcast %277 : vector<1x256xi1> to vector<8x256xi1>
    %279 = arith.select %278, %253, %276 : vector<8x256xi1>, vector<8x256xf32>
    %280 = arith.truncf %279 : vector<8x256xf32> to vector<8x256xbf16>
    %c0_127 = arith.constant 0 : index
    %c0_128 = arith.constant 0 : index
    %281 = vector.load %arg9[%c0_127, %c0_128] : memref<56x1024xbf16, #tpu.memory_space<vmem>>, vector<8x256xbf16>
    tpu.vector_store %arg9[%c0_127, %c0_128], %280 {strides = array<i32>} : memref<56x1024xbf16, #tpu.memory_space<vmem>>, vector<8x256xbf16>,
    %282 = arith.truncf %252 : vector<8x256xf32> to vector<8x256xbf16>
    %c8_129 = arith.constant 8 : index
    %c0_130 = arith.constant 0 : index
    %283 = vector.load %arg9[%c8_129, %c0_130] : memref<56x1024xbf16, #tpu.memory_space<vmem>>, vector<8x256xbf16>
    tpu.vector_store %arg9[%c8_129, %c0_130], %282 {strides = array<i32>} : memref<56x1024xbf16, #tpu.memory_space<vmem>>, vector<8x256xbf16>,
    %c255_i32 = arith.constant 255 : i32
    %284 = tpu.dynamic_rotate %252 by %c255_i32 dim 1 : vector<8x256xf32>, i32 -> vector<8x256xf32>
    %c0_i32_131 = arith.constant 0 : i32
    %285 = vector.broadcast %c0_i32_131 : i32 to vector<1x256xi32>
    %286 = arith.cmpi sge, %270, %285 : vector<1x256xi32>
    %c15_i32 = arith.constant 15 : i32
    %287 = vector.broadcast %c15_i32 : i32 to vector<1x256xi32>
    %288 = arith.cmpi slt, %270, %287 : vector<1x256xi32>
    %289 = arith.andi %286, %288 : vector<1x256xi1>
    %cst_132 = arith.constant 0.000000e+00 : f32
    %290 = vector.broadcast %cst_132 : f32 to vector<8x256xf32>
    %291 = vector.shape_cast %289 : vector<1x256xi1> to vector<1x256xi1>
    %292 = vector.broadcast %291 : vector<1x256xi1> to vector<8x256xi1>
    %293 = arith.select %292, %284, %290 : vector<8x256xi1>, vector<8x256xf32>
    %294 = arith.truncf %293 : vector<8x256xf32> to vector<8x256xbf16>
    %c16_133 = arith.constant 16 : index
    %c0_134 = arith.constant 0 : index
    %295 = vector.load %arg9[%c16_133, %c0_134] : memref<56x1024xbf16, #tpu.memory_space<vmem>>, vector<8x256xbf16>
    tpu.vector_store %arg9[%c16_133, %c0_134], %294 {strides = array<i32>} : memref<56x1024xbf16, #tpu.memory_space<vmem>>, vector<8x256xbf16>,
    %c4_135 = arith.constant 4 : index
    %c0_136 = arith.constant 0 : index
    %c0_137 = arith.constant 0 : index
    %296 = vector.load %arg2[%c4_135, %c0_136, %c0_137] : memref<11x16x56xbf16, #tpu.memory_space<vmem>>, vector<1x16x56xbf16>
    %297 = vector.shape_cast %296 : vector<1x16x56xbf16> to vector<16x56xbf16>
    %298 = vector.extract_strided_slice %297 {offsets = [0, 0], sizes = [8, 56], strides = [1, 1]} : vector<16x56xbf16> to vector<8x56xbf16>
    %c0_138 = arith.constant 0 : index
    %c0_139 = arith.constant 0 : index
    %299 = vector.load %arg9[%c0_138, %c0_139] : memref<56x1024xbf16, #tpu.memory_space<vmem>>, vector<56x256xbf16>
    %cst_140 = arith.constant dense<0.000000e+00> : vector<8x256xf32>
    %300 = tpu.matmul %298, %299, %cst_140 {dimension_numbers = #tpu.dot_dimension_numbers<[1], [0], [0], [1], [0, 0, 1, 1], [], []>} : vector<8x56xbf16>, vector<56x256xbf16>, vector<8x256xf32> -> vector<8x256xf32>
    %c0_141 = arith.constant 0 : index
    %c6 = arith.constant 6 : index
    %301 = vector.load %arg3[%c0_141, %c6] : memref<16x18xf32, #tpu.memory_space<vmem>>, vector<8x1xf32>
    %302 = vector.broadcast %301 : vector<8x1xf32> to vector<8x256xf32>
    %303 = arith.addf %300, %302 : vector<8x256xf32>
    %c511_i32_142 = arith.constant 511 : i32
    %304 = tpu.dynamic_rotate %205 by %c511_i32_142 dim 1 : vector<8x512xf32>, i32 -> vector<8x512xf32>
    %c0_i32_143 = arith.constant 0 : i32
    %305 = vector.broadcast %c0_i32_143 : i32 to vector<1x512xi32>
    %306 = arith.cmpi sge, %135, %305 : vector<1x512xi32>
    %c31_i32_144 = arith.constant 31 : i32
    %307 = vector.broadcast %c31_i32_144 : i32 to vector<1x512xi32>
    %308 = arith.cmpi slt, %135, %307 : vector<1x512xi32>
    %309 = arith.andi %306, %308 : vector<1x512xi1>
    %cst_145 = arith.constant 0.000000e+00 : f32
    %310 = vector.broadcast %cst_145 : f32 to vector<8x512xf32>
    %311 = vector.shape_cast %309 : vector<1x512xi1> to vector<1x512xi1>
    %312 = vector.broadcast %311 : vector<1x512xi1> to vector<8x512xi1>
    %313 = arith.select %312, %304, %310 : vector<8x512xi1>, vector<8x512xf32>
    %314 = arith.maximumf %205, %313 : vector<8x512xf32>
    %315 = arith.truncf %314 : vector<8x512xf32> to vector<8x512xbf16>
    %c0_146 = arith.constant 0 : index
    %c0_147 = arith.constant 0 : index
    %316 = vector.load %arg5[%c0_146, %c0_147] : memref<512x256xbf16, #tpu.memory_space<vmem>>, vector<512x256xbf16>
    %cst_148 = arith.constant dense<0.000000e+00> : vector<8x256xf32>
    %317 = tpu.matmul %315, %316, %cst_148 {dimension_numbers = #tpu.dot_dimension_numbers<[1], [0], [0], [1], [0, 0, 1, 1], [], []>} : vector<8x512xbf16>, vector<512x256xbf16>, vector<8x256xf32> -> vector<8x256xf32>
    %318 = arith.addf %303, %317 : vector<8x256xf32>
    %c0_149 = arith.constant 0 : index
    %c7 = arith.constant 7 : index
    %319 = vector.load %arg3[%c0_149, %c7] : memref<16x18xf32, #tpu.memory_space<vmem>>, vector<8x1xf32>
    %320 = vector.broadcast %319 : vector<8x1xf32> to vector<8x256xf32>
    %321 = arith.mulf %318, %320 : vector<8x256xf32>
    %c0_150 = arith.constant 0 : index
    %c8_151 = arith.constant 8 : index
    %322 = vector.load %arg3[%c0_150, %c8_151] : memref<16x18xf32, #tpu.memory_space<vmem>>, vector<8x1xf32>
    %323 = vector.broadcast %322 : vector<8x1xf32> to vector<8x256xf32>
    %324 = arith.addf %321, %323 : vector<8x256xf32>
    %cst_152 = arith.constant 0.000000e+00 : f32
    %325 = vector.broadcast %cst_152 : f32 to vector<8x256xf32>
    %326 = arith.maximumf %324, %325 : vector<8x256xf32>
    %c1_i32_153 = arith.constant 1 : i32
    %327 = tpu.dynamic_rotate %326 by %c1_i32_153 dim 1 : vector<8x256xf32>, i32 -> vector<8x256xf32>
    %c1_i32_154 = arith.constant 1 : i32
    %328 = vector.broadcast %c1_i32_154 : i32 to vector<1x256xi32>
    %329 = arith.cmpi sge, %270, %328 : vector<1x256xi32>
    %c16_i32_155 = arith.constant 16 : i32
    %330 = vector.broadcast %c16_i32_155 : i32 to vector<1x256xi32>
    %331 = arith.cmpi slt, %270, %330 : vector<1x256xi32>
    %332 = arith.andi %329, %331 : vector<1x256xi1>
    %cst_156 = arith.constant 0.000000e+00 : f32
    %333 = vector.broadcast %cst_156 : f32 to vector<8x256xf32>
    %334 = vector.shape_cast %332 : vector<1x256xi1> to vector<1x256xi1>
    %335 = vector.broadcast %334 : vector<1x256xi1> to vector<8x256xi1>
    %336 = arith.select %335, %327, %333 : vector<8x256xi1>, vector<8x256xf32>
    %337 = arith.truncf %336 : vector<8x256xf32> to vector<8x256xbf16>
    %c0_157 = arith.constant 0 : index
    %c0_158 = arith.constant 0 : index
    %338 = vector.load %arg9[%c0_157, %c0_158] : memref<56x1024xbf16, #tpu.memory_space<vmem>>, vector<8x256xbf16>
    tpu.vector_store %arg9[%c0_157, %c0_158], %337 {strides = array<i32>} : memref<56x1024xbf16, #tpu.memory_space<vmem>>, vector<8x256xbf16>,
    %339 = arith.truncf %326 : vector<8x256xf32> to vector<8x256xbf16>
    %c8_159 = arith.constant 8 : index
    %c0_160 = arith.constant 0 : index
    %340 = vector.load %arg9[%c8_159, %c0_160] : memref<56x1024xbf16, #tpu.memory_space<vmem>>, vector<8x256xbf16>
    tpu.vector_store %arg9[%c8_159, %c0_160], %339 {strides = array<i32>} : memref<56x1024xbf16, #tpu.memory_space<vmem>>, vector<8x256xbf16>,
    %c255_i32_161 = arith.constant 255 : i32
    %341 = tpu.dynamic_rotate %326 by %c255_i32_161 dim 1 : vector<8x256xf32>, i32 -> vector<8x256xf32>
    %c0_i32_162 = arith.constant 0 : i32
    %342 = vector.broadcast %c0_i32_162 : i32 to vector<1x256xi32>
    %343 = arith.cmpi sge, %270, %342 : vector<1x256xi32>
    %c15_i32_163 = arith.constant 15 : i32
    %344 = vector.broadcast %c15_i32_163 : i32 to vector<1x256xi32>
    %345 = arith.cmpi slt, %270, %344 : vector<1x256xi32>
    %346 = arith.andi %343, %345 : vector<1x256xi1>
    %cst_164 = arith.constant 0.000000e+00 : f32
    %347 = vector.broadcast %cst_164 : f32 to vector<8x256xf32>
    %348 = vector.shape_cast %346 : vector<1x256xi1> to vector<1x256xi1>
    %349 = vector.broadcast %348 : vector<1x256xi1> to vector<8x256xi1>
    %350 = arith.select %349, %341, %347 : vector<8x256xi1>, vector<8x256xf32>
    %351 = arith.truncf %350 : vector<8x256xf32> to vector<8x256xbf16>
    %c16_165 = arith.constant 16 : index
    %c0_166 = arith.constant 0 : index
    %352 = vector.load %arg9[%c16_165, %c0_166] : memref<56x1024xbf16, #tpu.memory_space<vmem>>, vector<8x256xbf16>
    tpu.vector_store %arg9[%c16_165, %c0_166], %351 {strides = array<i32>} : memref<56x1024xbf16, #tpu.memory_space<vmem>>, vector<8x256xbf16>,
    %c5_167 = arith.constant 5 : index
    %c0_168 = arith.constant 0 : index
    %c0_169 = arith.constant 0 : index
    %353 = vector.load %arg2[%c5_167, %c0_168, %c0_169] : memref<11x16x56xbf16, #tpu.memory_space<vmem>>, vector<1x16x56xbf16>
    %354 = vector.shape_cast %353 : vector<1x16x56xbf16> to vector<16x56xbf16>
    %c0_170 = arith.constant 0 : index
    %c0_171 = arith.constant 0 : index
    %355 = vector.load %arg9[%c0_170, %c0_171] : memref<56x1024xbf16, #tpu.memory_space<vmem>>, vector<56x256xbf16>
    %cst_172 = arith.constant dense<0.000000e+00> : vector<16x256xf32>
    %356 = tpu.matmul %354, %355, %cst_172 {dimension_numbers = #tpu.dot_dimension_numbers<[1], [0], [0], [1], [0, 0, 1, 1], [], []>} : vector<16x56xbf16>, vector<56x256xbf16>, vector<16x256xf32> -> vector<16x256xf32>
    %c0_173 = arith.constant 0 : index
    %c9 = arith.constant 9 : index
    %357 = vector.load %arg3[%c0_173, %c9] : memref<16x18xf32, #tpu.memory_space<vmem>>, vector<16x1xf32>
    %358 = vector.broadcast %357 : vector<16x1xf32> to vector<16x256xf32>
    %359 = arith.addf %356, %358 : vector<16x256xf32>
    %cst_174 = arith.constant 0.000000e+00 : f32
    %360 = vector.broadcast %cst_174 : f32 to vector<16x256xf32>
    %361 = arith.maximumf %359, %360 : vector<16x256xf32>
    %c1_i32_175 = arith.constant 1 : i32
    %362 = tpu.dynamic_rotate %361 by %c1_i32_175 dim 1 : vector<16x256xf32>, i32 -> vector<16x256xf32>
    %c1_i32_176 = arith.constant 1 : i32
    %363 = vector.broadcast %c1_i32_176 : i32 to vector<1x256xi32>
    %364 = arith.cmpi sge, %270, %363 : vector<1x256xi32>
    %c16_i32_177 = arith.constant 16 : i32
    %365 = vector.broadcast %c16_i32_177 : i32 to vector<1x256xi32>
    %366 = arith.cmpi slt, %270, %365 : vector<1x256xi32>
    %367 = arith.andi %364, %366 : vector<1x256xi1>
    %cst_178 = arith.constant 0.000000e+00 : f32
    %368 = vector.broadcast %cst_178 : f32 to vector<16x256xf32>
    %369 = vector.shape_cast %367 : vector<1x256xi1> to vector<1x256xi1>
    %370 = vector.broadcast %369 : vector<1x256xi1> to vector<16x256xi1>
    %371 = arith.select %370, %362, %368 : vector<16x256xi1>, vector<16x256xf32>
    %372 = arith.truncf %371 : vector<16x256xf32> to vector<16x256xbf16>
    %c0_179 = arith.constant 0 : index
    %c0_180 = arith.constant 0 : index
    %373 = vector.load %arg9[%c0_179, %c0_180] : memref<56x1024xbf16, #tpu.memory_space<vmem>>, vector<16x256xbf16>
    tpu.vector_store %arg9[%c0_179, %c0_180], %372 {strides = array<i32>} : memref<56x1024xbf16, #tpu.memory_space<vmem>>, vector<16x256xbf16>,
    %374 = arith.truncf %361 : vector<16x256xf32> to vector<16x256xbf16>
    %c16_181 = arith.constant 16 : index
    %c0_182 = arith.constant 0 : index
    %375 = vector.load %arg9[%c16_181, %c0_182] : memref<56x1024xbf16, #tpu.memory_space<vmem>>, vector<16x256xbf16>
    tpu.vector_store %arg9[%c16_181, %c0_182], %374 {strides = array<i32>} : memref<56x1024xbf16, #tpu.memory_space<vmem>>, vector<16x256xbf16>,
    %c255_i32_183 = arith.constant 255 : i32
    %376 = tpu.dynamic_rotate %361 by %c255_i32_183 dim 1 : vector<16x256xf32>, i32 -> vector<16x256xf32>
    %c0_i32_184 = arith.constant 0 : i32
    %377 = vector.broadcast %c0_i32_184 : i32 to vector<1x256xi32>
    %378 = arith.cmpi sge, %270, %377 : vector<1x256xi32>
    %c15_i32_185 = arith.constant 15 : i32
    %379 = vector.broadcast %c15_i32_185 : i32 to vector<1x256xi32>
    %380 = arith.cmpi slt, %270, %379 : vector<1x256xi32>
    %381 = arith.andi %378, %380 : vector<1x256xi1>
    %cst_186 = arith.constant 0.000000e+00 : f32
    %382 = vector.broadcast %cst_186 : f32 to vector<16x256xf32>
    %383 = vector.shape_cast %381 : vector<1x256xi1> to vector<1x256xi1>
    %384 = vector.broadcast %383 : vector<1x256xi1> to vector<16x256xi1>
    %385 = arith.select %384, %376, %382 : vector<16x256xi1>, vector<16x256xf32>
    %386 = arith.truncf %385 : vector<16x256xf32> to vector<16x256xbf16>
    %c32_187 = arith.constant 32 : index
    %c0_188 = arith.constant 0 : index
    %387 = vector.load %arg9[%c32_187, %c0_188] : memref<56x1024xbf16, #tpu.memory_space<vmem>>, vector<16x256xbf16>
    tpu.vector_store %arg9[%c32_187, %c0_188], %386 {strides = array<i32>} : memref<56x1024xbf16, #tpu.memory_space<vmem>>, vector<16x256xbf16>,
    %c6_189 = arith.constant 6 : index
    %c0_190 = arith.constant 0 : index
    %c0_191 = arith.constant 0 : index
    %388 = vector.load %arg2[%c6_189, %c0_190, %c0_191] : memref<11x16x56xbf16, #tpu.memory_space<vmem>>, vector<1x16x56xbf16>
    %389 = vector.shape_cast %388 : vector<1x16x56xbf16> to vector<16x56xbf16>
    %c0_192 = arith.constant 0 : index
    %c0_193 = arith.constant 0 : index
    %390 = vector.load %arg9[%c0_192, %c0_193] : memref<56x1024xbf16, #tpu.memory_space<vmem>>, vector<56x256xbf16>
    %cst_194 = arith.constant dense<0.000000e+00> : vector<16x256xf32>
    %391 = tpu.matmul %389, %390, %cst_194 {dimension_numbers = #tpu.dot_dimension_numbers<[1], [0], [0], [1], [0, 0, 1, 1], [], []>} : vector<16x56xbf16>, vector<56x256xbf16>, vector<16x256xf32> -> vector<16x256xf32>
    %c0_195 = arith.constant 0 : index
    %c10 = arith.constant 10 : index
    %392 = vector.load %arg3[%c0_195, %c10] : memref<16x18xf32, #tpu.memory_space<vmem>>, vector<16x1xf32>
    %393 = vector.broadcast %392 : vector<16x1xf32> to vector<16x256xf32>
    %394 = arith.addf %391, %393 : vector<16x256xf32>
    %c7_196 = arith.constant 7 : index
    %c0_197 = arith.constant 0 : index
    %c0_198 = arith.constant 0 : index
    %395 = vector.load %arg2[%c7_196, %c0_197, %c0_198] : memref<11x16x56xbf16, #tpu.memory_space<vmem>>, vector<1x16x56xbf16>
    %396 = vector.shape_cast %395 : vector<1x16x56xbf16> to vector<16x56xbf16>
    %397 = vector.extract_strided_slice %396 {offsets = [0, 0], sizes = [16, 8], strides = [1, 1]} : vector<16x56xbf16> to vector<16x8xbf16>
    %398 = arith.truncf %318 : vector<8x256xf32> to vector<8x256xbf16>
    %cst_199 = arith.constant dense<0.000000e+00> : vector<16x256xf32>
    %399 = tpu.matmul %397, %398, %cst_199 {dimension_numbers = #tpu.dot_dimension_numbers<[1], [0], [0], [1], [0, 0, 1, 1], [], []>} : vector<16x8xbf16>, vector<8x256xbf16>, vector<16x256xf32> -> vector<16x256xf32>
    %400 = arith.addf %394, %399 : vector<16x256xf32>
    %c0_200 = arith.constant 0 : index
    %c11 = arith.constant 11 : index
    %401 = vector.load %arg3[%c0_200, %c11] : memref<16x18xf32, #tpu.memory_space<vmem>>, vector<16x1xf32>
    %402 = vector.broadcast %401 : vector<16x1xf32> to vector<16x256xf32>
    %403 = arith.mulf %400, %402 : vector<16x256xf32>
    %c0_201 = arith.constant 0 : index
    %c12 = arith.constant 12 : index
    %404 = vector.load %arg3[%c0_201, %c12] : memref<16x18xf32, #tpu.memory_space<vmem>>, vector<16x1xf32>
    %405 = vector.broadcast %404 : vector<16x1xf32> to vector<16x256xf32>
    %406 = arith.addf %403, %405 : vector<16x256xf32>
    %cst_202 = arith.constant 0.000000e+00 : f32
    %407 = vector.broadcast %cst_202 : f32 to vector<16x256xf32>
    %408 = arith.maximumf %406, %407 : vector<16x256xf32>
    %409 = arith.truncf %408 : vector<16x256xf32> to vector<16x256xbf16>
    %c0_203 = arith.constant 0 : index
    %c0_204 = arith.constant 0 : index
    %410 = vector.load %arg9[%c0_203, %c0_204] : memref<56x1024xbf16, #tpu.memory_space<vmem>>, vector<16x256xbf16>
    tpu.vector_store %arg9[%c0_203, %c0_204], %409 {strides = array<i32>} : memref<56x1024xbf16, #tpu.memory_space<vmem>>, vector<16x256xbf16>,
    %c255_i32_205 = arith.constant 255 : i32
    %411 = tpu.dynamic_rotate %408 by %c255_i32_205 dim 1 : vector<16x256xf32>, i32 -> vector<16x256xf32>
    %c0_i32_206 = arith.constant 0 : i32
    %412 = vector.broadcast %c0_i32_206 : i32 to vector<1x256xi32>
    %413 = arith.cmpi sge, %270, %412 : vector<1x256xi32>
    %c15_i32_207 = arith.constant 15 : i32
    %414 = vector.broadcast %c15_i32_207 : i32 to vector<1x256xi32>
    %415 = arith.cmpi slt, %270, %414 : vector<1x256xi32>
    %416 = arith.andi %413, %415 : vector<1x256xi1>
    %cst_208 = arith.constant 0.000000e+00 : f32
    %417 = vector.broadcast %cst_208 : f32 to vector<16x256xf32>
    %418 = vector.shape_cast %416 : vector<1x256xi1> to vector<1x256xi1>
    %419 = vector.broadcast %418 : vector<1x256xi1> to vector<16x256xi1>
    %420 = arith.select %419, %411, %417 : vector<16x256xi1>, vector<16x256xf32>
    %421 = arith.truncf %420 : vector<16x256xf32> to vector<16x256xbf16>
    %c16_209 = arith.constant 16 : index
    %c0_210 = arith.constant 0 : index
    %422 = vector.load %arg9[%c16_209, %c0_210] : memref<56x1024xbf16, #tpu.memory_space<vmem>>, vector<16x256xbf16>
    tpu.vector_store %arg9[%c16_209, %c0_210], %421 {strides = array<i32>} : memref<56x1024xbf16, #tpu.memory_space<vmem>>, vector<16x256xbf16>,
    %c254_i32 = arith.constant 254 : i32
    %423 = tpu.dynamic_rotate %408 by %c254_i32 dim 1 : vector<16x256xf32>, i32 -> vector<16x256xf32>
    %c0_i32_211 = arith.constant 0 : i32
    %424 = vector.broadcast %c0_i32_211 : i32 to vector<1x256xi32>
    %425 = arith.cmpi sge, %270, %424 : vector<1x256xi32>
    %c14_i32 = arith.constant 14 : i32
    %426 = vector.broadcast %c14_i32 : i32 to vector<1x256xi32>
    %427 = arith.cmpi slt, %270, %426 : vector<1x256xi32>
    %428 = arith.andi %425, %427 : vector<1x256xi1>
    %cst_212 = arith.constant 0.000000e+00 : f32
    %429 = vector.broadcast %cst_212 : f32 to vector<16x256xf32>
    %430 = vector.shape_cast %428 : vector<1x256xi1> to vector<1x256xi1>
    %431 = vector.broadcast %430 : vector<1x256xi1> to vector<16x256xi1>
    %432 = arith.select %431, %423, %429 : vector<16x256xi1>, vector<16x256xf32>
    %433 = arith.truncf %432 : vector<16x256xf32> to vector<16x256xbf16>
    %c32_213 = arith.constant 32 : index
    %c0_214 = arith.constant 0 : index
    %434 = vector.load %arg9[%c32_213, %c0_214] : memref<56x1024xbf16, #tpu.memory_space<vmem>>, vector<16x256xbf16>
    tpu.vector_store %arg9[%c32_213, %c0_214], %433 {strides = array<i32>} : memref<56x1024xbf16, #tpu.memory_space<vmem>>, vector<16x256xbf16>,
    %c8_215 = arith.constant 8 : index
    %c0_216 = arith.constant 0 : index
    %c0_217 = arith.constant 0 : index
    %435 = vector.load %arg2[%c8_215, %c0_216, %c0_217] : memref<11x16x56xbf16, #tpu.memory_space<vmem>>, vector<1x16x56xbf16>
    %436 = vector.shape_cast %435 : vector<1x16x56xbf16> to vector<16x56xbf16>
    %c0_218 = arith.constant 0 : index
    %c0_219 = arith.constant 0 : index
    %437 = vector.load %arg9[%c0_218, %c0_219] : memref<56x1024xbf16, #tpu.memory_space<vmem>>, vector<56x256xbf16>
    %cst_220 = arith.constant dense<0.000000e+00> : vector<16x256xf32>
    %438 = tpu.matmul %436, %437, %cst_220 {dimension_numbers = #tpu.dot_dimension_numbers<[1], [0], [0], [1], [0, 0, 1, 1], [], []>} : vector<16x56xbf16>, vector<56x256xbf16>, vector<16x256xf32> -> vector<16x256xf32>
    %439 = arith.truncf %438 : vector<16x256xf32> to vector<16x256xbf16>
    %c0_221 = arith.constant 0 : index
    %c0_222 = arith.constant 0 : index
    %440 = vector.load %arg6[%c0_221, %c0_222] : memref<256x128xbf16, #tpu.memory_space<vmem>>, vector<256x128xbf16>
    %cst_223 = arith.constant dense<0.000000e+00> : vector<16x128xf32>
    %441 = tpu.matmul %439, %440, %cst_223 {dimension_numbers = #tpu.dot_dimension_numbers<[1], [0], [0], [1], [0, 0, 1, 1], [], []>} : vector<16x256xbf16>, vector<256x128xbf16>, vector<16x128xf32> -> vector<16x128xf32>
    %c0_224 = arith.constant 0 : index
    %c13 = arith.constant 13 : index
    %442 = vector.load %arg3[%c0_224, %c13] : memref<16x18xf32, #tpu.memory_space<vmem>>, vector<16x1xf32>
    %443 = vector.broadcast %442 : vector<16x1xf32> to vector<16x128xf32>
    %444 = arith.addf %441, %443 : vector<16x128xf32>
    %cst_225 = arith.constant 0.000000e+00 : f32
    %445 = vector.broadcast %cst_225 : f32 to vector<16x128xf32>
    %446 = arith.maximumf %444, %445 : vector<16x128xf32>
    %c1_i32_226 = arith.constant 1 : i32
    %447 = tpu.dynamic_rotate %446 by %c1_i32_226 dim 1 : vector<16x128xf32>, i32 -> vector<16x128xf32>
    %448 = tpu.iota {dimensions = array<i32: 1>} : vector<1x128xi32>
    %c8_i32 = arith.constant 8 : i32
    %c0_i32_227 = arith.constant 0 : i32
    %449 = arith.cmpi eq, %c8_i32, %c0_i32_227 : i32
    %c1_i32_228 = arith.constant 1 : i32
    %450 = arith.select %449, %c1_i32_228, %c8_i32 : i32
    %451 = vector.broadcast %450 : i32 to vector<1x128xi32>
    %452 = arith.remsi %448, %451 : vector<1x128xi32>
    %c0_i32_229 = arith.constant 0 : i32
    %453 = vector.broadcast %c0_i32_229 : i32 to vector<1x128xi32>
    %454 = arith.cmpi ne, %452, %453 : vector<1x128xi32>
    %c0_i32_230 = arith.constant 0 : i32
    %455 = vector.broadcast %c0_i32_230 : i32 to vector<1x128xi32>
    %456 = arith.cmpi slt, %452, %455 : vector<1x128xi32>
    %c0_i32_231 = arith.constant 0 : i32
    %457 = arith.cmpi slt, %450, %c0_i32_231 : i32
    %458 = vector.broadcast %457 : i1 to vector<1x128xi1>
    %459 = vector.broadcast %458 : vector<1x128xi1> to vector<1x128xi1>
    %460 = arith.xori %456, %459 : vector<1x128xi1>
    %461 = arith.andi %460, %454 : vector<1x128xi1>
    %462 = vector.broadcast %450 : i32 to vector<1x128xi32>
    %463 = arith.addi %452, %462 : vector<1x128xi32>
    %464 = arith.select %461, %463, %452 : vector<1x128xi1>, vector<1x128xi32>
    %c1_i32_232 = arith.constant 1 : i32
    %465 = vector.broadcast %c1_i32_232 : i32 to vector<1x128xi32>
    %466 = arith.cmpi sge, %464, %465 : vector<1x128xi32>
    %c8_i32_233 = arith.constant 8 : i32
    %467 = vector.broadcast %c8_i32_233 : i32 to vector<1x128xi32>
    %468 = arith.cmpi slt, %464, %467 : vector<1x128xi32>
    %469 = arith.andi %466, %468 : vector<1x128xi1>
    %cst_234 = arith.constant 0.000000e+00 : f32
    %470 = vector.broadcast %cst_234 : f32 to vector<16x128xf32>
    %471 = vector.shape_cast %469 : vector<1x128xi1> to vector<1x128xi1>
    %472 = vector.broadcast %471 : vector<1x128xi1> to vector<16x128xi1>
    %473 = arith.select %472, %447, %470 : vector<16x128xi1>, vector<16x128xf32>
    %474 = arith.truncf %473 : vector<16x128xf32> to vector<16x128xbf16>
    %c0_235 = arith.constant 0 : index
    %c0_236 = arith.constant 0 : index
    %475 = vector.load %arg9[%c0_235, %c0_236] : memref<56x1024xbf16, #tpu.memory_space<vmem>>, vector<16x128xbf16>
    tpu.vector_store %arg9[%c0_235, %c0_236], %474 {strides = array<i32>} : memref<56x1024xbf16, #tpu.memory_space<vmem>>, vector<16x128xbf16>,
    %476 = arith.truncf %446 : vector<16x128xf32> to vector<16x128xbf16>
    %c16_237 = arith.constant 16 : index
    %c0_238 = arith.constant 0 : index
    %477 = vector.load %arg9[%c16_237, %c0_238] : memref<56x1024xbf16, #tpu.memory_space<vmem>>, vector<16x128xbf16>
    tpu.vector_store %arg9[%c16_237, %c0_238], %476 {strides = array<i32>} : memref<56x1024xbf16, #tpu.memory_space<vmem>>, vector<16x128xbf16>,
    %c127_i32 = arith.constant 127 : i32
    %478 = tpu.dynamic_rotate %446 by %c127_i32 dim 1 : vector<16x128xf32>, i32 -> vector<16x128xf32>
    %c0_i32_239 = arith.constant 0 : i32
    %479 = vector.broadcast %c0_i32_239 : i32 to vector<1x128xi32>
    %480 = arith.cmpi sge, %464, %479 : vector<1x128xi32>
    %c7_i32 = arith.constant 7 : i32
    %481 = vector.broadcast %c7_i32 : i32 to vector<1x128xi32>
    %482 = arith.cmpi slt, %464, %481 : vector<1x128xi32>
    %483 = arith.andi %480, %482 : vector<1x128xi1>
    %cst_240 = arith.constant 0.000000e+00 : f32
    %484 = vector.broadcast %cst_240 : f32 to vector<16x128xf32>
    %485 = vector.shape_cast %483 : vector<1x128xi1> to vector<1x128xi1>
    %486 = vector.broadcast %485 : vector<1x128xi1> to vector<16x128xi1>
    %487 = arith.select %486, %478, %484 : vector<16x128xi1>, vector<16x128xf32>
    %488 = arith.truncf %487 : vector<16x128xf32> to vector<16x128xbf16>
    %c32_241 = arith.constant 32 : index
    %c0_242 = arith.constant 0 : index
    %489 = vector.load %arg9[%c32_241, %c0_242] : memref<56x1024xbf16, #tpu.memory_space<vmem>>, vector<16x128xbf16>
    tpu.vector_store %arg9[%c32_241, %c0_242], %488 {strides = array<i32>} : memref<56x1024xbf16, #tpu.memory_space<vmem>>, vector<16x128xbf16>,
    %c9_243 = arith.constant 9 : index
    %c0_244 = arith.constant 0 : index
    %c0_245 = arith.constant 0 : index
    %490 = vector.load %arg2[%c9_243, %c0_244, %c0_245] : memref<11x16x56xbf16, #tpu.memory_space<vmem>>, vector<1x16x56xbf16>
    %491 = vector.shape_cast %490 : vector<1x16x56xbf16> to vector<16x56xbf16>
    %c0_246 = arith.constant 0 : index
    %c0_247 = arith.constant 0 : index
    %492 = vector.load %arg9[%c0_246, %c0_247] : memref<56x1024xbf16, #tpu.memory_space<vmem>>, vector<56x128xbf16>
    %cst_248 = arith.constant dense<0.000000e+00> : vector<16x128xf32>
    %493 = tpu.matmul %491, %492, %cst_248 {dimension_numbers = #tpu.dot_dimension_numbers<[1], [0], [0], [1], [0, 0, 1, 1], [], []>} : vector<16x56xbf16>, vector<56x128xbf16>, vector<16x128xf32> -> vector<16x128xf32>
    %c0_249 = arith.constant 0 : index
    %c14 = arith.constant 14 : index
    %494 = vector.load %arg3[%c0_249, %c14] : memref<16x18xf32, #tpu.memory_space<vmem>>, vector<16x1xf32>
    %495 = vector.broadcast %494 : vector<16x1xf32> to vector<16x128xf32>
    %496 = arith.addf %493, %495 : vector<16x128xf32>
    %c255_i32_250 = arith.constant 255 : i32
    %497 = tpu.dynamic_rotate %400 by %c255_i32_250 dim 1 : vector<16x256xf32>, i32 -> vector<16x256xf32>
    %c0_i32_251 = arith.constant 0 : i32
    %498 = vector.broadcast %c0_i32_251 : i32 to vector<1x256xi32>
    %499 = arith.cmpi sge, %270, %498 : vector<1x256xi32>
    %c15_i32_252 = arith.constant 15 : i32
    %500 = vector.broadcast %c15_i32_252 : i32 to vector<1x256xi32>
    %501 = arith.cmpi slt, %270, %500 : vector<1x256xi32>
    %502 = arith.andi %499, %501 : vector<1x256xi1>
    %cst_253 = arith.constant 0.000000e+00 : f32
    %503 = vector.broadcast %cst_253 : f32 to vector<16x256xf32>
    %504 = vector.shape_cast %502 : vector<1x256xi1> to vector<1x256xi1>
    %505 = vector.broadcast %504 : vector<1x256xi1> to vector<16x256xi1>
    %506 = arith.select %505, %497, %503 : vector<16x256xi1>, vector<16x256xf32>
    %507 = arith.maximumf %400, %506 : vector<16x256xf32>
    %508 = arith.truncf %507 : vector<16x256xf32> to vector<16x256xbf16>
    %c0_254 = arith.constant 0 : index
    %c0_255 = arith.constant 0 : index
    %509 = vector.load %arg6[%c0_254, %c0_255] : memref<256x128xbf16, #tpu.memory_space<vmem>>, vector<256x128xbf16>
    %cst_256 = arith.constant dense<0.000000e+00> : vector<16x128xf32>
    %510 = tpu.matmul %508, %509, %cst_256 {dimension_numbers = #tpu.dot_dimension_numbers<[1], [0], [0], [1], [0, 0, 1, 1], [], []>} : vector<16x256xbf16>, vector<256x128xbf16>, vector<16x128xf32> -> vector<16x128xf32>
    %511 = arith.addf %496, %510 : vector<16x128xf32>
    %c0_257 = arith.constant 0 : index
    %c15 = arith.constant 15 : index
    %512 = vector.load %arg3[%c0_257, %c15] : memref<16x18xf32, #tpu.memory_space<vmem>>, vector<16x1xf32>
    %513 = vector.broadcast %512 : vector<16x1xf32> to vector<16x128xf32>
    %514 = arith.mulf %511, %513 : vector<16x128xf32>
    %c0_258 = arith.constant 0 : index
    %c16_259 = arith.constant 16 : index
    %515 = vector.load %arg3[%c0_258, %c16_259] : memref<16x18xf32, #tpu.memory_space<vmem>>, vector<16x1xf32>
    %516 = vector.broadcast %515 : vector<16x1xf32> to vector<16x128xf32>
    %517 = arith.addf %514, %516 : vector<16x128xf32>
    %cst_260 = arith.constant 0.000000e+00 : f32
    %518 = vector.broadcast %cst_260 : f32 to vector<16x128xf32>
    %519 = arith.maximumf %517, %518 : vector<16x128xf32>
    %520 = arith.truncf %519 : vector<16x128xf32> to vector<16x128xbf16>
    %c0_261 = arith.constant 0 : index
    %c0_262 = arith.constant 0 : index
    %521 = vector.load %arg7[%c0_261, %c0_262] : memref<128x16xbf16, #tpu.memory_space<vmem>>, vector<128x16xbf16>
    %cst_263 = arith.constant dense<0.000000e+00> : vector<16x16xf32>
    %522 = tpu.matmul %520, %521, %cst_263 {dimension_numbers = #tpu.dot_dimension_numbers<[1], [0], [0], [1], [0, 0, 1, 1], [], []>} : vector<16x128xbf16>, vector<128x16xbf16>, vector<16x16xf32> -> vector<16x16xf32>
    %cst_264 = arith.constant 1.250000e-01 : f32
    %523 = vector.broadcast %cst_264 : f32 to vector<16x16xf32>
    %524 = arith.mulf %522, %523 : vector<16x16xf32>
    %c10_265 = arith.constant 10 : index
    %c0_266 = arith.constant 0 : index
    %c0_267 = arith.constant 0 : index
    %525 = vector.load %arg2[%c10_265, %c0_266, %c0_267] : memref<11x16x56xbf16, #tpu.memory_space<vmem>>, vector<1x16x56xbf16>
    %526 = vector.shape_cast %525 : vector<1x16x56xbf16> to vector<16x56xbf16>
    %527 = vector.extract_strided_slice %526 {offsets = [0, 0], sizes = [5, 16], strides = [1, 1]} : vector<16x56xbf16> to vector<5x16xbf16>
    %528 = arith.truncf %524 : vector<16x16xf32> to vector<16x16xbf16>
    %cst_268 = arith.constant dense<0.000000e+00> : vector<5x16xf32>
    %529 = tpu.matmul %527, %528, %cst_268 {dimension_numbers = #tpu.dot_dimension_numbers<[1], [0], [0], [1], [0, 0, 1, 1], [], []>} : vector<5x16xbf16>, vector<16x16xbf16>, vector<5x16xf32> -> vector<5x16xf32>
    %c0_269 = arith.constant 0 : index
    %c17 = arith.constant 17 : index
    %530 = vector.load %arg3[%c0_269, %c17] : memref<16x18xf32, #tpu.memory_space<vmem>>, vector<5x1xf32>
    %531 = vector.broadcast %530 : vector<5x1xf32> to vector<5x16xf32>
    %532 = arith.addf %529, %531 : vector<5x16xf32>
    %c0_270 = arith.constant 0 : index
    %c0_271 = arith.constant 0 : index
    %c0_272 = arith.constant 0 : index
    %533 = vector.load %arg8[%c0_270, %c0_271, %c0_272] : memref<1x5x16xf32, #tpu.memory_space<vmem>>, vector<1x5x16xf32>
    %534 = vector.shape_cast %533 : vector<1x5x16xf32> to vector<5x16xf32>
    %535 = vector.shape_cast %532 : vector<5x16xf32> to vector<1x5x16xf32>
    tpu.vector_store %arg8[%c0_270, %c0_271, %c0_272], %535 {strides = array<i32>} : memref<1x5x16xf32, #tpu.memory_space<vmem>>, vector<1x5x16xf32>,
    return
  }
  func.func @transform_0(%arg0: i32) -> (i32, i32) {
    %c0_i32 = arith.constant 0 : i32
    %c0_i32_0 = arith.constant 0 : i32
    return %c0_i32, %arg0 : i32, i32
  }
  func.func @transform_1(%arg0: i32) -> (i32, i32, i32) {
    %c0_i32 = arith.constant 0 : i32
    %c0_i32_0 = arith.constant 0 : i32
    %c0_i32_1 = arith.constant 0 : i32
    %c0_i32_2 = arith.constant 0 : i32
    return %c0_i32, %c0_i32_0, %c0_i32_1 : i32, i32, i32
  }
  func.func @transform_2(%arg0: i32) -> (i32, i32) {
    %c0_i32 = arith.constant 0 : i32
    %c0_i32_0 = arith.constant 0 : i32
    %c0_i32_1 = arith.constant 0 : i32
    return %c0_i32, %c0_i32_0 : i32, i32
  }
  func.func @transform_3(%arg0: i32) -> (i32, i32) {
    %c0_i32 = arith.constant 0 : i32
    %c0_i32_0 = arith.constant 0 : i32
    %c0_i32_1 = arith.constant 0 : i32
    return %c0_i32, %c0_i32_0 : i32, i32
  }
  func.func @transform_4(%arg0: i32) -> (i32, i32) {
    %c0_i32 = arith.constant 0 : i32
    %c0_i32_0 = arith.constant 0 : i32
    %c0_i32_1 = arith.constant 0 : i32
    return %c0_i32, %c0_i32_0 : i32, i32
  }
  func.func @transform_5(%arg0: i32) -> (i32, i32) {
    %c0_i32 = arith.constant 0 : i32
    %c0_i32_0 = arith.constant 0 : i32
    %c0_i32_1 = arith.constant 0 : i32
    return %c0_i32, %c0_i32_0 : i32, i32
  }
  func.func @transform_6(%arg0: i32) -> (i32, i32) {
    %c0_i32 = arith.constant 0 : i32
    %c0_i32_0 = arith.constant 0 : i32
    %c0_i32_1 = arith.constant 0 : i32
    return %c0_i32, %c0_i32_0 : i32, i32
  }
  func.func @transform_7(%arg0: i32) -> (i32, i32, i32) {
    %c0_i32 = arith.constant 0 : i32
    %c0_i32_0 = arith.constant 0 : i32
    %c0_i32_1 = arith.constant 0 : i32
    return %arg0, %c0_i32, %c0_i32_0 : i32, i32, i32
  }
}

</mosaic_0001>

<llo_original>
// kernel: forward.1
$region0: #{forward.1}
  #allocation0 [shape = 'u32[]', space=smem, size = 0x4, offset = 0x4, fixed_abs, tag = 'smem constant byte address 0x4 - core index']
  #allocation1 [shape = 'u32[72,128]{1,0:T(1,128)}', space=vmem, size = 0x9000, scoped, tag = 'internal scratch']
  #allocation2 [shape = 'bf16[56,1024]{1,0:T(8,128)(2,1)}', space=vmem, size = 0x1c000, scoped, tag = 'scratch operand']
  %s0 = inlined_call_operand.vmem [shape: f32[4,2048], index: 0, kind: input, shape index: {}]
  %s1 = inlined_call_operand.vmem [shape: bf16[11,16,56], index: 1, kind: input, shape index: {}]
  %s2 = inlined_call_operand.vmem [shape: f32[16,18], index: 2, kind: input, shape index: {}]
  %s3 = inlined_call_operand.hbm [shape: bf16[1024,512], index: 3, kind: input, shape index: {}]
  %s4 = inlined_call_operand.hbm [shape: bf16[512,256], index: 4, kind: input, shape index: {}]
  %s5 = inlined_call_operand.vmem [shape: bf16[256,128], index: 5, kind: input, shape index: {}]
  %s6 = inlined_call_operand.vmem [shape: bf16[128,16], index: 6, kind: input, shape index: {}]
  %s7 = inlined_call_operand.vmem [shape: f32[2,5,16], index: 7, kind: output, shape index: {}]
  %s8 = sld [smem:[#allocation0]]
  $region69: #{forward.1} parent=0
    _
  %s10 = ssub.s32 1, %s8
  %s11 = scalar_select 0, %s10, %s8
  $region1: #{forward.1} parent=0
    #allocation3 [shape = 'u8[1048576]{0}', space=vmem, size = 0x100000, scoped, tag = 'input window, operand 3, single buffered']
    #allocation4 [shape = 's32[2]{0}', space=sflag, size = 0x8, scoped, tag = 'scoped memory for forward.1']
    #allocation5 [shape = 'u8[262144]{0}', space=vmem, size = 0x40000, scoped, tag = 'input window, operand 4, single buffered']
    #allocation6 [shape = 's32[1]{0}', space=sflag, size = 0x4, scoped, tag = 'scoped memory for forward.1']
    %12 = vsyncpa [#allocation4], 0
    %13 = vsyncpa [#allocation6], 0
    loop: start=0, step=1, limit=4
    $region2: #{forward.1} parent=1 // loop_pre_header
      _
    $region3: #{forward.1} parent=1 // loop_header
      %s15 = sphi 0, %s19
      %p16 = scmp.ge.s32.totalorder %s15, 4
      %s25 = sphi 0, %s27
      %s28 = sphi 0, %s25
      %s29 = sphi 0, %s28
      %s45 = sphi 0, %s29
      %s49 = sphi 0, %s49
      %s51 = sphi 0, %s49
      %s52 = sphi 0, %s51
      %s66 = sphi 0, %s52
      %s70 = sphi 0, %s70
      %s72 = sphi 0, %s70
      %s73 = sphi 0, %s72
      %s87 = sphi 0, %s73
      %s91 = sphi 0, %s91
      %s93 = sphi 0, %s91
      %s94 = sphi 0, %s93
      %s108 = sphi 0, %s94
      %s112 = sphi 0, %s112
      %s114 = sphi 0, %s112
      %s115 = sphi 0, %s114
      %s129 = sphi 0, %s115
      %s133 = sphi 0, %s133
      %s135 = sphi 0, %s133
      %s136 = sphi 0, %s135
      %s150 = sphi 0, %s136
      %s154 = sphi 0, %s154
      %s156 = sphi 0, %s154
      %s157 = sphi 0, %s156
      %s171 = sphi 0, %s157
      %s177 = sphi 0, %s179
      %s180 = sphi 0, %s177
      %s181 = sphi 0, %s180
      %s197 = sphi 0, %s181
    $region4: #{forward.1} parent=1 // loop_header_branch
      %18 = sbr.rel (%p16) target = $region8
    $region5: #{forward.1} parent=1 // loop_body
      %s20 = ssub.s32 %s15, 1
      %s21 = ssub.s32 %s15, 2
      %s22 = sadd.s32 %s15, 1
      %s23 = ssub.s32 %s15, %s22
      %p24 = scmp.eq.s32.totalorder %s23, 0
      %s26 = sadd.s32 %s25, 1
      %s27 = scalar_select %p24, %s25, %s26
      %p30 = pneg %p24
      %p31 = scmp.eq.s32.totalorder %s15, 1
      %p32 = por %p30, %p31
      %p33 = scmp.ne.s32.totalorder %s25, %s28
      %p34 = scmp.eq.s32.totalorder %s15, 0
      %p35 = por %p33, %p34
      %p36 = scmp.ne.s32.totalorder %s25, %s28
      %p37 = scmp.eq.s32.totalorder %s20, 1
      %p38 = por %p36, %p37
      %p39 = scmp.ne.s32.totalorder %s28, %s29
      %p40 = scmp.eq.s32.totalorder %s20, 0
      %p41 = por %p39, %p40
      %p42 = scmp.ne.s32.totalorder %s28, %s29
      %p43 = scmp.eq.s32.totalorder %s21, 1
      %p44 = por %p42, %p43
      %p46 = scmp.ne.s32.totalorder %s29, %s45
      %p47 = scmp.eq.s32.totalorder %s21, 0
      %p48 = por %p46, %p47
      %s50 = sadd.s32 %s49, 1
      %p53 = scmp.eq.s32.totalorder %s15, 1
      %p54 = scmp.ne.s32.totalorder %s49, %s51
      %p55 = scmp.eq.s32.totalorder %s15, 0
      %p56 = por %p54, %p55
      %p57 = scmp.ne.s32.totalorder %s49, %s51
      %p58 = scmp.eq.s32.totalorder %s20, 1
      %p59 = por %p57, %p58
      %p60 = scmp.ne.s32.totalorder %s51, %s52
      %p61 = scmp.eq.s32.totalorder %s20, 0
      %p62 = por %p60, %p61
      %p63 = scmp.ne.s32.totalorder %s51, %s52
      %p64 = scmp.eq.s32.totalorder %s21, 1
      %p65 = por %p63, %p64
      %p67 = scmp.ne.s32.totalorder %s52, %s66
      %p68 = scmp.eq.s32.totalorder %s21, 0
      %p69 = por %p67, %p68
      %s71 = sadd.s32 %s70, 1
      %p74 = scmp.eq.s32.totalorder %s15, 1
      %p75 = scmp.ne.s32.totalorder %s70, %s72
      %p76 = scmp.eq.s32.totalorder %s15, 0
      %p77 = por %p75, %p76
      %p78 = scmp.ne.s32.totalorder %s70, %s72
      %p79 = scmp.eq.s32.totalorder %s20, 1
      %p80 = por %p78, %p79
      %p81 = scmp.ne.s32.totalorder %s72, %s73
      %p82 = scmp.eq.s32.totalorder %s20, 0
      %p83 = por %p81, %p82
      %p84 = scmp.ne.s32.totalorder %s72, %s73
      %p85 = scmp.eq.s32.totalorder %s21, 1
      %p86 = por %p84, %p85
      %p88 = scmp.ne.s32.totalorder %s73, %s87
      %p89 = scmp.eq.s32.totalorder %s21, 0
      %p90 = por %p88, %p89
      %s92 = sadd.s32 %s91, 1
      %p95 = scmp.eq.s32.totalorder %s15, 1
      %p96 = scmp.ne.s32.totalorder %s91, %s93
      %p97 = scmp.eq.s32.totalorder %s15, 0
      %p98 = por %p96, %p97
      %p99 = scmp.ne.s32.totalorder %s91, %s93
      %p100 = scmp.eq.s32.totalorder %s20, 1
      %p101 = por %p99, %p100
      %p102 = scmp.ne.s32.totalorder %s93, %s94
      %p103 = scmp.eq.s32.totalorder %s20, 0
      %p104 = por %p102, %p103
      %p105 = scmp.ne.s32.totalorder %s93, %s94
      %p106 = scmp.eq.s32.totalorder %s21, 1
      %p107 = por %p105, %p106
      %p109 = scmp.ne.s32.totalorder %s94, %s108
      %p110 = scmp.eq.s32.totalorder %s21, 0
      %p111 = por %p109, %p110
      %s113 = sadd.s32 %s112, 1
      %p116 = scmp.eq.s32.totalorder %s15, 1
      %p117 = scmp.ne.s32.totalorder %s112, %s114
      %p118 = scmp.eq.s32.totalorder %s15, 0
      %p119 = por %p117, %p118
      %p120 = scmp.ne.s32.totalorder %s112, %s114
      %p121 = scmp.eq.s32.totalorder %s20, 1
      %p122 = por %p120, %p121
      %p123 = scmp.ne.s32.totalorder %s114, %s115
      %p124 = scmp.eq.s32.totalorder %s20, 0
      %p125 = por %p123, %p124
      %p126 = scmp.ne.s32.totalorder %s114, %s115
      %p127 = scmp.eq.s32.totalorder %s21, 1
      %p128 = por %p126, %p127
      %p130 = scmp.ne.s32.totalorder %s115, %s129
      %p131 = scmp.eq.s32.totalorder %s21, 0
      %p132 = por %p130, %p131
      %s134 = sadd.s32 %s133, 1
      %p137 = scmp.eq.s32.totalorder %s15, 1
      %p138 = scmp.ne.s32.totalorder %s133, %s135
      %p139 = scmp.eq.s32.totalorder %s15, 0
      %p140 = por %p138, %p139
      %p141 = scmp.ne.s32.totalorder %s133, %s135
      %p142 = scmp.eq.s32.totalorder %s20, 1
      %p143 = por %p141, %p142
      %p144 = scmp.ne.s32.totalorder %s135, %s136
      %p145 = scmp.eq.s32.totalorder %s20, 0
      %p146 = por %p144, %p145
      %p147 = scmp.ne.s32.totalorder %s135, %s136
      %p148 = scmp.eq.s32.totalorder %s21, 1
      %p149 = por %p147, %p148
      %p151 = scmp.ne.s32.totalorder %s136, %s150
      %p152 = scmp.eq.s32.totalorder %s21, 0
      %p153 = por %p151, %p152
      %s155 = sadd.s32 %s154, 1
      %p158 = scmp.eq.s32.totalorder %s15, 1
      %p159 = scmp.ne.s32.totalorder %s154, %s156
      %p160 = scmp.eq.s32.totalorder %s15, 0
      %p161 = por %p159, %p160
      %p162 = scmp.ne.s32.totalorder %s154, %s156
      %p163 = scmp.eq.s32.totalorder %s20, 1
      %p164 = por %p162, %p163
      %p165 = scmp.ne.s32.totalorder %s156, %s157
      %p166 = scmp.eq.s32.totalorder %s20, 0
      %p167 = por %p165, %p166
      %p168 = scmp.ne.s32.totalorder %s156, %s157
      %p169 = scmp.eq.s32.totalorder %s21, 1
      %p170 = por %p168, %p169
      %p172 = scmp.ne.s32.totalorder %s157, %s171
      %p173 = scmp.eq.s32.totalorder %s21, 0
      %p174 = por %p172, %p173
      %s175 = ssub.s32 %s15, %s22
      %p176 = scmp.eq.s32.totalorder %s175, 0
      %s178 = sadd.s32 %s177, 1
      %s179 = scalar_select %p176, %s177, %s178
      %p182 = pneg %p176
      %p183 = scmp.eq.s32.totalorder %s15, 1
      %p184 = por %p182, %p183
      %p185 = scmp.ne.s32.totalorder %s177, %s180
      %p186 = scmp.eq.s32.totalorder %s15, 0
      %p187 = por %p185, %p186
      %p188 = scmp.ne.s32.totalorder %s177, %s180
      %p189 = scmp.eq.s32.totalorder %s20, 1
      %p190 = por %p188, %p189
      %p191 = scmp.ne.s32.totalorder %s180, %s181
      %p192 = scmp.eq.s32.totalorder %s20, 0
      %p193 = por %p191, %p192
      %p194 = scmp.ne.s32.totalorder %s180, %s181
      %p195 = scmp.eq.s32.totalorder %s21, 1
      %p196 = por %p194, %p195
      %p198 = scmp.ne.s32.totalorder %s181, %s197
      %p199 = scmp.eq.s32.totalorder %s21, 0
      %p200 = por %p198, %p199
      %p201 = scmp.le.s32.totalorder 1, %s15
      %p202 = scmp.lt.s32.totalorder %s15, 3
      %p203 = pnand %p201, %p202
      %p204 = pneg %p203
      // Predicated region
      $region9: #{forward.1} parent=5 // pred_check
        _
      $region10: #{forward.1} parent=5 // pred_check_branch
        %206 = sbr.rel (%p203) target = $region12
      $region11: #{forward.1} parent=5 // pred_region
        %s207 = ssub.s32 %s15, 1
        // Predicated region
        $region13: #{forward.1} parent=11 // pred_check
          %p208 = pneg %p62
        $region14: #{forward.1} parent=11 // pred_check_branch
          %210 = sbr.rel (%p208) target = $region16
        $region15: #{forward.1} parent=11 // pred_region
          _
        $region16: #{forward.1} parent=11 // pred_fallthru
          _
        // Predicated region
        $region17: #{forward.1} parent=11 // pred_check
          %p211 = pneg %p83
        $region18: #{forward.1} parent=11 // pred_check_branch
          %213 = sbr.rel (%p211) target = $region20
        $region19: #{forward.1} parent=11 // pred_region
          _
        $region20: #{forward.1} parent=11 // pred_fallthru
          _
        // Predicated region
        $region21: #{forward.1} parent=11 // pred_check
          %p214 = pneg %p104
        $region22: #{forward.1} parent=11 // pred_check_branch
          %216 = sbr.rel (%p214) target = $region24
        $region23: #{forward.1} parent=11 // pred_region
          %218 = vsyncadd [#allocation4], 0
          %s219 = sshll.u32 %s3, 4
          %s220 = int_to_ptr.hbm [resolvable:$true] %s219
          %s221 = sshll.u32 [#allocation3], 4
          %s222 = int_to_ptr.vmem [resolvable:$true] %s221
          %227 = dma.hbm_to_vmem [thread:$0]  %s220, 32768, %s222, [#allocation4], 256, 256, 16
        $region24: #{forward.1} parent=11 // pred_fallthru
          _
        // Predicated region
        $region25: #{forward.1} parent=11 // pred_check
          %p228 = pneg %p125
        $region26: #{forward.1} parent=11 // pred_check_branch
          %230 = sbr.rel (%p228) target = $region28
        $region27: #{forward.1} parent=11 // pred_region
          %232 = vsyncadd [#allocation6], 0
          %s233 = sshll.u32 %s4, 4
          %s234 = int_to_ptr.hbm [resolvable:$true] %s233
          %s235 = sshll.u32 [#allocation5], 4
          %s236 = int_to_ptr.vmem [resolvable:$true] %s235
          %241 = dma.hbm_to_vmem [thread:$0]  %s234, 8192, %s236, [#allocation6], 128, 128, 8
        $region28: #{forward.1} parent=11 // pred_fallthru
          _
        // Predicated region
        $region29: #{forward.1} parent=11 // pred_check
          %p242 = pneg %p146
        $region30: #{forward.1} parent=11 // pred_check_branch
          %244 = sbr.rel (%p242) target = $region32
        $region31: #{forward.1} parent=11 // pred_region
          _
        $region32: #{forward.1} parent=11 // pred_fallthru
          _
        // Predicated region
        $region33: #{forward.1} parent=11 // pred_check
          %p245 = pneg %p167
        $region34: #{forward.1} parent=11 // pred_check_branch
          %247 = sbr.rel (%p245) target = $region36
        $region35: #{forward.1} parent=11 // pred_region
          _
        $region36: #{forward.1} parent=11 // pred_fallthru
          _
      $region12: #{forward.1} parent=5 // pred_fallthru
        _
      %p248 = scmp.lt.s32.totalorder %s15, 2
      // Predicated region
      $region37: #{forward.1} parent=5 // pred_check
        %p249 = pneg %p248
      $region38: #{forward.1} parent=5 // pred_check_branch
        %251 = sbr.rel (%p249) target = $region40
      $region39: #{forward.1} parent=5 // pred_region
        // Predicated region
        $region41: #{forward.1} parent=39 // pred_check
          %p252 = pneg %p35
        $region42: #{forward.1} parent=39 // pred_check_branch
          %254 = sbr.rel (%p252) target = $region44
        $region43: #{forward.1} parent=39 // pred_region
          %s255 = smul.u32 8, %s15
          %p256 = scmp.lt.s32.totalorder %s255, 15
          %s257 = scalar_select %p256, %s255, 15
          %s258 = smul.addr %s257, 4
          %s259 = scalar_lea.vmem %s0, %s258
          %s260 = smul.u32 8, %s15
        $region44: #{forward.1} parent=39 // pred_fallthru
          _
      $region40: #{forward.1} parent=5 // pred_fallthru
        _
      %p261 = scmp.le.s32.totalorder 1, %s15
      %p262 = scmp.lt.s32.totalorder %s15, 3
      %p263 = pnand %p261, %p262
      %p264 = pneg %p263
      // Predicated region
      $region45: #{forward.1} parent=5 // pred_check
        _
      $region46: #{forward.1} parent=5 // pred_check_branch
        %266 = sbr.rel (%p263) target = $region48
      $region47: #{forward.1} parent=5 // pred_region
        %s267 = ssub.s32 %s15, 1
        // Predicated region
        $region49: #{forward.1} parent=47 // pred_check
          %p268 = pneg %p104
        $region50: #{forward.1} parent=47 // pred_check_branch
          %270 = sbr.rel (%p268) target = $region52
        $region51: #{forward.1} parent=47 // pred_region
          %272 = dma.done [#allocation4], 32768
        $region52: #{forward.1} parent=47 // pred_fallthru
          _
        // Predicated region
        $region53: #{forward.1} parent=47 // pred_check
          %p273 = pneg %p125
        $region54: #{forward.1} parent=47 // pred_check_branch
          %275 = sbr.rel (%p273) target = $region56
        $region55: #{forward.1} parent=47 // pred_region
          %277 = dma.done [#allocation6], 8192
        $region56: #{forward.1} parent=47 // pred_fallthru
          _
        %s278 = smul.u32 8, %s20
        %p279 = scmp.lt.s32.totalorder %s278, 15
        %s280 = scalar_select %p279, %s278, 15
        %s281 = smul.addr %s280, 4
        %s282 = scalar_lea.vmem %s0, %s281
        %p283 = pneg %p41
        %p284 = pneg %p38
        %p285 = pneg %p62
        %p286 = pneg %p59
        %p287 = pneg %p83
        %p288 = pneg %p80
        %p289 = pneg %p104
        %p290 = pneg %p101
        %p291 = pneg %p125
        %p292 = pneg %p122
        %p293 = pneg %p146
        %p294 = pneg %p143
        %p295 = pneg %p167
        %p296 = pneg %p164
        %p297 = pneg %p193
        %p298 = pneg %p190
        %p299 = scmp.lt.s32.totalorder %s20, 1
        %s300 = scalar_select %p299, %s20, 1
        %s301 = smul.addr %s300, 8
        %s302 = scalar_lea.vmem %s7, %s301
        %s303 = smul.u32 8, %s20
        %p304 = scmp.lt.s32.totalorder %s303, 15
        %s305 = scalar_select %p304, %s303, 15
        %s306 = smul.addr %s305, 4
        %s307 = scalar_lea.vmem %s0, %s306
        %s308 = smul.u32 8, %s20
        %p309 = scmp.lt.s32.totalorder %s20, 1
        %s310 = scalar_select %p309, %s20, 1
        %s311 = smul.addr %s310, 8
        %s312 = scalar_lea.vmem %s7, %s311
        %314 = vst [vmem:[#allocation2] sm:$0xff] 0
        %315 = vst [vmem:[#allocation2 + $0x8] sm:$0xff] 0
        %316 = vst [vmem:[#allocation2 + $0x10] sm:$0xff] 0
        %317 = vst [vmem:[#allocation2 + $0x18] sm:$0xff] 0
        %318 = vst [vmem:[#allocation2 + $0x20] sm:$0xff] 0
        %319 = vst [vmem:[#allocation2 + $0x28] sm:$0xff] 0
        %320 = vst [vmem:[#allocation2 + $0x30] sm:$0xff] 0
        %321 = vst [vmem:[#allocation2 + $0x38] sm:$0xff] 0
        %322 = vst [vmem:[#allocation2 + $0x40] sm:$0xff] 0
        %323 = vst [vmem:[#allocation2 + $0x48] sm:$0xff] 0
        %324 = vst [vmem:[#allocation2 + $0x50] sm:$0xff] 0
        %325 = vst [vmem:[#allocation2 + $0x58] sm:$0xff] 0
        %326 = vst [vmem:[#allocation2 + $0x60] sm:$0xff] 0
        %327 = vst [vmem:[#allocation2 + $0x68] sm:$0xff] 0
        %328 = vst [vmem:[#allocation2 + $0x70] sm:$0xff] 0
        %329 = vst [vmem:[#allocation2 + $0x78] sm:$0xff] 0
        %330 = vst [vmem:[#allocation2 + $0x80] sm:$0xff] 0
        %331 = vst [vmem:[#allocation2 + $0x88] sm:$0xff] 0
        %332 = vst [vmem:[#allocation2 + $0x90] sm:$0xff] 0
        %333 = vst [vmem:[#allocation2 + $0x98] sm:$0xff] 0
        %334 = vst [vmem:[#allocation2 + $0xa0] sm:$0xff] 0
        %335 = vst [vmem:[#allocation2 + $0xa8] sm:$0xff] 0
        %336 = vst [vmem:[#allocation2 + $0xb0] sm:$0xff] 0
        %337 = vst [vmem:[#allocation2 + $0xb8] sm:$0xff] 0
        %338 = vst [vmem:[#allocation2 + $0xc0] sm:$0xff] 0
        %339 = vst [vmem:[#allocation2 + $0xc8] sm:$0xff] 0
        %340 = vst [vmem:[#allocation2 + $0xd0] sm:$0xff] 0
        %341 = vst [vmem:[#allocation2 + $0xd8] sm:$0xff] 0
        %v342 = vld [vmem:[%s307] sm:$0xff]
        %v343 = vld [vmem:[%s307 + $0x8] sm:$0xff]
        %v344 = vld [vmem:[%s307 + $0x10] sm:$0xff]
        %v345 = vld [vmem:[%s307 + $0x18] sm:$0xff]
        %350 = vst [vmem:[#allocation1] ss:$2 sm:$0xff] %v342
        %s351 = scalar_lea.vmem [#allocation1], 16
        %352 = vst [vmem:[%s351] ss:$2 sm:$0xff] %v343
        %s353 = scalar_lea.vmem [#allocation1], 32
        %354 = vst [vmem:[%s353] ss:$2 sm:$0xff] %v344
        %s355 = scalar_lea.vmem [#allocation1], 48
        %356 = vst [vmem:[%s355] ss:$2 sm:$0xff] %v345
        %v357 = vld.sshfl [vmem:[#allocation1] sm:$0xff pattern:$0x75316420]
        %v358 = vld.sshfl [vmem:[#allocation1 + $0x8] sm:$0xff pattern:$0x75316420]
        %v359 = vld.sshfl [vmem:[#allocation1 + $0x10] sm:$0xff pattern:$0x75316420]
        %v360 = vld.sshfl [vmem:[#allocation1 + $0x18] sm:$0xff pattern:$0x75316420]
        %v361 = vld.sshfl [vmem:[#allocation1 + $0x20] sm:$0xff pattern:$0x75316420]
        %v362 = vld.sshfl [vmem:[#allocation1 + $0x28] sm:$0xff pattern:$0x75316420]
        %v363 = vld.sshfl [vmem:[#allocation1 + $0x30] sm:$0xff pattern:$0x75316420]
        %v364 = vld.sshfl [vmem:[#allocation1 + $0x38] sm:$0xff pattern:$0x75316420]
        %373 = vrot.lane.b32.xlu0 %v357, 3
        %v374 = vpop.permute.xlu0 %373
        %375 = vrot.lane.b32.xlu0 %v358, 3
        %v376 = vpop.permute.xlu0 %375
        %377 = vrot.lane.b32.xlu0 %v359, 3
        %v378 = vpop.permute.xlu0 %377
        %379 = vrot.lane.b32.xlu0 %v360, 3
        %v380 = vpop.permute.xlu0 %379
        %381 = vrot.lane.b32.xlu0 %v361, 3
        %v382 = vpop.permute.xlu0 %381
        %383 = vrot.lane.b32.xlu0 %v362, 3
        %v384 = vpop.permute.xlu0 %383
        %385 = vrot.lane.b32.xlu0 %v363, 3
        %v386 = vpop.permute.xlu0 %385
        %387 = vrot.lane.b32.xlu0 %v364, 3
        %v388 = vpop.permute.xlu0 %387
        %v389 = vlaneseq
        %v390 = vand.u32 %v389, 127
        %vm391 = vcmp.lt.s32.totalorder %v390, 3
        %v392 = vsel %vm391, %v386, %v388
        %v393 = vsel %vm391, %v384, %v386
        %v394 = vsel %vm391, %v382, %v384
        %v395 = vsel %vm391, %v380, %v382
        %v396 = vsel %vm391, %v378, %v380
        %v397 = vsel %vm391, %v376, %v378
        %v398 = vsel %vm391, %v374, %v376
        %v399 = vsel %vm391, %v388, %v374
        %v400 = vadd.s32 %v390, 128
        %v401 = vadd.s32 %v390, 256
        %v402 = vadd.s32 %v390, 384
        %v403 = vadd.s32 %v390, 512
        %v404 = vadd.s32 %v390, 640
        %v405 = vadd.s32 %v390, 768
        %v406 = vadd.s32 %v390, 896
        %vm407 = vcmp.lt.s32.totalorder %v390, 0
        %v408 = vsub.s32 0, %v390
        %v409 = vsel %vm407, %v408, %v390
        %v410 = vshrl.u32 %v409, 6
        %v411 = vand.u32 %v409, 63
        %v412 = vsub.s32 0, %v411
        %v413 = vsel %vm407, %v412, %v411
        %vm414 = vcmp.lt.s32.totalorder %v400, 0
        %v415 = vsub.s32 0, %v400
        %v416 = vsel %vm414, %v415, %v400
        %v417 = vshrl.u32 %v416, 6
        %v418 = vand.u32 %v416, 63
        %v419 = vsub.s32 0, %v418
        %v420 = vsel %vm414, %v419, %v418
        %vm421 = vcmp.lt.s32.totalorder %v401, 0
        %v422 = vsub.s32 0, %v401
        %v423 = vsel %vm421, %v422, %v401
        %v424 = vshrl.u32 %v423, 6
        %v425 = vand.u32 %v423, 63
        %v426 = vsub.s32 0, %v425
        %v427 = vsel %vm421, %v426, %v425
        %vm428 = vcmp.lt.s32.totalorder %v402, 0
        %v429 = vsub.s32 0, %v402
        %v430 = vsel %vm428, %v429, %v402
        %v431 = vshrl.u32 %v430, 6
        %v432 = vand.u32 %v430, 63
        %v433 = vsub.s32 0, %v432
        %v434 = vsel %vm428, %v433, %v432
        %vm435 = vcmp.lt.s32.totalorder %v403, 0
        %v436 = vsub.s32 0, %v403
        %v437 = vsel %vm435, %v436, %v403
        %v438 = vshrl.u32 %v437, 6
        %v439 = vand.u32 %v437, 63
        %v440 = vsub.s32 0, %v439
        %v441 = vsel %vm435, %v440, %v439
        %vm442 = vcmp.lt.s32.totalorder %v404, 0
        %v443 = vsub.s32 0, %v404
        %v444 = vsel %vm442, %v443, %v404
        %v445 = vshrl.u32 %v444, 6
        %v446 = vand.u32 %v444, 63
        %v447 = vsub.s32 0, %v446
        %v448 = vsel %vm442, %v447, %v446
        %vm449 = vcmp.lt.s32.totalorder %v405, 0
        %v450 = vsub.s32 0, %v405
        %v451 = vsel %vm449, %v450, %v405
        %v452 = vshrl.u32 %v451, 6
        %v453 = vand.u32 %v451, 63
        %v454 = vsub.s32 0, %v453
        %v455 = vsel %vm449, %v454, %v453
        %vm456 = vcmp.lt.s32.totalorder %v406, 0
        %v457 = vsub.s32 0, %v406
        %v458 = vsel %vm456, %v457, %v406
        %v459 = vshrl.u32 %v458, 6
        %v460 = vand.u32 %v458, 63
        %v461 = vsub.s32 0, %v460
        %v462 = vsel %vm456, %v461, %v460
        %vm463 = vcmp.ne.s32.totalorder %v413, 0
        %vm464 = vcmp.ne.s32.totalorder %v420, 0
        %vm465 = vcmp.ne.s32.totalorder %v427, 0
        %vm466 = vcmp.ne.s32.totalorder %v434, 0
        %vm467 = vcmp.ne.s32.totalorder %v441, 0
        %vm468 = vcmp.ne.s32.totalorder %v448, 0
        %vm469 = vcmp.ne.s32.totalorder %v455, 0
        %vm470 = vcmp.ne.s32.totalorder %v462, 0
        %vm471 = vcmp.lt.s32.totalorder %v413, 0
        %vm472 = vcmp.lt.s32.totalorder %v420, 0
        %vm473 = vcmp.lt.s32.totalorder %v427, 0
        %vm474 = vcmp.lt.s32.totalorder %v434, 0
        %vm475 = vcmp.lt.s32.totalorder %v441, 0
        %vm476 = vcmp.lt.s32.totalorder %v448, 0
        %vm477 = vcmp.lt.s32.totalorder %v455, 0
        %vm478 = vcmp.lt.s32.totalorder %v462, 0
        %vm479 = vmand %vm471, %vm463
        %vm480 = vmand %vm472, %vm464
        %vm481 = vmand %vm473, %vm465
        %vm482 = vmand %vm474, %vm466
        %vm483 = vmand %vm475, %vm467
        %vm484 = vmand %vm476, %vm468
        %vm485 = vmand %vm477, %vm469
        %vm486 = vmand %vm478, %vm470
        %v487 = vadd.s32 %v413, 64
        %v488 = vadd.s32 %v420, 64
        %v489 = vadd.s32 %v427, 64
        %v490 = vadd.s32 %v434, 64
        %v491 = vadd.s32 %v441, 64
        %v492 = vadd.s32 %v448, 64
        %v493 = vadd.s32 %v455, 64
        %v494 = vadd.s32 %v462, 64
        %v495 = vsel %vm479, %v487, %v413
        %v496 = vsel %vm480, %v488, %v420
        %v497 = vsel %vm481, %v489, %v427
        %v498 = vsel %vm482, %v490, %v434
        %v499 = vsel %vm483, %v491, %v441
        %v500 = vsel %vm484, %v492, %v448
        %v501 = vsel %vm485, %v493, %v455
        %v502 = vsel %vm486, %v494, %v462
        %vm503 = vcmp.ge.s32.totalorder %v495, 3
        %vm504 = vcmp.ge.s32.totalorder %v496, 3
        %vm505 = vcmp.ge.s32.totalorder %v497, 3
        %vm506 = vcmp.ge.s32.totalorder %v498, 3
        %vm507 = vcmp.ge.s32.totalorder %v499, 3
        %vm508 = vcmp.ge.s32.totalorder %v500, 3
        %vm509 = vcmp.ge.s32.totalorder %v501, 3
        %vm510 = vcmp.ge.s32.totalorder %v502, 3
        %vm511 = vcmp.lt.s32.totalorder %v495, 64
        %vm512 = vcmp.lt.s32.totalorder %v496, 64
        %vm513 = vcmp.lt.s32.totalorder %v497, 64
        %vm514 = vcmp.lt.s32.totalorder %v498, 64
        %vm515 = vcmp.lt.s32.totalorder %v499, 64
        %vm516 = vcmp.lt.s32.totalorder %v500, 64
        %vm517 = vcmp.lt.s32.totalorder %v501, 64
        %vm518 = vcmp.lt.s32.totalorder %v502, 64
        %vm519 = vmand %vm503, %vm511
        %vm520 = vmand %vm504, %vm512
        %vm521 = vmand %vm505, %vm513
        %vm522 = vmand %vm506, %vm514
        %vm523 = vmand %vm507, %vm515
        %vm524 = vmand %vm508, %vm516
        %vm525 = vmand %vm509, %vm517
        %vm526 = vmand %vm510, %vm518
        %v527 = vsel %vm519, 1, 0
        %v528 = vsel %vm520, 1, 0
        %v529 = vsel %vm521, 1, 0
        %v530 = vsel %vm522, 1, 0
        %v531 = vsel %vm523, 1, 0
        %v532 = vsel %vm524, 1, 0
        %v533 = vsel %vm525, 1, 0
        %v534 = vsel %vm526, 1, 0
        %vm535 = vcmp.eq.s32.totalorder %v527, 1
        %vm536 = vcmp.eq.s32.totalorder %v528, 1
        %vm537 = vcmp.eq.s32.totalorder %v529, 1
        %vm538 = vcmp.eq.s32.totalorder %v530, 1
        %vm539 = vcmp.eq.s32.totalorder %v531, 1
        %vm540 = vcmp.eq.s32.totalorder %v532, 1
        %vm541 = vcmp.eq.s32.totalorder %v533, 1
        %vm542 = vcmp.eq.s32.totalorder %v534, 1
        %v543 = vsel %vm535, %v399, 0.0
        %v544 = vsel %vm536, %v398, 0.0
        %v545 = vsel %vm537, %v397, 0.0
        %v546 = vsel %vm538, %v396, 0.0
        %v547 = vsel %vm539, %v395, 0.0
        %v548 = vsel %vm540, %v394, 0.0
        %v549 = vsel %vm541, %v393, 0.0
        %v550 = vsel %vm542, %v392, 0.0
        %v551 = vpack.c.bf16 %v544, %v543
        %v552 = vpack.c.bf16 %v546, %v545
        %v553 = vpack.c.bf16 %v548, %v547
        %v554 = vpack.c.bf16 %v550, %v549
        %555 = vst [vmem:[#allocation2] sm:$0x33] %v551
        %556 = vst [vmem:[#allocation2 + $0x8] sm:$0x33] %v552
        %557 = vst [vmem:[#allocation2 + $0x10] sm:$0x33] %v553
        %558 = vst [vmem:[#allocation2 + $0x18] sm:$0x33] %v554
        %559 = vst [vmem:[#allocation1] ss:$2 sm:$0xff] %v342
        %s560 = scalar_lea.vmem [#allocation1], 16
        %561 = vst [vmem:[%s560] ss:$2 sm:$0xff] %v343
        %s562 = scalar_lea.vmem [#allocation1], 32
        %563 = vst [vmem:[%s562] ss:$2 sm:$0xff] %v344
        %s564 = scalar_lea.vmem [#allocation1], 48
        %565 = vst [vmem:[%s564] ss:$2 sm:$0xff] %v345
        %v566 = vld.sshfl [vmem:[#allocation1] sm:$0xff pattern:$0x75316420]
        %v567 = vld.sshfl [vmem:[#allocation1 + $0x8] sm:$0xff pattern:$0x75316420]
        %v568 = vld.sshfl [vmem:[#allocation1 + $0x10] sm:$0xff pattern:$0x75316420]
        %v569 = vld.sshfl [vmem:[#allocation1 + $0x18] sm:$0xff pattern:$0x75316420]
        %v570 = vld.sshfl [vmem:[#allocation1 + $0x20] sm:$0xff pattern:$0x75316420]
        %v571 = vld.sshfl [vmem:[#allocation1 + $0x28] sm:$0xff pattern:$0x75316420]
        %v572 = vld.sshfl [vmem:[#allocation1 + $0x30] sm:$0xff pattern:$0x75316420]
        %v573 = vld.sshfl [vmem:[#allocation1 + $0x38] sm:$0xff pattern:$0x75316420]
        %582 = vrot.lane.b32.xlu0 %v566, 2
        %v583 = vpop.permute.xlu0 %582
        %584 = vrot.lane.b32.xlu0 %v567, 2
        %v585 = vpop.permute.xlu0 %584
        %586 = vrot.lane.b32.xlu0 %v568, 2
        %v587 = vpop.permute.xlu0 %586
        %588 = vrot.lane.b32.xlu0 %v569, 2
        %v589 = vpop.permute.xlu0 %588
        %590 = vrot.lane.b32.xlu0 %v570, 2
        %v591 = vpop.permute.xlu0 %590
        %592 = vrot.lane.b32.xlu0 %v571, 2
        %v593 = vpop.permute.xlu0 %592
        %594 = vrot.lane.b32.xlu0 %v572, 2
        %v595 = vpop.permute.xlu0 %594
        %596 = vrot.lane.b32.xlu0 %v573, 2
        %v597 = vpop.permute.xlu0 %596
        %vm598 = vcmp.lt.s32.totalorder %v390, 2
        %v599 = vsel %vm598, %v595, %v597
        %v600 = vsel %vm598, %v593, %v595
        %v601 = vsel %vm598, %v591, %v593
        %v602 = vsel %vm598, %v589, %v591
        %v603 = vsel %vm598, %v587, %v589
        %v604 = vsel %vm598, %v585, %v587
        %v605 = vsel %vm598, %v583, %v585
        %v606 = vsel %vm598, %v597, %v583
        %vm607 = vcmp.ge.s32.totalorder %v495, 2
        %vm608 = vcmp.ge.s32.totalorder %v496, 2
        %vm609 = vcmp.ge.s32.totalorder %v497, 2
        %vm610 = vcmp.ge.s32.totalorder %v498, 2
        %vm611 = vcmp.ge.s32.totalorder %v499, 2
        %vm612 = vcmp.ge.s32.totalorder %v500, 2
        %vm613 = vcmp.ge.s32.totalorder %v501, 2
        %vm614 = vcmp.ge.s32.totalorder %v502, 2
        %vm615 = vmand %vm607, %vm511
        %vm616 = vmand %vm608, %vm512
        %vm617 = vmand %vm609, %vm513
        %vm618 = vmand %vm610, %vm514
        %vm619 = vmand %vm611, %vm515
        %vm620 = vmand %vm612, %vm516
        %vm621 = vmand %vm613, %vm517
        %vm622 = vmand %vm614, %vm518
        %v623 = vsel %vm615, 1, 0
        %v624 = vsel %vm616, 1, 0
        %v625 = vsel %vm617, 1, 0
        %v626 = vsel %vm618, 1, 0
        %v627 = vsel %vm619, 1, 0
        %v628 = vsel %vm620, 1, 0
        %v629 = vsel %vm621, 1, 0
        %v630 = vsel %vm622, 1, 0
        %vm631 = vcmp.eq.s32.totalorder %v623, 1
        %vm632 = vcmp.eq.s32.totalorder %v624, 1
        %vm633 = vcmp.eq.s32.totalorder %v625, 1
        %vm634 = vcmp.eq.s32.totalorder %v626, 1
        %vm635 = vcmp.eq.s32.totalorder %v627, 1
        %vm636 = vcmp.eq.s32.totalorder %v628, 1
        %vm637 = vcmp.eq.s32.totalorder %v629, 1
        %vm638 = vcmp.eq.s32.totalorder %v630, 1
        %v639 = vsel %vm631, %v606, 0.0
        %v640 = vsel %vm632, %v605, 0.0
        %v641 = vsel %vm633, %v604, 0.0
        %v642 = vsel %vm634, %v603, 0.0
        %v643 = vsel %vm635, %v602, 0.0
        %v644 = vsel %vm636, %v601, 0.0
        %v645 = vsel %vm637, %v600, 0.0
        %v646 = vsel %vm638, %v599, 0.0
        %v647 = vpack.c.bf16 %v640, %v639
        %v648 = vpack.c.bf16 %v642, %v641
        %v649 = vpack.c.bf16 %v644, %v643
        %v650 = vpack.c.bf16 %v646, %v645
        %651 = vst [vmem:[#allocation2 + $0x20] sm:$0x33] %v647
        %652 = vst [vmem:[#allocation2 + $0x28] sm:$0x33] %v648
        %653 = vst [vmem:[#allocation2 + $0x30] sm:$0x33] %v649
        %654 = vst [vmem:[#allocation2 + $0x38] sm:$0x33] %v650
        %655 = vst [vmem:[#allocation1] ss:$2 sm:$0xff] %v342
        %s656 = scalar_lea.vmem [#allocation1], 16
        %657 = vst [vmem:[%s656] ss:$2 sm:$0xff] %v343
        %s658 = scalar_lea.vmem [#allocation1], 32
        %659 = vst [vmem:[%s658] ss:$2 sm:$0xff] %v344
        %s660 = scalar_lea.vmem [#allocation1], 48
        %661 = vst [vmem:[%s660] ss:$2 sm:$0xff] %v345
        %v662 = vld.sshfl [vmem:[#allocation1] sm:$0xff pattern:$0x75316420]
        %v663 = vld.sshfl [vmem:[#allocation1 + $0x8] sm:$0xff pattern:$0x75316420]
        %v664 = vld.sshfl [vmem:[#allocation1 + $0x10] sm:$0xff pattern:$0x75316420]
        %v665 = vld.sshfl [vmem:[#allocation1 + $0x18] sm:$0xff pattern:$0x75316420]
        %v666 = vld.sshfl [vmem:[#allocation1 + $0x20] sm:$0xff pattern:$0x75316420]
        %v667 = vld.sshfl [vmem:[#allocation1 + $0x28] sm:$0xff pattern:$0x75316420]
        %v668 = vld.sshfl [vmem:[#allocation1 + $0x30] sm:$0xff pattern:$0x75316420]
        %v669 = vld.sshfl [vmem:[#allocation1 + $0x38] sm:$0xff pattern:$0x75316420]
        %678 = vrot.lane.b32.xlu0 %v662, 1
        %v679 = vpop.permute.xlu0 %678
        %680 = vrot.lane.b32.xlu0 %v663, 1
        %v681 = vpop.permute.xlu0 %680
        %682 = vrot.lane.b32.xlu0 %v664, 1
        %v683 = vpop.permute.xlu0 %682
        %684 = vrot.lane.b32.xlu0 %v665, 1
        %v685 = vpop.permute.xlu0 %684
        %686 = vrot.lane.b32.xlu0 %v666, 1
        %v687 = vpop.permute.xlu0 %686
        %688 = vrot.lane.b32.xlu0 %v667, 1
        %v689 = vpop.permute.xlu0 %688
        %690 = vrot.lane.b32.xlu0 %v668, 1
        %v691 = vpop.permute.xlu0 %690
        %692 = vrot.lane.b32.xlu0 %v669, 1
        %v693 = vpop.permute.xlu0 %692
        %vm694 = vcmp.lt.s32.totalorder %v390, 1
        %v695 = vsel %vm694, %v691, %v693
        %v696 = vsel %vm694, %v689, %v691
        %v697 = vsel %vm694, %v687, %v689
        %v698 = vsel %vm694, %v685, %v687
        %v699 = vsel %vm694, %v683, %v685
        %v700 = vsel %vm694, %v681, %v683
        %v701 = vsel %vm694, %v679, %v681
        %v702 = vsel %vm694, %v693, %v679
        %vm703 = vcmp.ge.s32.totalorder %v495, 1
        %vm704 = vcmp.ge.s32.totalorder %v496, 1
        %vm705 = vcmp.ge.s32.totalorder %v497, 1
        %vm706 = vcmp.ge.s32.totalorder %v498, 1
        %vm707 = vcmp.ge.s32.totalorder %v499, 1
        %vm708 = vcmp.ge.s32.totalorder %v500, 1
        %vm709 = vcmp.ge.s32.totalorder %v501, 1
        %vm710 = vcmp.ge.s32.totalorder %v502, 1
        %vm711 = vmand %vm703, %vm511
        %vm712 = vmand %vm704, %vm512
        %vm713 = vmand %vm705, %vm513
        %vm714 = vmand %vm706, %vm514
        %vm715 = vmand %vm707, %vm515
        %vm716 = vmand %vm708, %vm516
        %vm717 = vmand %vm709, %vm517
        %vm718 = vmand %vm710, %vm518
        %v719 = vsel %vm711, 1, 0
        %v720 = vsel %vm712, 1, 0
        %v721 = vsel %vm713, 1, 0
        %v722 = vsel %vm714, 1, 0
        %v723 = vsel %vm715, 1, 0
        %v724 = vsel %vm716, 1, 0
        %v725 = vsel %vm717, 1, 0
        %v726 = vsel %vm718, 1, 0
        %vm727 = vcmp.eq.s32.totalorder %v719, 1
        %vm728 = vcmp.eq.s32.totalorder %v720, 1
        %vm729 = vcmp.eq.s32.totalorder %v721, 1
        %vm730 = vcmp.eq.s32.totalorder %v722, 1
        %vm731 = vcmp.eq.s32.totalorder %v723, 1
        %vm732 = vcmp.eq.s32.totalorder %v724, 1
        %vm733 = vcmp.eq.s32.totalorder %v725, 1
        %vm734 = vcmp.eq.s32.totalorder %v726, 1
        %v735 = vsel %vm727, %v702, 0.0
        %v736 = vsel %vm728, %v701, 0.0
        %v737 = vsel %vm729, %v700, 0.0
        %v738 = vsel %vm730, %v699, 0.0
        %v739 = vsel %vm731, %v698, 0.0
        %v740 = vsel %vm732, %v697, 0.0
        %v741 = vsel %vm733, %v696, 0.0
        %v742 = vsel %vm734, %v695, 0.0
        %v743 = vpack.c.bf16 %v736, %v735
        %v744 = vpack.c.bf16 %v738, %v737
        %v745 = vpack.c.bf16 %v740, %v739
        %v746 = vpack.c.bf16 %v742, %v741
        %747 = vst [vmem:[#allocation2 + $0x40] sm:$0x33] %v743
        %748 = vst [vmem:[#allocation2 + $0x48] sm:$0x33] %v744
        %749 = vst [vmem:[#allocation2 + $0x50] sm:$0x33] %v745
        %750 = vst [vmem:[#allocation2 + $0x58] sm:$0x33] %v746
        %751 = vst [vmem:[#allocation1] ss:$2 sm:$0xff] %v342
        %s752 = scalar_lea.vmem [#allocation1], 16
        %753 = vst [vmem:[%s752] ss:$2 sm:$0xff] %v343
        %s754 = scalar_lea.vmem [#allocation1], 32
        %755 = vst [vmem:[%s754] ss:$2 sm:$0xff] %v344
        %s756 = scalar_lea.vmem [#allocation1], 48
        %757 = vst [vmem:[%s756] ss:$2 sm:$0xff] %v345
        %v758 = vld.sshfl [vmem:[#allocation1] sm:$0xff pattern:$0x75316420]
        %v759 = vld.sshfl [vmem:[#allocation1 + $0x8] sm:$0xff pattern:$0x75316420]
        %v760 = vld.sshfl [vmem:[#allocation1 + $0x10] sm:$0xff pattern:$0x75316420]
        %v761 = vld.sshfl [vmem:[#allocation1 + $0x18] sm:$0xff pattern:$0x75316420]
        %v762 = vld.sshfl [vmem:[#allocation1 + $0x20] sm:$0xff pattern:$0x75316420]
        %v763 = vld.sshfl [vmem:[#allocation1 + $0x28] sm:$0xff pattern:$0x75316420]
        %v764 = vld.sshfl [vmem:[#allocation1 + $0x30] sm:$0xff pattern:$0x75316420]
        %v765 = vld.sshfl [vmem:[#allocation1 + $0x38] sm:$0xff pattern:$0x75316420]
        %v774 = vpack.c.bf16 %v759, %v758
        %v775 = vpack.c.bf16 %v761, %v760
        %v776 = vpack.c.bf16 %v763, %v762
        %v777 = vpack.c.bf16 %v765, %v764
        %778 = vst [vmem:[#allocation2 + $0x60] sm:$0x33] %v774
        %779 = vst [vmem:[#allocation2 + $0x68] sm:$0x33] %v775
        %780 = vst [vmem:[#allocation2 + $0x70] sm:$0x33] %v776
        %781 = vst [vmem:[#allocation2 + $0x78] sm:$0x33] %v777
        %782 = vst [vmem:[#allocation1] ss:$2 sm:$0xff] %v342
        %s783 = scalar_lea.vmem [#allocation1], 16
        %784 = vst [vmem:[%s783] ss:$2 sm:$0xff] %v343
        %s785 = scalar_lea.vmem [#allocation1], 32
        %786 = vst [vmem:[%s785] ss:$2 sm:$0xff] %v344
        %s787 = scalar_lea.vmem [#allocation1], 48
        %788 = vst [vmem:[%s787] ss:$2 sm:$0xff] %v345
        %v789 = vld.sshfl [vmem:[#allocation1] sm:$0xff pattern:$0x75316420]
        %v790 = vld.sshfl [vmem:[#allocation1 + $0x8] sm:$0xff pattern:$0x75316420]
        %v791 = vld.sshfl [vmem:[#allocation1 + $0x10] sm:$0xff pattern:$0x75316420]
        %v792 = vld.sshfl [vmem:[#allocation1 + $0x18] sm:$0xff pattern:$0x75316420]
        %v793 = vld.sshfl [vmem:[#allocation1 + $0x20] sm:$0xff pattern:$0x75316420]
        %v794 = vld.sshfl [vmem:[#allocation1 + $0x28] sm:$0xff pattern:$0x75316420]
        %v795 = vld.sshfl [vmem:[#allocation1 + $0x30] sm:$0xff pattern:$0x75316420]
        %v796 = vld.sshfl [vmem:[#allocation1 + $0x38] sm:$0xff pattern:$0x75316420]
        %805 = vrot.lane.b32.xlu0 %v789, 127
        %v806 = vpop.permute.xlu0 %805
        %807 = vrot.lane.b32.xlu0 %v790, 127
        %v808 = vpop.permute.xlu0 %807
        %809 = vrot.lane.b32.xlu0 %v791, 127
        %v810 = vpop.permute.xlu0 %809
        %811 = vrot.lane.b32.xlu0 %v792, 127
        %v812 = vpop.permute.xlu0 %811
        %813 = vrot.lane.b32.xlu0 %v793, 127
        %v814 = vpop.permute.xlu0 %813
        %815 = vrot.lane.b32.xlu0 %v794, 127
        %v816 = vpop.permute.xlu0 %815
        %817 = vrot.lane.b32.xlu0 %v795, 127
        %v818 = vpop.permute.xlu0 %817
        %819 = vrot.lane.b32.xlu0 %v796, 127
        %v820 = vpop.permute.xlu0 %819
        %vm821 = vcmp.lt.s32.totalorder %v390, 127
        %v822 = vsel %vm821, %v818, %v820
        %v823 = vsel %vm821, %v816, %v818
        %v824 = vsel %vm821, %v814, %v816
        %v825 = vsel %vm821, %v812, %v814
        %v826 = vsel %vm821, %v810, %v812
        %v827 = vsel %vm821, %v808, %v810
        %v828 = vsel %vm821, %v806, %v808
        %v829 = vsel %vm821, %v820, %v806
        %vm830 = vcmp.ge.s32.totalorder %v495, 0
        %vm831 = vcmp.ge.s32.totalorder %v496, 0
        %vm832 = vcmp.ge.s32.totalorder %v497, 0
        %vm833 = vcmp.ge.s32.totalorder %v498, 0
        %vm834 = vcmp.ge.s32.totalorder %v499, 0
        %vm835 = vcmp.ge.s32.totalorder %v500, 0
        %vm836 = vcmp.ge.s32.totalorder %v501, 0
        %vm837 = vcmp.ge.s32.totalorder %v502, 0
        %vm838 = vcmp.lt.s32.totalorder %v495, 63
        %vm839 = vcmp.lt.s32.totalorder %v496, 63
        %vm840 = vcmp.lt.s32.totalorder %v497, 63
        %vm841 = vcmp.lt.s32.totalorder %v498, 63
        %vm842 = vcmp.lt.s32.totalorder %v499, 63
        %vm843 = vcmp.lt.s32.totalorder %v500, 63
        %vm844 = vcmp.lt.s32.totalorder %v501, 63
        %vm845 = vcmp.lt.s32.totalorder %v502, 63
        %vm846 = vmand %vm830, %vm838
        %vm847 = vmand %vm831, %vm839
        %vm848 = vmand %vm832, %vm840
        %vm849 = vmand %vm833, %vm841
        %vm850 = vmand %vm834, %vm842
        %vm851 = vmand %vm835, %vm843
        %vm852 = vmand %vm836, %vm844
        %vm853 = vmand %vm837, %vm845
        %v854 = vsel %vm846, 1, 0
        %v855 = vsel %vm847, 1, 0
        %v856 = vsel %vm848, 1, 0
        %v857 = vsel %vm849, 1, 0
        %v858 = vsel %vm850, 1, 0
        %v859 = vsel %vm851, 1, 0
        %v860 = vsel %vm852, 1, 0
        %v861 = vsel %vm853, 1, 0
        %vm862 = vcmp.eq.s32.totalorder %v854, 1
        %vm863 = vcmp.eq.s32.totalorder %v855, 1
        %vm864 = vcmp.eq.s32.totalorder %v856, 1
        %vm865 = vcmp.eq.s32.totalorder %v857, 1
        %vm866 = vcmp.eq.s32.totalorder %v858, 1
        %vm867 = vcmp.eq.s32.totalorder %v859, 1
        %vm868 = vcmp.eq.s32.totalorder %v860, 1
        %vm869 = vcmp.eq.s32.totalorder %v861, 1
        %v870 = vsel %vm862, %v828, 0.0
        %v871 = vsel %vm863, %v827, 0.0
        %v872 = vsel %vm864, %v826, 0.0
        %v873 = vsel %vm865, %v825, 0.0
        %v874 = vsel %vm866, %v824, 0.0
        %v875 = vsel %vm867, %v823, 0.0
        %v876 = vsel %vm868, %v822, 0.0
        %v877 = vsel %vm869, %v829, 0.0
        %v878 = vpack.c.bf16 %v871, %v870
        %v879 = vpack.c.bf16 %v873, %v872
        %v880 = vpack.c.bf16 %v875, %v874
        %v881 = vpack.c.bf16 %v877, %v876
        %882 = vst [vmem:[#allocation2 + $0x80] sm:$0x33] %v878
        %883 = vst [vmem:[#allocation2 + $0x88] sm:$0x33] %v879
        %884 = vst [vmem:[#allocation2 + $0x90] sm:$0x33] %v880
        %885 = vst [vmem:[#allocation2 + $0x98] sm:$0x33] %v881
        %886 = vst [vmem:[#allocation1] ss:$2 sm:$0xff] %v342
        %s887 = scalar_lea.vmem [#allocation1], 16
        %888 = vst [vmem:[%s887] ss:$2 sm:$0xff] %v343
        %s889 = scalar_lea.vmem [#allocation1], 32
        %890 = vst [vmem:[%s889] ss:$2 sm:$0xff] %v344
        %s891 = scalar_lea.vmem [#allocation1], 48
        %892 = vst [vmem:[%s891] ss:$2 sm:$0xff] %v345
        %v893 = vld.sshfl [vmem:[#allocation1] sm:$0xff pattern:$0x75316420]
        %v894 = vld.sshfl [vmem:[#allocation1 + $0x8] sm:$0xff pattern:$0x75316420]
        %v895 = vld.sshfl [vmem:[#allocation1 + $0x10] sm:$0xff pattern:$0x75316420]
        %v896 = vld.sshfl [vmem:[#allocation1 + $0x18] sm:$0xff pattern:$0x75316420]
        %v897 = vld.sshfl [vmem:[#allocation1 + $0x20] sm:$0xff pattern:$0x75316420]
        %v898 = vld.sshfl [vmem:[#allocation1 + $0x28] sm:$0xff pattern:$0x75316420]
        %v899 = vld.sshfl [vmem:[#allocation1 + $0x30] sm:$0xff pattern:$0x75316420]
        %v900 = vld.sshfl [vmem:[#allocation1 + $0x38] sm:$0xff pattern:$0x75316420]
        %909 = vrot.lane.b32.xlu0 %v893, 126
        %v910 = vpop.permute.xlu0 %909
        %911 = vrot.lane.b32.xlu0 %v894, 126
        %v912 = vpop.permute.xlu0 %911
        %913 = vrot.lane.b32.xlu0 %v895, 126
        %v914 = vpop.permute.xlu0 %913
        %915 = vrot.lane.b32.xlu0 %v896, 126
        %v916 = vpop.permute.xlu0 %915
        %917 = vrot.lane.b32.xlu0 %v897, 126
        %v918 = vpop.permute.xlu0 %917
        %919 = vrot.lane.b32.xlu0 %v898, 126
        %v920 = vpop.permute.xlu0 %919
        %921 = vrot.lane.b32.xlu0 %v899, 126
        %v922 = vpop.permute.xlu0 %921
        %923 = vrot.lane.b32.xlu0 %v900, 126
        %v924 = vpop.permute.xlu0 %923
        %vm925 = vcmp.lt.s32.totalorder %v390, 126
        %v926 = vsel %vm925, %v922, %v924
        %v927 = vsel %vm925, %v920, %v922
        %v928 = vsel %vm925, %v918, %v920
        %v929 = vsel %vm925, %v916, %v918
        %v930 = vsel %vm925, %v914, %v916
        %v931 = vsel %vm925, %v912, %v914
        %v932 = vsel %vm925, %v910, %v912
        %v933 = vsel %vm925, %v924, %v910
        %vm934 = vcmp.lt.s32.totalorder %v495, 62
        %vm935 = vcmp.lt.s32.totalorder %v496, 62
        %vm936 = vcmp.lt.s32.totalorder %v497, 62
        %vm937 = vcmp.lt.s32.totalorder %v498, 62
        %vm938 = vcmp.lt.s32.totalorder %v499, 62
        %vm939 = vcmp.lt.s32.totalorder %v500, 62
        %vm940 = vcmp.lt.s32.totalorder %v501, 62
        %vm941 = vcmp.lt.s32.totalorder %v502, 62
        %vm942 = vmand %vm830, %vm934
        %vm943 = vmand %vm831, %vm935
        %vm944 = vmand %vm832, %vm936
        %vm945 = vmand %vm833, %vm937
        %vm946 = vmand %vm834, %vm938
        %vm947 = vmand %vm835, %vm939
        %vm948 = vmand %vm836, %vm940
        %vm949 = vmand %vm837, %vm941
        %v950 = vsel %vm942, 1, 0
        %v951 = vsel %vm943, 1, 0
        %v952 = vsel %vm944, 1, 0
        %v953 = vsel %vm945, 1, 0
        %v954 = vsel %vm946, 1, 0
        %v955 = vsel %vm947, 1, 0
        %v956 = vsel %vm948, 1, 0
        %v957 = vsel %vm949, 1, 0
        %vm958 = vcmp.eq.s32.totalorder %v950, 1
        %vm959 = vcmp.eq.s32.totalorder %v951, 1
        %vm960 = vcmp.eq.s32.totalorder %v952, 1
        %vm961 = vcmp.eq.s32.totalorder %v953, 1
        %vm962 = vcmp.eq.s32.totalorder %v954, 1
        %vm963 = vcmp.eq.s32.totalorder %v955, 1
        %vm964 = vcmp.eq.s32.totalorder %v956, 1
        %vm965 = vcmp.eq.s32.totalorder %v957, 1
        %v966 = vsel %vm958, %v932, 0.0
        %v967 = vsel %vm959, %v931, 0.0
        %v968 = vsel %vm960, %v930, 0.0
        %v969 = vsel %vm961, %v929, 0.0
        %v970 = vsel %vm962, %v928, 0.0
        %v971 = vsel %vm963, %v927, 0.0
        %v972 = vsel %vm964, %v926, 0.0
        %v973 = vsel %vm965, %v933, 0.0
        %v974 = vpack.c.bf16 %v967, %v966
        %v975 = vpack.c.bf16 %v969, %v968
        %v976 = vpack.c.bf16 %v971, %v970
        %v977 = vpack.c.bf16 %v973, %v972
        %978 = vst [vmem:[#allocation2 + $0xa0] sm:$0x33] %v974
        %979 = vst [vmem:[#allocation2 + $0xa8] sm:$0x33] %v975
        %980 = vst [vmem:[#allocation2 + $0xb0] sm:$0x33] %v976
        %981 = vst [vmem:[#allocation2 + $0xb8] sm:$0x33] %v977
        %982 = vst [vmem:[#allocation1] ss:$2 sm:$0xff] %v342
        %s983 = scalar_lea.vmem [#allocation1], 16
        %984 = vst [vmem:[%s983] ss:$2 sm:$0xff] %v343
        %s985 = scalar_lea.vmem [#allocation1], 32
        %986 = vst [vmem:[%s985] ss:$2 sm:$0xff] %v344
        %s987 = scalar_lea.vmem [#allocation1], 48
        %988 = vst [vmem:[%s987] ss:$2 sm:$0xff] %v345
        %v989 = vld.sshfl [vmem:[#allocation1] sm:$0xff pattern:$0x75316420]
        %v990 = vld.sshfl [vmem:[#allocation1 + $0x8] sm:$0xff pattern:$0x75316420]
        %v991 = vld.sshfl [vmem:[#allocation1 + $0x10] sm:$0xff pattern:$0x75316420]
        %v992 = vld.sshfl [vmem:[#allocation1 + $0x18] sm:$0xff pattern:$0x75316420]
        %v993 = vld.sshfl [vmem:[#allocation1 + $0x20] sm:$0xff pattern:$0x75316420]
        %v994 = vld.sshfl [vmem:[#allocation1 + $0x28] sm:$0xff pattern:$0x75316420]
        %v995 = vld.sshfl [vmem:[#allocation1 + $0x30] sm:$0xff pattern:$0x75316420]
        %v996 = vld.sshfl [vmem:[#allocation1 + $0x38] sm:$0xff pattern:$0x75316420]
        %1005 = vrot.lane.b32.xlu0 %v989, 125
        %v1006 = vpop.permute.xlu0 %1005
        %1007 = vrot.lane.b32.xlu0 %v990, 125
        %v1008 = vpop.permute.xlu0 %1007
        %1009 = vrot.lane.b32.xlu0 %v991, 125
        %v1010 = vpop.permute.xlu0 %1009
        %1011 = vrot.lane.b32.xlu0 %v992, 125
        %v1012 = vpop.permute.xlu0 %1011
        %1013 = vrot.lane.b32.xlu0 %v993, 125
        %v1014 = vpop.permute.xlu0 %1013
        %1015 = vrot.lane.b32.xlu0 %v994, 125
        %v1016 = vpop.permute.xlu0 %1015
        %1017 = vrot.lane.b32.xlu0 %v995, 125
        %v1018 = vpop.permute.xlu0 %1017
        %1019 = vrot.lane.b32.xlu0 %v996, 125
        %v1020 = vpop.permute.xlu0 %1019
        %vm1021 = vcmp.lt.s32.totalorder %v390, 125
        %v1022 = vsel %vm1021, %v1018, %v1020
        %v1023 = vsel %vm1021, %v1016, %v1018
        %v1024 = vsel %vm1021, %v1014, %v1016
        %v1025 = vsel %vm1021, %v1012, %v1014
        %v1026 = vsel %vm1021, %v1010, %v1012
        %v1027 = vsel %vm1021, %v1008, %v1010
        %v1028 = vsel %vm1021, %v1006, %v1008
        %v1029 = vsel %vm1021, %v1020, %v1006
        %vm1030 = vcmp.lt.s32.totalorder %v495, 61
        %vm1031 = vcmp.lt.s32.totalorder %v496, 61
        %vm1032 = vcmp.lt.s32.totalorder %v497, 61
        %vm1033 = vcmp.lt.s32.totalorder %v498, 61
        %vm1034 = vcmp.lt.s32.totalorder %v499, 61
        %vm1035 = vcmp.lt.s32.totalorder %v500, 61
        %vm1036 = vcmp.lt.s32.totalorder %v501, 61
        %vm1037 = vcmp.lt.s32.totalorder %v502, 61
        %vm1038 = vmand %vm830, %vm1030
        %vm1039 = vmand %vm831, %vm1031
        %vm1040 = vmand %vm832, %vm1032
        %vm1041 = vmand %vm833, %vm1033
        %vm1042 = vmand %vm834, %vm1034
        %vm1043 = vmand %vm835, %vm1035
        %vm1044 = vmand %vm836, %vm1036
        %vm1045 = vmand %vm837, %vm1037
        %v1046 = vsel %vm1038, 1, 0
        %v1047 = vsel %vm1039, 1, 0
        %v1048 = vsel %vm1040, 1, 0
        %v1049 = vsel %vm1041, 1, 0
        %v1050 = vsel %vm1042, 1, 0
        %v1051 = vsel %vm1043, 1, 0
        %v1052 = vsel %vm1044, 1, 0
        %v1053 = vsel %vm1045, 1, 0
        %vm1054 = vcmp.eq.s32.totalorder %v1046, 1
        %vm1055 = vcmp.eq.s32.totalorder %v1047, 1
        %vm1056 = vcmp.eq.s32.totalorder %v1048, 1
        %vm1057 = vcmp.eq.s32.totalorder %v1049, 1
        %vm1058 = vcmp.eq.s32.totalorder %v1050, 1
        %vm1059 = vcmp.eq.s32.totalorder %v1051, 1
        %vm1060 = vcmp.eq.s32.totalorder %v1052, 1
        %vm1061 = vcmp.eq.s32.totalorder %v1053, 1
        %v1062 = vsel %vm1054, %v1028, 0.0
        %v1063 = vsel %vm1055, %v1027, 0.0
        %v1064 = vsel %vm1056, %v1026, 0.0
        %v1065 = vsel %vm1057, %v1025, 0.0
        %v1066 = vsel %vm1058, %v1024, 0.0
        %v1067 = vsel %vm1059, %v1023, 0.0
        %v1068 = vsel %vm1060, %v1022, 0.0
        %v1069 = vsel %vm1061, %v1029, 0.0
        %v1070 = vpack.c.bf16 %v1063, %v1062
        %v1071 = vpack.c.bf16 %v1065, %v1064
        %v1072 = vpack.c.bf16 %v1067, %v1066
        %v1073 = vpack.c.bf16 %v1069, %v1068
        %1074 = vst [vmem:[#allocation2 + $0xc0] sm:$0x33] %v1070
        %1075 = vst [vmem:[#allocation2 + $0xc8] sm:$0x33] %v1071
        %1076 = vst [vmem:[#allocation2 + $0xd0] sm:$0x33] %v1072
        %1077 = vst [vmem:[#allocation2 + $0xd8] sm:$0x33] %v1073
        %v1078 = vld [vmem:[%s1] sm:$0xf]
        %v1079 = vld [vmem:[#allocation2] sm:$0xff]
        %v1080 = vld [vmem:[#allocation2 + $0x8] sm:$0xff]
        %v1081 = vld [vmem:[#allocation2 + $0x10] sm:$0xff]
        %v1082 = vld [vmem:[#allocation2 + $0x18] sm:$0xff]
        %v1083 = vld [vmem:[#allocation2 + $0x20] sm:$0xff]
        %v1084 = vld [vmem:[#allocation2 + $0x28] sm:$0xff]
        %v1085 = vld [vmem:[#allocation2 + $0x30] sm:$0xff]
        %v1086 = vld [vmem:[#allocation2 + $0x38] sm:$0xff]
        %v1087 = vld [vmem:[#allocation2 + $0x40] sm:$0xff]
        %v1088 = vld [vmem:[#allocation2 + $0x48] sm:$0xff]
        %v1089 = vld [vmem:[#allocation2 + $0x50] sm:$0xff]
        %v1090 = vld [vmem:[#allocation2 + $0x58] sm:$0xff]
        %v1091 = vld [vmem:[#allocation2 + $0x60] sm:$0xff]
        %v1092 = vld [vmem:[#allocation2 + $0x68] sm:$0xff]
        %v1093 = vld [vmem:[#allocation2 + $0x70] sm:$0xff]
        %v1094 = vld [vmem:[#allocation2 + $0x78] sm:$0xff]
        %v1095 = vld [vmem:[#allocation2 + $0x80] sm:$0xff]
        %v1096 = vld [vmem:[#allocation2 + $0x88] sm:$0xff]
        %v1097 = vld [vmem:[#allocation2 + $0x90] sm:$0xff]
        %v1098 = vld [vmem:[#allocation2 + $0x98] sm:$0xff]
        %v1099 = vld [vmem:[#allocation2 + $0xa0] sm:$0xff]
        %v1100 = vld [vmem:[#allocation2 + $0xa8] sm:$0xff]
        %v1101 = vld [vmem:[#allocation2 + $0xb0] sm:$0xff]
        %v1102 = vld [vmem:[#allocation2 + $0xb8] sm:$0xff]
        %v1103 = vld [vmem:[#allocation2 + $0xc0] sm:$0xff]
        %v1104 = vld [vmem:[#allocation2 + $0xc8] sm:$0xff]
        %v1105 = vld [vmem:[#allocation2 + $0xd0] sm:$0xff]
        %v1106 = vld [vmem:[#allocation2 + $0xd8] sm:$0xff]
        %v1107 = vld [vmem:[%s2] sm:$0xff]
        %1109 = vset.pattern.permute.xlu0 0
        %1110 = vperm.xlu0 %1109, %v1107
        %v1111 = vpop.permute.xlu0 %1110
        %v1141 = vunpack.c.l.b16 %v1079
        %v1142 = vunpack.c.h.b16 %v1079
        %v1143 = vunpack.c.l.b16 %v1080
        %v1144 = vunpack.c.h.b16 %v1080
        %v1145 = vunpack.c.l.b16 %v1081
        %v1146 = vunpack.c.h.b16 %v1081
        %v1147 = vunpack.c.l.b16 %v1082
        %v1148 = vunpack.c.h.b16 %v1082
        %v1149 = vunpack.c.l.b16 %v1083
        %v1150 = vunpack.c.h.b16 %v1083
        %v1151 = vunpack.c.l.b16 %v1084
        %v1152 = vunpack.c.h.b16 %v1084
        %v1153 = vunpack.c.l.b16 %v1085
        %v1154 = vunpack.c.h.b16 %v1085
        %v1155 = vunpack.c.l.b16 %v1086
        %v1156 = vunpack.c.h.b16 %v1086
        %v1157 = vunpack.c.l.b16 %v1087
        %v1158 = vunpack.c.h.b16 %v1087
        %v1159 = vunpack.c.l.b16 %v1088
        %v1160 = vunpack.c.h.b16 %v1088
        %v1161 = vunpack.c.l.b16 %v1089
        %v1162 = vunpack.c.h.b16 %v1089
        %v1163 = vunpack.c.l.b16 %v1090
        %v1164 = vunpack.c.h.b16 %v1090
        %v1165 = vunpack.c.l.b16 %v1091
        %v1166 = vunpack.c.h.b16 %v1091
        %v1167 = vunpack.c.l.b16 %v1092
        %v1168 = vunpack.c.h.b16 %v1092
        %v1169 = vunpack.c.l.b16 %v1093
        %v1170 = vunpack.c.h.b16 %v1093
        %v1171 = vunpack.c.l.b16 %v1094
        %v1172 = vunpack.c.h.b16 %v1094
        %v1173 = vunpack.c.l.b16 %v1095
        %v1174 = vunpack.c.h.b16 %v1095
        %v1175 = vunpack.c.l.b16 %v1096
        %v1176 = vunpack.c.h.b16 %v1096
        %v1177 = vunpack.c.l.b16 %v1097
        %v1178 = vunpack.c.h.b16 %v1097
        %v1179 = vunpack.c.l.b16 %v1098
        %v1180 = vunpack.c.h.b16 %v1098
        %v1181 = vunpack.c.l.b16 %v1099
        %v1182 = vunpack.c.h.b16 %v1099
        %v1183 = vunpack.c.l.b16 %v1100
        %v1184 = vunpack.c.h.b16 %v1100
        %v1185 = vunpack.c.l.b16 %v1101
        %v1186 = vunpack.c.h.b16 %v1101
        %v1187 = vunpack.c.l.b16 %v1102
        %v1188 = vunpack.c.h.b16 %v1102
        %v1189 = vunpack.c.l.b16 %v1103
        %v1190 = vunpack.c.h.b16 %v1103
        %v1191 = vunpack.c.l.b16 %v1104
        %v1192 = vunpack.c.h.b16 %v1104
        %v1193 = vunpack.c.l.b16 %v1105
        %v1194 = vunpack.c.h.b16 %v1105
        %v1195 = vunpack.c.l.b16 %v1106
        %v1196 = vunpack.c.h.b16 %v1106
        %v1197 = vpack.c.b16 %v1149, %v1141
        %v1198 = vpack.c.b16 %v1150, %v1142
        %v1199 = vpack.c.b16 %v1151, %v1143
        %v1200 = vpack.c.b16 %v1152, %v1144
        %v1201 = vpack.c.b16 %v1153, %v1145
        %v1202 = vpack.c.b16 %v1154, %v1146
        %v1203 = vpack.c.b16 %v1155, %v1147
        %v1204 = vpack.c.b16 %v1156, %v1148
        %v1205 = vpack.c.b16 %v1165, %v1157
        %v1206 = vpack.c.b16 %v1166, %v1158
        %v1207 = vpack.c.b16 %v1167, %v1159
        %v1208 = vpack.c.b16 %v1168, %v1160
        %v1209 = vpack.c.b16 %v1169, %v1161
        %v1210 = vpack.c.b16 %v1170, %v1162
        %v1211 = vpack.c.b16 %v1171, %v1163
        %v1212 = vpack.c.b16 %v1172, %v1164
        %v1213 = vpack.c.b16 %v1181, %v1173
        %v1214 = vpack.c.b16 %v1182, %v1174
        %v1215 = vpack.c.b16 %v1183, %v1175
        %v1216 = vpack.c.b16 %v1184, %v1176
        %v1217 = vpack.c.b16 %v1185, %v1177
        %v1218 = vpack.c.b16 %v1186, %v1178
        %v1219 = vpack.c.b16 %v1187, %v1179
        %v1220 = vpack.c.b16 %v1188, %v1180
        %v1221 = vpack.c.b16 %v1189, %v1189
        %v1222 = vpack.c.b16 %v1190, %v1190
        %v1223 = vpack.c.b16 %v1191, %v1191
        %v1224 = vpack.c.b16 %v1192, %v1192
        %v1225 = vpack.c.b16 %v1193, %v1193
        %v1226 = vpack.c.b16 %v1194, %v1194
        %v1227 = vpack.c.b16 %v1195, %v1195
        %v1228 = vpack.c.b16 %v1196, %v1196
        %vm1253 = vcmask 457728
        %v1255 = vsel %vm1253, %v1078, 0
        %vm1257 = vcmask 1043456
        %v1259 = vsel %vm1257, %v1221, 0
        %v1262 = vsel %vm1257, %v1222, 0
        %v1265 = vsel %vm1257, %v1223, 0
        %v1268 = vsel %vm1257, %v1224, 0
        %v1271 = vsel %vm1257, %v1225, 0
        %v1274 = vsel %vm1257, %v1226, 0
        %v1277 = vsel %vm1257, %v1227, 0
        %v1280 = vsel %vm1257, %v1228, 0
        %1282 = vmatpush.bf16.msra.mxu0 0
        %1283 = vmatpush.bf16.msra.mxu0 0
        %1284 = vmatpush.bf16.msra.mxu0 0
        %1285 = vmatpush.bf16.msra.mxu0 0
        %1286 = vmatpush.bf16.msra.mxu0 %v1259
        %1287 = vmatpush.bf16.msra.mxu0 %v1213
        %1288 = vmatpush.bf16.msra.mxu0 %v1205
        %1289 = vmatpush.bf16.msra.mxu0 %v1197
        %1290 = vmatmul.bf16.gmra.mxu0 %v1255
        %v1291 = vpop.f32.mrf.mxu0
        %v1292 = vadd.f32 %v1111, %v1291
        %v1293 = vpop.f32.mrf.mxu0
        %1294 = vdwg.mxu0
        %1295 = vmatpush.bf16.msra.mxu0 0
        %1296 = vmatpush.bf16.msra.mxu0 0
        %1297 = vmatpush.bf16.msra.mxu0 0
        %1298 = vmatpush.bf16.msra.mxu0 0
        %1299 = vmatpush.bf16.msra.mxu0 %v1262
        %1300 = vmatpush.bf16.msra.mxu0 %v1214
        %1301 = vmatpush.bf16.msra.mxu0 %v1206
        %1302 = vmatpush.bf16.msra.mxu0 %v1198
        %1303 = vmatmul.bf16.gmra.mxu0 %v1255
        %v1304 = vpop.f32.mrf.mxu0
        %v1305 = vadd.f32 %v1111, %v1304
        %v1306 = vpop.f32.mrf.mxu0
        %1307 = vdwg.mxu0
        %1308 = vmatpush.bf16.msra.mxu0 0
        %1309 = vmatpush.bf16.msra.mxu0 0
        %1310 = vmatpush.bf16.msra.mxu0 0
        %1311 = vmatpush.bf16.msra.mxu0 0
        %1312 = vmatpush.bf16.msra.mxu0 %v1265
        %1313 = vmatpush.bf16.msra.mxu0 %v1215
        %1314 = vmatpush.bf16.msra.mxu0 %v1207
        %1315 = vmatpush.bf16.msra.mxu0 %v1199
        %1316 = vmatmul.bf16.gmra.mxu0 %v1255
        %v1317 = vpop.f32.mrf.mxu0
        %v1318 = vadd.f32 %v1111, %v1317
        %v1319 = vpop.f32.mrf.mxu0
        %1320 = vdwg.mxu0
        %1321 = vmatpush.bf16.msra.mxu0 0
        %1322 = vmatpush.bf16.msra.mxu0 0
        %1323 = vmatpush.bf16.msra.mxu0 0
        %1324 = vmatpush.bf16.msra.mxu0 0
        %1325 = vmatpush.bf16.msra.mxu0 %v1268
        %1326 = vmatpush.bf16.msra.mxu0 %v1216
        %1327 = vmatpush.bf16.msra.mxu0 %v1208
        %1328 = vmatpush.bf16.msra.mxu0 %v1200
        %1329 = vmatmul.bf16.gmra.mxu0 %v1255
        %v1330 = vpop.f32.mrf.mxu0
        %v1331 = vadd.f32 %v1111, %v1330
        %v1332 = vpop.f32.mrf.mxu0
        %1333 = vdwg.mxu0
        %1334 = vmatpush.bf16.msra.mxu0 0
        %1335 = vmatpush.bf16.msra.mxu0 0
        %1336 = vmatpush.bf16.msra.mxu0 0
        %1337 = vmatpush.bf16.msra.mxu0 0
        %1338 = vmatpush.bf16.msra.mxu0 %v1271
        %1339 = vmatpush.bf16.msra.mxu0 %v1217
        %1340 = vmatpush.bf16.msra.mxu0 %v1209
        %1341 = vmatpush.bf16.msra.mxu0 %v1201
        %1342 = vmatmul.bf16.gmra.mxu0 %v1255
        %v1343 = vpop.f32.mrf.mxu0
        %v1344 = vadd.f32 %v1111, %v1343
        %v1345 = vpop.f32.mrf.mxu0
        %1346 = vdwg.mxu0
        %1347 = vmatpush.bf16.msra.mxu0 0
        %1348 = vmatpush.bf16.msra.mxu0 0
        %1349 = vmatpush.bf16.msra.mxu0 0
        %1350 = vmatpush.bf16.msra.mxu0 0
        %1351 = vmatpush.bf16.msra.mxu0 %v1274
        %1352 = vmatpush.bf16.msra.mxu0 %v1218
        %1353 = vmatpush.bf16.msra.mxu0 %v1210
        %1354 = vmatpush.bf16.msra.mxu0 %v1202
        %1355 = vmatmul.bf16.gmra.mxu0 %v1255
        %v1356 = vpop.f32.mrf.mxu0
        %v1357 = vadd.f32 %v1111, %v1356
        %v1358 = vpop.f32.mrf.mxu0
        %1359 = vdwg.mxu0
        %1360 = vmatpush.bf16.msra.mxu0 0
        %1361 = vmatpush.bf16.msra.mxu0 0
        %1362 = vmatpush.bf16.msra.mxu0 0
        %1363 = vmatpush.bf16.msra.mxu0 0
        %1364 = vmatpush.bf16.msra.mxu0 %v1277
        %1365 = vmatpush.bf16.msra.mxu0 %v1219
        %1366 = vmatpush.bf16.msra.mxu0 %v1211
        %1367 = vmatpush.bf16.msra.mxu0 %v1203
        %1368 = vmatmul.bf16.gmra.mxu0 %v1255
        %v1369 = vpop.f32.mrf.mxu0
        %v1370 = vadd.f32 %v1111, %v1369
        %v1371 = vpop.f32.mrf.mxu0
        %1372 = vdwg.mxu0
        %1373 = vmatpush.bf16.msra.mxu0 0
        %1374 = vmatpush.bf16.msra.mxu0 0
        %1375 = vmatpush.bf16.msra.mxu0 0
        %1376 = vmatpush.bf16.msra.mxu0 0
        %1377 = vmatpush.bf16.msra.mxu0 %v1280
        %1378 = vmatpush.bf16.msra.mxu0 %v1220
        %1379 = vmatpush.bf16.msra.mxu0 %v1212
        %1380 = vmatpush.bf16.msra.mxu0 %v1204
        %1381 = vmatmul.bf16.gmra.mxu0 %v1255
        %v1382 = vpop.f32.mrf.mxu0
        %v1383 = vadd.f32 %v1111, %v1382
        %v1384 = vpop.f32.mrf.mxu0
        %1385 = vdwg.mxu0
        %v1386 = vmax.f32 %v1292, 0.0
        %v1387 = vmax.f32 %v1305, 0.0
        %v1388 = vmax.f32 %v1318, 0.0
        %v1389 = vmax.f32 %v1331, 0.0
        %v1390 = vmax.f32 %v1344, 0.0
        %v1391 = vmax.f32 %v1357, 0.0
        %v1392 = vmax.f32 %v1370, 0.0
        %v1393 = vmax.f32 %v1383, 0.0
        %1394 = vrot.lane.b32.xlu0 %v1386, 127
        %v1395 = vpop.permute.xlu0 %1394
        %1396 = vrot.lane.b32.xlu0 %v1387, 127
        %v1397 = vpop.permute.xlu0 %1396
        %1398 = vrot.lane.b32.xlu0 %v1388, 127
        %v1399 = vpop.permute.xlu0 %1398
        %1400 = vrot.lane.b32.xlu0 %v1389, 127
        %v1401 = vpop.permute.xlu0 %1400
        %1402 = vrot.lane.b32.xlu0 %v1390, 127
        %v1403 = vpop.permute.xlu0 %1402
        %1404 = vrot.lane.b32.xlu0 %v1391, 127
        %v1405 = vpop.permute.xlu0 %1404
        %1406 = vrot.lane.b32.xlu0 %v1392, 127
        %v1407 = vpop.permute.xlu0 %1406
        %1408 = vrot.lane.b32.xlu0 %v1393, 127
        %v1409 = vpop.permute.xlu0 %1408
        %v1410 = vsel %vm821, %v1407, %v1409
        %v1411 = vsel %vm821, %v1405, %v1407
        %v1412 = vsel %vm821, %v1403, %v1405
        %v1413 = vsel %vm821, %v1401, %v1403
        %v1414 = vsel %vm821, %v1399, %v1401
        %v1415 = vsel %vm821, %v1397, %v1399
        %v1416 = vsel %vm821, %v1395, %v1397
        %v1417 = vsel %vm821, %v1409, %v1395
        %v1418 = vsel %vm862, %v1416, 0.0
        %v1419 = vsel %vm863, %v1415, 0.0
        %v1420 = vsel %vm864, %v1414, 0.0
        %v1421 = vsel %vm865, %v1413, 0.0
        %v1422 = vsel %vm866, %v1412, 0.0
        %v1423 = vsel %vm867, %v1411, 0.0
        %v1424 = vsel %vm868, %v1410, 0.0
        %v1425 = vsel %vm869, %v1417, 0.0
        %v1426 = vmax.f32 %v1386, %v1418
        %v1427 = vmax.f32 %v1387, %v1419
        %v1428 = vmax.f32 %v1388, %v1420
        %v1429 = vmax.f32 %v1389, %v1421
        %v1430 = vmax.f32 %v1390, %v1422
        %v1431 = vmax.f32 %v1391, %v1423
        %v1432 = vmax.f32 %v1392, %v1424
        %v1433 = vmax.f32 %v1393, %v1425
        %v1434 = vpack.c.bf16 %v1426, %v1426
        %v1435 = vpack.c.bf16 %v1427, %v1427
        %v1436 = vpack.c.bf16 %v1428, %v1428
        %v1437 = vpack.c.bf16 %v1429, %v1429
        %v1438 = vpack.c.bf16 %v1430, %v1430
        %v1439 = vpack.c.bf16 %v1431, %v1431
        %v1440 = vpack.c.bf16 %v1432, %v1432
        %v1441 = vpack.c.bf16 %v1433, %v1433
        %v1442 = vld [vmem:[#allocation3] sm:$0xff]
        %v1443 = vld [vmem:[#allocation3 + $0x8] sm:$0xff]
        %v1444 = vld [vmem:[#allocation3 + $0x10] sm:$0xff]
        %v1445 = vld [vmem:[#allocation3 + $0x18] sm:$0xff]
        %v1446 = vld [vmem:[#allocation3 + $0x20] sm:$0xff]
        %v1447 = vld [vmem:[#allocation3 + $0x28] sm:$0xff]
        %v1448 = vld [vmem:[#allocation3 + $0x30] sm:$0xff]
        %v1449 = vld [vmem:[#allocation3 + $0x38] sm:$0xff]
        %v1450 = vld [vmem:[#allocation3 + $0x40] sm:$0xff]
        %v1451 = vld [vmem:[#allocation3 + $0x48] sm:$0xff]
        %v1452 = vld [vmem:[#allocation3 + $0x50] sm:$0xff]
        %v1453 = vld [vmem:[#allocation3 + $0x58] sm:$0xff]
        %v1454 = vld [vmem:[#allocation3 + $0x60] sm:$0xff]
        %v1455 = vld [vmem:[#allocation3 + $0x68] sm:$0xff]
        %v1456 = vld [vmem:[#allocation3 + $0x70] sm:$0xff]
        %v1457 = vld [vmem:[#allocation3 + $0x78] sm:$0xff]
        %v1458 = vld [vmem:[#allocation3 + $0x80] sm:$0xff]
        %v1459 = vld [vmem:[#allocation3 + $0x88] sm:$0xff]
        %v1460 = vld [vmem:[#allocation3 + $0x90] sm:$0xff]
        %v1461 = vld [vmem:[#allocation3 + $0x98] sm:$0xff]
        %v1462 = vld [vmem:[#allocation3 + $0xa0] sm:$0xff]
        %v1463 = vld [vmem:[#allocation3 + $0xa8] sm:$0xff]
        %v1464 = vld [vmem:[#allocation3 + $0xb0] sm:$0xff]
        %v1465 = vld [vmem:[#allocation3 + $0xb8] sm:$0xff]
        %v1466 = vld [vmem:[#allocation3 + $0xc0] sm:$0xff]
        %v1467 = vld [vmem:[#allocation3 + $0xc8] sm:$0xff]
        %v1468 = vld [vmem:[#allocation3 + $0xd0] sm:$0xff]
        %v1469 = vld [vmem:[#allocation3 + $0xd8] sm:$0xff]
        %v1470 = vld [vmem:[#allocation3 + $0xe0] sm:$0xff]
        %v1471 = vld [vmem:[#allocation3 + $0xe8] sm:$0xff]
        %v1472 = vld [vmem:[#allocation3 + $0xf0] sm:$0xff]
        %v1473 = vld [vmem:[#allocation3 + $0xf8] sm:$0xff]
        %v1474 = vld [vmem:[#allocation3 + $0x100] sm:$0xff]
        %v1475 = vld [vmem:[#allocation3 + $0x108] sm:$0xff]
        %v1476 = vld [vmem:[#allocation3 + $0x110] sm:$0xff]
        %v1477 = vld [vmem:[#allocation3 + $0x118] sm:$0xff]
        %v1478 = vld [vmem:[#allocation3 + $0x120] sm:$0xff]
        %v1479 = vld [vmem:[#allocation3 + $0x128] sm:$0xff]
        %v1480 = vld [vmem:[#allocation3 + $0x130] sm:$0xff]
        %v1481 = vld [vmem:[#allocation3 + $0x138] sm:$0xff]
        %v1482 = vld [vmem:[#allocation3 + $0x140] sm:$0xff]
        %v1483 = vld [vmem:[#allocation3 + $0x148] sm:$0xff]
        %v1484 = vld [vmem:[#allocation3 + $0x150] sm:$0xff]
        %v1485 = vld [vmem:[#allocation3 + $0x158] sm:$0xff]
        %v1486 = vld [vmem:[#allocation3 + $0x160] sm:$0xff]
        %v1487 = vld [vmem:[#allocation3 + $0x168] sm:$0xff]
        %v1488 = vld [vmem:[#allocation3 + $0x170] sm:$0xff]
        %v1489 = vld [vmem:[#allocation3 + $0x178] sm:$0xff]
        %v1490 = vld [vmem:[#allocation3 + $0x180] sm:$0xff]
        %v1491 = vld [vmem:[#allocation3 + $0x188] sm:$0xff]
        %v1492 = vld [vmem:[#allocation3 + $0x190] sm:$0xff]
        %v1493 = vld [vmem:[#allocation3 + $0x198] sm:$0xff]
        %v1494 = vld [vmem:[#allocation3 + $0x1a0] sm:$0xff]
        %v1495 = vld [vmem:[#allocation3 + $0x1a8] sm:$0xff]
        %v1496 = vld [vmem:[#allocation3 + $0x1b0] sm:$0xff]
        %v1497 = vld [vmem:[#allocation3 + $0x1b8] sm:$0xff]
        %v1498 = vld [vmem:[#allocation3 + $0x1c0] sm:$0xff]
        %v1499 = vld [vmem:[#allocation3 + $0x1c8] sm:$0xff]
        %v1500 = vld [vmem:[#allocation3 + $0x1d0] sm:$0xff]
        %v1501 = vld [vmem:[#allocation3 + $0x1d8] sm:$0xff]
        %v1502 = vld [vmem:[#allocation3 + $0x1e0] sm:$0xff]
        %v1503 = vld [vmem:[#allocation3 + $0x1e8] sm:$0xff]
        %v1504 = vld [vmem:[#allocation3 + $0x1f0] sm:$0xff]
        %v1505 = vld [vmem:[#allocation3 + $0x1f8] sm:$0xff]
        %v1506 = vld [vmem:[#allocation3 + $0x200] sm:$0xff]
        %v1507 = vld [vmem:[#allocation3 + $0x208] sm:$0xff]
        %v1508 = vld [vmem:[#allocation3 + $0x210] sm:$0xff]
        %v1509 = vld [vmem:[#allocation3 + $0x218] sm:$0xff]
        %v1510 = vld [vmem:[#allocation3 + $0x220] sm:$0xff]
        %v1511 = vld [vmem:[#allocation3 + $0x228] sm:$0xff]
        %v1512 = vld [vmem:[#allocation3 + $0x230] sm:$0xff]
        %v1513 = vld [vmem:[#allocation3 + $0x238] sm:$0xff]
        %v1514 = vld [vmem:[#allocation3 + $0x240] sm:$0xff]
        %v1515 = vld [vmem:[#allocation3 + $0x248] sm:$0xff]
        %v1516 = vld [vmem:[#allocation3 + $0x250] sm:$0xff]
        %v1517 = vld [vmem:[#allocation3 + $0x258] sm:$0xff]
        %v1518 = vld [vmem:[#allocation3 + $0x260] sm:$0xff]
        %v1519 = vld [vmem:[#allocation3 + $0x268] sm:$0xff]
        %v1520 = vld [vmem:[#allocation3 + $0x270] sm:$0xff]
        %v1521 = vld [vmem:[#allocation3 + $0x278] sm:$0xff]
        %v1522 = vld [vmem:[#allocation3 + $0x280] sm:$0xff]
        %v1523 = vld [vmem:[#allocation3 + $0x288] sm:$0xff]
        %v1524 = vld [vmem:[#allocation3 + $0x290] sm:$0xff]
        %v1525 = vld [vmem:[#allocation3 + $0x298] sm:$0xff]
        %v1526 = vld [vmem:[#allocation3 + $0x2a0] sm:$0xff]
        %v1527 = vld [vmem:[#allocation3 + $0x2a8] sm:$0xff]
        %v1528 = vld [vmem:[#allocation3 + $0x2b0] sm:$0xff]
        %v1529 = vld [vmem:[#allocation3 + $0x2b8] sm:$0xff]
        %v1530 = vld [vmem:[#allocation3 + $0x2c0] sm:$0xff]
        %v1531 = vld [vmem:[#allocation3 + $0x2c8] sm:$0xff]
        %v1532 = vld [vmem:[#allocation3 + $0x2d0] sm:$0xff]
        %v1533 = vld [vmem:[#allocation3 + $0x2d8] sm:$0xff]
        %v1534 = vld [vmem:[#allocation3 + $0x2e0] sm:$0xff]
        %v1535 = vld [vmem:[#allocation3 + $0x2e8] sm:$0xff]
        %v1536 = vld [vmem:[#allocation3 + $0x2f0] sm:$0xff]
        %v1537 = vld [vmem:[#allocation3 + $0x2f8] sm:$0xff]
        %v1538 = vld [vmem:[#allocation3 + $0x300] sm:$0xff]
        %v1539 = vld [vmem:[#allocation3 + $0x308] sm:$0xff]
        %v1540 = vld [vmem:[#allocation3 + $0x310] sm:$0xff]
        %v1541 = vld [vmem:[#allocation3 + $0x318] sm:$0xff]
        %v1542 = vld [vmem:[#allocation3 + $0x320] sm:$0xff]
        %v1543 = vld [vmem:[#allocation3 + $0x328] sm:$0xff]
        %v1544 = vld [vmem:[#allocation3 + $0x330] sm:$0xff]
        %v1545 = vld [vmem:[#allocation3 + $0x338] sm:$0xff]
        %v1546 = vld [vmem:[#allocation3 + $0x340] sm:$0xff]
        %v1547 = vld [vmem:[#allocation3 + $0x348] sm:$0xff]
        %v1548 = vld [vmem:[#allocation3 + $0x350] sm:$0xff]
        %v1549 = vld [vmem:[#allocation3 + $0x358] sm:$0xff]
        %v1550 = vld [vmem:[#allocation3 + $0x360] sm:$0xff]
        %v1551 = vld [vmem:[#allocation3 + $0x368] sm:$0xff]
        %v1552 = vld [vmem:[#allocation3 + $0x370] sm:$0xff]
        %v1553 = vld [vmem:[#allocation3 + $0x378] sm:$0xff]
        %v1554 = vld [vmem:[#allocation3 + $0x380] sm:$0xff]
        %v1555 = vld [vmem:[#allocation3 + $0x388] sm:$0xff]
        %v1556 = vld [vmem:[#allocation3 + $0x390] sm:$0xff]
        %v1557 = vld [vmem:[#allocation3 + $0x398] sm:$0xff]
        %v1558 = vld [vmem:[#allocation3 + $0x3a0] sm:$0xff]
        %v1559 = vld [vmem:[#allocation3 + $0x3a8] sm:$0xff]
        %v1560 = vld [vmem:[#allocation3 + $0x3b0] sm:$0xff]
        %v1561 = vld [vmem:[#allocation3 + $0x3b8] sm:$0xff]
        %v1562 = vld [vmem:[#allocation3 + $0x3c0] sm:$0xff]
        %v1563 = vld [vmem:[#allocation3 + $0x3c8] sm:$0xff]
        %v1564 = vld [vmem:[#allocation3 + $0x3d0] sm:$0xff]
        %v1565 = vld [vmem:[#allocation3 + $0x3d8] sm:$0xff]
        %v1566 = vld [vmem:[#allocation3 + $0x3e0] sm:$0xff]
        %v1567 = vld [vmem:[#allocation3 + $0x3e8] sm:$0xff]
        %v1568 = vld [vmem:[#allocation3 + $0x3f0] sm:$0xff]
        %v1569 = vld [vmem:[#allocation3 + $0x3f8] sm:$0xff]
        %v1570 = vld [vmem:[#allocation3 + $0x400] sm:$0xff]
        %v1571 = vld [vmem:[#allocation3 + $0x408] sm:$0xff]
        %v1572 = vld [vmem:[#allocation3 + $0x410] sm:$0xff]
        %v1573 = vld [vmem:[#allocation3 + $0x418] sm:$0xff]
        %v1574 = vld [vmem:[#allocation3 + $0x420] sm:$0xff]
        %v1575 = vld [vmem:[#allocation3 + $0x428] sm:$0xff]
        %v1576 = vld [vmem:[#allocation3 + $0x430] sm:$0xff]
        %v1577 = vld [vmem:[#allocation3 + $0x438] sm:$0xff]
        %v1578 = vld [vmem:[#allocation3 + $0x440] sm:$0xff]
        %v1579 = vld [vmem:[#allocation3 + $0x448] sm:$0xff]
        %v1580 = vld [vmem:[#allocation3 + $0x450] sm:$0xff]
        %v1581 = vld [vmem:[#allocation3 + $0x458] sm:$0xff]
        %v1582 = vld [vmem:[#allocation3 + $0x460] sm:$0xff]
        %v1583 = vld [vmem:[#allocation3 + $0x468] sm:$0xff]
        %v1584 = vld [vmem:[#allocation3 + $0x470] sm:$0xff]
        %v1585 = vld [vmem:[#allocation3 + $0x478] sm:$0xff]
        %v1586 = vld [vmem:[#allocation3 + $0x480] sm:$0xff]
        %v1587 = vld [vmem:[#allocation3 + $0x488] sm:$0xff]
        %v1588 = vld [vmem:[#allocation3 + $0x490] sm:$0xff]
        %v1589 = vld [vmem:[#allocation3 + $0x498] sm:$0xff]
        %v1590 = vld [vmem:[#allocation3 + $0x4a0] sm:$0xff]
        %v1591 = vld [vmem:[#allocation3 + $0x4a8] sm:$0xff]
        %v1592 = vld [vmem:[#allocation3 + $0x4b0] sm:$0xff]
        %v1593 = vld [vmem:[#allocation3 + $0x4b8] sm:$0xff]
        %v1594 = vld [vmem:[#allocation3 + $0x4c0] sm:$0xff]
        %v1595 = vld [vmem:[#allocation3 + $0x4c8] sm:$0xff]
        %v1596 = vld [vmem:[#allocation3 + $0x4d0] sm:$0xff]
        %v1597 = vld [vmem:[#allocation3 + $0x4d8] sm:$0xff]
        %v1598 = vld [vmem:[#allocation3 + $0x4e0] sm:$0xff]
        %v1599 = vld [vmem:[#allocation3 + $0x4e8] sm:$0xff]
        %v1600 = vld [vmem:[#allocation3 + $0x4f0] sm:$0xff]
        %v1601 = vld [vmem:[#allocation3 + $0x4f8] sm:$0xff]
        %v1602 = vld [vmem:[#allocation3 + $0x500] sm:$0xff]
        %v1603 = vld [vmem:[#allocation3 + $0x508] sm:$0xff]
        %v1604 = vld [vmem:[#allocation3 + $0x510] sm:$0xff]
        %v1605 = vld [vmem:[#allocation3 + $0x518] sm:$0xff]
        %v1606 = vld [vmem:[#allocation3 + $0x520] sm:$0xff]
        %v1607 = vld [vmem:[#allocation3 + $0x528] sm:$0xff]
        %v1608 = vld [vmem:[#allocation3 + $0x530] sm:$0xff]
        %v1609 = vld [vmem:[#allocation3 + $0x538] sm:$0xff]
        %v1610 = vld [vmem:[#allocation3 + $0x540] sm:$0xff]
        %v1611 = vld [vmem:[#allocation3 + $0x548] sm:$0xff]
        %v1612 = vld [vmem:[#allocation3 + $0x550] sm:$0xff]
        %v1613 = vld [vmem:[#allocation3 + $0x558] sm:$0xff]
        %v1614 = vld [vmem:[#allocation3 + $0x560] sm:$0xff]
        %v1615 = vld [vmem:[#allocation3 + $0x568] sm:$0xff]
        %v1616 = vld [vmem:[#allocation3 + $0x570] sm:$0xff]
        %v1617 = vld [vmem:[#allocation3 + $0x578] sm:$0xff]
        %v1618 = vld [vmem:[#allocation3 + $0x580] sm:$0xff]
        %v1619 = vld [vmem:[#allocation3 + $0x588] sm:$0xff]
        %v1620 = vld [vmem:[#allocation3 + $0x590] sm:$0xff]
        %v1621 = vld [vmem:[#allocation3 + $0x598] sm:$0xff]
        %v1622 = vld [vmem:[#allocation3 + $0x5a0] sm:$0xff]
        %v1623 = vld [vmem:[#allocation3 + $0x5a8] sm:$0xff]
        %v1624 = vld [vmem:[#allocation3 + $0x5b0] sm:$0xff]
        %v1625 = vld [vmem:[#allocation3 + $0x5b8] sm:$0xff]
        %v1626 = vld [vmem:[#allocation3 + $0x5c0] sm:$0xff]
        %v1627 = vld [vmem:[#allocation3 + $0x5c8] sm:$0xff]
        %v1628 = vld [vmem:[#allocation3 + $0x5d0] sm:$0xff]
        %v1629 = vld [vmem:[#allocation3 + $0x5d8] sm:$0xff]
        %v1630 = vld [vmem:[#allocation3 + $0x5e0] sm:$0xff]
        %v1631 = vld [vmem:[#allocation3 + $0x5e8] sm:$0xff]
        %v1632 = vld [vmem:[#allocation3 + $0x5f0] sm:$0xff]
        %v1633 = vld [vmem:[#allocation3 + $0x5f8] sm:$0xff]
        %v1634 = vld [vmem:[#allocation3 + $0x600] sm:$0xff]
        %v1635 = vld [vmem:[#allocation3 + $0x608] sm:$0xff]
        %v1636 = vld [vmem:[#allocation3 + $0x610] sm:$0xff]
        %v1637 = vld [vmem:[#allocation3 + $0x618] sm:$0xff]
        %v1638 = vld [vmem:[#allocation3 + $0x620] sm:$0xff]
        %v1639 = vld [vmem:[#allocation3 + $0x628] sm:$0xff]
        %v1640 = vld [vmem:[#allocation3 + $0x630] sm:$0xff]
        %v1641 = vld [vmem:[#allocation3 + $0x638] sm:$0xff]
        %v1642 = vld [vmem:[#allocation3 + $0x640] sm:$0xff]
        %v1643 = vld [vmem:[#allocation3 + $0x648] sm:$0xff]
        %v1644 = vld [vmem:[#allocation3 + $0x650] sm:$0xff]
        %v1645 = vld [vmem:[#allocation3 + $0x658] sm:$0xff]
        %v1646 = vld [vmem:[#allocation3 + $0x660] sm:$0xff]
        %v1647 = vld [vmem:[#allocation3 + $0x668] sm:$0xff]
        %v1648 = vld [vmem:[#allocation3 + $0x670] sm:$0xff]
        %v1649 = vld [vmem:[#allocation3 + $0x678] sm:$0xff]
        %v1650 = vld [vmem:[#allocation3 + $0x680] sm:$0xff]
        %v1651 = vld [vmem:[#allocation3 + $0x688] sm:$0xff]
        %v1652 = vld [vmem:[#allocation3 + $0x690] sm:$0xff]
        %v1653 = vld [vmem:[#allocation3 + $0x698] sm:$0xff]
        %v1654 = vld [vmem:[#allocation3 + $0x6a0] sm:$0xff]
        %v1655 = vld [vmem:[#allocation3 + $0x6a8] sm:$0xff]
        %v1656 = vld [vmem:[#allocation3 + $0x6b0] sm:$0xff]
        %v1657 = vld [vmem:[#allocation3 + $0x6b8] sm:$0xff]
        %v1658 = vld [vmem:[#allocation3 + $0x6c0] sm:$0xff]
        %v1659 = vld [vmem:[#allocation3 + $0x6c8] sm:$0xff]
        %v1660 = vld [vmem:[#allocation3 + $0x6d0] sm:$0xff]
        %v1661 = vld [vmem:[#allocation3 + $0x6d8] sm:$0xff]
        %v1662 = vld [vmem:[#allocation3 + $0x6e0] sm:$0xff]
        %v1663 = vld [vmem:[#allocation3 + $0x6e8] sm:$0xff]
        %v1664 = vld [vmem:[#allocation3 + $0x6f0] sm:$0xff]
        %v1665 = vld [vmem:[#allocation3 + $0x6f8] sm:$0xff]
        %v1666 = vld [vmem:[#allocation3 + $0x700] sm:$0xff]
        %v1667 = vld [vmem:[#allocation3 + $0x708] sm:$0xff]
        %v1668 = vld [vmem:[#allocation3 + $0x710] sm:$0xff]
        %v1669 = vld [vmem:[#allocation3 + $0x718] sm:$0xff]
        %v1670 = vld [vmem:[#allocation3 + $0x720] sm:$0xff]
        %v1671 = vld [vmem:[#allocation3 + $0x728] sm:$0xff]
        %v1672 = vld [vmem:[#allocation3 + $0x730] sm:$0xff]
        %v1673 = vld [vmem:[#allocation3 + $0x738] sm:$0xff]
        %v1674 = vld [vmem:[#allocation3 + $0x740] sm:$0xff]
        %v1675 = vld [vmem:[#allocation3 + $0x748] sm:$0xff]
        %v1676 = vld [vmem:[#allocation3 + $0x750] sm:$0xff]
        %v1677 = vld [vmem:[#allocation3 + $0x758] sm:$0xff]
        %v1678 = vld [vmem:[#allocation3 + $0x760] sm:$0xff]
        %v1679 = vld [vmem:[#allocation3 + $0x768] sm:$0xff]
        %v1680 = vld [vmem:[#allocation3 + $0x770] sm:$0xff]
        %v1681 = vld [vmem:[#allocation3 + $0x778] sm:$0xff]
        %v1682 = vld [vmem:[#allocation3 + $0x780] sm:$0xff]
        %v1683 = vld [vmem:[#allocation3 + $0x788] sm:$0xff]
        %v1684 = vld [vmem:[#allocation3 + $0x790] sm:$0xff]
        %v1685 = vld [vmem:[#allocation3 + $0x798] sm:$0xff]
        %v1686 = vld [vmem:[#allocation3 + $0x7a0] sm:$0xff]
        %v1687 = vld [vmem:[#allocation3 + $0x7a8] sm:$0xff]
        %v1688 = vld [vmem:[#allocation3 + $0x7b0] sm:$0xff]
        %v1689 = vld [vmem:[#allocation3 + $0x7b8] sm:$0xff]
        %v1690 = vld [vmem:[#allocation3 + $0x7c0] sm:$0xff]
        %v1691 = vld [vmem:[#allocation3 + $0x7c8] sm:$0xff]
        %v1692 = vld [vmem:[#allocation3 + $0x7d0] sm:$0xff]
        %v1693 = vld [vmem:[#allocation3 + $0x7d8] sm:$0xff]
        %v1694 = vld [vmem:[#allocation3 + $0x7e0] sm:$0xff]
        %v1695 = vld [vmem:[#allocation3 + $0x7e8] sm:$0xff]
        %v1696 = vld [vmem:[#allocation3 + $0x7f0] sm:$0xff]
        %v1697 = vld [vmem:[#allocation3 + $0x7f8] sm:$0xff]
        %v1954 = vunpack.c.l.b16 %v1442
        %v1955 = vunpack.c.h.b16 %v1442
        %v1956 = vunpack.c.l.b16 %v1443
        %v1957 = vunpack.c.h.b16 %v1443
        %v1958 = vunpack.c.l.b16 %v1444
        %v1959 = vunpack.c.h.b16 %v1444
        %v1960 = vunpack.c.l.b16 %v1445
        %v1961 = vunpack.c.h.b16 %v1445
        %v1962 = vunpack.c.l.b16 %v1446
        %v1963 = vunpack.c.h.b16 %v1446
        %v1964 = vunpack.c.l.b16 %v1447
        %v1965 = vunpack.c.h.b16 %v1447
        %v1966 = vunpack.c.l.b16 %v1448
        %v1967 = vunpack.c.h.b16 %v1448
        %v1968 = vunpack.c.l.b16 %v1449
        %v1969 = vunpack.c.h.b16 %v1449
        %v1970 = vunpack.c.l.b16 %v1450
        %v1971 = vunpack.c.h.b16 %v1450
        %v1972 = vunpack.c.l.b16 %v1451
        %v1973 = vunpack.c.h.b16 %v1451
        %v1974 = vunpack.c.l.b16 %v1452
        %v1975 = vunpack.c.h.b16 %v1452
        %v1976 = vunpack.c.l.b16 %v1453
        %v1977 = vunpack.c.h.b16 %v1453
        %v1978 = vunpack.c.l.b16 %v1454
        %v1979 = vunpack.c.h.b16 %v1454
        %v1980 = vunpack.c.l.b16 %v1455
        %v1981 = vunpack.c.h.b16 %v1455
        %v1982 = vunpack.c.l.b16 %v1456
        %v1983 = vunpack.c.h.b16 %v1456
        %v1984 = vunpack.c.l.b16 %v1457
        %v1985 = vunpack.c.h.b16 %v1457
        %v1986 = vunpack.c.l.b16 %v1458
        %v1987 = vunpack.c.h.b16 %v1458
        %v1988 = vunpack.c.l.b16 %v1459
        %v1989 = vunpack.c.h.b16 %v1459
        %v1990 = vunpack.c.l.b16 %v1460
        %v1991 = vunpack.c.h.b16 %v1460
        %v1992 = vunpack.c.l.b16 %v1461
        %v1993 = vunpack.c.h.b16 %v1461
        %v1994 = vunpack.c.l.b16 %v1462
        %v1995 = vunpack.c.h.b16 %v1462
        %v1996 = vunpack.c.l.b16 %v1463
        %v1997 = vunpack.c.h.b16 %v1463
        %v1998 = vunpack.c.l.b16 %v1464
        %v1999 = vunpack.c.h.b16 %v1464
        %v2000 = vunpack.c.l.b16 %v1465
        %v2001 = vunpack.c.h.b16 %v1465
        %v2002 = vunpack.c.l.b16 %v1466
        %v2003 = vunpack.c.h.b16 %v1466
        %v2004 = vunpack.c.l.b16 %v1467
        %v2005 = vunpack.c.h.b16 %v1467
        %v2006 = vunpack.c.l.b16 %v1468
        %v2007 = vunpack.c.h.b16 %v1468
        %v2008 = vunpack.c.l.b16 %v1469
        %v2009 = vunpack.c.h.b16 %v1469
        %v2010 = vunpack.c.l.b16 %v1470
        %v2011 = vunpack.c.h.b16 %v1470
        %v2012 = vunpack.c.l.b16 %v1471
        %v2013 = vunpack.c.h.b16 %v1471
        %v2014 = vunpack.c.l.b16 %v1472
        %v2015 = vunpack.c.h.b16 %v1472
        %v2016 = vunpack.c.l.b16 %v1473
        %v2017 = vunpack.c.h.b16 %v1473
        %v2018 = vunpack.c.l.b16 %v1474
        %v2019 = vunpack.c.h.b16 %v1474
        %v2020 = vunpack.c.l.b16 %v1475
        %v2021 = vunpack.c.h.b16 %v1475
        %v2022 = vunpack.c.l.b16 %v1476
        %v2023 = vunpack.c.h.b16 %v1476
        %v2024 = vunpack.c.l.b16 %v1477
        %v2025 = vunpack.c.h.b16 %v1477
        %v2026 = vunpack.c.l.b16 %v1478
        %v2027 = vunpack.c.h.b16 %v1478
        %v2028 = vunpack.c.l.b16 %v1479
        %v2029 = vunpack.c.h.b16 %v1479
        %v2030 = vunpack.c.l.b16 %v1480
        %v2031 = vunpack.c.h.b16 %v1480
        %v2032 = vunpack.c.l.b16 %v1481
        %v2033 = vunpack.c.h.b16 %v1481
        %v2034 = vunpack.c.l.b16 %v1482
        %v2035 = vunpack.c.h.b16 %v1482
        %v2036 = vunpack.c.l.b16 %v1483
        %v2037 = vunpack.c.h.b16 %v1483
        %v2038 = vunpack.c.l.b16 %v1484
        %v2039 = vunpack.c.h.b16 %v1484
        %v2040 = vunpack.c.l.b16 %v1485
        %v2041 = vunpack.c.h.b16 %v1485
        %v2042 = vunpack.c.l.b16 %v1486
        %v2043 = vunpack.c.h.b16 %v1486
        %v2044 = vunpack.c.l.b16 %v1487
        %v2045 = vunpack.c.h.b16 %v1487
        %v2046 = vunpack.c.l.b16 %v1488
        %v2047 = vunpack.c.h.b16 %v1488
        %v2048 = vunpack.c.l.b16 %v1489
        %v2049 = vunpack.c.h.b16 %v1489
        %v2050 = vunpack.c.l.b16 %v1490
        %v2051 = vunpack.c.h.b16 %v1490
        %v2052 = vunpack.c.l.b16 %v1491
        %v2053 = vunpack.c.h.b16 %v1491
        %v2054 = vunpack.c.l.b16 %v1492
        %v2055 = vunpack.c.h.b16 %v1492
        %v2056 = vunpack.c.l.b16 %v1493
        %v2057 = vunpack.c.h.b16 %v1493
        %v2058 = vunpack.c.l.b16 %v1494
        %v2059 = vunpack.c.h.b16 %v1494
        %v2060 = vunpack.c.l.b16 %v1495
        %v2061 = vunpack.c.h.b16 %v1495
        %v2062 = vunpack.c.l.b16 %v1496
        %v2063 = vunpack.c.h.b16 %v1496
        %v2064 = vunpack.c.l.b16 %v1497
        %v2065 = vunpack.c.h.b16 %v1497
        %v2066 = vunpack.c.l.b16 %v1498
        %v2067 = vunpack.c.h.b16 %v1498
        %v2068 = vunpack.c.l.b16 %v1499
        %v2069 = vunpack.c.h.b16 %v1499
        %v2070 = vunpack.c.l.b16 %v1500
        %v2071 = vunpack.c.h.b16 %v1500
        %v2072 = vunpack.c.l.b16 %v1501
        %v2073 = vunpack.c.h.b16 %v1501
        %v2074 = vunpack.c.l.b16 %v1502
        %v2075 = vunpack.c.h.b16 %v1502
        %v2076 = vunpack.c.l.b16 %v1503
        %v2077 = vunpack.c.h.b16 %v1503
        %v2078 = vunpack.c.l.b16 %v1504
        %v2079 = vunpack.c.h.b16 %v1504
        %v2080 = vunpack.c.l.b16 %v1505
        %v2081 = vunpack.c.h.b16 %v1505
        %v2082 = vunpack.c.l.b16 %v1506
        %v2083 = vunpack.c.h.b16 %v1506
        %v2084 = vunpack.c.l.b16 %v1507
        %v2085 = vunpack.c.h.b16 %v1507
        %v2086 = vunpack.c.l.b16 %v1508
        %v2087 = vunpack.c.h.b16 %v1508
        %v2088 = vunpack.c.l.b16 %v1509
        %v2089 = vunpack.c.h.b16 %v1509
        %v2090 = vunpack.c.l.b16 %v1510
        %v2091 = vunpack.c.h.b16 %v1510
        %v2092 = vunpack.c.l.b16 %v1511
        %v2093 = vunpack.c.h.b16 %v1511
        %v2094 = vunpack.c.l.b16 %v1512
        %v2095 = vunpack.c.h.b16 %v1512
        %v2096 = vunpack.c.l.b16 %v1513
        %v2097 = vunpack.c.h.b16 %v1513
        %v2098 = vunpack.c.l.b16 %v1514
        %v2099 = vunpack.c.h.b16 %v1514
        %v2100 = vunpack.c.l.b16 %v1515
        %v2101 = vunpack.c.h.b16 %v1515
        %v2102 = vunpack.c.l.b16 %v1516
        %v2103 = vunpack.c.h.b16 %v1516
        %v2104 = vunpack.c.l.b16 %v1517
        %v2105 = vunpack.c.h.b16 %v1517
        %v2106 = vunpack.c.l.b16 %v1518
        %v2107 = vunpack.c.h.b16 %v1518
        %v2108 = vunpack.c.l.b16 %v1519
        %v2109 = vunpack.c.h.b16 %v1519
        %v2110 = vunpack.c.l.b16 %v1520
        %v2111 = vunpack.c.h.b16 %v1520
        %v2112 = vunpack.c.l.b16 %v1521
        %v2113 = vunpack.c.h.b16 %v1521
        %v2114 = vunpack.c.l.b16 %v1522
        %v2115 = vunpack.c.h.b16 %v1522
        %v2116 = vunpack.c.l.b16 %v1523
        %v2117 = vunpack.c.h.b16 %v1523
        %v2118 = vunpack.c.l.b16 %v1524
        %v2119 = vunpack.c.h.b16 %v1524
        %v2120 = vunpack.c.l.b16 %v1525
        %v2121 = vunpack.c.h.b16 %v1525
        %v2122 = vunpack.c.l.b16 %v1526
        %v2123 = vunpack.c.h.b16 %v1526
        %v2124 = vunpack.c.l.b16 %v1527
        %v2125 = vunpack.c.h.b16 %v1527
        %v2126 = vunpack.c.l.b16 %v1528
        %v2127 = vunpack.c.h.b16 %v1528
        %v2128 = vunpack.c.l.b16 %v1529
        %v2129 = vunpack.c.h.b16 %v1529
        %v2130 = vunpack.c.l.b16 %v1530
        %v2131 = vunpack.c.h.b16 %v1530
        %v2132 = vunpack.c.l.b16 %v1531
        %v2133 = vunpack.c.h.b16 %v1531
        %v2134 = vunpack.c.l.b16 %v1532
        %v2135 = vunpack.c.h.b16 %v1532
        %v2136 = vunpack.c.l.b16 %v1533
        %v2137 = vunpack.c.h.b16 %v1533
        %v2138 = vunpack.c.l.b16 %v1534
        %v2139 = vunpack.c.h.b16 %v1534
        %v2140 = vunpack.c.l.b16 %v1535
        %v2141 = vunpack.c.h.b16 %v1535
        %v2142 = vunpack.c.l.b16 %v1536
        %v2143 = vunpack.c.h.b16 %v1536
        %v2144 = vunpack.c.l.b16 %v1537
        %v2145 = vunpack.c.h.b16 %v1537
        %v2146 = vunpack.c.l.b16 %v1538
        %v2147 = vunpack.c.h.b16 %v1538
        %v2148 = vunpack.c.l.b16 %v1539
        %v2149 = vunpack.c.h.b16 %v1539
        %v2150 = vunpack.c.l.b16 %v1540
        %v2151 = vunpack.c.h.b16 %v1540
        %v2152 = vunpack.c.l.b16 %v1541
        %v2153 = vunpack.c.h.b16 %v1541
        %v2154 = vunpack.c.l.b16 %v1542
        %v2155 = vunpack.c.h.b16 %v1542
        %v2156 = vunpack.c.l.b16 %v1543
        %v2157 = vunpack.c.h.b16 %v1543
        %v2158 = vunpack.c.l.b16 %v1544
        %v2159 = vunpack.c.h.b16 %v1544
        %v2160 = vunpack.c.l.b16 %v1545
        %v2161 = vunpack.c.h.b16 %v1545
        %v2162 = vunpack.c.l.b16 %v1546
        %v2163 = vunpack.c.h.b16 %v1546
        %v2164 = vunpack.c.l.b16 %v1547
        %v2165 = vunpack.c.h.b16 %v1547
        %v2166 = vunpack.c.l.b16 %v1548
        %v2167 = vunpack.c.h.b16 %v1548
        %v2168 = vunpack.c.l.b16 %v1549
        %v2169 = vunpack.c.h.b16 %v1549
        %v2170 = vunpack.c.l.b16 %v1550
        %v2171 = vunpack.c.h.b16 %v1550
        %v2172 = vunpack.c.l.b16 %v1551
        %v2173 = vunpack.c.h.b16 %v1551
        %v2174 = vunpack.c.l.b16 %v1552
        %v2175 = vunpack.c.h.b16 %v1552
        %v2176 = vunpack.c.l.b16 %v1553
        %v2177 = vunpack.c.h.b16 %v1553
        %v2178 = vunpack.c.l.b16 %v1554
        %v2179 = vunpack.c.h.b16 %v1554
        %v2180 = vunpack.c.l.b16 %v1555
        %v2181 = vunpack.c.h.b16 %v1555
        %v2182 = vunpack.c.l.b16 %v1556
        %v2183 = vunpack.c.h.b16 %v1556
        %v2184 = vunpack.c.l.b16 %v1557
        %v2185 = vunpack.c.h.b16 %v1557
        %v2186 = vunpack.c.l.b16 %v1558
        %v2187 = vunpack.c.h.b16 %v1558
        %v2188 = vunpack.c.l.b16 %v1559
        %v2189 = vunpack.c.h.b16 %v1559
        %v2190 = vunpack.c.l.b16 %v1560
        %v2191 = vunpack.c.h.b16 %v1560
        %v2192 = vunpack.c.l.b16 %v1561
        %v2193 = vunpack.c.h.b16 %v1561
        %v2194 = vunpack.c.l.b16 %v1562
        %v2195 = vunpack.c.h.b16 %v1562
        %v2196 = vunpack.c.l.b16 %v1563
        %v2197 = vunpack.c.h.b16 %v1563
        %v2198 = vunpack.c.l.b16 %v1564
        %v2199 = vunpack.c.h.b16 %v1564
        %v2200 = vunpack.c.l.b16 %v1565
        %v2201 = vunpack.c.h.b16 %v1565
        %v2202 = vunpack.c.l.b16 %v1566
        %v2203 = vunpack.c.h.b16 %v1566
        %v2204 = vunpack.c.l.b16 %v1567
        %v2205 = vunpack.c.h.b16 %v1567
        %v2206 = vunpack.c.l.b16 %v1568
        %v2207 = vunpack.c.h.b16 %v1568
        %v2208 = vunpack.c.l.b16 %v1569
        %v2209 = vunpack.c.h.b16 %v1569
        %v2210 = vunpack.c.l.b16 %v1570
        %v2211 = vunpack.c.h.b16 %v1570
        %v2212 = vunpack.c.l.b16 %v1571
        %v2213 = vunpack.c.h.b16 %v1571
        %v2214 = vunpack.c.l.b16 %v1572
        %v2215 = vunpack.c.h.b16 %v1572
        %v2216 = vunpack.c.l.b16 %v1573
        %v2217 = vunpack.c.h.b16 %v1573
        %v2218 = vunpack.c.l.b16 %v1574
        %v2219 = vunpack.c.h.b16 %v1574
        %v2220 = vunpack.c.l.b16 %v1575
        %v2221 = vunpack.c.h.b16 %v1575
        %v2222 = vunpack.c.l.b16 %v1576
        %v2223 = vunpack.c.h.b16 %v1576
        %v2224 = vunpack.c.l.b16 %v1577
        %v2225 = vunpack.c.h.b16 %v1577
        %v2226 = vunpack.c.l.b16 %v1578
        %v2227 = vunpack.c.h.b16 %v1578
        %v2228 = vunpack.c.l.b16 %v1579
        %v2229 = vunpack.c.h.b16 %v1579
        %v2230 = vunpack.c.l.b16 %v1580
        %v2231 = vunpack.c.h.b16 %v1580
        %v2232 = vunpack.c.l.b16 %v1581
        %v2233 = vunpack.c.h.b16 %v1581
        %v2234 = vunpack.c.l.b16 %v1582
        %v2235 = vunpack.c.h.b16 %v1582
        %v2236 = vunpack.c.l.b16 %v1583
        %v2237 = vunpack.c.h.b16 %v1583
        %v2238 = vunpack.c.l.b16 %v1584
        %v2239 = vunpack.c.h.b16 %v1584
        %v2240 = vunpack.c.l.b16 %v1585
        %v2241 = vunpack.c.h.b16 %v1585
        %v2242 = vunpack.c.l.b16 %v1586
        %v2243 = vunpack.c.h.b16 %v1586
        %v2244 = vunpack.c.l.b16 %v1587
        %v2245 = vunpack.c.h.b16 %v1587
        %v2246 = vunpack.c.l.b16 %v1588
        %v2247 = vunpack.c.h.b16 %v1588
        %v2248 = vunpack.c.l.b16 %v1589
        %v2249 = vunpack.c.h.b16 %v1589
        %v2250 = vunpack.c.l.b16 %v1590
        %v2251 = vunpack.c.h.b16 %v1590
        %v2252 = vunpack.c.l.b16 %v1591
        %v2253 = vunpack.c.h.b16 %v1591
        %v2254 = vunpack.c.l.b16 %v1592
        %v2255 = vunpack.c.h.b16 %v1592
        %v2256 = vunpack.c.l.b16 %v1593
        %v2257 = vunpack.c.h.b16 %v1593
        %v2258 = vunpack.c.l.b16 %v1594
        %v2259 = vunpack.c.h.b16 %v1594
        %v2260 = vunpack.c.l.b16 %v1595
        %v2261 = vunpack.c.h.b16 %v1595
        %v2262 = vunpack.c.l.b16 %v1596
        %v2263 = vunpack.c.h.b16 %v1596
        %v2264 = vunpack.c.l.b16 %v1597
        %v2265 = vunpack.c.h.b16 %v1597
        %v2266 = vunpack.c.l.b16 %v1598
        %v2267 = vunpack.c.h.b16 %v1598
        %v2268 = vunpack.c.l.b16 %v1599
        %v2269 = vunpack.c.h.b16 %v1599
        %v2270 = vunpack.c.l.b16 %v1600
        %v2271 = vunpack.c.h.b16 %v1600
        %v2272 = vunpack.c.l.b16 %v1601
        %v2273 = vunpack.c.h.b16 %v1601
        %v2274 = vunpack.c.l.b16 %v1602
        %v2275 = vunpack.c.h.b16 %v1602
        %v2276 = vunpack.c.l.b16 %v1603
        %v2277 = vunpack.c.h.b16 %v1603
        %v2278 = vunpack.c.l.b16 %v1604
        %v2279 = vunpack.c.h.b16 %v1604
        %v2280 = vunpack.c.l.b16 %v1605
        %v2281 = vunpack.c.h.b16 %v1605
        %v2282 = vunpack.c.l.b16 %v1606
        %v2283 = vunpack.c.h.b16 %v1606
        %v2284 = vunpack.c.l.b16 %v1607
        %v2285 = vunpack.c.h.b16 %v1607
        %v2286 = vunpack.c.l.b16 %v1608
        %v2287 = vunpack.c.h.b16 %v1608
        %v2288 = vunpack.c.l.b16 %v1609
        %v2289 = vunpack.c.h.b16 %v1609
        %v2290 = vunpack.c.l.b16 %v1610
        %v2291 = vunpack.c.h.b16 %v1610
        %v2292 = vunpack.c.l.b16 %v1611
        %v2293 = vunpack.c.h.b16 %v1611
        %v2294 = vunpack.c.l.b16 %v1612
        %v2295 = vunpack.c.h.b16 %v1612
        %v2296 = vunpack.c.l.b16 %v1613
        %v2297 = vunpack.c.h.b16 %v1613
        %v2298 = vunpack.c.l.b16 %v1614
        %v2299 = vunpack.c.h.b16 %v1614
        %v2300 = vunpack.c.l.b16 %v1615
        %v2301 = vunpack.c.h.b16 %v1615
        %v2302 = vunpack.c.l.b16 %v1616
        %v2303 = vunpack.c.h.b16 %v1616
        %v2304 = vunpack.c.l.b16 %v1617
        %v2305 = vunpack.c.h.b16 %v1617
        %v2306 = vunpack.c.l.b16 %v1618
        %v2307 = vunpack.c.h.b16 %v1618
        %v2308 = vunpack.c.l.b16 %v1619
        %v2309 = vunpack.c.h.b16 %v1619
        %v2310 = vunpack.c.l.b16 %v1620
        %v2311 = vunpack.c.h.b16 %v1620
        %v2312 = vunpack.c.l.b16 %v1621
        %v2313 = vunpack.c.h.b16 %v1621
        %v2314 = vunpack.c.l.b16 %v1622
        %v2315 = vunpack.c.h.b16 %v1622
        %v2316 = vunpack.c.l.b16 %v1623
        %v2317 = vunpack.c.h.b16 %v1623
        %v2318 = vunpack.c.l.b16 %v1624
        %v2319 = vunpack.c.h.b16 %v1624
        %v2320 = vunpack.c.l.b16 %v1625
        %v2321 = vunpack.c.h.b16 %v1625
        %v2322 = vunpack.c.l.b16 %v1626
        %v2323 = vunpack.c.h.b16 %v1626
        %v2324 = vunpack.c.l.b16 %v1627
        %v2325 = vunpack.c.h.b16 %v1627
        %v2326 = vunpack.c.l.b16 %v1628
        %v2327 = vunpack.c.h.b16 %v1628
        %v2328 = vunpack.c.l.b16 %v1629
        %v2329 = vunpack.c.h.b16 %v1629
        %v2330 = vunpack.c.l.b16 %v1630
        %v2331 = vunpack.c.h.b16 %v1630
        %v2332 = vunpack.c.l.b16 %v1631
        %v2333 = vunpack.c.h.b16 %v1631
        %v2334 = vunpack.c.l.b16 %v1632
        %v2335 = vunpack.c.h.b16 %v1632
        %v2336 = vunpack.c.l.b16 %v1633
        %v2337 = vunpack.c.h.b16 %v1633
        %v2338 = vunpack.c.l.b16 %v1634
        %v2339 = vunpack.c.h.b16 %v1634
        %v2340 = vunpack.c.l.b16 %v1635
        %v2341 = vunpack.c.h.b16 %v1635
        %v2342 = vunpack.c.l.b16 %v1636
        %v2343 = vunpack.c.h.b16 %v1636
        %v2344 = vunpack.c.l.b16 %v1637
        %v2345 = vunpack.c.h.b16 %v1637
        %v2346 = vunpack.c.l.b16 %v1638
        %v2347 = vunpack.c.h.b16 %v1638
        %v2348 = vunpack.c.l.b16 %v1639
        %v2349 = vunpack.c.h.b16 %v1639
        %v2350 = vunpack.c.l.b16 %v1640
        %v2351 = vunpack.c.h.b16 %v1640
        %v2352 = vunpack.c.l.b16 %v1641
        %v2353 = vunpack.c.h.b16 %v1641
        %v2354 = vunpack.c.l.b16 %v1642
        %v2355 = vunpack.c.h.b16 %v1642
        %v2356 = vunpack.c.l.b16 %v1643
        %v2357 = vunpack.c.h.b16 %v1643
        %v2358 = vunpack.c.l.b16 %v1644
        %v2359 = vunpack.c.h.b16 %v1644
        %v2360 = vunpack.c.l.b16 %v1645
        %v2361 = vunpack.c.h.b16 %v1645
        %v2362 = vunpack.c.l.b16 %v1646
        %v2363 = vunpack.c.h.b16 %v1646
        %v2364 = vunpack.c.l.b16 %v1647
        %v2365 = vunpack.c.h.b16 %v1647
        %v2366 = vunpack.c.l.b16 %v1648
        %v2367 = vunpack.c.h.b16 %v1648
        %v2368 = vunpack.c.l.b16 %v1649
        %v2369 = vunpack.c.h.b16 %v1649
        %v2370 = vunpack.c.l.b16 %v1650
        %v2371 = vunpack.c.h.b16 %v1650
        %v2372 = vunpack.c.l.b16 %v1651
        %v2373 = vunpack.c.h.b16 %v1651
        %v2374 = vunpack.c.l.b16 %v1652
        %v2375 = vunpack.c.h.b16 %v1652
        %v2376 = vunpack.c.l.b16 %v1653
        %v2377 = vunpack.c.h.b16 %v1653
        %v2378 = vunpack.c.l.b16 %v1654
        %v2379 = vunpack.c.h.b16 %v1654
        %v2380 = vunpack.c.l.b16 %v1655
        %v2381 = vunpack.c.h.b16 %v1655
        %v2382 = vunpack.c.l.b16 %v1656
        %v2383 = vunpack.c.h.b16 %v1656
        %v2384 = vunpack.c.l.b16 %v1657
        %v2385 = vunpack.c.h.b16 %v1657
        %v2386 = vunpack.c.l.b16 %v1658
        %v2387 = vunpack.c.h.b16 %v1658
        %v2388 = vunpack.c.l.b16 %v1659
        %v2389 = vunpack.c.h.b16 %v1659
        %v2390 = vunpack.c.l.b16 %v1660
        %v2391 = vunpack.c.h.b16 %v1660
        %v2392 = vunpack.c.l.b16 %v1661
        %v2393 = vunpack.c.h.b16 %v1661
        %v2394 = vunpack.c.l.b16 %v1662
        %v2395 = vunpack.c.h.b16 %v1662
        %v2396 = vunpack.c.l.b16 %v1663
        %v2397 = vunpack.c.h.b16 %v1663
        %v2398 = vunpack.c.l.b16 %v1664
        %v2399 = vunpack.c.h.b16 %v1664
        %v2400 = vunpack.c.l.b16 %v1665
        %v2401 = vunpack.c.h.b16 %v1665
        %v2402 = vunpack.c.l.b16 %v1666
        %v2403 = vunpack.c.h.b16 %v1666
        %v2404 = vunpack.c.l.b16 %v1667
        %v2405 = vunpack.c.h.b16 %v1667
        %v2406 = vunpack.c.l.b16 %v1668
        %v2407 = vunpack.c.h.b16 %v1668
        %v2408 = vunpack.c.l.b16 %v1669
        %v2409 = vunpack.c.h.b16 %v1669
        %v2410 = vunpack.c.l.b16 %v1670
        %v2411 = vunpack.c.h.b16 %v1670
        %v2412 = vunpack.c.l.b16 %v1671
        %v2413 = vunpack.c.h.b16 %v1671
        %v2414 = vunpack.c.l.b16 %v1672
        %v2415 = vunpack.c.h.b16 %v1672
        %v2416 = vunpack.c.l.b16 %v1673
        %v2417 = vunpack.c.h.b16 %v1673
        %v2418 = vunpack.c.l.b16 %v1674
        %v2419 = vunpack.c.h.b16 %v1674
        %v2420 = vunpack.c.l.b16 %v1675
        %v2421 = vunpack.c.h.b16 %v1675
        %v2422 = vunpack.c.l.b16 %v1676
        %v2423 = vunpack.c.h.b16 %v1676
        %v2424 = vunpack.c.l.b16 %v1677
        %v2425 = vunpack.c.h.b16 %v1677
        %v2426 = vunpack.c.l.b16 %v1678
        %v2427 = vunpack.c.h.b16 %v1678
        %v2428 = vunpack.c.l.b16 %v1679
        %v2429 = vunpack.c.h.b16 %v1679
        %v2430 = vunpack.c.l.b16 %v1680
        %v2431 = vunpack.c.h.b16 %v1680
        %v2432 = vunpack.c.l.b16 %v1681
        %v2433 = vunpack.c.h.b16 %v1681
        %v2434 = vunpack.c.l.b16 %v1682
        %v2435 = vunpack.c.h.b16 %v1682
        %v2436 = vunpack.c.l.b16 %v1683
        %v2437 = vunpack.c.h.b16 %v1683
        %v2438 = vunpack.c.l.b16 %v1684
        %v2439 = vunpack.c.h.b16 %v1684
        %v2440 = vunpack.c.l.b16 %v1685
        %v2441 = vunpack.c.h.b16 %v1685
        %v2442 = vunpack.c.l.b16 %v1686
        %v2443 = vunpack.c.h.b16 %v1686
        %v2444 = vunpack.c.l.b16 %v1687
        %v2445 = vunpack.c.h.b16 %v1687
        %v2446 = vunpack.c.l.b16 %v1688
        %v2447 = vunpack.c.h.b16 %v1688
        %v2448 = vunpack.c.l.b16 %v1689
        %v2449 = vunpack.c.h.b16 %v1689
        %v2450 = vunpack.c.l.b16 %v1690
        %v2451 = vunpack.c.h.b16 %v1690
        %v2452 = vunpack.c.l.b16 %v1691
        %v2453 = vunpack.c.h.b16 %v1691
        %v2454 = vunpack.c.l.b16 %v1692
        %v2455 = vunpack.c.h.b16 %v1692
        %v2456 = vunpack.c.l.b16 %v1693
        %v2457 = vunpack.c.h.b16 %v1693
        %v2458 = vunpack.c.l.b16 %v1694
        %v2459 = vunpack.c.h.b16 %v1694
        %v2460 = vunpack.c.l.b16 %v1695
        %v2461 = vunpack.c.h.b16 %v1695
        %v2462 = vunpack.c.l.b16 %v1696
        %v2463 = vunpack.c.h.b16 %v1696
        %v2464 = vunpack.c.l.b16 %v1697
        %v2465 = vunpack.c.h.b16 %v1697
        %v2466 = vpack.c.b16 %v1958, %v1954
        %v2467 = vpack.c.b16 %v1959, %v1955
        %v2468 = vpack.c.b16 %v1960, %v1956
        %v2469 = vpack.c.b16 %v1961, %v1957
        %v2470 = vpack.c.b16 %v1966, %v1962
        %v2471 = vpack.c.b16 %v1967, %v1963
        %v2472 = vpack.c.b16 %v1968, %v1964
        %v2473 = vpack.c.b16 %v1969, %v1965
        %v2474 = vpack.c.b16 %v1974, %v1970
        %v2475 = vpack.c.b16 %v1975, %v1971
        %v2476 = vpack.c.b16 %v1976, %v1972
        %v2477 = vpack.c.b16 %v1977, %v1973
        %v2478 = vpack.c.b16 %v1982, %v1978
        %v2479 = vpack.c.b16 %v1983, %v1979
        %v2480 = vpack.c.b16 %v1984, %v1980
        %v2481 = vpack.c.b16 %v1985, %v1981
        %v2482 = vpack.c.b16 %v1990, %v1986
        %v2483 = vpack.c.b16 %v1991, %v1987
        %v2484 = vpack.c.b16 %v1992, %v1988
        %v2485 = vpack.c.b16 %v1993, %v1989
        %v2486 = vpack.c.b16 %v1998, %v1994
        %v2487 = vpack.c.b16 %v1999, %v1995
        %v2488 = vpack.c.b16 %v2000, %v1996
        %v2489 = vpack.c.b16 %v2001, %v1997
        %v2490 = vpack.c.b16 %v2006, %v2002
        %v2491 = vpack.c.b16 %v2007, %v2003
        %v2492 = vpack.c.b16 %v2008, %v2004
        %v2493 = vpack.c.b16 %v2009, %v2005
        %v2494 = vpack.c.b16 %v2014, %v2010
        %v2495 = vpack.c.b16 %v2015, %v2011
        %v2496 = vpack.c.b16 %v2016, %v2012
        %v2497 = vpack.c.b16 %v2017, %v2013
        %v2498 = vpack.c.b16 %v2022, %v2018
        %v2499 = vpack.c.b16 %v2023, %v2019
        %v2500 = vpack.c.b16 %v2024, %v2020
        %v2501 = vpack.c.b16 %v2025, %v2021
        %v2502 = vpack.c.b16 %v2030, %v2026
        %v2503 = vpack.c.b16 %v2031, %v2027
        %v2504 = vpack.c.b16 %v2032, %v2028
        %v2505 = vpack.c.b16 %v2033, %v2029
        %v2506 = vpack.c.b16 %v2038, %v2034
        %v2507 = vpack.c.b16 %v2039, %v2035
        %v2508 = vpack.c.b16 %v2040, %v2036
        %v2509 = vpack.c.b16 %v2041, %v2037
        %v2510 = vpack.c.b16 %v2046, %v2042
        %v2511 = vpack.c.b16 %v2047, %v2043
        %v2512 = vpack.c.b16 %v2048, %v2044
        %v2513 = vpack.c.b16 %v2049, %v2045
        %v2514 = vpack.c.b16 %v2054, %v2050
        %v2515 = vpack.c.b16 %v2055, %v2051
        %v2516 = vpack.c.b16 %v2056, %v2052
        %v2517 = vpack.c.b16 %v2057, %v2053
        %v2518 = vpack.c.b16 %v2062, %v2058
        %v2519 = vpack.c.b16 %v2063, %v2059
        %v2520 = vpack.c.b16 %v2064, %v2060
        %v2521 = vpack.c.b16 %v2065, %v2061
        %v2522 = vpack.c.b16 %v2070, %v2066
        %v2523 = vpack.c.b16 %v2071, %v2067
        %v2524 = vpack.c.b16 %v2072, %v2068
        %v2525 = vpack.c.b16 %v2073, %v2069
        %v2526 = vpack.c.b16 %v2078, %v2074
        %v2527 = vpack.c.b16 %v2079, %v2075
        %v2528 = vpack.c.b16 %v2080, %v2076
        %v2529 = vpack.c.b16 %v2081, %v2077
        %v2530 = vpack.c.b16 %v2086, %v2082
        %v2531 = vpack.c.b16 %v2087, %v2083
        %v2532 = vpack.c.b16 %v2088, %v2084
        %v2533 = vpack.c.b16 %v2089, %v2085
        %v2534 = vpack.c.b16 %v2094, %v2090
        %v2535 = vpack.c.b16 %v2095, %v2091
        %v2536 = vpack.c.b16 %v2096, %v2092
        %v2537 = vpack.c.b16 %v2097, %v2093
        %v2538 = vpack.c.b16 %v2102, %v2098
        %v2539 = vpack.c.b16 %v2103, %v2099
        %v2540 = vpack.c.b16 %v2104, %v2100
        %v2541 = vpack.c.b16 %v2105, %v2101
        %v2542 = vpack.c.b16 %v2110, %v2106
        %v2543 = vpack.c.b16 %v2111, %v2107
        %v2544 = vpack.c.b16 %v2112, %v2108
        %v2545 = vpack.c.b16 %v2113, %v2109
        %v2546 = vpack.c.b16 %v2118, %v2114
        %v2547 = vpack.c.b16 %v2119, %v2115
        %v2548 = vpack.c.b16 %v2120, %v2116
        %v2549 = vpack.c.b16 %v2121, %v2117
        %v2550 = vpack.c.b16 %v2126, %v2122
        %v2551 = vpack.c.b16 %v2127, %v2123
        %v2552 = vpack.c.b16 %v2128, %v2124
        %v2553 = vpack.c.b16 %v2129, %v2125
        %v2554 = vpack.c.b16 %v2134, %v2130
        %v2555 = vpack.c.b16 %v2135, %v2131
        %v2556 = vpack.c.b16 %v2136, %v2132
        %v2557 = vpack.c.b16 %v2137, %v2133
        %v2558 = vpack.c.b16 %v2142, %v2138
        %v2559 = vpack.c.b16 %v2143, %v2139
        %v2560 = vpack.c.b16 %v2144, %v2140
        %v2561 = vpack.c.b16 %v2145, %v2141
        %v2562 = vpack.c.b16 %v2150, %v2146
        %v2563 = vpack.c.b16 %v2151, %v2147
        %v2564 = vpack.c.b16 %v2152, %v2148
        %v2565 = vpack.c.b16 %v2153, %v2149
        %v2566 = vpack.c.b16 %v2158, %v2154
        %v2567 = vpack.c.b16 %v2159, %v2155
        %v2568 = vpack.c.b16 %v2160, %v2156
        %v2569 = vpack.c.b16 %v2161, %v2157
        %v2570 = vpack.c.b16 %v2166, %v2162
        %v2571 = vpack.c.b16 %v2167, %v2163
        %v2572 = vpack.c.b16 %v2168, %v2164
        %v2573 = vpack.c.b16 %v2169, %v2165
        %v2574 = vpack.c.b16 %v2174, %v2170
        %v2575 = vpack.c.b16 %v2175, %v2171
        %v2576 = vpack.c.b16 %v2176, %v2172
        %v2577 = vpack.c.b16 %v2177, %v2173
        %v2578 = vpack.c.b16 %v2182, %v2178
        %v2579 = vpack.c.b16 %v2183, %v2179
        %v2580 = vpack.c.b16 %v2184, %v2180
        %v2581 = vpack.c.b16 %v2185, %v2181
        %v2582 = vpack.c.b16 %v2190, %v2186
        %v2583 = vpack.c.b16 %v2191, %v2187
        %v2584 = vpack.c.b16 %v2192, %v2188
        %v2585 = vpack.c.b16 %v2193, %v2189
        %v2586 = vpack.c.b16 %v2198, %v2194
        %v2587 = vpack.c.b16 %v2199, %v2195
        %v2588 = vpack.c.b16 %v2200, %v2196
        %v2589 = vpack.c.b16 %v2201, %v2197
        %v2590 = vpack.c.b16 %v2206, %v2202
        %v2591 = vpack.c.b16 %v2207, %v2203
        %v2592 = vpack.c.b16 %v2208, %v2204
        %v2593 = vpack.c.b16 %v2209, %v2205
        %v2594 = vpack.c.b16 %v2214, %v2210
        %v2595 = vpack.c.b16 %v2215, %v2211
        %v2596 = vpack.c.b16 %v2216, %v2212
        %v2597 = vpack.c.b16 %v2217, %v2213
        %v2598 = vpack.c.b16 %v2222, %v2218
        %v2599 = vpack.c.b16 %v2223, %v2219
        %v2600 = vpack.c.b16 %v2224, %v2220
        %v2601 = vpack.c.b16 %v2225, %v2221
        %v2602 = vpack.c.b16 %v2230, %v2226
        %v2603 = vpack.c.b16 %v2231, %v2227
        %v2604 = vpack.c.b16 %v2232, %v2228
        %v2605 = vpack.c.b16 %v2233, %v2229
        %v2606 = vpack.c.b16 %v2238, %v2234
        %v2607 = vpack.c.b16 %v2239, %v2235
        %v2608 = vpack.c.b16 %v2240, %v2236
        %v2609 = vpack.c.b16 %v2241, %v2237
        %v2610 = vpack.c.b16 %v2246, %v2242
        %v2611 = vpack.c.b16 %v2247, %v2243
        %v2612 = vpack.c.b16 %v2248, %v2244
        %v2613 = vpack.c.b16 %v2249, %v2245
        %v2614 = vpack.c.b16 %v2254, %v2250
        %v2615 = vpack.c.b16 %v2255, %v2251
        %v2616 = vpack.c.b16 %v2256, %v2252
        %v2617 = vpack.c.b16 %v2257, %v2253
        %v2618 = vpack.c.b16 %v2262, %v2258
        %v2619 = vpack.c.b16 %v2263, %v2259
        %v2620 = vpack.c.b16 %v2264, %v2260
        %v2621 = vpack.c.b16 %v2265, %v2261
        %v2622 = vpack.c.b16 %v2270, %v2266
        %v2623 = vpack.c.b16 %v2271, %v2267
        %v2624 = vpack.c.b16 %v2272, %v2268
        %v2625 = vpack.c.b16 %v2273, %v2269
        %v2626 = vpack.c.b16 %v2278, %v2274
        %v2627 = vpack.c.b16 %v2279, %v2275
        %v2628 = vpack.c.b16 %v2280, %v2276
        %v2629 = vpack.c.b16 %v2281, %v2277
        %v2630 = vpack.c.b16 %v2286, %v2282
        %v2631 = vpack.c.b16 %v2287, %v2283
        %v2632 = vpack.c.b16 %v2288, %v2284
        %v2633 = vpack.c.b16 %v2289, %v2285
        %v2634 = vpack.c.b16 %v2294, %v2290
        %v2635 = vpack.c.b16 %v2295, %v2291
        %v2636 = vpack.c.b16 %v2296, %v2292
        %v2637 = vpack.c.b16 %v2297, %v2293
        %v2638 = vpack.c.b16 %v2302, %v2298
        %v2639 = vpack.c.b16 %v2303, %v2299
        %v2640 = vpack.c.b16 %v2304, %v2300
        %v2641 = vpack.c.b16 %v2305, %v2301
        %v2642 = vpack.c.b16 %v2310, %v2306
        %v2643 = vpack.c.b16 %v2311, %v2307
        %v2644 = vpack.c.b16 %v2312, %v2308
        %v2645 = vpack.c.b16 %v2313, %v2309
        %v2646 = vpack.c.b16 %v2318, %v2314
        %v2647 = vpack.c.b16 %v2319, %v2315
        %v2648 = vpack.c.b16 %v2320, %v2316
        %v2649 = vpack.c.b16 %v2321, %v2317
        %v2650 = vpack.c.b16 %v2326, %v2322
        %v2651 = vpack.c.b16 %v2327, %v2323
        %v2652 = vpack.c.b16 %v2328, %v2324
        %v2653 = vpack.c.b16 %v2329, %v2325
        %v2654 = vpack.c.b16 %v2334, %v2330
        %v2655 = vpack.c.b16 %v2335, %v2331
        %v2656 = vpack.c.b16 %v2336, %v2332
        %v2657 = vpack.c.b16 %v2337, %v2333
        %v2658 = vpack.c.b16 %v2342, %v2338
        %v2659 = vpack.c.b16 %v2343, %v2339
        %v2660 = vpack.c.b16 %v2344, %v2340
        %v2661 = vpack.c.b16 %v2345, %v2341
        %v2662 = vpack.c.b16 %v2350, %v2346
        %v2663 = vpack.c.b16 %v2351, %v2347
        %v2664 = vpack.c.b16 %v2352, %v2348
        %v2665 = vpack.c.b16 %v2353, %v2349
        %v2666 = vpack.c.b16 %v2358, %v2354
        %v2667 = vpack.c.b16 %v2359, %v2355
        %v2668 = vpack.c.b16 %v2360, %v2356
        %v2669 = vpack.c.b16 %v2361, %v2357
        %v2670 = vpack.c.b16 %v2366, %v2362
        %v2671 = vpack.c.b16 %v2367, %v2363
        %v2672 = vpack.c.b16 %v2368, %v2364
        %v2673 = vpack.c.b16 %v2369, %v2365
        %v2674 = vpack.c.b16 %v2374, %v2370
        %v2675 = vpack.c.b16 %v2375, %v2371
        %v2676 = vpack.c.b16 %v2376, %v2372
        %v2677 = vpack.c.b16 %v2377, %v2373
        %v2678 = vpack.c.b16 %v2382, %v2378
        %v2679 = vpack.c.b16 %v2383, %v2379
        %v2680 = vpack.c.b16 %v2384, %v2380
        %v2681 = vpack.c.b16 %v2385, %v2381
        %v2682 = vpack.c.b16 %v2390, %v2386
        %v2683 = vpack.c.b16 %v2391, %v2387
        %v2684 = vpack.c.b16 %v2392, %v2388
        %v2685 = vpack.c.b16 %v2393, %v2389
        %v2686 = vpack.c.b16 %v2398, %v2394
        %v2687 = vpack.c.b16 %v2399, %v2395
        %v2688 = vpack.c.b16 %v2400, %v2396
        %v2689 = vpack.c.b16 %v2401, %v2397
        %v2690 = vpack.c.b16 %v2406, %v2402
        %v2691 = vpack.c.b16 %v2407, %v2403
        %v2692 = vpack.c.b16 %v2408, %v2404
        %v2693 = vpack.c.b16 %v2409, %v2405
        %v2694 = vpack.c.b16 %v2414, %v2410
        %v2695 = vpack.c.b16 %v2415, %v2411
        %v2696 = vpack.c.b16 %v2416, %v2412
        %v2697 = vpack.c.b16 %v2417, %v2413
        %v2698 = vpack.c.b16 %v2422, %v2418
        %v2699 = vpack.c.b16 %v2423, %v2419
        %v2700 = vpack.c.b16 %v2424, %v2420
        %v2701 = vpack.c.b16 %v2425, %v2421
        %v2702 = vpack.c.b16 %v2430, %v2426
        %v2703 = vpack.c.b16 %v2431, %v2427
        %v2704 = vpack.c.b16 %v2432, %v2428
        %v2705 = vpack.c.b16 %v2433, %v2429
        %v2706 = vpack.c.b16 %v2438, %v2434
        %v2707 = vpack.c.b16 %v2439, %v2435
        %v2708 = vpack.c.b16 %v2440, %v2436
        %v2709 = vpack.c.b16 %v2441, %v2437
        %v2710 = vpack.c.b16 %v2446, %v2442
        %v2711 = vpack.c.b16 %v2447, %v2443
        %v2712 = vpack.c.b16 %v2448, %v2444
        %v2713 = vpack.c.b16 %v2449, %v2445
        %v2714 = vpack.c.b16 %v2454, %v2450
        %v2715 = vpack.c.b16 %v2455, %v2451
        %v2716 = vpack.c.b16 %v2456, %v2452
        %v2717 = vpack.c.b16 %v2457, %v2453
        %v2718 = vpack.c.b16 %v2462, %v2458
        %v2719 = vpack.c.b16 %v2463, %v2459
        %v2720 = vpack.c.b16 %v2464, %v2460
        %v2721 = vpack.c.b16 %v2465, %v2461
        %2978 = vmatpush.bf16.msra.mxu0 %v2494
        %2979 = vmatpush.bf16.msra.mxu0 %v2490
        %2980 = vmatpush.bf16.msra.mxu0 %v2486
        %2981 = vmatpush.bf16.msra.mxu0 %v2482
        %2982 = vmatpush.bf16.msra.mxu0 %v2478
        %2983 = vmatpush.bf16.msra.mxu0 %v2474
        %2984 = vmatpush.bf16.msra.mxu0 %v2470
        %2985 = vmatpush.bf16.msra.mxu0 %v2466
        %2986 = vmatmul.bf16.gmra.mxu0 %v1434
        %v2987 = vpop.f32.mrf.mxu0
        %v2988 = vadd.f32 0.0, %v2987
        %v2989 = vpop.f32.mrf.mxu0
        %2990 = vdwg.mxu0
        %2991 = vmatpush.bf16.msra.mxu0 %v2526
        %2992 = vmatpush.bf16.msra.mxu0 %v2522
        %2993 = vmatpush.bf16.msra.mxu0 %v2518
        %2994 = vmatpush.bf16.msra.mxu0 %v2514
        %2995 = vmatpush.bf16.msra.mxu0 %v2510
        %2996 = vmatpush.bf16.msra.mxu0 %v2506
        %2997 = vmatpush.bf16.msra.mxu0 %v2502
        %2998 = vmatpush.bf16.msra.mxu0 %v2498
        %2999 = vmatmul.bf16.gmra.mxu0 %v1435
        %v3000 = vpop.f32.mrf.mxu0
        %v3001 = vadd.f32 %v2988, %v3000
        %v3002 = vpop.f32.mrf.mxu0
        %3003 = vdwg.mxu0
        %3004 = vmatpush.bf16.msra.mxu0 %v2558
        %3005 = vmatpush.bf16.msra.mxu0 %v2554
        %3006 = vmatpush.bf16.msra.mxu0 %v2550
        %3007 = vmatpush.bf16.msra.mxu0 %v2546
        %3008 = vmatpush.bf16.msra.mxu0 %v2542
        %3009 = vmatpush.bf16.msra.mxu0 %v2538
        %3010 = vmatpush.bf16.msra.mxu0 %v2534
        %3011 = vmatpush.bf16.msra.mxu0 %v2530
        %3012 = vmatmul.bf16.gmra.mxu0 %v1436
        %v3013 = vpop.f32.mrf.mxu0
        %v3014 = vadd.f32 %v3001, %v3013
        %v3015 = vpop.f32.mrf.mxu0
        %3016 = vdwg.mxu0
        %3017 = vmatpush.bf16.msra.mxu0 %v2590
        %3018 = vmatpush.bf16.msra.mxu0 %v2586
        %3019 = vmatpush.bf16.msra.mxu0 %v2582
        %3020 = vmatpush.bf16.msra.mxu0 %v2578
        %3021 = vmatpush.bf16.msra.mxu0 %v2574
        %3022 = vmatpush.bf16.msra.mxu0 %v2570
        %3023 = vmatpush.bf16.msra.mxu0 %v2566
        %3024 = vmatpush.bf16.msra.mxu0 %v2562
        %3025 = vmatmul.bf16.gmra.mxu0 %v1437
        %v3026 = vpop.f32.mrf.mxu0
        %v3027 = vadd.f32 %v3014, %v3026
        %v3028 = vpop.f32.mrf.mxu0
        %3029 = vdwg.mxu0
        %3030 = vmatpush.bf16.msra.mxu0 %v2622
        %3031 = vmatpush.bf16.msra.mxu0 %v2618
        %3032 = vmatpush.bf16.msra.mxu0 %v2614
        %3033 = vmatpush.bf16.msra.mxu0 %v2610
        %3034 = vmatpush.bf16.msra.mxu0 %v2606
        %3035 = vmatpush.bf16.msra.mxu0 %v2602
        %3036 = vmatpush.bf16.msra.mxu0 %v2598
        %3037 = vmatpush.bf16.msra.mxu0 %v2594
        %3038 = vmatmul.bf16.gmra.mxu0 %v1438
        %v3039 = vpop.f32.mrf.mxu0
        %v3040 = vadd.f32 %v3027, %v3039
        %v3041 = vpop.f32.mrf.mxu0
        %3042 = vdwg.mxu0
        %3043 = vmatpush.bf16.msra.mxu0 %v2654
        %3044 = vmatpush.bf16.msra.mxu0 %v2650
        %3045 = vmatpush.bf16.msra.mxu0 %v2646
        %3046 = vmatpush.bf16.msra.mxu0 %v2642
        %3047 = vmatpush.bf16.msra.mxu0 %v2638
        %3048 = vmatpush.bf16.msra.mxu0 %v2634
        %3049 = vmatpush.bf16.msra.mxu0 %v2630
        %3050 = vmatpush.bf16.msra.mxu0 %v2626
        %3051 = vmatmul.bf16.gmra.mxu0 %v1439
        %v3052 = vpop.f32.mrf.mxu0
        %v3053 = vadd.f32 %v3040, %v3052
        %v3054 = vpop.f32.mrf.mxu0
        %3055 = vdwg.mxu0
        %3056 = vmatpush.bf16.msra.mxu0 %v2686
        %3057 = vmatpush.bf16.msra.mxu0 %v2682
        %3058 = vmatpush.bf16.msra.mxu0 %v2678
        %3059 = vmatpush.bf16.msra.mxu0 %v2674
        %3060 = vmatpush.bf16.msra.mxu0 %v2670
        %3061 = vmatpush.bf16.msra.mxu0 %v2666
        %3062 = vmatpush.bf16.msra.mxu0 %v2662
        %3063 = vmatpush.bf16.msra.mxu0 %v2658
        %3064 = vmatmul.bf16.gmra.mxu0 %v1440
        %v3065 = vpop.f32.mrf.mxu0
        %v3066 = vadd.f32 %v3053, %v3065
        %v3067 = vpop.f32.mrf.mxu0
        %3068 = vdwg.mxu0
        %3069 = vmatpush.bf16.msra.mxu0 %v2718
        %3070 = vmatpush.bf16.msra.mxu0 %v2714
        %3071 = vmatpush.bf16.msra.mxu0 %v2710
        %3072 = vmatpush.bf16.msra.mxu0 %v2706
        %3073 = vmatpush.bf16.msra.mxu0 %v2702
        %3074 = vmatpush.bf16.msra.mxu0 %v2698
        %3075 = vmatpush.bf16.msra.mxu0 %v2694
        %3076 = vmatpush.bf16.msra.mxu0 %v2690
        %3077 = vmatmul.bf16.gmra.mxu0 %v1441
        %v3078 = vpop.f32.mrf.mxu0
        %v3079 = vadd.f32 %v3066, %v3078
        %v3080 = vpop.f32.mrf.mxu0
        %3081 = vdwg.mxu0
        %3082 = vmatpush.bf16.msra.mxu0 %v2495
        %3083 = vmatpush.bf16.msra.mxu0 %v2491
        %3084 = vmatpush.bf16.msra.mxu0 %v2487
        %3085 = vmatpush.bf16.msra.mxu0 %v2483
        %3086 = vmatpush.bf16.msra.mxu0 %v2479
        %3087 = vmatpush.bf16.msra.mxu0 %v2475
        %3088 = vmatpush.bf16.msra.mxu0 %v2471
        %3089 = vmatpush.bf16.msra.mxu0 %v2467
        %3090 = vmatmul.bf16.gmra.mxu0 %v1434
        %v3091 = vpop.f32.mrf.mxu0
        %v3092 = vadd.f32 0.0, %v3091
        %v3093 = vpop.f32.mrf.mxu0
        %3094 = vdwg.mxu0
        %3095 = vmatpush.bf16.msra.mxu0 %v2527
        %3096 = vmatpush.bf16.msra.mxu0 %v2523
        %3097 = vmatpush.bf16.msra.mxu0 %v2519
        %3098 = vmatpush.bf16.msra.mxu0 %v2515
        %3099 = vmatpush.bf16.msra.mxu0 %v2511
        %3100 = vmatpush.bf16.msra.mxu0 %v2507
        %3101 = vmatpush.bf16.msra.mxu0 %v2503
        %3102 = vmatpush.bf16.msra.mxu0 %v2499
        %3103 = vmatmul.bf16.gmra.mxu0 %v1435
        %v3104 = vpop.f32.mrf.mxu0
        %v3105 = vadd.f32 %v3092, %v3104
        %v3106 = vpop.f32.mrf.mxu0
        %3107 = vdwg.mxu0
        %3108 = vmatpush.bf16.msra.mxu0 %v2559
        %3109 = vmatpush.bf16.msra.mxu0 %v2555
        %3110 = vmatpush.bf16.msra.mxu0 %v2551
        %3111 = vmatpush.bf16.msra.mxu0 %v2547
        %3112 = vmatpush.bf16.msra.mxu0 %v2543
        %3113 = vmatpush.bf16.msra.mxu0 %v2539
        %3114 = vmatpush.bf16.msra.mxu0 %v2535
        %3115 = vmatpush.bf16.msra.mxu0 %v2531
        %3116 = vmatmul.bf16.gmra.mxu0 %v1436
        %v3117 = vpop.f32.mrf.mxu0
        %v3118 = vadd.f32 %v3105, %v3117
        %v3119 = vpop.f32.mrf.mxu0
        %3120 = vdwg.mxu0
        %3121 = vmatpush.bf16.msra.mxu0 %v2591
        %3122 = vmatpush.bf16.msra.mxu0 %v2587
        %3123 = vmatpush.bf16.msra.mxu0 %v2583
        %3124 = vmatpush.bf16.msra.mxu0 %v2579
        %3125 = vmatpush.bf16.msra.mxu0 %v2575
        %3126 = vmatpush.bf16.msra.mxu0 %v2571
        %3127 = vmatpush.bf16.msra.mxu0 %v2567
        %3128 = vmatpush.bf16.msra.mxu0 %v2563
        %3129 = vmatmul.bf16.gmra.mxu0 %v1437
        %v3130 = vpop.f32.mrf.mxu0
        %v3131 = vadd.f32 %v3118, %v3130
        %v3132 = vpop.f32.mrf.mxu0
        %3133 = vdwg.mxu0
        %3134 = vmatpush.bf16.msra.mxu0 %v2623
        %3135 = vmatpush.bf16.msra.mxu0 %v2619
        %3136 = vmatpush.bf16.msra.mxu0 %v2615
        %3137 = vmatpush.bf16.msra.mxu0 %v2611
        %3138 = vmatpush.bf16.msra.mxu0 %v2607
        %3139 = vmatpush.bf16.msra.mxu0 %v2603
        %3140 = vmatpush.bf16.msra.mxu0 %v2599
        %3141 = vmatpush.bf16.msra.mxu0 %v2595
        %3142 = vmatmul.bf16.gmra.mxu0 %v1438
        %v3143 = vpop.f32.mrf.mxu0
        %v3144 = vadd.f32 %v3131, %v3143
        %v3145 = vpop.f32.mrf.mxu0
        %3146 = vdwg.mxu0
        %3147 = vmatpush.bf16.msra.mxu0 %v2655
        %3148 = vmatpush.bf16.msra.mxu0 %v2651
        %3149 = vmatpush.bf16.msra.mxu0 %v2647
        %3150 = vmatpush.bf16.msra.mxu0 %v2643
        %3151 = vmatpush.bf16.msra.mxu0 %v2639
        %3152 = vmatpush.bf16.msra.mxu0 %v2635
        %3153 = vmatpush.bf16.msra.mxu0 %v2631
        %3154 = vmatpush.bf16.msra.mxu0 %v2627
        %3155 = vmatmul.bf16.gmra.mxu0 %v1439
        %v3156 = vpop.f32.mrf.mxu0
        %v3157 = vadd.f32 %v3144, %v3156
        %v3158 = vpop.f32.mrf.mxu0
        %3159 = vdwg.mxu0
        %3160 = vmatpush.bf16.msra.mxu0 %v2687
        %3161 = vmatpush.bf16.msra.mxu0 %v2683
        %3162 = vmatpush.bf16.msra.mxu0 %v2679
        %3163 = vmatpush.bf16.msra.mxu0 %v2675
        %3164 = vmatpush.bf16.msra.mxu0 %v2671
        %3165 = vmatpush.bf16.msra.mxu0 %v2667
        %3166 = vmatpush.bf16.msra.mxu0 %v2663
        %3167 = vmatpush.bf16.msra.mxu0 %v2659
        %3168 = vmatmul.bf16.gmra.mxu0 %v1440
        %v3169 = vpop.f32.mrf.mxu0
        %v3170 = vadd.f32 %v3157, %v3169
        %v3171 = vpop.f32.mrf.mxu0
        %3172 = vdwg.mxu0
        %3173 = vmatpush.bf16.msra.mxu0 %v2719
        %3174 = vmatpush.bf16.msra.mxu0 %v2715
        %3175 = vmatpush.bf16.msra.mxu0 %v2711
        %3176 = vmatpush.bf16.msra.mxu0 %v2707
        %3177 = vmatpush.bf16.msra.mxu0 %v2703
        %3178 = vmatpush.bf16.msra.mxu0 %v2699
        %3179 = vmatpush.bf16.msra.mxu0 %v2695
        %3180 = vmatpush.bf16.msra.mxu0 %v2691
        %3181 = vmatmul.bf16.gmra.mxu0 %v1441
        %v3182 = vpop.f32.mrf.mxu0
        %v3183 = vadd.f32 %v3170, %v3182
        %v3184 = vpop.f32.mrf.mxu0
        %3185 = vdwg.mxu0
        %3186 = vmatpush.bf16.msra.mxu0 %v2496
        %3187 = vmatpush.bf16.msra.mxu0 %v2492
        %3188 = vmatpush.bf16.msra.mxu0 %v2488
        %3189 = vmatpush.bf16.msra.mxu0 %v2484
        %3190 = vmatpush.bf16.msra.mxu0 %v2480
        %3191 = vmatpush.bf16.msra.mxu0 %v2476
        %3192 = vmatpush.bf16.msra.mxu0 %v2472
        %3193 = vmatpush.bf16.msra.mxu0 %v2468
        %3194 = vmatmul.bf16.gmra.mxu0 %v1434
        %v3195 = vpop.f32.mrf.mxu0
        %v3196 = vadd.f32 0.0, %v3195
        %v3197 = vpop.f32.mrf.mxu0
        %3198 = vdwg.mxu0
        %3199 = vmatpush.bf16.msra.mxu0 %v2528
        %3200 = vmatpush.bf16.msra.mxu0 %v2524
        %3201 = vmatpush.bf16.msra.mxu0 %v2520
        %3202 = vmatpush.bf16.msra.mxu0 %v2516
        %3203 = vmatpush.bf16.msra.mxu0 %v2512
        %3204 = vmatpush.bf16.msra.mxu0 %v2508
        %3205 = vmatpush.bf16.msra.mxu0 %v2504
        %3206 = vmatpush.bf16.msra.mxu0 %v2500
        %3207 = vmatmul.bf16.gmra.mxu0 %v1435
        %v3208 = vpop.f32.mrf.mxu0
        %v3209 = vadd.f32 %v3196, %v3208
        %v3210 = vpop.f32.mrf.mxu0
        %3211 = vdwg.mxu0
        %3212 = vmatpush.bf16.msra.mxu0 %v2560
        %3213 = vmatpush.bf16.msra.mxu0 %v2556
        %3214 = vmatpush.bf16.msra.mxu0 %v2552
        %3215 = vmatpush.bf16.msra.mxu0 %v2548
        %3216 = vmatpush.bf16.msra.mxu0 %v2544
        %3217 = vmatpush.bf16.msra.mxu0 %v2540
        %3218 = vmatpush.bf16.msra.mxu0 %v2536
        %3219 = vmatpush.bf16.msra.mxu0 %v2532
        %3220 = vmatmul.bf16.gmra.mxu0 %v1436
        %v3221 = vpop.f32.mrf.mxu0
        %v3222 = vadd.f32 %v3209, %v3221
        %v3223 = vpop.f32.mrf.mxu0
        %3224 = vdwg.mxu0
        %3225 = vmatpush.bf16.msra.mxu0 %v2592
        %3226 = vmatpush.bf16.msra.mxu0 %v2588
        %3227 = vmatpush.bf16.msra.mxu0 %v2584
        %3228 = vmatpush.bf16.msra.mxu0 %v2580
        %3229 = vmatpush.bf16.msra.mxu0 %v2576
        %3230 = vmatpush.bf16.msra.mxu0 %v2572
        %3231 = vmatpush.bf16.msra.mxu0 %v2568
        %3232 = vmatpush.bf16.msra.mxu0 %v2564
        %3233 = vmatmul.bf16.gmra.mxu0 %v1437
        %v3234 = vpop.f32.mrf.mxu0
        %v3235 = vadd.f32 %v3222, %v3234
        %v3236 = vpop.f32.mrf.mxu0
        %3237 = vdwg.mxu0
        %3238 = vmatpush.bf16.msra.mxu0 %v2624
        %3239 = vmatpush.bf16.msra.mxu0 %v2620
        %3240 = vmatpush.bf16.msra.mxu0 %v2616
        %3241 = vmatpush.bf16.msra.mxu0 %v2612
        %3242 = vmatpush.bf16.msra.mxu0 %v2608
        %3243 = vmatpush.bf16.msra.mxu0 %v2604
        %3244 = vmatpush.bf16.msra.mxu0 %v2600
        %3245 = vmatpush.bf16.msra.mxu0 %v2596
        %3246 = vmatmul.bf16.gmra.mxu0 %v1438
        %v3247 = vpop.f32.mrf.mxu0
        %v3248 = vadd.f32 %v3235, %v3247
        %v3249 = vpop.f32.mrf.mxu0
        %3250 = vdwg.mxu0
        %3251 = vmatpush.bf16.msra.mxu0 %v2656
        %3252 = vmatpush.bf16.msra.mxu0 %v2652
        %3253 = vmatpush.bf16.msra.mxu0 %v2648
        %3254 = vmatpush.bf16.msra.mxu0 %v2644
        %3255 = vmatpush.bf16.msra.mxu0 %v2640
        %3256 = vmatpush.bf16.msra.mxu0 %v2636
        %3257 = vmatpush.bf16.msra.mxu0 %v2632
        %3258 = vmatpush.bf16.msra.mxu0 %v2628
        %3259 = vmatmul.bf16.gmra.mxu0 %v1439
        %v3260 = vpop.f32.mrf.mxu0
        %v3261 = vadd.f32 %v3248, %v3260
        %v3262 = vpop.f32.mrf.mxu0
        %3263 = vdwg.mxu0
        %3264 = vmatpush.bf16.msra.mxu0 %v2688
        %3265 = vmatpush.bf16.msra.mxu0 %v2684
        %3266 = vmatpush.bf16.msra.mxu0 %v2680
        %3267 = vmatpush.bf16.msra.mxu0 %v2676
        %3268 = vmatpush.bf16.msra.mxu0 %v2672
        %3269 = vmatpush.bf16.msra.mxu0 %v2668
        %3270 = vmatpush.bf16.msra.mxu0 %v2664
        %3271 = vmatpush.bf16.msra.mxu0 %v2660
        %3272 = vmatmul.bf16.gmra.mxu0 %v1440
        %v3273 = vpop.f32.mrf.mxu0
        %v3274 = vadd.f32 %v3261, %v3273
        %v3275 = vpop.f32.mrf.mxu0
        %3276 = vdwg.mxu0
        %3277 = vmatpush.bf16.msra.mxu0 %v2720
        %3278 = vmatpush.bf16.msra.mxu0 %v2716
        %3279 = vmatpush.bf16.msra.mxu0 %v2712
        %3280 = vmatpush.bf16.msra.mxu0 %v2708
        %3281 = vmatpush.bf16.msra.mxu0 %v2704
        %3282 = vmatpush.bf16.msra.mxu0 %v2700
        %3283 = vmatpush.bf16.msra.mxu0 %v2696
        %3284 = vmatpush.bf16.msra.mxu0 %v2692
        %3285 = vmatmul.bf16.gmra.mxu0 %v1441
        %v3286 = vpop.f32.mrf.mxu0
        %v3287 = vadd.f32 %v3274, %v3286
        %v3288 = vpop.f32.mrf.mxu0
        %3289 = vdwg.mxu0
        %3290 = vmatpush.bf16.msra.mxu0 %v2497
        %3291 = vmatpush.bf16.msra.mxu0 %v2493
        %3292 = vmatpush.bf16.msra.mxu0 %v2489
        %3293 = vmatpush.bf16.msra.mxu0 %v2485
        %3294 = vmatpush.bf16.msra.mxu0 %v2481
        %3295 = vmatpush.bf16.msra.mxu0 %v2477
        %3296 = vmatpush.bf16.msra.mxu0 %v2473
        %3297 = vmatpush.bf16.msra.mxu0 %v2469
        %3298 = vmatmul.bf16.gmra.mxu0 %v1434
        %v3299 = vpop.f32.mrf.mxu0
        %v3300 = vadd.f32 0.0, %v3299
        %v3301 = vpop.f32.mrf.mxu0
        %3302 = vdwg.mxu0
        %3303 = vmatpush.bf16.msra.mxu0 %v2529
        %3304 = vmatpush.bf16.msra.mxu0 %v2525
        %3305 = vmatpush.bf16.msra.mxu0 %v2521
        %3306 = vmatpush.bf16.msra.mxu0 %v2517
        %3307 = vmatpush.bf16.msra.mxu0 %v2513
        %3308 = vmatpush.bf16.msra.mxu0 %v2509
        %3309 = vmatpush.bf16.msra.mxu0 %v2505
        %3310 = vmatpush.bf16.msra.mxu0 %v2501
        %3311 = vmatmul.bf16.gmra.mxu0 %v1435
        %v3312 = vpop.f32.mrf.mxu0
        %v3313 = vadd.f32 %v3300, %v3312
        %v3314 = vpop.f32.mrf.mxu0
        %3315 = vdwg.mxu0
        %3316 = vmatpush.bf16.msra.mxu0 %v2561
        %3317 = vmatpush.bf16.msra.mxu0 %v2557
        %3318 = vmatpush.bf16.msra.mxu0 %v2553
        %3319 = vmatpush.bf16.msra.mxu0 %v2549
        %3320 = vmatpush.bf16.msra.mxu0 %v2545
        %3321 = vmatpush.bf16.msra.mxu0 %v2541
        %3322 = vmatpush.bf16.msra.mxu0 %v2537
        %3323 = vmatpush.bf16.msra.mxu0 %v2533
        %3324 = vmatmul.bf16.gmra.mxu0 %v1436
        %v3325 = vpop.f32.mrf.mxu0
        %v3326 = vadd.f32 %v3313, %v3325
        %v3327 = vpop.f32.mrf.mxu0
        %3328 = vdwg.mxu0
        %3329 = vmatpush.bf16.msra.mxu0 %v2593
        %3330 = vmatpush.bf16.msra.mxu0 %v2589
        %3331 = vmatpush.bf16.msra.mxu0 %v2585
        %3332 = vmatpush.bf16.msra.mxu0 %v2581
        %3333 = vmatpush.bf16.msra.mxu0 %v2577
        %3334 = vmatpush.bf16.msra.mxu0 %v2573
        %3335 = vmatpush.bf16.msra.mxu0 %v2569
        %3336 = vmatpush.bf16.msra.mxu0 %v2565
        %3337 = vmatmul.bf16.gmra.mxu0 %v1437
        %v3338 = vpop.f32.mrf.mxu0
        %v3339 = vadd.f32 %v3326, %v3338
        %v3340 = vpop.f32.mrf.mxu0
        %3341 = vdwg.mxu0
        %3342 = vmatpush.bf16.msra.mxu0 %v2625
        %3343 = vmatpush.bf16.msra.mxu0 %v2621
        %3344 = vmatpush.bf16.msra.mxu0 %v2617
        %3345 = vmatpush.bf16.msra.mxu0 %v2613
        %3346 = vmatpush.bf16.msra.mxu0 %v2609
        %3347 = vmatpush.bf16.msra.mxu0 %v2605
        %3348 = vmatpush.bf16.msra.mxu0 %v2601
        %3349 = vmatpush.bf16.msra.mxu0 %v2597
        %3350 = vmatmul.bf16.gmra.mxu0 %v1438
        %v3351 = vpop.f32.mrf.mxu0
        %v3352 = vadd.f32 %v3339, %v3351
        %v3353 = vpop.f32.mrf.mxu0
        %3354 = vdwg.mxu0
        %3355 = vmatpush.bf16.msra.mxu0 %v2657
        %3356 = vmatpush.bf16.msra.mxu0 %v2653
        %3357 = vmatpush.bf16.msra.mxu0 %v2649
        %3358 = vmatpush.bf16.msra.mxu0 %v2645
        %3359 = vmatpush.bf16.msra.mxu0 %v2641
        %3360 = vmatpush.bf16.msra.mxu0 %v2637
        %3361 = vmatpush.bf16.msra.mxu0 %v2633
        %3362 = vmatpush.bf16.msra.mxu0 %v2629
        %3363 = vmatmul.bf16.gmra.mxu0 %v1439
        %v3364 = vpop.f32.mrf.mxu0
        %v3365 = vadd.f32 %v3352, %v3364
        %v3366 = vpop.f32.mrf.mxu0
        %3367 = vdwg.mxu0
        %3368 = vmatpush.bf16.msra.mxu0 %v2689
        %3369 = vmatpush.bf16.msra.mxu0 %v2685
        %3370 = vmatpush.bf16.msra.mxu0 %v2681
        %3371 = vmatpush.bf16.msra.mxu0 %v2677
        %3372 = vmatpush.bf16.msra.mxu0 %v2673
        %3373 = vmatpush.bf16.msra.mxu0 %v2669
        %3374 = vmatpush.bf16.msra.mxu0 %v2665
        %3375 = vmatpush.bf16.msra.mxu0 %v2661
        %3376 = vmatmul.bf16.gmra.mxu0 %v1440
        %v3377 = vpop.f32.mrf.mxu0
        %v3378 = vadd.f32 %v3365, %v3377
        %v3379 = vpop.f32.mrf.mxu0
        %3380 = vdwg.mxu0
        %3381 = vmatpush.bf16.msra.mxu0 %v2721
        %3382 = vmatpush.bf16.msra.mxu0 %v2717
        %3383 = vmatpush.bf16.msra.mxu0 %v2713
        %3384 = vmatpush.bf16.msra.mxu0 %v2709
        %3385 = vmatpush.bf16.msra.mxu0 %v2705
        %3386 = vmatpush.bf16.msra.mxu0 %v2701
        %3387 = vmatpush.bf16.msra.mxu0 %v2697
        %3388 = vmatpush.bf16.msra.mxu0 %v2693
        %3389 = vmatmul.bf16.gmra.mxu0 %v1441
        %v3390 = vpop.f32.mrf.mxu0
        %v3391 = vadd.f32 %v3378, %v3390
        %v3392 = vpop.f32.mrf.mxu0
        %3393 = vdwg.mxu0
        %3394 = vrot.lane.b32.xlu0 %v3079, 1
        %v3395 = vpop.permute.xlu0 %3394
        %3396 = vrot.lane.b32.xlu0 %v3183, 1
        %v3397 = vpop.permute.xlu0 %3396
        %3398 = vrot.lane.b32.xlu0 %v3287, 1
        %v3399 = vpop.permute.xlu0 %3398
        %3400 = vrot.lane.b32.xlu0 %v3391, 1
        %v3401 = vpop.permute.xlu0 %3400
        %v3402 = vsel %vm694, %v3399, %v3401
        %v3403 = vsel %vm694, %v3397, %v3399
        %v3404 = vsel %vm694, %v3395, %v3397
        %v3405 = vsel %vm694, %v3401, %v3395
        %vm3406 = vcmp.lt.s32.totalorder %v390, 0
        %v3407 = vsub.s32 0, %v390
        %v3408 = vsel %vm3406, %v3407, %v390
        %v3409 = vshrl.u32 %v3408, 5
        %v3410 = vand.u32 %v3408, 31
        %v3411 = vsub.s32 0, %v3410
        %v3412 = vsel %vm3406, %v3411, %v3410
        %vm3413 = vcmp.lt.s32.totalorder %v400, 0
        %v3414 = vsub.s32 0, %v400
        %v3415 = vsel %vm3413, %v3414, %v400
        %v3416 = vshrl.u32 %v3415, 5
        %v3417 = vand.u32 %v3415, 31
        %v3418 = vsub.s32 0, %v3417
        %v3419 = vsel %vm3413, %v3418, %v3417
        %vm3420 = vcmp.lt.s32.totalorder %v401, 0
        %v3421 = vsub.s32 0, %v401
        %v3422 = vsel %vm3420, %v3421, %v401
        %v3423 = vshrl.u32 %v3422, 5
        %v3424 = vand.u32 %v3422, 31
        %v3425 = vsub.s32 0, %v3424
        %v3426 = vsel %vm3420, %v3425, %v3424
        %vm3427 = vcmp.lt.s32.totalorder %v402, 0
        %v3428 = vsub.s32 0, %v402
        %v3429 = vsel %vm3427, %v3428, %v402
        %v3430 = vshrl.u32 %v3429, 5
        %v3431 = vand.u32 %v3429, 31
        %v3432 = vsub.s32 0, %v3431
        %v3433 = vsel %vm3427, %v3432, %v3431
        %vm3434 = vcmp.ne.s32.totalorder %v3412, 0
        %vm3435 = vcmp.ne.s32.totalorder %v3419, 0
        %vm3436 = vcmp.ne.s32.totalorder %v3426, 0
        %vm3437 = vcmp.ne.s32.totalorder %v3433, 0
        %vm3438 = vcmp.lt.s32.totalorder %v3412, 0
        %vm3439 = vcmp.lt.s32.totalorder %v3419, 0
        %vm3440 = vcmp.lt.s32.totalorder %v3426, 0
        %vm3441 = vcmp.lt.s32.totalorder %v3433, 0
        %vm3442 = vmand %vm3438, %vm3434
        %vm3443 = vmand %vm3439, %vm3435
        %vm3444 = vmand %vm3440, %vm3436
        %vm3445 = vmand %vm3441, %vm3437
        %v3446 = vadd.s32 %v3412, 32
        %v3447 = vadd.s32 %v3419, 32
        %v3448 = vadd.s32 %v3426, 32
        %v3449 = vadd.s32 %v3433, 32
        %v3450 = vsel %vm3442, %v3446, %v3412
        %v3451 = vsel %vm3443, %v3447, %v3419
        %v3452 = vsel %vm3444, %v3448, %v3426
        %v3453 = vsel %vm3445, %v3449, %v3433
        %vm3454 = vcmp.ge.s32.totalorder %v3450, 1
        %vm3455 = vcmp.ge.s32.totalorder %v3451, 1
        %vm3456 = vcmp.ge.s32.totalorder %v3452, 1
        %vm3457 = vcmp.ge.s32.totalorder %v3453, 1
        %vm3458 = vcmp.lt.s32.totalorder %v3450, 32
        %vm3459 = vcmp.lt.s32.totalorder %v3451, 32
        %vm3460 = vcmp.lt.s32.totalorder %v3452, 32
        %vm3461 = vcmp.lt.s32.totalorder %v3453, 32
        %vm3462 = vmand %vm3454, %vm3458
        %vm3463 = vmand %vm3455, %vm3459
        %vm3464 = vmand %vm3456, %vm3460
        %vm3465 = vmand %vm3457, %vm3461
        %v3466 = vsel %vm3462, 1, 0
        %v3467 = vsel %vm3463, 1, 0
        %v3468 = vsel %vm3464, 1, 0
        %v3469 = vsel %vm3465, 1, 0
        %vm3470 = vcmp.eq.s32.totalorder %v3466, 1
        %vm3471 = vcmp.eq.s32.totalorder %v3467, 1
        %vm3472 = vcmp.eq.s32.totalorder %v3468, 1
        %vm3473 = vcmp.eq.s32.totalorder %v3469, 1
        %v3474 = vsel %vm3470, %v3405, 0.0
        %v3475 = vsel %vm3471, %v3404, 0.0
        %v3476 = vsel %vm3472, %v3403, 0.0
        %v3477 = vsel %vm3473, %v3402, 0.0
        %v3478 = vpack.c.bf16 %v3475, %v3474
        %v3479 = vpack.c.bf16 %v3477, %v3476
        %3480 = vst [vmem:[#allocation2] sm:$0xff] %v3478
        %3481 = vst [vmem:[#allocation2 + $0x8] sm:$0xff] %v3479
        %v3482 = vpack.c.bf16 %v3183, %v3079
        %v3483 = vpack.c.bf16 %v3391, %v3287
        %3484 = vst [vmem:[#allocation2 + $0x20] sm:$0xff] %v3482
        %3485 = vst [vmem:[#allocation2 + $0x28] sm:$0xff] %v3483
        %3486 = vrot.lane.b32.xlu0 %v3079, 127
        %v3487 = vpop.permute.xlu0 %3486
        %3488 = vrot.lane.b32.xlu0 %v3183, 127
        %v3489 = vpop.permute.xlu0 %3488
        %3490 = vrot.lane.b32.xlu0 %v3287, 127
        %v3491 = vpop.permute.xlu0 %3490
        %3492 = vrot.lane.b32.xlu0 %v3391, 127
        %v3493 = vpop.permute.xlu0 %3492
        %v3494 = vsel %vm821, %v3491, %v3493
        %v3495 = vsel %vm821, %v3489, %v3491
        %v3496 = vsel %vm821, %v3487, %v3489
        %v3497 = vsel %vm821, %v3493, %v3487
        %vm3498 = vcmp.ge.s32.totalorder %v3450, 0
        %vm3499 = vcmp.ge.s32.totalorder %v3451, 0
        %vm3500 = vcmp.ge.s32.totalorder %v3452, 0
        %vm3501 = vcmp.ge.s32.totalorder %v3453, 0
        %vm3502 = vcmp.lt.s32.totalorder %v3450, 31
        %vm3503 = vcmp.lt.s32.totalorder %v3451, 31
        %vm3504 = vcmp.lt.s32.totalorder %v3452, 31
        %vm3505 = vcmp.lt.s32.totalorder %v3453, 31
        %vm3506 = vmand %vm3498, %vm3502
        %vm3507 = vmand %vm3499, %vm3503
        %vm3508 = vmand %vm3500, %vm3504
        %vm3509 = vmand %vm3501, %vm3505
        %v3510 = vsel %vm3506, 1, 0
        %v3511 = vsel %vm3507, 1, 0
        %v3512 = vsel %vm3508, 1, 0
        %v3513 = vsel %vm3509, 1, 0
        %vm3514 = vcmp.eq.s32.totalorder %v3510, 1
        %vm3515 = vcmp.eq.s32.totalorder %v3511, 1
        %vm3516 = vcmp.eq.s32.totalorder %v3512, 1
        %vm3517 = vcmp.eq.s32.totalorder %v3513, 1
        %v3518 = vsel %vm3514, %v3496, 0.0
        %v3519 = vsel %vm3515, %v3495, 0.0
        %v3520 = vsel %vm3516, %v3494, 0.0
        %v3521 = vsel %vm3517, %v3497, 0.0
        %v3522 = vpack.c.bf16 %v3519, %v3518
        %v3523 = vpack.c.bf16 %v3521, %v3520
        %3524 = vst [vmem:[#allocation2 + $0x40] sm:$0xff] %v3522
        %3525 = vst [vmem:[#allocation2 + $0x48] sm:$0xff] %v3523
        %s3526 = scalar_lea.vmem %s1, 8
        %v3527 = vld [vmem:[%s3526] sm:$0xf]
        %v3528 = vld [vmem:[#allocation2] sm:$0xff]
        %v3529 = vld [vmem:[#allocation2 + $0x8] sm:$0xff]
        %v3530 = vld [vmem:[#allocation2 + $0x20] sm:$0xff]
        %v3531 = vld [vmem:[#allocation2 + $0x28] sm:$0xff]
        %v3532 = vld [vmem:[#allocation2 + $0x40] sm:$0xff]
        %v3533 = vld [vmem:[#allocation2 + $0x48] sm:$0xff]
        %v3534 = vld [vmem:[#allocation2 + $0x60] sm:$0xff]
        %v3535 = vld [vmem:[#allocation2 + $0x68] sm:$0xff]
        %v3536 = vld [vmem:[#allocation2 + $0x80] sm:$0xff]
        %v3537 = vld [vmem:[#allocation2 + $0x88] sm:$0xff]
        %v3538 = vld [vmem:[#allocation2 + $0xa0] sm:$0xff]
        %v3539 = vld [vmem:[#allocation2 + $0xa8] sm:$0xff]
        %v3540 = vld [vmem:[#allocation2 + $0xc0] sm:$0xff]
        %v3541 = vld [vmem:[#allocation2 + $0xc8] sm:$0xff]
        %v3542 = vld [vmem:[%s2] sm:$0xff]
        %3544 = vset.pattern.permute.xlu0 1
        %3545 = vperm.xlu0 %3544, %v3542
        %v3546 = vpop.permute.xlu0 %3545
        %v3562 = vunpack.c.l.b16 %v3528
        %v3563 = vunpack.c.h.b16 %v3528
        %v3564 = vunpack.c.l.b16 %v3529
        %v3565 = vunpack.c.h.b16 %v3529
        %v3566 = vunpack.c.l.b16 %v3530
        %v3567 = vunpack.c.h.b16 %v3530
        %v3568 = vunpack.c.l.b16 %v3531
        %v3569 = vunpack.c.h.b16 %v3531
        %v3570 = vunpack.c.l.b16 %v3532
        %v3571 = vunpack.c.h.b16 %v3532
        %v3572 = vunpack.c.l.b16 %v3533
        %v3573 = vunpack.c.h.b16 %v3533
        %v3574 = vunpack.c.l.b16 %v3534
        %v3575 = vunpack.c.h.b16 %v3534
        %v3576 = vunpack.c.l.b16 %v3535
        %v3577 = vunpack.c.h.b16 %v3535
        %v3578 = vunpack.c.l.b16 %v3536
        %v3579 = vunpack.c.h.b16 %v3536
        %v3580 = vunpack.c.l.b16 %v3537
        %v3581 = vunpack.c.h.b16 %v3537
        %v3582 = vunpack.c.l.b16 %v3538
        %v3583 = vunpack.c.h.b16 %v3538
        %v3584 = vunpack.c.l.b16 %v3539
        %v3585 = vunpack.c.h.b16 %v3539
        %v3586 = vunpack.c.l.b16 %v3540
        %v3587 = vunpack.c.h.b16 %v3540
        %v3588 = vunpack.c.l.b16 %v3541
        %v3589 = vunpack.c.h.b16 %v3541
        %v3590 = vpack.c.b16 %v3566, %v3562
        %v3591 = vpack.c.b16 %v3567, %v3563
        %v3592 = vpack.c.b16 %v3568, %v3564
        %v3593 = vpack.c.b16 %v3569, %v3565
        %v3594 = vpack.c.b16 %v3574, %v3570
        %v3595 = vpack.c.b16 %v3575, %v3571
        %v3596 = vpack.c.b16 %v3576, %v3572
        %v3597 = vpack.c.b16 %v3577, %v3573
        %v3598 = vpack.c.b16 %v3582, %v3578
        %v3599 = vpack.c.b16 %v3583, %v3579
        %v3600 = vpack.c.b16 %v3584, %v3580
        %v3601 = vpack.c.b16 %v3585, %v3581
        %v3602 = vpack.c.b16 %v3586, %v3586
        %v3603 = vpack.c.b16 %v3587, %v3587
        %v3604 = vpack.c.b16 %v3588, %v3588
        %v3605 = vpack.c.b16 %v3589, %v3589
        %v3619 = vsel %vm1253, %v3527, 0
        %v3622 = vsel %vm1257, %v3602, 0
        %v3625 = vsel %vm1257, %v3603, 0
        %v3628 = vsel %vm1257, %v3604, 0
        %v3631 = vsel %vm1257, %v3605, 0
        %3633 = vmatpush.bf16.msra.mxu0 0
        %3634 = vmatpush.bf16.msra.mxu0 0
        %3635 = vmatpush.bf16.msra.mxu0 0
        %3636 = vmatpush.bf16.msra.mxu0 0
        %3637 = vmatpush.bf16.msra.mxu0 %v3622
        %3638 = vmatpush.bf16.msra.mxu0 %v3598
        %3639 = vmatpush.bf16.msra.mxu0 %v3594
        %3640 = vmatpush.bf16.msra.mxu0 %v3590
        %3641 = vmatmul.bf16.gmra.mxu0 %v3619
        %v3642 = vpop.f32.mrf.mxu0
        %v3643 = vadd.f32 %v3546, %v3642
        %v3644 = vpop.f32.mrf.mxu0
        %3645 = vdwg.mxu0
        %3646 = vmatpush.bf16.msra.mxu0 0
        %3647 = vmatpush.bf16.msra.mxu0 0
        %3648 = vmatpush.bf16.msra.mxu0 0
        %3649 = vmatpush.bf16.msra.mxu0 0
        %3650 = vmatpush.bf16.msra.mxu0 %v3625
        %3651 = vmatpush.bf16.msra.mxu0 %v3599
        %3652 = vmatpush.bf16.msra.mxu0 %v3595
        %3653 = vmatpush.bf16.msra.mxu0 %v3591
        %3654 = vmatmul.bf16.gmra.mxu0 %v3619
        %v3655 = vpop.f32.mrf.mxu0
        %v3656 = vadd.f32 %v3546, %v3655
        %v3657 = vpop.f32.mrf.mxu0
        %3658 = vdwg.mxu0
        %3659 = vmatpush.bf16.msra.mxu0 0
        %3660 = vmatpush.bf16.msra.mxu0 0
        %3661 = vmatpush.bf16.msra.mxu0 0
        %3662 = vmatpush.bf16.msra.mxu0 0
        %3663 = vmatpush.bf16.msra.mxu0 %v3628
        %3664 = vmatpush.bf16.msra.mxu0 %v3600
        %3665 = vmatpush.bf16.msra.mxu0 %v3596
        %3666 = vmatpush.bf16.msra.mxu0 %v3592
        %3667 = vmatmul.bf16.gmra.mxu0 %v3619
        %v3668 = vpop.f32.mrf.mxu0
        %v3669 = vadd.f32 %v3546, %v3668
        %v3670 = vpop.f32.mrf.mxu0
        %3671 = vdwg.mxu0
        %3672 = vmatpush.bf16.msra.mxu0 0
        %3673 = vmatpush.bf16.msra.mxu0 0
        %3674 = vmatpush.bf16.msra.mxu0 0
        %3675 = vmatpush.bf16.msra.mxu0 0
        %3676 = vmatpush.bf16.msra.mxu0 %v3631
        %3677 = vmatpush.bf16.msra.mxu0 %v3601
        %3678 = vmatpush.bf16.msra.mxu0 %v3597
        %3679 = vmatpush.bf16.msra.mxu0 %v3593
        %3680 = vmatmul.bf16.gmra.mxu0 %v3619
        %v3681 = vpop.f32.mrf.mxu0
        %v3682 = vadd.f32 %v3546, %v3681
        %v3683 = vpop.f32.mrf.mxu0
        %3684 = vdwg.mxu0
        %v3685 = vmax.f32 %v3643, 0.0
        %v3686 = vmax.f32 %v3656, 0.0
        %v3687 = vmax.f32 %v3669, 0.0
        %v3688 = vmax.f32 %v3682, 0.0
        %3689 = vrot.lane.b32.xlu0 %v3685, 1
        %v3690 = vpop.permute.xlu0 %3689
        %3691 = vrot.lane.b32.xlu0 %v3686, 1
        %v3692 = vpop.permute.xlu0 %3691
        %3693 = vrot.lane.b32.xlu0 %v3687, 1
        %v3694 = vpop.permute.xlu0 %3693
        %3695 = vrot.lane.b32.xlu0 %v3688, 1
        %v3696 = vpop.permute.xlu0 %3695
        %v3697 = vsel %vm694, %v3694, %v3696
        %v3698 = vsel %vm694, %v3692, %v3694
        %v3699 = vsel %vm694, %v3690, %v3692
        %v3700 = vsel %vm694, %v3696, %v3690
        %v3701 = vsel %vm3470, %v3700, 0.0
        %v3702 = vsel %vm3471, %v3699, 0.0
        %v3703 = vsel %vm3472, %v3698, 0.0
        %v3704 = vsel %vm3473, %v3697, 0.0
        %v3705 = vpack.c.bf16 %v3702, %v3701
        %v3706 = vpack.c.bf16 %v3704, %v3703
        %3707 = vst [vmem:[#allocation2] sm:$0xff] %v3705
        %3708 = vst [vmem:[#allocation2 + $0x8] sm:$0xff] %v3706
        %v3709 = vpack.c.bf16 %v3686, %v3685
        %v3710 = vpack.c.bf16 %v3688, %v3687
        %3711 = vst [vmem:[#allocation2 + $0x20] sm:$0xff] %v3709
        %3712 = vst [vmem:[#allocation2 + $0x28] sm:$0xff] %v3710
        %3713 = vrot.lane.b32.xlu0 %v3685, 127
        %v3714 = vpop.permute.xlu0 %3713
        %3715 = vrot.lane.b32.xlu0 %v3686, 127
        %v3716 = vpop.permute.xlu0 %3715
        %3717 = vrot.lane.b32.xlu0 %v3687, 127
        %v3718 = vpop.permute.xlu0 %3717
        %3719 = vrot.lane.b32.xlu0 %v3688, 127
        %v3720 = vpop.permute.xlu0 %3719
        %v3721 = vsel %vm821, %v3718, %v3720
        %v3722 = vsel %vm821, %v3716, %v3718
        %v3723 = vsel %vm821, %v3714, %v3716
        %v3724 = vsel %vm821, %v3720, %v3714
        %v3725 = vsel %vm3514, %v3723, 0.0
        %v3726 = vsel %vm3515, %v3722, 0.0
        %v3727 = vsel %vm3516, %v3721, 0.0
        %v3728 = vsel %vm3517, %v3724, 0.0
        %v3729 = vpack.c.bf16 %v3726, %v3725
        %v3730 = vpack.c.bf16 %v3728, %v3727
        %3731 = vst [vmem:[#allocation2 + $0x40] sm:$0xff] %v3729
        %3732 = vst [vmem:[#allocation2 + $0x48] sm:$0xff] %v3730
        %s3733 = scalar_lea.vmem %s1, 16
        %v3734 = vld [vmem:[%s3733] sm:$0xf]
        %v3735 = vld [vmem:[#allocation2] sm:$0xff]
        %v3736 = vld [vmem:[#allocation2 + $0x8] sm:$0xff]
        %v3737 = vld [vmem:[#allocation2 + $0x20] sm:$0xff]
        %v3738 = vld [vmem:[#allocation2 + $0x28] sm:$0xff]
        %v3739 = vld [vmem:[#allocation2 + $0x40] sm:$0xff]
        %v3740 = vld [vmem:[#allocation2 + $0x48] sm:$0xff]
        %v3741 = vld [vmem:[#allocation2 + $0x60] sm:$0xff]
        %v3742 = vld [vmem:[#allocation2 + $0x68] sm:$0xff]
        %v3743 = vld [vmem:[#allocation2 + $0x80] sm:$0xff]
        %v3744 = vld [vmem:[#allocation2 + $0x88] sm:$0xff]
        %v3745 = vld [vmem:[#allocation2 + $0xa0] sm:$0xff]
        %v3746 = vld [vmem:[#allocation2 + $0xa8] sm:$0xff]
        %v3747 = vld [vmem:[#allocation2 + $0xc0] sm:$0xff]
        %v3748 = vld [vmem:[#allocation2 + $0xc8] sm:$0xff]
        %v3749 = vld [vmem:[%s2] sm:$0xff]
        %3751 = vset.pattern.permute.xlu0 2
        %3752 = vperm.xlu0 %3751, %v3749
        %v3753 = vpop.permute.xlu0 %3752
        %v3769 = vunpack.c.l.b16 %v3735
        %v3770 = vunpack.c.h.b16 %v3735
        %v3771 = vunpack.c.l.b16 %v3736
        %v3772 = vunpack.c.h.b16 %v3736
        %v3773 = vunpack.c.l.b16 %v3737
        %v3774 = vunpack.c.h.b16 %v3737
        %v3775 = vunpack.c.l.b16 %v3738
        %v3776 = vunpack.c.h.b16 %v3738
        %v3777 = vunpack.c.l.b16 %v3739
        %v3778 = vunpack.c.h.b16 %v3739
        %v3779 = vunpack.c.l.b16 %v3740
        %v3780 = vunpack.c.h.b16 %v3740
        %v3781 = vunpack.c.l.b16 %v3741
        %v3782 = vunpack.c.h.b16 %v3741
        %v3783 = vunpack.c.l.b16 %v3742
        %v3784 = vunpack.c.h.b16 %v3742
        %v3785 = vunpack.c.l.b16 %v3743
        %v3786 = vunpack.c.h.b16 %v3743
        %v3787 = vunpack.c.l.b16 %v3744
        %v3788 = vunpack.c.h.b16 %v3744
        %v3789 = vunpack.c.l.b16 %v3745
        %v3790 = vunpack.c.h.b16 %v3745
        %v3791 = vunpack.c.l.b16 %v3746
        %v3792 = vunpack.c.h.b16 %v3746
        %v3793 = vunpack.c.l.b16 %v3747
        %v3794 = vunpack.c.h.b16 %v3747
        %v3795 = vunpack.c.l.b16 %v3748
        %v3796 = vunpack.c.h.b16 %v3748
        %v3797 = vpack.c.b16 %v3773, %v3769
        %v3798 = vpack.c.b16 %v3774, %v3770
        %v3799 = vpack.c.b16 %v3775, %v3771
        %v3800 = vpack.c.b16 %v3776, %v3772
        %v3801 = vpack.c.b16 %v3781, %v3777
        %v3802 = vpack.c.b16 %v3782, %v3778
        %v3803 = vpack.c.b16 %v3783, %v3779
        %v3804 = vpack.c.b16 %v3784, %v3780
        %v3805 = vpack.c.b16 %v3789, %v3785
        %v3806 = vpack.c.b16 %v3790, %v3786
        %v3807 = vpack.c.b16 %v3791, %v3787
        %v3808 = vpack.c.b16 %v3792, %v3788
        %v3809 = vpack.c.b16 %v3793, %v3793
        %v3810 = vpack.c.b16 %v3794, %v3794
        %v3811 = vpack.c.b16 %v3795, %v3795
        %v3812 = vpack.c.b16 %v3796, %v3796
        %v3826 = vsel %vm1253, %v3734, 0
        %v3829 = vsel %vm1257, %v3809, 0
        %v3832 = vsel %vm1257, %v3810, 0
        %v3835 = vsel %vm1257, %v3811, 0
        %v3838 = vsel %vm1257, %v3812, 0
        %3840 = vmatpush.bf16.msra.mxu0 0
        %3841 = vmatpush.bf16.msra.mxu0 0
        %3842 = vmatpush.bf16.msra.mxu0 0
        %3843 = vmatpush.bf16.msra.mxu0 0
        %3844 = vmatpush.bf16.msra.mxu0 %v3829
        %3845 = vmatpush.bf16.msra.mxu0 %v3805
        %3846 = vmatpush.bf16.msra.mxu0 %v3801
        %3847 = vmatpush.bf16.msra.mxu0 %v3797
        %3848 = vmatmul.bf16.gmra.mxu0 %v3826
        %v3849 = vpop.f32.mrf.mxu0
        %v3850 = vadd.f32 %v3753, %v3849
        %v3851 = vpop.f32.mrf.mxu0
        %3852 = vdwg.mxu0
        %3853 = vmatpush.bf16.msra.mxu0 0
        %3854 = vmatpush.bf16.msra.mxu0 0
        %3855 = vmatpush.bf16.msra.mxu0 0
        %3856 = vmatpush.bf16.msra.mxu0 0
        %3857 = vmatpush.bf16.msra.mxu0 %v3832
        %3858 = vmatpush.bf16.msra.mxu0 %v3806
        %3859 = vmatpush.bf16.msra.mxu0 %v3802
        %3860 = vmatpush.bf16.msra.mxu0 %v3798
        %3861 = vmatmul.bf16.gmra.mxu0 %v3826
        %v3862 = vpop.f32.mrf.mxu0
        %v3863 = vadd.f32 %v3753, %v3862
        %v3864 = vpop.f32.mrf.mxu0
        %3865 = vdwg.mxu0
        %3866 = vmatpush.bf16.msra.mxu0 0
        %3867 = vmatpush.bf16.msra.mxu0 0
        %3868 = vmatpush.bf16.msra.mxu0 0
        %3869 = vmatpush.bf16.msra.mxu0 0
        %3870 = vmatpush.bf16.msra.mxu0 %v3835
        %3871 = vmatpush.bf16.msra.mxu0 %v3807
        %3872 = vmatpush.bf16.msra.mxu0 %v3803
        %3873 = vmatpush.bf16.msra.mxu0 %v3799
        %3874 = vmatmul.bf16.gmra.mxu0 %v3826
        %v3875 = vpop.f32.mrf.mxu0
        %v3876 = vadd.f32 %v3753, %v3875
        %v3877 = vpop.f32.mrf.mxu0
        %3878 = vdwg.mxu0
        %3879 = vmatpush.bf16.msra.mxu0 0
        %3880 = vmatpush.bf16.msra.mxu0 0
        %3881 = vmatpush.bf16.msra.mxu0 0
        %3882 = vmatpush.bf16.msra.mxu0 0
        %3883 = vmatpush.bf16.msra.mxu0 %v3838
        %3884 = vmatpush.bf16.msra.mxu0 %v3808
        %3885 = vmatpush.bf16.msra.mxu0 %v3804
        %3886 = vmatpush.bf16.msra.mxu0 %v3800
        %3887 = vmatmul.bf16.gmra.mxu0 %v3826
        %v3888 = vpop.f32.mrf.mxu0
        %v3889 = vadd.f32 %v3753, %v3888
        %v3890 = vpop.f32.mrf.mxu0
        %3891 = vdwg.mxu0
        %v3892 = vadd.f32 %v3850, %v3079
        %v3893 = vadd.f32 %v3863, %v3183
        %v3894 = vadd.f32 %v3876, %v3287
        %v3895 = vadd.f32 %v3889, %v3391
        %3896 = vset.pattern.permute.xlu0 3
        %3897 = vperm.xlu0 %3896, %v3749
        %v3898 = vpop.permute.xlu0 %3897
        %v3900 = vmul.f32 %v3892, %v3898
        %v3901 = vmul.f32 %v3893, %v3898
        %v3902 = vmul.f32 %v3894, %v3898
        %v3903 = vmul.f32 %v3895, %v3898
        %3904 = vset.pattern.permute.xlu0 4
        %3905 = vperm.xlu0 %3904, %v3749
        %v3906 = vpop.permute.xlu0 %3905
        %v3908 = vadd.f32 %v3900, %v3906
        %v3909 = vadd.f32 %v3901, %v3906
        %v3910 = vadd.f32 %v3902, %v3906
        %v3911 = vadd.f32 %v3903, %v3906
        %v3912 = vmax.f32 %v3908, 0.0
        %v3913 = vmax.f32 %v3909, 0.0
        %v3914 = vmax.f32 %v3910, 0.0
        %v3915 = vmax.f32 %v3911, 0.0
        %v3916 = vpack.c.bf16 %v3913, %v3912
        %v3917 = vpack.c.bf16 %v3915, %v3914
        %3918 = vst [vmem:[#allocation2] sm:$0xff] %v3916
        %3919 = vst [vmem:[#allocation2 + $0x8] sm:$0xff] %v3917
        %3920 = vrot.lane.b32.xlu0 %v3912, 127
        %v3921 = vpop.permute.xlu0 %3920
        %3922 = vrot.lane.b32.xlu0 %v3913, 127
        %v3923 = vpop.permute.xlu0 %3922
        %3924 = vrot.lane.b32.xlu0 %v3914, 127
        %v3925 = vpop.permute.xlu0 %3924
        %3926 = vrot.lane.b32.xlu0 %v3915, 127
        %v3927 = vpop.permute.xlu0 %3926
        %v3928 = vsel %vm821, %v3925, %v3927
        %v3929 = vsel %vm821, %v3923, %v3925
        %v3930 = vsel %vm821, %v3921, %v3923
        %v3931 = vsel %vm821, %v3927, %v3921
        %v3932 = vsel %vm3514, %v3930, 0.0
        %v3933 = vsel %vm3515, %v3929, 0.0
        %v3934 = vsel %vm3516, %v3928, 0.0
        %v3935 = vsel %vm3517, %v3931, 0.0
        %v3936 = vpack.c.bf16 %v3933, %v3932
        %v3937 = vpack.c.bf16 %v3935, %v3934
        %3938 = vst [vmem:[#allocation2 + $0x20] sm:$0xff] %v3936
        %3939 = vst [vmem:[#allocation2 + $0x28] sm:$0xff] %v3937
        %3940 = vrot.lane.b32.xlu0 %v3912, 126
        %v3941 = vpop.permute.xlu0 %3940
        %3942 = vrot.lane.b32.xlu0 %v3913, 126
        %v3943 = vpop.permute.xlu0 %3942
        %3944 = vrot.lane.b32.xlu0 %v3914, 126
        %v3945 = vpop.permute.xlu0 %3944
        %3946 = vrot.lane.b32.xlu0 %v3915, 126
        %v3947 = vpop.permute.xlu0 %3946
        %v3948 = vsel %vm925, %v3945, %v3947
        %v3949 = vsel %vm925, %v3943, %v3945
        %v3950 = vsel %vm925, %v3941, %v3943
        %v3951 = vsel %vm925, %v3947, %v3941
        %vm3952 = vcmp.lt.s32.totalorder %v3450, 30
        %vm3953 = vcmp.lt.s32.totalorder %v3451, 30
        %vm3954 = vcmp.lt.s32.totalorder %v3452, 30
        %vm3955 = vcmp.lt.s32.totalorder %v3453, 30
        %vm3956 = vmand %vm3498, %vm3952
        %vm3957 = vmand %vm3499, %vm3953
        %vm3958 = vmand %vm3500, %vm3954
        %vm3959 = vmand %vm3501, %vm3955
        %v3960 = vsel %vm3956, 1, 0
        %v3961 = vsel %vm3957, 1, 0
        %v3962 = vsel %vm3958, 1, 0
        %v3963 = vsel %vm3959, 1, 0
        %vm3964 = vcmp.eq.s32.totalorder %v3960, 1
        %vm3965 = vcmp.eq.s32.totalorder %v3961, 1
        %vm3966 = vcmp.eq.s32.totalorder %v3962, 1
        %vm3967 = vcmp.eq.s32.totalorder %v3963, 1
        %v3968 = vsel %vm3964, %v3950, 0.0
        %v3969 = vsel %vm3965, %v3949, 0.0
        %v3970 = vsel %vm3966, %v3948, 0.0
        %v3971 = vsel %vm3967, %v3951, 0.0
        %v3972 = vpack.c.bf16 %v3969, %v3968
        %v3973 = vpack.c.bf16 %v3971, %v3970
        %3974 = vst [vmem:[#allocation2 + $0x40] sm:$0xff] %v3972
        %3975 = vst [vmem:[#allocation2 + $0x48] sm:$0xff] %v3973
        %s3976 = scalar_lea.vmem %s1, 24
        %v3977 = vld [vmem:[%s3976] sm:$0xf]
        %v3978 = vld [vmem:[#allocation2] sm:$0xff]
        %v3979 = vld [vmem:[#allocation2 + $0x8] sm:$0xff]
        %v3980 = vld [vmem:[#allocation2 + $0x20] sm:$0xff]
        %v3981 = vld [vmem:[#allocation2 + $0x28] sm:$0xff]
        %v3982 = vld [vmem:[#allocation2 + $0x40] sm:$0xff]
        %v3983 = vld [vmem:[#allocation2 + $0x48] sm:$0xff]
        %v3984 = vld [vmem:[#allocation2 + $0x60] sm:$0xff]
        %v3985 = vld [vmem:[#allocation2 + $0x68] sm:$0xff]
        %v3986 = vld [vmem:[#allocation2 + $0x80] sm:$0xff]
        %v3987 = vld [vmem:[#allocation2 + $0x88] sm:$0xff]
        %v3988 = vld [vmem:[#allocation2 + $0xa0] sm:$0xff]
        %v3989 = vld [vmem:[#allocation2 + $0xa8] sm:$0xff]
        %v3990 = vld [vmem:[#allocation2 + $0xc0] sm:$0xff]
        %v3991 = vld [vmem:[#allocation2 + $0xc8] sm:$0xff]
        %v4006 = vunpack.c.l.b16 %v3978
        %v4007 = vunpack.c.h.b16 %v3978
        %v4008 = vunpack.c.l.b16 %v3979
        %v4009 = vunpack.c.h.b16 %v3979
        %v4010 = vunpack.c.l.b16 %v3980
        %v4011 = vunpack.c.h.b16 %v3980
        %v4012 = vunpack.c.l.b16 %v3981
        %v4013 = vunpack.c.h.b16 %v3981
        %v4014 = vunpack.c.l.b16 %v3982
        %v4015 = vunpack.c.h.b16 %v3982
        %v4016 = vunpack.c.l.b16 %v3983
        %v4017 = vunpack.c.h.b16 %v3983
        %v4018 = vunpack.c.l.b16 %v3984
        %v4019 = vunpack.c.h.b16 %v3984
        %v4020 = vunpack.c.l.b16 %v3985
        %v4021 = vunpack.c.h.b16 %v3985
        %v4022 = vunpack.c.l.b16 %v3986
        %v4023 = vunpack.c.h.b16 %v3986
        %v4024 = vunpack.c.l.b16 %v3987
        %v4025 = vunpack.c.h.b16 %v3987
        %v4026 = vunpack.c.l.b16 %v3988
        %v4027 = vunpack.c.h.b16 %v3988
        %v4028 = vunpack.c.l.b16 %v3989
        %v4029 = vunpack.c.h.b16 %v3989
        %v4030 = vunpack.c.l.b16 %v3990
        %v4031 = vunpack.c.h.b16 %v3990
        %v4032 = vunpack.c.l.b16 %v3991
        %v4033 = vunpack.c.h.b16 %v3991
        %v4034 = vpack.c.b16 %v4010, %v4006
        %v4035 = vpack.c.b16 %v4011, %v4007
        %v4036 = vpack.c.b16 %v4012, %v4008
        %v4037 = vpack.c.b16 %v4013, %v4009
        %v4038 = vpack.c.b16 %v4018, %v4014
        %v4039 = vpack.c.b16 %v4019, %v4015
        %v4040 = vpack.c.b16 %v4020, %v4016
        %v4041 = vpack.c.b16 %v4021, %v4017
        %v4042 = vpack.c.b16 %v4026, %v4022
        %v4043 = vpack.c.b16 %v4027, %v4023
        %v4044 = vpack.c.b16 %v4028, %v4024
        %v4045 = vpack.c.b16 %v4029, %v4025
        %v4046 = vpack.c.b16 %v4030, %v4030
        %v4047 = vpack.c.b16 %v4031, %v4031
        %v4048 = vpack.c.b16 %v4032, %v4032
        %v4049 = vpack.c.b16 %v4033, %v4033
        %v4063 = vsel %vm1253, %v3977, 0
        %v4066 = vsel %vm1257, %v4046, 0
        %v4069 = vsel %vm1257, %v4047, 0
        %v4072 = vsel %vm1257, %v4048, 0
        %v4075 = vsel %vm1257, %v4049, 0
        %4077 = vmatpush.bf16.msra.mxu0 0
        %4078 = vmatpush.bf16.msra.mxu0 0
        %4079 = vmatpush.bf16.msra.mxu0 0
        %4080 = vmatpush.bf16.msra.mxu0 0
        %4081 = vmatpush.bf16.msra.mxu0 %v4066
        %4082 = vmatpush.bf16.msra.mxu0 %v4042
        %4083 = vmatpush.bf16.msra.mxu0 %v4038
        %4084 = vmatpush.bf16.msra.mxu0 %v4034
        %4085 = vmatmul.bf16.gmra.mxu0 %v4063
        %v4086 = vpop.f32.mrf.mxu0
        %v4087 = vadd.f32 0.0, %v4086
        %v4088 = vpop.f32.mrf.mxu0
        %4089 = vdwg.mxu0
        %4090 = vmatpush.bf16.msra.mxu0 0
        %4091 = vmatpush.bf16.msra.mxu0 0
        %4092 = vmatpush.bf16.msra.mxu0 0
        %4093 = vmatpush.bf16.msra.mxu0 0
        %4094 = vmatpush.bf16.msra.mxu0 %v4069
        %4095 = vmatpush.bf16.msra.mxu0 %v4043
        %4096 = vmatpush.bf16.msra.mxu0 %v4039
        %4097 = vmatpush.bf16.msra.mxu0 %v4035
        %4098 = vmatmul.bf16.gmra.mxu0 %v4063
        %v4099 = vpop.f32.mrf.mxu0
        %v4100 = vadd.f32 0.0, %v4099
        %v4101 = vpop.f32.mrf.mxu0
        %4102 = vdwg.mxu0
        %4103 = vmatpush.bf16.msra.mxu0 0
        %4104 = vmatpush.bf16.msra.mxu0 0
        %4105 = vmatpush.bf16.msra.mxu0 0
        %4106 = vmatpush.bf16.msra.mxu0 0
        %4107 = vmatpush.bf16.msra.mxu0 %v4072
        %4108 = vmatpush.bf16.msra.mxu0 %v4044
        %4109 = vmatpush.bf16.msra.mxu0 %v4040
        %4110 = vmatpush.bf16.msra.mxu0 %v4036
        %4111 = vmatmul.bf16.gmra.mxu0 %v4063
        %v4112 = vpop.f32.mrf.mxu0
        %v4113 = vadd.f32 0.0, %v4112
        %v4114 = vpop.f32.mrf.mxu0
        %4115 = vdwg.mxu0
        %4116 = vmatpush.bf16.msra.mxu0 0
        %4117 = vmatpush.bf16.msra.mxu0 0
        %4118 = vmatpush.bf16.msra.mxu0 0
        %4119 = vmatpush.bf16.msra.mxu0 0
        %4120 = vmatpush.bf16.msra.mxu0 %v4075
        %4121 = vmatpush.bf16.msra.mxu0 %v4045
        %4122 = vmatpush.bf16.msra.mxu0 %v4041
        %4123 = vmatpush.bf16.msra.mxu0 %v4037
        %4124 = vmatmul.bf16.gmra.mxu0 %v4063
        %v4125 = vpop.f32.mrf.mxu0
        %v4126 = vadd.f32 0.0, %v4125
        %v4127 = vpop.f32.mrf.mxu0
        %4128 = vdwg.mxu0
        %v4129 = vpack.c.bf16 %v4087, %v4087
        %v4130 = vpack.c.bf16 %v4100, %v4100
        %v4131 = vpack.c.bf16 %v4113, %v4113
        %v4132 = vpack.c.bf16 %v4126, %v4126
        %v4133 = vld [vmem:[#allocation5] sm:$0xff]
        %v4134 = vld [vmem:[#allocation5 + $0x8] sm:$0xff]
        %v4135 = vld [vmem:[#allocation5 + $0x10] sm:$0xff]
        %v4136 = vld [vmem:[#allocation5 + $0x18] sm:$0xff]
        %v4137 = vld [vmem:[#allocation5 + $0x20] sm:$0xff]
        %v4138 = vld [vmem:[#allocation5 + $0x28] sm:$0xff]
        %v4139 = vld [vmem:[#allocation5 + $0x30] sm:$0xff]
        %v4140 = vld [vmem:[#allocation5 + $0x38] sm:$0xff]
        %v4141 = vld [vmem:[#allocation5 + $0x40] sm:$0xff]
        %v4142 = vld [vmem:[#allocation5 + $0x48] sm:$0xff]
        %v4143 = vld [vmem:[#allocation5 + $0x50] sm:$0xff]
        %v4144 = vld [vmem:[#allocation5 + $0x58] sm:$0xff]
        %v4145 = vld [vmem:[#allocation5 + $0x60] sm:$0xff]
        %v4146 = vld [vmem:[#allocation5 + $0x68] sm:$0xff]
        %v4147 = vld [vmem:[#allocation5 + $0x70] sm:$0xff]
        %v4148 = vld [vmem:[#allocation5 + $0x78] sm:$0xff]
        %v4149 = vld [vmem:[#allocation5 + $0x80] sm:$0xff]
        %v4150 = vld [vmem:[#allocation5 + $0x88] sm:$0xff]
        %v4151 = vld [vmem:[#allocation5 + $0x90] sm:$0xff]
        %v4152 = vld [vmem:[#allocation5 + $0x98] sm:$0xff]
        %v4153 = vld [vmem:[#allocation5 + $0xa0] sm:$0xff]
        %v4154 = vld [vmem:[#allocation5 + $0xa8] sm:$0xff]
        %v4155 = vld [vmem:[#allocation5 + $0xb0] sm:$0xff]
        %v4156 = vld [vmem:[#allocation5 + $0xb8] sm:$0xff]
        %v4157 = vld [vmem:[#allocation5 + $0xc0] sm:$0xff]
        %v4158 = vld [vmem:[#allocation5 + $0xc8] sm:$0xff]
        %v4159 = vld [vmem:[#allocation5 + $0xd0] sm:$0xff]
        %v4160 = vld [vmem:[#allocation5 + $0xd8] sm:$0xff]
        %v4161 = vld [vmem:[#allocation5 + $0xe0] sm:$0xff]
        %v4162 = vld [vmem:[#allocation5 + $0xe8] sm:$0xff]
        %v4163 = vld [vmem:[#allocation5 + $0xf0] sm:$0xff]
        %v4164 = vld [vmem:[#allocation5 + $0xf8] sm:$0xff]
        %v4165 = vld [vmem:[#allocation5 + $0x100] sm:$0xff]
        %v4166 = vld [vmem:[#allocation5 + $0x108] sm:$0xff]
        %v4167 = vld [vmem:[#allocation5 + $0x110] sm:$0xff]
        %v4168 = vld [vmem:[#allocation5 + $0x118] sm:$0xff]
        %v4169 = vld [vmem:[#allocation5 + $0x120] sm:$0xff]
        %v4170 = vld [vmem:[#allocation5 + $0x128] sm:$0xff]
        %v4171 = vld [vmem:[#allocation5 + $0x130] sm:$0xff]
        %v4172 = vld [vmem:[#allocation5 + $0x138] sm:$0xff]
        %v4173 = vld [vmem:[#allocation5 + $0x140] sm:$0xff]
        %v4174 = vld [vmem:[#allocation5 + $0x148] sm:$0xff]
        %v4175 = vld [vmem:[#allocation5 + $0x150] sm:$0xff]
        %v4176 = vld [vmem:[#allocation5 + $0x158] sm:$0xff]
        %v4177 = vld [vmem:[#allocation5 + $0x160] sm:$0xff]
        %v4178 = vld [vmem:[#allocation5 + $0x168] sm:$0xff]
        %v4179 = vld [vmem:[#allocation5 + $0x170] sm:$0xff]
        %v4180 = vld [vmem:[#allocation5 + $0x178] sm:$0xff]
        %v4181 = vld [vmem:[#allocation5 + $0x180] sm:$0xff]
        %v4182 = vld [vmem:[#allocation5 + $0x188] sm:$0xff]
        %v4183 = vld [vmem:[#allocation5 + $0x190] sm:$0xff]
        %v4184 = vld [vmem:[#allocation5 + $0x198] sm:$0xff]
        %v4185 = vld [vmem:[#allocation5 + $0x1a0] sm:$0xff]
        %v4186 = vld [vmem:[#allocation5 + $0x1a8] sm:$0xff]
        %v4187 = vld [vmem:[#allocation5 + $0x1b0] sm:$0xff]
        %v4188 = vld [vmem:[#allocation5 + $0x1b8] sm:$0xff]
        %v4189 = vld [vmem:[#allocation5 + $0x1c0] sm:$0xff]
        %v4190 = vld [vmem:[#allocation5 + $0x1c8] sm:$0xff]
        %v4191 = vld [vmem:[#allocation5 + $0x1d0] sm:$0xff]
        %v4192 = vld [vmem:[#allocation5 + $0x1d8] sm:$0xff]
        %v4193 = vld [vmem:[#allocation5 + $0x1e0] sm:$0xff]
        %v4194 = vld [vmem:[#allocation5 + $0x1e8] sm:$0xff]
        %v4195 = vld [vmem:[#allocation5 + $0x1f0] sm:$0xff]
        %v4196 = vld [vmem:[#allocation5 + $0x1f8] sm:$0xff]
        %v4197 = vld [vmem:[%s2] sm:$0xff]
        %4199 = vset.pattern.permute.xlu0 5
        %4200 = vperm.xlu0 %4199, %v4197
        %v4201 = vpop.permute.xlu0 %4200
        %v4267 = vunpack.c.l.b16 %v4133
        %v4268 = vunpack.c.h.b16 %v4133
        %v4269 = vunpack.c.l.b16 %v4134
        %v4270 = vunpack.c.h.b16 %v4134
        %v4271 = vunpack.c.l.b16 %v4135
        %v4272 = vunpack.c.h.b16 %v4135
        %v4273 = vunpack.c.l.b16 %v4136
        %v4274 = vunpack.c.h.b16 %v4136
        %v4275 = vunpack.c.l.b16 %v4137
        %v4276 = vunpack.c.h.b16 %v4137
        %v4277 = vunpack.c.l.b16 %v4138
        %v4278 = vunpack.c.h.b16 %v4138
        %v4279 = vunpack.c.l.b16 %v4139
        %v4280 = vunpack.c.h.b16 %v4139
        %v4281 = vunpack.c.l.b16 %v4140
        %v4282 = vunpack.c.h.b16 %v4140
        %v4283 = vunpack.c.l.b16 %v4141
        %v4284 = vunpack.c.h.b16 %v4141
        %v4285 = vunpack.c.l.b16 %v4142
        %v4286 = vunpack.c.h.b16 %v4142
        %v4287 = vunpack.c.l.b16 %v4143
        %v4288 = vunpack.c.h.b16 %v4143
        %v4289 = vunpack.c.l.b16 %v4144
        %v4290 = vunpack.c.h.b16 %v4144
        %v4291 = vunpack.c.l.b16 %v4145
        %v4292 = vunpack.c.h.b16 %v4145
        %v4293 = vunpack.c.l.b16 %v4146
        %v4294 = vunpack.c.h.b16 %v4146
        %v4295 = vunpack.c.l.b16 %v4147
        %v4296 = vunpack.c.h.b16 %v4147
        %v4297 = vunpack.c.l.b16 %v4148
        %v4298 = vunpack.c.h.b16 %v4148
        %v4299 = vunpack.c.l.b16 %v4149
        %v4300 = vunpack.c.h.b16 %v4149
        %v4301 = vunpack.c.l.b16 %v4150
        %v4302 = vunpack.c.h.b16 %v4150
        %v4303 = vunpack.c.l.b16 %v4151
        %v4304 = vunpack.c.h.b16 %v4151
        %v4305 = vunpack.c.l.b16 %v4152
        %v4306 = vunpack.c.h.b16 %v4152
        %v4307 = vunpack.c.l.b16 %v4153
        %v4308 = vunpack.c.h.b16 %v4153
        %v4309 = vunpack.c.l.b16 %v4154
        %v4310 = vunpack.c.h.b16 %v4154
        %v4311 = vunpack.c.l.b16 %v4155
        %v4312 = vunpack.c.h.b16 %v4155
        %v4313 = vunpack.c.l.b16 %v4156
        %v4314 = vunpack.c.h.b16 %v4156
        %v4315 = vunpack.c.l.b16 %v4157
        %v4316 = vunpack.c.h.b16 %v4157
        %v4317 = vunpack.c.l.b16 %v4158
        %v4318 = vunpack.c.h.b16 %v4158
        %v4319 = vunpack.c.l.b16 %v4159
        %v4320 = vunpack.c.h.b16 %v4159
        %v4321 = vunpack.c.l.b16 %v4160
        %v4322 = vunpack.c.h.b16 %v4160
        %v4323 = vunpack.c.l.b16 %v4161
        %v4324 = vunpack.c.h.b16 %v4161
        %v4325 = vunpack.c.l.b16 %v4162
        %v4326 = vunpack.c.h.b16 %v4162
        %v4327 = vunpack.c.l.b16 %v4163
        %v4328 = vunpack.c.h.b16 %v4163
        %v4329 = vunpack.c.l.b16 %v4164
        %v4330 = vunpack.c.h.b16 %v4164
        %v4331 = vunpack.c.l.b16 %v4165
        %v4332 = vunpack.c.h.b16 %v4165
        %v4333 = vunpack.c.l.b16 %v4166
        %v4334 = vunpack.c.h.b16 %v4166
        %v4335 = vunpack.c.l.b16 %v4167
        %v4336 = vunpack.c.h.b16 %v4167
        %v4337 = vunpack.c.l.b16 %v4168
        %v4338 = vunpack.c.h.b16 %v4168
        %v4339 = vunpack.c.l.b16 %v4169
        %v4340 = vunpack.c.h.b16 %v4169
        %v4341 = vunpack.c.l.b16 %v4170
        %v4342 = vunpack.c.h.b16 %v4170
        %v4343 = vunpack.c.l.b16 %v4171
        %v4344 = vunpack.c.h.b16 %v4171
        %v4345 = vunpack.c.l.b16 %v4172
        %v4346 = vunpack.c.h.b16 %v4172
        %v4347 = vunpack.c.l.b16 %v4173
        %v4348 = vunpack.c.h.b16 %v4173
        %v4349 = vunpack.c.l.b16 %v4174
        %v4350 = vunpack.c.h.b16 %v4174
        %v4351 = vunpack.c.l.b16 %v4175
        %v4352 = vunpack.c.h.b16 %v4175
        %v4353 = vunpack.c.l.b16 %v4176
        %v4354 = vunpack.c.h.b16 %v4176
        %v4355 = vunpack.c.l.b16 %v4177
        %v4356 = vunpack.c.h.b16 %v4177
        %v4357 = vunpack.c.l.b16 %v4178
        %v4358 = vunpack.c.h.b16 %v4178
        %v4359 = vunpack.c.l.b16 %v4179
        %v4360 = vunpack.c.h.b16 %v4179
        %v4361 = vunpack.c.l.b16 %v4180
        %v4362 = vunpack.c.h.b16 %v4180
        %v4363 = vunpack.c.l.b16 %v4181
        %v4364 = vunpack.c.h.b16 %v4181
        %v4365 = vunpack.c.l.b16 %v4182
        %v4366 = vunpack.c.h.b16 %v4182
        %v4367 = vunpack.c.l.b16 %v4183
        %v4368 = vunpack.c.h.b16 %v4183
        %v4369 = vunpack.c.l.b16 %v4184
        %v4370 = vunpack.c.h.b16 %v4184
        %v4371 = vunpack.c.l.b16 %v4185
        %v4372 = vunpack.c.h.b16 %v4185
        %v4373 = vunpack.c.l.b16 %v4186
        %v4374 = vunpack.c.h.b16 %v4186
        %v4375 = vunpack.c.l.b16 %v4187
        %v4376 = vunpack.c.h.b16 %v4187
        %v4377 = vunpack.c.l.b16 %v4188
        %v4378 = vunpack.c.h.b16 %v4188
        %v4379 = vunpack.c.l.b16 %v4189
        %v4380 = vunpack.c.h.b16 %v4189
        %v4381 = vunpack.c.l.b16 %v4190
        %v4382 = vunpack.c.h.b16 %v4190
        %v4383 = vunpack.c.l.b16 %v4191
        %v4384 = vunpack.c.h.b16 %v4191
        %v4385 = vunpack.c.l.b16 %v4192
        %v4386 = vunpack.c.h.b16 %v4192
        %v4387 = vunpack.c.l.b16 %v4193
        %v4388 = vunpack.c.h.b16 %v4193
        %v4389 = vunpack.c.l.b16 %v4194
        %v4390 = vunpack.c.h.b16 %v4194
        %v4391 = vunpack.c.l.b16 %v4195
        %v4392 = vunpack.c.h.b16 %v4195
        %v4393 = vunpack.c.l.b16 %v4196
        %v4394 = vunpack.c.h.b16 %v4196
        %v4395 = vpack.c.b16 %v4269, %v4267
        %v4396 = vpack.c.b16 %v4270, %v4268
        %v4397 = vpack.c.b16 %v4273, %v4271
        %v4398 = vpack.c.b16 %v4274, %v4272
        %v4399 = vpack.c.b16 %v4277, %v4275
        %v4400 = vpack.c.b16 %v4278, %v4276
        %v4401 = vpack.c.b16 %v4281, %v4279
        %v4402 = vpack.c.b16 %v4282, %v4280
        %v4403 = vpack.c.b16 %v4285, %v4283
        %v4404 = vpack.c.b16 %v4286, %v4284
        %v4405 = vpack.c.b16 %v4289, %v4287
        %v4406 = vpack.c.b16 %v4290, %v4288
        %v4407 = vpack.c.b16 %v4293, %v4291
        %v4408 = vpack.c.b16 %v4294, %v4292
        %v4409 = vpack.c.b16 %v4297, %v4295
        %v4410 = vpack.c.b16 %v4298, %v4296
        %v4411 = vpack.c.b16 %v4301, %v4299
        %v4412 = vpack.c.b16 %v4302, %v4300
        %v4413 = vpack.c.b16 %v4305, %v4303
        %v4414 = vpack.c.b16 %v4306, %v4304
        %v4415 = vpack.c.b16 %v4309, %v4307
        %v4416 = vpack.c.b16 %v4310, %v4308
        %v4417 = vpack.c.b16 %v4313, %v4311
        %v4418 = vpack.c.b16 %v4314, %v4312
        %v4419 = vpack.c.b16 %v4317, %v4315
        %v4420 = vpack.c.b16 %v4318, %v4316
        %v4421 = vpack.c.b16 %v4321, %v4319
        %v4422 = vpack.c.b16 %v4322, %v4320
        %v4423 = vpack.c.b16 %v4325, %v4323
        %v4424 = vpack.c.b16 %v4326, %v4324
        %v4425 = vpack.c.b16 %v4329, %v4327
        %v4426 = vpack.c.b16 %v4330, %v4328
        %v4427 = vpack.c.b16 %v4333, %v4331
        %v4428 = vpack.c.b16 %v4334, %v4332
        %v4429 = vpack.c.b16 %v4337, %v4335
        %v4430 = vpack.c.b16 %v4338, %v4336
        %v4431 = vpack.c.b16 %v4341, %v4339
        %v4432 = vpack.c.b16 %v4342, %v4340
        %v4433 = vpack.c.b16 %v4345, %v4343
        %v4434 = vpack.c.b16 %v4346, %v4344
        %v4435 = vpack.c.b16 %v4349, %v4347
        %v4436 = vpack.c.b16 %v4350, %v4348
        %v4437 = vpack.c.b16 %v4353, %v4351
        %v4438 = vpack.c.b16 %v4354, %v4352
        %v4439 = vpack.c.b16 %v4357, %v4355
        %v4440 = vpack.c.b16 %v4358, %v4356
        %v4441 = vpack.c.b16 %v4361, %v4359
        %v4442 = vpack.c.b16 %v4362, %v4360
        %v4443 = vpack.c.b16 %v4365, %v4363
        %v4444 = vpack.c.b16 %v4366, %v4364
        %v4445 = vpack.c.b16 %v4369, %v4367
        %v4446 = vpack.c.b16 %v4370, %v4368
        %v4447 = vpack.c.b16 %v4373, %v4371
        %v4448 = vpack.c.b16 %v4374, %v4372
        %v4449 = vpack.c.b16 %v4377, %v4375
        %v4450 = vpack.c.b16 %v4378, %v4376
        %v4451 = vpack.c.b16 %v4381, %v4379
        %v4452 = vpack.c.b16 %v4382, %v4380
        %v4453 = vpack.c.b16 %v4385, %v4383
        %v4454 = vpack.c.b16 %v4386, %v4384
        %v4455 = vpack.c.b16 %v4389, %v4387
        %v4456 = vpack.c.b16 %v4390, %v4388
        %v4457 = vpack.c.b16 %v4393, %v4391
        %v4458 = vpack.c.b16 %v4394, %v4392
        %4523 = vmatpush.bf16.msra.mxu0 %v4409
        %4524 = vmatpush.bf16.msra.mxu0 %v4407
        %4525 = vmatpush.bf16.msra.mxu0 %v4405
        %4526 = vmatpush.bf16.msra.mxu0 %v4403
        %4527 = vmatpush.bf16.msra.mxu0 %v4401
        %4528 = vmatpush.bf16.msra.mxu0 %v4399
        %4529 = vmatpush.bf16.msra.mxu0 %v4397
        %4530 = vmatpush.bf16.msra.mxu0 %v4395
        %4531 = vmatmul.bf16.gmra.mxu0 %v4129
        %v4532 = vpop.f32.mrf.mxu0
        %v4533 = vadd.f32 %v4201, %v4532
        %v4534 = vpop.f32.mrf.mxu0
        %4535 = vdwg.mxu0
        %4536 = vmatpush.bf16.msra.mxu0 %v4425
        %4537 = vmatpush.bf16.msra.mxu0 %v4423
        %4538 = vmatpush.bf16.msra.mxu0 %v4421
        %4539 = vmatpush.bf16.msra.mxu0 %v4419
        %4540 = vmatpush.bf16.msra.mxu0 %v4417
        %4541 = vmatpush.bf16.msra.mxu0 %v4415
        %4542 = vmatpush.bf16.msra.mxu0 %v4413
        %4543 = vmatpush.bf16.msra.mxu0 %v4411
        %4544 = vmatmul.bf16.gmra.mxu0 %v4130
        %v4545 = vpop.f32.mrf.mxu0
        %v4546 = vadd.f32 %v4533, %v4545
        %v4547 = vpop.f32.mrf.mxu0
        %4548 = vdwg.mxu0
        %4549 = vmatpush.bf16.msra.mxu0 %v4441
        %4550 = vmatpush.bf16.msra.mxu0 %v4439
        %4551 = vmatpush.bf16.msra.mxu0 %v4437
        %4552 = vmatpush.bf16.msra.mxu0 %v4435
        %4553 = vmatpush.bf16.msra.mxu0 %v4433
        %4554 = vmatpush.bf16.msra.mxu0 %v4431
        %4555 = vmatpush.bf16.msra.mxu0 %v4429
        %4556 = vmatpush.bf16.msra.mxu0 %v4427
        %4557 = vmatmul.bf16.gmra.mxu0 %v4131
        %v4558 = vpop.f32.mrf.mxu0
        %v4559 = vadd.f32 %v4546, %v4558
        %v4560 = vpop.f32.mrf.mxu0
        %4561 = vdwg.mxu0
        %4562 = vmatpush.bf16.msra.mxu0 %v4457
        %4563 = vmatpush.bf16.msra.mxu0 %v4455
        %4564 = vmatpush.bf16.msra.mxu0 %v4453
        %4565 = vmatpush.bf16.msra.mxu0 %v4451
        %4566 = vmatpush.bf16.msra.mxu0 %v4449
        %4567 = vmatpush.bf16.msra.mxu0 %v4447
        %4568 = vmatpush.bf16.msra.mxu0 %v4445
        %4569 = vmatpush.bf16.msra.mxu0 %v4443
        %4570 = vmatmul.bf16.gmra.mxu0 %v4132
        %v4571 = vpop.f32.mrf.mxu0
        %v4572 = vadd.f32 %v4559, %v4571
        %v4573 = vpop.f32.mrf.mxu0
        %4574 = vdwg.mxu0
        %4575 = vmatpush.bf16.msra.mxu0 %v4410
        %4576 = vmatpush.bf16.msra.mxu0 %v4408
        %4577 = vmatpush.bf16.msra.mxu0 %v4406
        %4578 = vmatpush.bf16.msra.mxu0 %v4404
        %4579 = vmatpush.bf16.msra.mxu0 %v4402
        %4580 = vmatpush.bf16.msra.mxu0 %v4400
        %4581 = vmatpush.bf16.msra.mxu0 %v4398
        %4582 = vmatpush.bf16.msra.mxu0 %v4396
        %4583 = vmatmul.bf16.gmra.mxu0 %v4129
        %v4584 = vpop.f32.mrf.mxu0
        %v4585 = vadd.f32 %v4201, %v4584
        %v4586 = vpop.f32.mrf.mxu0
        %4587 = vdwg.mxu0
        %4588 = vmatpush.bf16.msra.mxu0 %v4426
        %4589 = vmatpush.bf16.msra.mxu0 %v4424
        %4590 = vmatpush.bf16.msra.mxu0 %v4422
        %4591 = vmatpush.bf16.msra.mxu0 %v4420
        %4592 = vmatpush.bf16.msra.mxu0 %v4418
        %4593 = vmatpush.bf16.msra.mxu0 %v4416
        %4594 = vmatpush.bf16.msra.mxu0 %v4414
        %4595 = vmatpush.bf16.msra.mxu0 %v4412
        %4596 = vmatmul.bf16.gmra.mxu0 %v4130
        %v4597 = vpop.f32.mrf.mxu0
        %v4598 = vadd.f32 %v4585, %v4597
        %v4599 = vpop.f32.mrf.mxu0
        %4600 = vdwg.mxu0
        %4601 = vmatpush.bf16.msra.mxu0 %v4442
        %4602 = vmatpush.bf16.msra.mxu0 %v4440
        %4603 = vmatpush.bf16.msra.mxu0 %v4438
        %4604 = vmatpush.bf16.msra.mxu0 %v4436
        %4605 = vmatpush.bf16.msra.mxu0 %v4434
        %4606 = vmatpush.bf16.msra.mxu0 %v4432
        %4607 = vmatpush.bf16.msra.mxu0 %v4430
        %4608 = vmatpush.bf16.msra.mxu0 %v4428
        %4609 = vmatmul.bf16.gmra.mxu0 %v4131
        %v4610 = vpop.f32.mrf.mxu0
        %v4611 = vadd.f32 %v4598, %v4610
        %v4612 = vpop.f32.mrf.mxu0
        %4613 = vdwg.mxu0
        %4614 = vmatpush.bf16.msra.mxu0 %v4458
        %4615 = vmatpush.bf16.msra.mxu0 %v4456
        %4616 = vmatpush.bf16.msra.mxu0 %v4454
        %4617 = vmatpush.bf16.msra.mxu0 %v4452
        %4618 = vmatpush.bf16.msra.mxu0 %v4450
        %4619 = vmatpush.bf16.msra.mxu0 %v4448
        %4620 = vmatpush.bf16.msra.mxu0 %v4446
        %4621 = vmatpush.bf16.msra.mxu0 %v4444
        %4622 = vmatmul.bf16.gmra.mxu0 %v4132
        %v4623 = vpop.f32.mrf.mxu0
        %v4624 = vadd.f32 %v4611, %v4623
        %v4625 = vpop.f32.mrf.mxu0
        %4626 = vdwg.mxu0
        %v4627 = vmax.f32 %v4572, 0.0
        %v4628 = vmax.f32 %v4624, 0.0
        %4629 = vrot.lane.b32.xlu0 %v4627, 1
        %v4630 = vpop.permute.xlu0 %4629
        %4631 = vrot.lane.b32.xlu0 %v4628, 1
        %v4632 = vpop.permute.xlu0 %4631
        %v4633 = vsel %vm694, %v4630, %v4632
        %v4634 = vsel %vm694, %v4632, %v4630
        %vm4635 = vcmp.lt.s32.totalorder %v390, 0
        %v4636 = vsub.s32 0, %v390
        %v4637 = vsel %vm4635, %v4636, %v390
        %v4638 = vshrl.u32 %v4637, 4
        %v4639 = vand.u32 %v4637, 15
        %v4640 = vsub.s32 0, %v4639
        %v4641 = vsel %vm4635, %v4640, %v4639
        %vm4642 = vcmp.lt.s32.totalorder %v400, 0
        %v4643 = vsub.s32 0, %v400
        %v4644 = vsel %vm4642, %v4643, %v400
        %v4645 = vshrl.u32 %v4644, 4
        %v4646 = vand.u32 %v4644, 15
        %v4647 = vsub.s32 0, %v4646
        %v4648 = vsel %vm4642, %v4647, %v4646
        %vm4649 = vcmp.ne.s32.totalorder %v4641, 0
        %vm4650 = vcmp.ne.s32.totalorder %v4648, 0
        %vm4651 = vcmp.lt.s32.totalorder %v4641, 0
        %vm4652 = vcmp.lt.s32.totalorder %v4648, 0
        %vm4653 = vmand %vm4651, %vm4649
        %vm4654 = vmand %vm4652, %vm4650
        %v4655 = vadd.s32 %v4641, 16
        %v4656 = vadd.s32 %v4648, 16
        %v4657 = vsel %vm4653, %v4655, %v4641
        %v4658 = vsel %vm4654, %v4656, %v4648
        %vm4659 = vcmp.ge.s32.totalorder %v4657, 1
        %vm4660 = vcmp.ge.s32.totalorder %v4658, 1
        %vm4661 = vcmp.lt.s32.totalorder %v4657, 16
        %vm4662 = vcmp.lt.s32.totalorder %v4658, 16
        %vm4663 = vmand %vm4659, %vm4661
        %vm4664 = vmand %vm4660, %vm4662
        %v4665 = vsel %vm4663, 1, 0
        %v4666 = vsel %vm4664, 1, 0
        %vm4667 = vcmp.eq.s32.totalorder %v4665, 1
        %vm4668 = vcmp.eq.s32.totalorder %v4666, 1
        %v4669 = vsel %vm4667, %v4634, 0.0
        %v4670 = vsel %vm4668, %v4633, 0.0
        %v4671 = vpack.c.bf16 %v4670, %v4669
        %4672 = vst [vmem:[#allocation2] sm:$0xff] %v4671
        %v4673 = vpack.c.bf16 %v4628, %v4627
        %4674 = vst [vmem:[#allocation2 + $0x20] sm:$0xff] %v4673
        %4675 = vrot.lane.b32.xlu0 %v4627, 127
        %v4676 = vpop.permute.xlu0 %4675
        %4677 = vrot.lane.b32.xlu0 %v4628, 127
        %v4678 = vpop.permute.xlu0 %4677
        %v4679 = vsel %vm821, %v4676, %v4678
        %v4680 = vsel %vm821, %v4678, %v4676
        %vm4681 = vcmp.ge.s32.totalorder %v4657, 0
        %vm4682 = vcmp.ge.s32.totalorder %v4658, 0
        %vm4683 = vcmp.lt.s32.totalorder %v4657, 15
        %vm4684 = vcmp.lt.s32.totalorder %v4658, 15
        %vm4685 = vmand %vm4681, %vm4683
        %vm4686 = vmand %vm4682, %vm4684
        %v4687 = vsel %vm4685, 1, 0
        %v4688 = vsel %vm4686, 1, 0
        %vm4689 = vcmp.eq.s32.totalorder %v4687, 1
        %vm4690 = vcmp.eq.s32.totalorder %v4688, 1
        %v4691 = vsel %vm4689, %v4679, 0.0
        %v4692 = vsel %vm4690, %v4680, 0.0
        %v4693 = vpack.c.bf16 %v4692, %v4691
        %4694 = vst [vmem:[#allocation2 + $0x40] sm:$0xff] %v4693
        %s4695 = scalar_lea.vmem %s1, 32
        %v4696 = vld [vmem:[%s4695] sm:$0xf]
        %v4697 = vld [vmem:[#allocation2] sm:$0xff]
        %v4698 = vld [vmem:[#allocation2 + $0x20] sm:$0xff]
        %v4699 = vld [vmem:[#allocation2 + $0x40] sm:$0xff]
        %v4700 = vld [vmem:[#allocation2 + $0x60] sm:$0xff]
        %v4701 = vld [vmem:[#allocation2 + $0x80] sm:$0xff]
        %v4702 = vld [vmem:[#allocation2 + $0xa0] sm:$0xff]
        %v4703 = vld [vmem:[#allocation2 + $0xc0] sm:$0xff]
        %v4704 = vld [vmem:[%s2] sm:$0xff]
        %4706 = vset.pattern.permute.xlu0 6
        %4707 = vperm.xlu0 %4706, %v4704
        %v4708 = vpop.permute.xlu0 %4707
        %v4717 = vunpack.c.l.b16 %v4697
        %v4718 = vunpack.c.h.b16 %v4697
        %v4719 = vunpack.c.l.b16 %v4698
        %v4720 = vunpack.c.h.b16 %v4698
        %v4721 = vunpack.c.l.b16 %v4699
        %v4722 = vunpack.c.h.b16 %v4699
        %v4723 = vunpack.c.l.b16 %v4700
        %v4724 = vunpack.c.h.b16 %v4700
        %v4725 = vunpack.c.l.b16 %v4701
        %v4726 = vunpack.c.h.b16 %v4701
        %v4727 = vunpack.c.l.b16 %v4702
        %v4728 = vunpack.c.h.b16 %v4702
        %v4729 = vunpack.c.l.b16 %v4703
        %v4730 = vunpack.c.h.b16 %v4703
        %v4731 = vpack.c.b16 %v4719, %v4717
        %v4732 = vpack.c.b16 %v4720, %v4718
        %v4733 = vpack.c.b16 %v4723, %v4721
        %v4734 = vpack.c.b16 %v4724, %v4722
        %v4735 = vpack.c.b16 %v4727, %v4725
        %v4736 = vpack.c.b16 %v4728, %v4726
        %v4737 = vpack.c.b16 %v4729, %v4729
        %v4738 = vpack.c.b16 %v4730, %v4730
        %v4746 = vsel %vm1253, %v4696, 0
        %v4749 = vsel %vm1257, %v4737, 0
        %v4752 = vsel %vm1257, %v4738, 0
        %4754 = vmatpush.bf16.msra.mxu0 0
        %4755 = vmatpush.bf16.msra.mxu0 0
        %4756 = vmatpush.bf16.msra.mxu0 0
        %4757 = vmatpush.bf16.msra.mxu0 0
        %4758 = vmatpush.bf16.msra.mxu0 %v4749
        %4759 = vmatpush.bf16.msra.mxu0 %v4735
        %4760 = vmatpush.bf16.msra.mxu0 %v4733
        %4761 = vmatpush.bf16.msra.mxu0 %v4731
        %4762 = vmatmul.bf16.gmra.mxu0 %v4746
        %v4763 = vpop.f32.mrf.mxu0
        %v4764 = vadd.f32 %v4708, %v4763
        %v4765 = vpop.f32.mrf.mxu0
        %4766 = vdwg.mxu0
        %4767 = vmatpush.bf16.msra.mxu0 0
        %4768 = vmatpush.bf16.msra.mxu0 0
        %4769 = vmatpush.bf16.msra.mxu0 0
        %4770 = vmatpush.bf16.msra.mxu0 0
        %4771 = vmatpush.bf16.msra.mxu0 %v4752
        %4772 = vmatpush.bf16.msra.mxu0 %v4736
        %4773 = vmatpush.bf16.msra.mxu0 %v4734
        %4774 = vmatpush.bf16.msra.mxu0 %v4732
        %4775 = vmatmul.bf16.gmra.mxu0 %v4746
        %v4776 = vpop.f32.mrf.mxu0
        %v4777 = vadd.f32 %v4708, %v4776
        %v4778 = vpop.f32.mrf.mxu0
        %4779 = vdwg.mxu0
        %4780 = vrot.lane.b32.xlu0 %v3892, 127
        %v4781 = vpop.permute.xlu0 %4780
        %4782 = vrot.lane.b32.xlu0 %v3893, 127
        %v4783 = vpop.permute.xlu0 %4782
        %4784 = vrot.lane.b32.xlu0 %v3894, 127
        %v4785 = vpop.permute.xlu0 %4784
        %4786 = vrot.lane.b32.xlu0 %v3895, 127
        %v4787 = vpop.permute.xlu0 %4786
        %v4788 = vsel %vm821, %v4785, %v4787
        %v4789 = vsel %vm821, %v4783, %v4785
        %v4790 = vsel %vm821, %v4781, %v4783
        %v4791 = vsel %vm821, %v4787, %v4781
        %v4792 = vsel %vm3514, %v4790, 0.0
        %v4793 = vsel %vm3515, %v4789, 0.0
        %v4794 = vsel %vm3516, %v4788, 0.0
        %v4795 = vsel %vm3517, %v4791, 0.0
        %v4796 = vmax.f32 %v3892, %v4792
        %v4797 = vmax.f32 %v3893, %v4793
        %v4798 = vmax.f32 %v3894, %v4794
        %v4799 = vmax.f32 %v3895, %v4795
        %v4800 = vpack.c.bf16 %v4796, %v4796
        %v4801 = vpack.c.bf16 %v4797, %v4797
        %v4802 = vpack.c.bf16 %v4798, %v4798
        %v4803 = vpack.c.bf16 %v4799, %v4799
        %v4804 = vld [vmem:[#allocation5] sm:$0xff]
        %v4805 = vld [vmem:[#allocation5 + $0x8] sm:$0xff]
        %v4806 = vld [vmem:[#allocation5 + $0x10] sm:$0xff]
        %v4807 = vld [vmem:[#allocation5 + $0x18] sm:$0xff]
        %v4808 = vld [vmem:[#allocation5 + $0x20] sm:$0xff]
        %v4809 = vld [vmem:[#allocation5 + $0x28] sm:$0xff]
        %v4810 = vld [vmem:[#allocation5 + $0x30] sm:$0xff]
        %v4811 = vld [vmem:[#allocation5 + $0x38] sm:$0xff]
        %v4812 = vld [vmem:[#allocation5 + $0x40] sm:$0xff]
        %v4813 = vld [vmem:[#allocation5 + $0x48] sm:$0xff]
        %v4814 = vld [vmem:[#allocation5 + $0x50] sm:$0xff]
        %v4815 = vld [vmem:[#allocation5 + $0x58] sm:$0xff]
        %v4816 = vld [vmem:[#allocation5 + $0x60] sm:$0xff]
        %v4817 = vld [vmem:[#allocation5 + $0x68] sm:$0xff]
        %v4818 = vld [vmem:[#allocation5 + $0x70] sm:$0xff]
        %v4819 = vld [vmem:[#allocation5 + $0x78] sm:$0xff]
        %v4820 = vld [vmem:[#allocation5 + $0x80] sm:$0xff]
        %v4821 = vld [vmem:[#allocation5 + $0x88] sm:$0xff]
        %v4822 = vld [vmem:[#allocation5 + $0x90] sm:$0xff]
        %v4823 = vld [vmem:[#allocation5 + $0x98] sm:$0xff]
        %v4824 = vld [vmem:[#allocation5 + $0xa0] sm:$0xff]
        %v4825 = vld [vmem:[#allocation5 + $0xa8] sm:$0xff]
        %v4826 = vld [vmem:[#allocation5 + $0xb0] sm:$0xff]
        %v4827 = vld [vmem:[#allocation5 + $0xb8] sm:$0xff]
        %v4828 = vld [vmem:[#allocation5 + $0xc0] sm:$0xff]
        %v4829 = vld [vmem:[#allocation5 + $0xc8] sm:$0xff]
        %v4830 = vld [vmem:[#allocation5 + $0xd0] sm:$0xff]
        %v4831 = vld [vmem:[#allocation5 + $0xd8] sm:$0xff]
        %v4832 = vld [vmem:[#allocation5 + $0xe0] sm:$0xff]
        %v4833 = vld [vmem:[#allocation5 + $0xe8] sm:$0xff]
        %v4834 = vld [vmem:[#allocation5 + $0xf0] sm:$0xff]
        %v4835 = vld [vmem:[#allocation5 + $0xf8] sm:$0xff]
        %v4836 = vld [vmem:[#allocation5 + $0x100] sm:$0xff]
        %v4837 = vld [vmem:[#allocation5 + $0x108] sm:$0xff]
        %v4838 = vld [vmem:[#allocation5 + $0x110] sm:$0xff]
        %v4839 = vld [vmem:[#allocation5 + $0x118] sm:$0xff]
        %v4840 = vld [vmem:[#allocation5 + $0x120] sm:$0xff]
        %v4841 = vld [vmem:[#allocation5 + $0x128] sm:$0xff]
        %v4842 = vld [vmem:[#allocation5 + $0x130] sm:$0xff]
        %v4843 = vld [vmem:[#allocation5 + $0x138] sm:$0xff]
        %v4844 = vld [vmem:[#allocation5 + $0x140] sm:$0xff]
        %v4845 = vld [vmem:[#allocation5 + $0x148] sm:$0xff]
        %v4846 = vld [vmem:[#allocation5 + $0x150] sm:$0xff]
        %v4847 = vld [vmem:[#allocation5 + $0x158] sm:$0xff]
        %v4848 = vld [vmem:[#allocation5 + $0x160] sm:$0xff]
        %v4849 = vld [vmem:[#allocation5 + $0x168] sm:$0xff]
        %v4850 = vld [vmem:[#allocation5 + $0x170] sm:$0xff]
        %v4851 = vld [vmem:[#allocation5 + $0x178] sm:$0xff]
        %v4852 = vld [vmem:[#allocation5 + $0x180] sm:$0xff]
        %v4853 = vld [vmem:[#allocation5 + $0x188] sm:$0xff]
        %v4854 = vld [vmem:[#allocation5 + $0x190] sm:$0xff]
        %v4855 = vld [vmem:[#allocation5 + $0x198] sm:$0xff]
        %v4856 = vld [vmem:[#allocation5 + $0x1a0] sm:$0xff]
        %v4857 = vld [vmem:[#allocation5 + $0x1a8] sm:$0xff]
        %v4858 = vld [vmem:[#allocation5 + $0x1b0] sm:$0xff]
        %v4859 = vld [vmem:[#allocation5 + $0x1b8] sm:$0xff]
        %v4860 = vld [vmem:[#allocation5 + $0x1c0] sm:$0xff]
        %v4861 = vld [vmem:[#allocation5 + $0x1c8] sm:$0xff]
        %v4862 = vld [vmem:[#allocation5 + $0x1d0] sm:$0xff]
        %v4863 = vld [vmem:[#allocation5 + $0x1d8] sm:$0xff]
        %v4864 = vld [vmem:[#allocation5 + $0x1e0] sm:$0xff]
        %v4865 = vld [vmem:[#allocation5 + $0x1e8] sm:$0xff]
        %v4866 = vld [vmem:[#allocation5 + $0x1f0] sm:$0xff]
        %v4867 = vld [vmem:[#allocation5 + $0x1f8] sm:$0xff]
        %v4932 = vunpack.c.l.b16 %v4804
        %v4933 = vunpack.c.h.b16 %v4804
        %v4934 = vunpack.c.l.b16 %v4805
        %v4935 = vunpack.c.h.b16 %v4805
        %v4936 = vunpack.c.l.b16 %v4806
        %v4937 = vunpack.c.h.b16 %v4806
        %v4938 = vunpack.c.l.b16 %v4807
        %v4939 = vunpack.c.h.b16 %v4807
        %v4940 = vunpack.c.l.b16 %v4808
        %v4941 = vunpack.c.h.b16 %v4808
        %v4942 = vunpack.c.l.b16 %v4809
        %v4943 = vunpack.c.h.b16 %v4809
        %v4944 = vunpack.c.l.b16 %v4810
        %v4945 = vunpack.c.h.b16 %v4810
        %v4946 = vunpack.c.l.b16 %v4811
        %v4947 = vunpack.c.h.b16 %v4811
        %v4948 = vunpack.c.l.b16 %v4812
        %v4949 = vunpack.c.h.b16 %v4812
        %v4950 = vunpack.c.l.b16 %v4813
        %v4951 = vunpack.c.h.b16 %v4813
        %v4952 = vunpack.c.l.b16 %v4814
        %v4953 = vunpack.c.h.b16 %v4814
        %v4954 = vunpack.c.l.b16 %v4815
        %v4955 = vunpack.c.h.b16 %v4815
        %v4956 = vunpack.c.l.b16 %v4816
        %v4957 = vunpack.c.h.b16 %v4816
        %v4958 = vunpack.c.l.b16 %v4817
        %v4959 = vunpack.c.h.b16 %v4817
        %v4960 = vunpack.c.l.b16 %v4818
        %v4961 = vunpack.c.h.b16 %v4818
        %v4962 = vunpack.c.l.b16 %v4819
        %v4963 = vunpack.c.h.b16 %v4819
        %v4964 = vunpack.c.l.b16 %v4820
        %v4965 = vunpack.c.h.b16 %v4820
        %v4966 = vunpack.c.l.b16 %v4821
        %v4967 = vunpack.c.h.b16 %v4821
        %v4968 = vunpack.c.l.b16 %v4822
        %v4969 = vunpack.c.h.b16 %v4822
        %v4970 = vunpack.c.l.b16 %v4823
        %v4971 = vunpack.c.h.b16 %v4823
        %v4972 = vunpack.c.l.b16 %v4824
        %v4973 = vunpack.c.h.b16 %v4824
        %v4974 = vunpack.c.l.b16 %v4825
        %v4975 = vunpack.c.h.b16 %v4825
        %v4976 = vunpack.c.l.b16 %v4826
        %v4977 = vunpack.c.h.b16 %v4826
        %v4978 = vunpack.c.l.b16 %v4827
        %v4979 = vunpack.c.h.b16 %v4827
        %v4980 = vunpack.c.l.b16 %v4828
        %v4981 = vunpack.c.h.b16 %v4828
        %v4982 = vunpack.c.l.b16 %v4829
        %v4983 = vunpack.c.h.b16 %v4829
        %v4984 = vunpack.c.l.b16 %v4830
        %v4985 = vunpack.c.h.b16 %v4830
        %v4986 = vunpack.c.l.b16 %v4831
        %v4987 = vunpack.c.h.b16 %v4831
        %v4988 = vunpack.c.l.b16 %v4832
        %v4989 = vunpack.c.h.b16 %v4832
        %v4990 = vunpack.c.l.b16 %v4833
        %v4991 = vunpack.c.h.b16 %v4833
        %v4992 = vunpack.c.l.b16 %v4834
        %v4993 = vunpack.c.h.b16 %v4834
        %v4994 = vunpack.c.l.b16 %v4835
        %v4995 = vunpack.c.h.b16 %v4835
        %v4996 = vunpack.c.l.b16 %v4836
        %v4997 = vunpack.c.h.b16 %v4836
        %v4998 = vunpack.c.l.b16 %v4837
        %v4999 = vunpack.c.h.b16 %v4837
        %v5000 = vunpack.c.l.b16 %v4838
        %v5001 = vunpack.c.h.b16 %v4838
        %v5002 = vunpack.c.l.b16 %v4839
        %v5003 = vunpack.c.h.b16 %v4839
        %v5004 = vunpack.c.l.b16 %v4840
        %v5005 = vunpack.c.h.b16 %v4840
        %v5006 = vunpack.c.l.b16 %v4841
        %v5007 = vunpack.c.h.b16 %v4841
        %v5008 = vunpack.c.l.b16 %v4842
        %v5009 = vunpack.c.h.b16 %v4842
        %v5010 = vunpack.c.l.b16 %v4843
        %v5011 = vunpack.c.h.b16 %v4843
        %v5012 = vunpack.c.l.b16 %v4844
        %v5013 = vunpack.c.h.b16 %v4844
        %v5014 = vunpack.c.l.b16 %v4845
        %v5015 = vunpack.c.h.b16 %v4845
        %v5016 = vunpack.c.l.b16 %v4846
        %v5017 = vunpack.c.h.b16 %v4846
        %v5018 = vunpack.c.l.b16 %v4847
        %v5019 = vunpack.c.h.b16 %v4847
        %v5020 = vunpack.c.l.b16 %v4848
        %v5021 = vunpack.c.h.b16 %v4848
        %v5022 = vunpack.c.l.b16 %v4849
        %v5023 = vunpack.c.h.b16 %v4849
        %v5024 = vunpack.c.l.b16 %v4850
        %v5025 = vunpack.c.h.b16 %v4850
        %v5026 = vunpack.c.l.b16 %v4851
        %v5027 = vunpack.c.h.b16 %v4851
        %v5028 = vunpack.c.l.b16 %v4852
        %v5029 = vunpack.c.h.b16 %v4852
        %v5030 = vunpack.c.l.b16 %v4853
        %v5031 = vunpack.c.h.b16 %v4853
        %v5032 = vunpack.c.l.b16 %v4854
        %v5033 = vunpack.c.h.b16 %v4854
        %v5034 = vunpack.c.l.b16 %v4855
        %v5035 = vunpack.c.h.b16 %v4855
        %v5036 = vunpack.c.l.b16 %v4856
        %v5037 = vunpack.c.h.b16 %v4856
        %v5038 = vunpack.c.l.b16 %v4857
        %v5039 = vunpack.c.h.b16 %v4857
        %v5040 = vunpack.c.l.b16 %v4858
        %v5041 = vunpack.c.h.b16 %v4858
        %v5042 = vunpack.c.l.b16 %v4859
        %v5043 = vunpack.c.h.b16 %v4859
        %v5044 = vunpack.c.l.b16 %v4860
        %v5045 = vunpack.c.h.b16 %v4860
        %v5046 = vunpack.c.l.b16 %v4861
        %v5047 = vunpack.c.h.b16 %v4861
        %v5048 = vunpack.c.l.b16 %v4862
        %v5049 = vunpack.c.h.b16 %v4862
        %v5050 = vunpack.c.l.b16 %v4863
        %v5051 = vunpack.c.h.b16 %v4863
        %v5052 = vunpack.c.l.b16 %v4864
        %v5053 = vunpack.c.h.b16 %v4864
        %v5054 = vunpack.c.l.b16 %v4865
        %v5055 = vunpack.c.h.b16 %v4865
        %v5056 = vunpack.c.l.b16 %v4866
        %v5057 = vunpack.c.h.b16 %v4866
        %v5058 = vunpack.c.l.b16 %v4867
        %v5059 = vunpack.c.h.b16 %v4867
        %v5060 = vpack.c.b16 %v4934, %v4932
        %v5061 = vpack.c.b16 %v4935, %v4933
        %v5062 = vpack.c.b16 %v4938, %v4936
        %v5063 = vpack.c.b16 %v4939, %v4937
        %v5064 = vpack.c.b16 %v4942, %v4940
        %v5065 = vpack.c.b16 %v4943, %v4941
        %v5066 = vpack.c.b16 %v4946, %v4944
        %v5067 = vpack.c.b16 %v4947, %v4945
        %v5068 = vpack.c.b16 %v4950, %v4948
        %v5069 = vpack.c.b16 %v4951, %v4949
        %v5070 = vpack.c.b16 %v4954, %v4952
        %v5071 = vpack.c.b16 %v4955, %v4953
        %v5072 = vpack.c.b16 %v4958, %v4956
        %v5073 = vpack.c.b16 %v4959, %v4957
        %v5074 = vpack.c.b16 %v4962, %v4960
        %v5075 = vpack.c.b16 %v4963, %v4961
        %v5076 = vpack.c.b16 %v4966, %v4964
        %v5077 = vpack.c.b16 %v4967, %v4965
        %v5078 = vpack.c.b16 %v4970, %v4968
        %v5079 = vpack.c.b16 %v4971, %v4969
        %v5080 = vpack.c.b16 %v4974, %v4972
        %v5081 = vpack.c.b16 %v4975, %v4973
        %v5082 = vpack.c.b16 %v4978, %v4976
        %v5083 = vpack.c.b16 %v4979, %v4977
        %v5084 = vpack.c.b16 %v4982, %v4980
        %v5085 = vpack.c.b16 %v4983, %v4981
        %v5086 = vpack.c.b16 %v4986, %v4984
        %v5087 = vpack.c.b16 %v4987, %v4985
        %v5088 = vpack.c.b16 %v4990, %v4988
        %v5089 = vpack.c.b16 %v4991, %v4989
        %v5090 = vpack.c.b16 %v4994, %v4992
        %v5091 = vpack.c.b16 %v4995, %v4993
        %v5092 = vpack.c.b16 %v4998, %v4996
        %v5093 = vpack.c.b16 %v4999, %v4997
        %v5094 = vpack.c.b16 %v5002, %v5000
        %v5095 = vpack.c.b16 %v5003, %v5001
        %v5096 = vpack.c.b16 %v5006, %v5004
        %v5097 = vpack.c.b16 %v5007, %v5005
        %v5098 = vpack.c.b16 %v5010, %v5008
        %v5099 = vpack.c.b16 %v5011, %v5009
        %v5100 = vpack.c.b16 %v5014, %v5012
        %v5101 = vpack.c.b16 %v5015, %v5013
        %v5102 = vpack.c.b16 %v5018, %v5016
        %v5103 = vpack.c.b16 %v5019, %v5017
        %v5104 = vpack.c.b16 %v5022, %v5020
        %v5105 = vpack.c.b16 %v5023, %v5021
        %v5106 = vpack.c.b16 %v5026, %v5024
        %v5107 = vpack.c.b16 %v5027, %v5025
        %v5108 = vpack.c.b16 %v5030, %v5028
        %v5109 = vpack.c.b16 %v5031, %v5029
        %v5110 = vpack.c.b16 %v5034, %v5032
        %v5111 = vpack.c.b16 %v5035, %v5033
        %v5112 = vpack.c.b16 %v5038, %v5036
        %v5113 = vpack.c.b16 %v5039, %v5037
        %v5114 = vpack.c.b16 %v5042, %v5040
        %v5115 = vpack.c.b16 %v5043, %v5041
        %v5116 = vpack.c.b16 %v5046, %v5044
        %v5117 = vpack.c.b16 %v5047, %v5045
        %v5118 = vpack.c.b16 %v5050, %v5048
        %v5119 = vpack.c.b16 %v5051, %v5049
        %v5120 = vpack.c.b16 %v5054, %v5052
        %v5121 = vpack.c.b16 %v5055, %v5053
        %v5122 = vpack.c.b16 %v5058, %v5056
        %v5123 = vpack.c.b16 %v5059, %v5057
        %5188 = vmatpush.bf16.msra.mxu0 %v5074
        %5189 = vmatpush.bf16.msra.mxu0 %v5072
        %5190 = vmatpush.bf16.msra.mxu0 %v5070
        %5191 = vmatpush.bf16.msra.mxu0 %v5068
        %5192 = vmatpush.bf16.msra.mxu0 %v5066
        %5193 = vmatpush.bf16.msra.mxu0 %v5064
        %5194 = vmatpush.bf16.msra.mxu0 %v5062
        %5195 = vmatpush.bf16.msra.mxu0 %v5060
        %5196 = vmatmul.bf16.gmra.mxu0 %v4800
        %v5197 = vpop.f32.mrf.mxu0
        %v5198 = vadd.f32 0.0, %v5197
        %v5199 = vpop.f32.mrf.mxu0
        %5200 = vdwg.mxu0
        %5201 = vmatpush.bf16.msra.mxu0 %v5090
        %5202 = vmatpush.bf16.msra.mxu0 %v5088
        %5203 = vmatpush.bf16.msra.mxu0 %v5086
        %5204 = vmatpush.bf16.msra.mxu0 %v5084
        %5205 = vmatpush.bf16.msra.mxu0 %v5082
        %5206 = vmatpush.bf16.msra.mxu0 %v5080
        %5207 = vmatpush.bf16.msra.mxu0 %v5078
        %5208 = vmatpush.bf16.msra.mxu0 %v5076
        %5209 = vmatmul.bf16.gmra.mxu0 %v4801
        %v5210 = vpop.f32.mrf.mxu0
        %v5211 = vadd.f32 %v5198, %v5210
        %v5212 = vpop.f32.mrf.mxu0
        %5213 = vdwg.mxu0
        %5214 = vmatpush.bf16.msra.mxu0 %v5106
        %5215 = vmatpush.bf16.msra.mxu0 %v5104
        %5216 = vmatpush.bf16.msra.mxu0 %v5102
        %5217 = vmatpush.bf16.msra.mxu0 %v5100
        %5218 = vmatpush.bf16.msra.mxu0 %v5098
        %5219 = vmatpush.bf16.msra.mxu0 %v5096
        %5220 = vmatpush.bf16.msra.mxu0 %v5094
        %5221 = vmatpush.bf16.msra.mxu0 %v5092
        %5222 = vmatmul.bf16.gmra.mxu0 %v4802
        %v5223 = vpop.f32.mrf.mxu0
        %v5224 = vadd.f32 %v5211, %v5223
        %v5225 = vpop.f32.mrf.mxu0
        %5226 = vdwg.mxu0
        %5227 = vmatpush.bf16.msra.mxu0 %v5122
        %5228 = vmatpush.bf16.msra.mxu0 %v5120
        %5229 = vmatpush.bf16.msra.mxu0 %v5118
        %5230 = vmatpush.bf16.msra.mxu0 %v5116
        %5231 = vmatpush.bf16.msra.mxu0 %v5114
        %5232 = vmatpush.bf16.msra.mxu0 %v5112
        %5233 = vmatpush.bf16.msra.mxu0 %v5110
        %5234 = vmatpush.bf16.msra.mxu0 %v5108
        %5235 = vmatmul.bf16.gmra.mxu0 %v4803
        %v5236 = vpop.f32.mrf.mxu0
        %v5237 = vadd.f32 %v5224, %v5236
        %v5238 = vpop.f32.mrf.mxu0
        %5239 = vdwg.mxu0
        %5240 = vmatpush.bf16.msra.mxu0 %v5075
        %5241 = vmatpush.bf16.msra.mxu0 %v5073
        %5242 = vmatpush.bf16.msra.mxu0 %v5071
        %5243 = vmatpush.bf16.msra.mxu0 %v5069
        %5244 = vmatpush.bf16.msra.mxu0 %v5067
        %5245 = vmatpush.bf16.msra.mxu0 %v5065
        %5246 = vmatpush.bf16.msra.mxu0 %v5063
        %5247 = vmatpush.bf16.msra.mxu0 %v5061
        %5248 = vmatmul.bf16.gmra.mxu0 %v4800
        %v5249 = vpop.f32.mrf.mxu0
        %v5250 = vadd.f32 0.0, %v5249
        %v5251 = vpop.f32.mrf.mxu0
        %5252 = vdwg.mxu0
        %5253 = vmatpush.bf16.msra.mxu0 %v5091
        %5254 = vmatpush.bf16.msra.mxu0 %v5089
        %5255 = vmatpush.bf16.msra.mxu0 %v5087
        %5256 = vmatpush.bf16.msra.mxu0 %v5085
        %5257 = vmatpush.bf16.msra.mxu0 %v5083
        %5258 = vmatpush.bf16.msra.mxu0 %v5081
        %5259 = vmatpush.bf16.msra.mxu0 %v5079
        %5260 = vmatpush.bf16.msra.mxu0 %v5077
        %5261 = vmatmul.bf16.gmra.mxu0 %v4801
        %v5262 = vpop.f32.mrf.mxu0
        %v5263 = vadd.f32 %v5250, %v5262
        %v5264 = vpop.f32.mrf.mxu0
        %5265 = vdwg.mxu0
        %5266 = vmatpush.bf16.msra.mxu0 %v5107
        %5267 = vmatpush.bf16.msra.mxu0 %v5105
        %5268 = vmatpush.bf16.msra.mxu0 %v5103
        %5269 = vmatpush.bf16.msra.mxu0 %v5101
        %5270 = vmatpush.bf16.msra.mxu0 %v5099
        %5271 = vmatpush.bf16.msra.mxu0 %v5097
        %5272 = vmatpush.bf16.msra.mxu0 %v5095
        %5273 = vmatpush.bf16.msra.mxu0 %v5093
        %5274 = vmatmul.bf16.gmra.mxu0 %v4802
        %v5275 = vpop.f32.mrf.mxu0
        %v5276 = vadd.f32 %v5263, %v5275
        %v5277 = vpop.f32.mrf.mxu0
        %5278 = vdwg.mxu0
        %5279 = vmatpush.bf16.msra.mxu0 %v5123
        %5280 = vmatpush.bf16.msra.mxu0 %v5121
        %5281 = vmatpush.bf16.msra.mxu0 %v5119
        %5282 = vmatpush.bf16.msra.mxu0 %v5117
        %5283 = vmatpush.bf16.msra.mxu0 %v5115
        %5284 = vmatpush.bf16.msra.mxu0 %v5113
        %5285 = vmatpush.bf16.msra.mxu0 %v5111
        %5286 = vmatpush.bf16.msra.mxu0 %v5109
        %5287 = vmatmul.bf16.gmra.mxu0 %v4803
        %v5288 = vpop.f32.mrf.mxu0
        %v5289 = vadd.f32 %v5276, %v5288
        %v5290 = vpop.f32.mrf.mxu0
        %5291 = vdwg.mxu0
        %v5292 = vadd.f32 %v4764, %v5237
        %v5293 = vadd.f32 %v4777, %v5289
        %5294 = vset.pattern.permute.xlu0 7
        %5295 = vperm.xlu0 %5294, %v4704
        %v5296 = vpop.permute.xlu0 %5295
        %v5298 = vmul.f32 %v5292, %v5296
        %v5299 = vmul.f32 %v5293, %v5296
        %5300 = vset.pattern.permute.xlu0 8
        %5301 = vperm.xlu0 %5300, %v4704
        %v5302 = vpop.permute.xlu0 %5301
        %v5304 = vadd.f32 %v5298, %v5302
        %v5305 = vadd.f32 %v5299, %v5302
        %v5306 = vmax.f32 %v5304, 0.0
        %v5307 = vmax.f32 %v5305, 0.0
        %5308 = vrot.lane.b32.xlu0 %v5306, 1
        %v5309 = vpop.permute.xlu0 %5308
        %5310 = vrot.lane.b32.xlu0 %v5307, 1
        %v5311 = vpop.permute.xlu0 %5310
        %v5312 = vsel %vm694, %v5309, %v5311
        %v5313 = vsel %vm694, %v5311, %v5309
        %v5314 = vsel %vm4667, %v5313, 0.0
        %v5315 = vsel %vm4668, %v5312, 0.0
        %v5316 = vpack.c.bf16 %v5315, %v5314
        %5317 = vst [vmem:[#allocation2] sm:$0xff] %v5316
        %v5318 = vpack.c.bf16 %v5307, %v5306
        %5319 = vst [vmem:[#allocation2 + $0x20] sm:$0xff] %v5318
        %5320 = vrot.lane.b32.xlu0 %v5306, 127
        %v5321 = vpop.permute.xlu0 %5320
        %5322 = vrot.lane.b32.xlu0 %v5307, 127
        %v5323 = vpop.permute.xlu0 %5322
        %v5324 = vsel %vm821, %v5321, %v5323
        %v5325 = vsel %vm821, %v5323, %v5321
        %v5326 = vsel %vm4689, %v5324, 0.0
        %v5327 = vsel %vm4690, %v5325, 0.0
        %v5328 = vpack.c.bf16 %v5327, %v5326
        %5329 = vst [vmem:[#allocation2 + $0x40] sm:$0xff] %v5328
        %s5330 = scalar_lea.vmem %s1, 40
        %v5331 = vld [vmem:[%s5330] sm:$0xf]
        %v5332 = vld [vmem:[%s5330 + $0x4] sm:$0xf]
        %v5333 = vld [vmem:[#allocation2] sm:$0xff]
        %v5334 = vld [vmem:[#allocation2 + $0x20] sm:$0xff]
        %v5335 = vld [vmem:[#allocation2 + $0x40] sm:$0xff]
        %v5336 = vld [vmem:[#allocation2 + $0x60] sm:$0xff]
        %v5337 = vld [vmem:[#allocation2 + $0x80] sm:$0xff]
        %v5338 = vld [vmem:[#allocation2 + $0xa0] sm:$0xff]
        %v5339 = vld [vmem:[#allocation2 + $0xc0] sm:$0xff]
        %v5340 = vld [vmem:[%s2] sm:$0xff]
        %v5341 = vld [vmem:[%s2 + $0x8] sm:$0xff]
        %5343 = vset.pattern.permute.xlu0 9
        %5344 = vperm.xlu0 %5343, %v5340
        %v5345 = vpop.permute.xlu0 %5344
        %5348 = vset.pattern.permute.xlu0 9
        %5349 = vperm.xlu0 %5348, %v5341
        %v5350 = vpop.permute.xlu0 %5349
        %v5354 = vunpack.c.l.b16 %v5331
        %v5355 = vunpack.c.l.b16 %v5332
        %v5356 = vpack.c.b16 %v5355, %v5354
        %v5364 = vunpack.c.l.b16 %v5333
        %v5365 = vunpack.c.h.b16 %v5333
        %v5366 = vunpack.c.l.b16 %v5334
        %v5367 = vunpack.c.h.b16 %v5334
        %v5368 = vunpack.c.l.b16 %v5335
        %v5369 = vunpack.c.h.b16 %v5335
        %v5370 = vunpack.c.l.b16 %v5336
        %v5371 = vunpack.c.h.b16 %v5336
        %v5372 = vunpack.c.l.b16 %v5337
        %v5373 = vunpack.c.h.b16 %v5337
        %v5374 = vunpack.c.l.b16 %v5338
        %v5375 = vunpack.c.h.b16 %v5338
        %v5376 = vunpack.c.l.b16 %v5339
        %v5377 = vunpack.c.h.b16 %v5339
        %v5378 = vpack.c.b16 %v5366, %v5364
        %v5379 = vpack.c.b16 %v5367, %v5365
        %v5380 = vpack.c.b16 %v5370, %v5368
        %v5381 = vpack.c.b16 %v5371, %v5369
        %v5382 = vpack.c.b16 %v5374, %v5372
        %v5383 = vpack.c.b16 %v5375, %v5373
        %v5384 = vpack.c.b16 %v5376, %v5376
        %v5385 = vpack.c.b16 %v5377, %v5377
        %v5393 = vsel %vm1253, %v5356, 0
        %v5396 = vsel %vm1257, %v5384, 0
        %v5399 = vsel %vm1257, %v5385, 0
        %5401 = vmatpush.bf16.msra.mxu0 0
        %5402 = vmatpush.bf16.msra.mxu0 0
        %5403 = vmatpush.bf16.msra.mxu0 0
        %5404 = vmatpush.bf16.msra.mxu0 0
        %5405 = vmatpush.bf16.msra.mxu0 %v5396
        %5406 = vmatpush.bf16.msra.mxu0 %v5382
        %5407 = vmatpush.bf16.msra.mxu0 %v5380
        %5408 = vmatpush.bf16.msra.mxu0 %v5378
        %5409 = vmatmul.bf16.gmra.mxu0 %v5393
        %v5410 = vpop.f32.mrf.mxu0
        %v5411 = vadd.f32 %v5345, %v5410
        %v5412 = vpop.f32.mrf.mxu0
        %v5413 = vadd.f32 %v5350, %v5412
        %5414 = vdwg.mxu0
        %5415 = vmatpush.bf16.msra.mxu0 0
        %5416 = vmatpush.bf16.msra.mxu0 0
        %5417 = vmatpush.bf16.msra.mxu0 0
        %5418 = vmatpush.bf16.msra.mxu0 0
        %5419 = vmatpush.bf16.msra.mxu0 %v5399
        %5420 = vmatpush.bf16.msra.mxu0 %v5383
        %5421 = vmatpush.bf16.msra.mxu0 %v5381
        %5422 = vmatpush.bf16.msra.mxu0 %v5379
        %5423 = vmatmul.bf16.gmra.mxu0 %v5393
        %v5424 = vpop.f32.mrf.mxu0
        %v5425 = vadd.f32 %v5345, %v5424
        %v5426 = vpop.f32.mrf.mxu0
        %v5427 = vadd.f32 %v5350, %v5426
        %5428 = vdwg.mxu0
        %v5429 = vmax.f32 %v5411, 0.0
        %v5430 = vmax.f32 %v5425, 0.0
        %v5431 = vmax.f32 %v5413, 0.0
        %v5432 = vmax.f32 %v5427, 0.0
        %5433 = vrot.lane.b32.xlu0 %v5429, 1
        %v5434 = vpop.permute.xlu0 %5433
        %5435 = vrot.lane.b32.xlu0 %v5431, 1
        %v5436 = vpop.permute.xlu0 %5435
        %5437 = vrot.lane.b32.xlu0 %v5430, 1
        %v5438 = vpop.permute.xlu0 %5437
        %5439 = vrot.lane.b32.xlu0 %v5432, 1
        %v5440 = vpop.permute.xlu0 %5439
        %v5441 = vsel %vm694, %v5434, %v5438
        %v5442 = vsel %vm694, %v5436, %v5440
        %v5443 = vsel %vm694, %v5438, %v5434
        %v5444 = vsel %vm694, %v5440, %v5436
        %v5445 = vsel %vm4667, %v5443, 0.0
        %v5446 = vsel %vm4668, %v5441, 0.0
        %v5447 = vsel %vm4667, %v5444, 0.0
        %v5448 = vsel %vm4668, %v5442, 0.0
        %v5449 = vpack.c.bf16 %v5446, %v5445
        %v5450 = vpack.c.bf16 %v5448, %v5447
        %5451 = vst [vmem:[#allocation2] sm:$0xff] %v5449
        %5452 = vst [vmem:[#allocation2 + $0x20] sm:$0xff] %v5450
        %v5453 = vpack.c.bf16 %v5430, %v5429
        %v5454 = vpack.c.bf16 %v5432, %v5431
        %5455 = vst [vmem:[#allocation2 + $0x40] sm:$0xff] %v5453
        %5456 = vst [vmem:[#allocation2 + $0x60] sm:$0xff] %v5454
        %5457 = vrot.lane.b32.xlu0 %v5429, 127
        %v5458 = vpop.permute.xlu0 %5457
        %5459 = vrot.lane.b32.xlu0 %v5431, 127
        %v5460 = vpop.permute.xlu0 %5459
        %5461 = vrot.lane.b32.xlu0 %v5430, 127
        %v5462 = vpop.permute.xlu0 %5461
        %5463 = vrot.lane.b32.xlu0 %v5432, 127
        %v5464 = vpop.permute.xlu0 %5463
        %v5465 = vsel %vm821, %v5458, %v5462
        %v5466 = vsel %vm821, %v5460, %v5464
        %v5467 = vsel %vm821, %v5462, %v5458
        %v5468 = vsel %vm821, %v5464, %v5460
        %v5469 = vsel %vm4689, %v5465, 0.0
        %v5470 = vsel %vm4690, %v5467, 0.0
        %v5471 = vsel %vm4689, %v5466, 0.0
        %v5472 = vsel %vm4690, %v5468, 0.0
        %v5473 = vpack.c.bf16 %v5470, %v5469
        %v5474 = vpack.c.bf16 %v5472, %v5471
        %5475 = vst [vmem:[#allocation2 + $0x80] sm:$0xff] %v5473
        %5476 = vst [vmem:[#allocation2 + $0xa0] sm:$0xff] %v5474
        %s5477 = scalar_lea.vmem %s1, 48
        %v5478 = vld [vmem:[%s5477] sm:$0xf]
        %v5479 = vld [vmem:[%s5477 + $0x4] sm:$0xf]
        %v5480 = vld [vmem:[#allocation2] sm:$0xff]
        %v5481 = vld [vmem:[#allocation2 + $0x20] sm:$0xff]
        %v5482 = vld [vmem:[#allocation2 + $0x40] sm:$0xff]
        %v5483 = vld [vmem:[#allocation2 + $0x60] sm:$0xff]
        %v5484 = vld [vmem:[#allocation2 + $0x80] sm:$0xff]
        %v5485 = vld [vmem:[#allocation2 + $0xa0] sm:$0xff]
        %v5486 = vld [vmem:[#allocation2 + $0xc0] sm:$0xff]
        %v5487 = vld [vmem:[%s2] sm:$0xff]
        %v5488 = vld [vmem:[%s2 + $0x8] sm:$0xff]
        %5490 = vset.pattern.permute.xlu0 10
        %5491 = vperm.xlu0 %5490, %v5487
        %v5492 = vpop.permute.xlu0 %5491
        %5495 = vset.pattern.permute.xlu0 10
        %5496 = vperm.xlu0 %5495, %v5488
        %v5497 = vpop.permute.xlu0 %5496
        %v5501 = vunpack.c.l.b16 %v5478
        %v5502 = vunpack.c.l.b16 %v5479
        %v5503 = vpack.c.b16 %v5502, %v5501
        %v5511 = vunpack.c.l.b16 %v5480
        %v5512 = vunpack.c.h.b16 %v5480
        %v5513 = vunpack.c.l.b16 %v5481
        %v5514 = vunpack.c.h.b16 %v5481
        %v5515 = vunpack.c.l.b16 %v5482
        %v5516 = vunpack.c.h.b16 %v5482
        %v5517 = vunpack.c.l.b16 %v5483
        %v5518 = vunpack.c.h.b16 %v5483
        %v5519 = vunpack.c.l.b16 %v5484
        %v5520 = vunpack.c.h.b16 %v5484
        %v5521 = vunpack.c.l.b16 %v5485
        %v5522 = vunpack.c.h.b16 %v5485
        %v5523 = vunpack.c.l.b16 %v5486
        %v5524 = vunpack.c.h.b16 %v5486
        %v5525 = vpack.c.b16 %v5513, %v5511
        %v5526 = vpack.c.b16 %v5514, %v5512
        %v5527 = vpack.c.b16 %v5517, %v5515
        %v5528 = vpack.c.b16 %v5518, %v5516
        %v5529 = vpack.c.b16 %v5521, %v5519
        %v5530 = vpack.c.b16 %v5522, %v5520
        %v5531 = vpack.c.b16 %v5523, %v5523
        %v5532 = vpack.c.b16 %v5524, %v5524
        %v5540 = vsel %vm1253, %v5503, 0
        %v5543 = vsel %vm1257, %v5531, 0
        %v5546 = vsel %vm1257, %v5532, 0
        %5548 = vmatpush.bf16.msra.mxu0 0
        %5549 = vmatpush.bf16.msra.mxu0 0
        %5550 = vmatpush.bf16.msra.mxu0 0
        %5551 = vmatpush.bf16.msra.mxu0 0
        %5552 = vmatpush.bf16.msra.mxu0 %v5543
        %5553 = vmatpush.bf16.msra.mxu0 %v5529
        %5554 = vmatpush.bf16.msra.mxu0 %v5527
        %5555 = vmatpush.bf16.msra.mxu0 %v5525
        %5556 = vmatmul.bf16.gmra.mxu0 %v5540
        %v5557 = vpop.f32.mrf.mxu0
        %v5558 = vadd.f32 %v5492, %v5557
        %v5559 = vpop.f32.mrf.mxu0
        %v5560 = vadd.f32 %v5497, %v5559
        %5561 = vdwg.mxu0
        %5562 = vmatpush.bf16.msra.mxu0 0
        %5563 = vmatpush.bf16.msra.mxu0 0
        %5564 = vmatpush.bf16.msra.mxu0 0
        %5565 = vmatpush.bf16.msra.mxu0 0
        %5566 = vmatpush.bf16.msra.mxu0 %v5546
        %5567 = vmatpush.bf16.msra.mxu0 %v5530
        %5568 = vmatpush.bf16.msra.mxu0 %v5528
        %5569 = vmatpush.bf16.msra.mxu0 %v5526
        %5570 = vmatmul.bf16.gmra.mxu0 %v5540
        %v5571 = vpop.f32.mrf.mxu0
        %v5572 = vadd.f32 %v5492, %v5571
        %v5573 = vpop.f32.mrf.mxu0
        %v5574 = vadd.f32 %v5497, %v5573
        %5575 = vdwg.mxu0
        %s5576 = scalar_lea.vmem %s1, 56
        %v5577 = vld [vmem:[%s5576] sm:$0xf]
        %v5578 = vld [vmem:[%s5576 + $0x4] sm:$0xf]
        %v5579 = vpack.c.bf16 %v5292, %v5292
        %v5580 = vpack.c.bf16 %v5293, %v5293
        %v5583 = vunpack.c.l.b16 %v5577
        %v5584 = vunpack.c.l.b16 %v5578
        %v5585 = vpack.c.b16 %v5584, %v5583
        %vm5586 = vcmask 64512
        %v5588 = vsel %vm5586, %v5585, 0
        %v5591 = vsel %vm1257, %v5579, 0
        %v5594 = vsel %vm1257, %v5580, 0
        %5596 = vmatpush.bf16.msra.mxu0 0
        %5597 = vmatpush.bf16.msra.mxu0 0
        %5598 = vmatpush.bf16.msra.mxu0 0
        %5599 = vmatpush.bf16.msra.mxu0 0
        %5600 = vmatpush.bf16.msra.mxu0 0
        %5601 = vmatpush.bf16.msra.mxu0 0
        %5602 = vmatpush.bf16.msra.mxu0 0
        %5603 = vmatpush.bf16.msra.mxu0 %v5591
        %5604 = vmatmul.bf16.gmra.mxu0 %v5588
        %v5605 = vpop.f32.mrf.mxu0
        %v5606 = vadd.f32 0.0, %v5605
        %v5607 = vpop.f32.mrf.mxu0
        %v5608 = vadd.f32 0.0, %v5607
        %5609 = vdwg.mxu0
        %5610 = vmatpush.bf16.msra.mxu0 0
        %5611 = vmatpush.bf16.msra.mxu0 0
        %5612 = vmatpush.bf16.msra.mxu0 0
        %5613 = vmatpush.bf16.msra.mxu0 0
        %5614 = vmatpush.bf16.msra.mxu0 0
        %5615 = vmatpush.bf16.msra.mxu0 0
        %5616 = vmatpush.bf16.msra.mxu0 0
        %5617 = vmatpush.bf16.msra.mxu0 %v5594
        %5618 = vmatmul.bf16.gmra.mxu0 %v5588
        %v5619 = vpop.f32.mrf.mxu0
        %v5620 = vadd.f32 0.0, %v5619
        %v5621 = vpop.f32.mrf.mxu0
        %v5622 = vadd.f32 0.0, %v5621
        %5623 = vdwg.mxu0
        %v5624 = vadd.f32 %v5558, %v5606
        %v5625 = vadd.f32 %v5572, %v5620
        %v5626 = vadd.f32 %v5560, %v5608
        %v5627 = vadd.f32 %v5574, %v5622
        %5628 = vset.pattern.permute.xlu0 11
        %5629 = vperm.xlu0 %5628, %v5487
        %v5630 = vpop.permute.xlu0 %5629
        %5632 = vset.pattern.permute.xlu0 11
        %5633 = vperm.xlu0 %5632, %v5488
        %v5634 = vpop.permute.xlu0 %5633
        %v5636 = vmul.f32 %v5624, %v5630
        %v5637 = vmul.f32 %v5625, %v5630
        %v5638 = vmul.f32 %v5626, %v5634
        %v5639 = vmul.f32 %v5627, %v5634
        %5640 = vset.pattern.permute.xlu0 12
        %5641 = vperm.xlu0 %5640, %v5487
        %v5642 = vpop.permute.xlu0 %5641
        %5644 = vset.pattern.permute.xlu0 12
        %5645 = vperm.xlu0 %5644, %v5488
        %v5646 = vpop.permute.xlu0 %5645
        %v5648 = vadd.f32 %v5636, %v5642
        %v5649 = vadd.f32 %v5637, %v5642
        %v5650 = vadd.f32 %v5638, %v5646
        %v5651 = vadd.f32 %v5639, %v5646
        %v5652 = vmax.f32 %v5648, 0.0
        %v5653 = vmax.f32 %v5649, 0.0
        %v5654 = vmax.f32 %v5650, 0.0
        %v5655 = vmax.f32 %v5651, 0.0
        %v5656 = vpack.c.bf16 %v5653, %v5652
        %v5657 = vpack.c.bf16 %v5655, %v5654
        %5658 = vst [vmem:[#allocation2] sm:$0xff] %v5656
        %5659 = vst [vmem:[#allocation2 + $0x20] sm:$0xff] %v5657
        %5660 = vrot.lane.b32.xlu0 %v5652, 127
        %v5661 = vpop.permute.xlu0 %5660
        %5662 = vrot.lane.b32.xlu0 %v5654, 127
        %v5663 = vpop.permute.xlu0 %5662
        %5664 = vrot.lane.b32.xlu0 %v5653, 127
        %v5665 = vpop.permute.xlu0 %5664
        %5666 = vrot.lane.b32.xlu0 %v5655, 127
        %v5667 = vpop.permute.xlu0 %5666
        %v5668 = vsel %vm821, %v5661, %v5665
        %v5669 = vsel %vm821, %v5663, %v5667
        %v5670 = vsel %vm821, %v5665, %v5661
        %v5671 = vsel %vm821, %v5667, %v5663
        %v5672 = vsel %vm4689, %v5668, 0.0
        %v5673 = vsel %vm4690, %v5670, 0.0
        %v5674 = vsel %vm4689, %v5669, 0.0
        %v5675 = vsel %vm4690, %v5671, 0.0
        %v5676 = vpack.c.bf16 %v5673, %v5672
        %v5677 = vpack.c.bf16 %v5675, %v5674
        %5678 = vst [vmem:[#allocation2 + $0x40] sm:$0xff] %v5676
        %5679 = vst [vmem:[#allocation2 + $0x60] sm:$0xff] %v5677
        %5680 = vrot.lane.b32.xlu0 %v5652, 126
        %v5681 = vpop.permute.xlu0 %5680
        %5682 = vrot.lane.b32.xlu0 %v5654, 126
        %v5683 = vpop.permute.xlu0 %5682
        %5684 = vrot.lane.b32.xlu0 %v5653, 126
        %v5685 = vpop.permute.xlu0 %5684
        %5686 = vrot.lane.b32.xlu0 %v5655, 126
        %v5687 = vpop.permute.xlu0 %5686
        %v5688 = vsel %vm925, %v5681, %v5685
        %v5689 = vsel %vm925, %v5683, %v5687
        %v5690 = vsel %vm925, %v5685, %v5681
        %v5691 = vsel %vm925, %v5687, %v5683
        %vm5692 = vcmp.lt.s32.totalorder %v4657, 14
        %vm5693 = vcmp.lt.s32.totalorder %v4658, 14
        %vm5694 = vmand %vm4681, %vm5692
        %vm5695 = vmand %vm4682, %vm5693
        %v5696 = vsel %vm5694, 1, 0
        %v5697 = vsel %vm5695, 1, 0
        %vm5698 = vcmp.eq.s32.totalorder %v5696, 1
        %vm5699 = vcmp.eq.s32.totalorder %v5697, 1
        %v5700 = vsel %vm5698, %v5688, 0.0
        %v5701 = vsel %vm5699, %v5690, 0.0
        %v5702 = vsel %vm5698, %v5689, 0.0
        %v5703 = vsel %vm5699, %v5691, 0.0
        %v5704 = vpack.c.bf16 %v5701, %v5700
        %v5705 = vpack.c.bf16 %v5703, %v5702
        %5706 = vst [vmem:[#allocation2 + $0x80] sm:$0xff] %v5704
        %5707 = vst [vmem:[#allocation2 + $0xa0] sm:$0xff] %v5705
        %s5708 = scalar_lea.vmem %s1, 64
        %v5709 = vld [vmem:[%s5708] sm:$0xf]
        %v5710 = vld [vmem:[%s5708 + $0x4] sm:$0xf]
        %v5711 = vld [vmem:[#allocation2] sm:$0xff]
        %v5712 = vld [vmem:[#allocation2 + $0x20] sm:$0xff]
        %v5713 = vld [vmem:[#allocation2 + $0x40] sm:$0xff]
        %v5714 = vld [vmem:[#allocation2 + $0x60] sm:$0xff]
        %v5715 = vld [vmem:[#allocation2 + $0x80] sm:$0xff]
        %v5716 = vld [vmem:[#allocation2 + $0xa0] sm:$0xff]
        %v5717 = vld [vmem:[#allocation2 + $0xc0] sm:$0xff]
        %v5720 = vunpack.c.l.b16 %v5709
        %v5721 = vunpack.c.l.b16 %v5710
        %v5722 = vpack.c.b16 %v5721, %v5720
        %v5730 = vunpack.c.l.b16 %v5711
        %v5731 = vunpack.c.h.b16 %v5711
        %v5732 = vunpack.c.l.b16 %v5712
        %v5733 = vunpack.c.h.b16 %v5712
        %v5734 = vunpack.c.l.b16 %v5713
        %v5735 = vunpack.c.h.b16 %v5713
        %v5736 = vunpack.c.l.b16 %v5714
        %v5737 = vunpack.c.h.b16 %v5714
        %v5738 = vunpack.c.l.b16 %v5715
        %v5739 = vunpack.c.h.b16 %v5715
        %v5740 = vunpack.c.l.b16 %v5716
        %v5741 = vunpack.c.h.b16 %v5716
        %v5742 = vunpack.c.l.b16 %v5717
        %v5743 = vunpack.c.h.b16 %v5717
        %v5744 = vpack.c.b16 %v5732, %v5730
        %v5745 = vpack.c.b16 %v5733, %v5731
        %v5746 = vpack.c.b16 %v5736, %v5734
        %v5747 = vpack.c.b16 %v5737, %v5735
        %v5748 = vpack.c.b16 %v5740, %v5738
        %v5749 = vpack.c.b16 %v5741, %v5739
        %v5750 = vpack.c.b16 %v5742, %v5742
        %v5751 = vpack.c.b16 %v5743, %v5743
        %v5759 = vsel %vm1253, %v5722, 0
        %v5762 = vsel %vm1257, %v5750, 0
        %v5765 = vsel %vm1257, %v5751, 0
        %5767 = vmatpush.bf16.msra.mxu0 0
        %5768 = vmatpush.bf16.msra.mxu0 0
        %5769 = vmatpush.bf16.msra.mxu0 0
        %5770 = vmatpush.bf16.msra.mxu0 0
        %5771 = vmatpush.bf16.msra.mxu0 %v5762
        %5772 = vmatpush.bf16.msra.mxu0 %v5748
        %5773 = vmatpush.bf16.msra.mxu0 %v5746
        %5774 = vmatpush.bf16.msra.mxu0 %v5744
        %5775 = vmatmul.bf16.gmra.mxu0 %v5759
        %v5776 = vpop.f32.mrf.mxu0
        %v5777 = vadd.f32 0.0, %v5776
        %v5778 = vpop.f32.mrf.mxu0
        %v5779 = vadd.f32 0.0, %v5778
        %5780 = vdwg.mxu0
        %5781 = vmatpush.bf16.msra.mxu0 0
        %5782 = vmatpush.bf16.msra.mxu0 0
        %5783 = vmatpush.bf16.msra.mxu0 0
        %5784 = vmatpush.bf16.msra.mxu0 0
        %5785 = vmatpush.bf16.msra.mxu0 %v5765
        %5786 = vmatpush.bf16.msra.mxu0 %v5749
        %5787 = vmatpush.bf16.msra.mxu0 %v5747
        %5788 = vmatpush.bf16.msra.mxu0 %v5745
        %5789 = vmatmul.bf16.gmra.mxu0 %v5759
        %v5790 = vpop.f32.mrf.mxu0
        %v5791 = vadd.f32 0.0, %v5790
        %v5792 = vpop.f32.mrf.mxu0
        %v5793 = vadd.f32 0.0, %v5792
        %5794 = vdwg.mxu0
        %v5795 = vpack.c.bf16 %v5779, %v5777
        %v5796 = vpack.c.bf16 %v5793, %v5791
        %v5797 = vld [vmem:[%s5] sm:$0xf]
        %v5798 = vld [vmem:[%s5 + $0x4] sm:$0xf]
        %v5799 = vld [vmem:[%s5 + $0x8] sm:$0xf]
        %v5800 = vld [vmem:[%s5 + $0xc] sm:$0xf]
        %v5801 = vld [vmem:[%s5 + $0x10] sm:$0xf]
        %v5802 = vld [vmem:[%s5 + $0x14] sm:$0xf]
        %v5803 = vld [vmem:[%s5 + $0x18] sm:$0xf]
        %v5804 = vld [vmem:[%s5 + $0x1c] sm:$0xf]
        %v5805 = vld [vmem:[%s5 + $0x20] sm:$0xf]
        %v5806 = vld [vmem:[%s5 + $0x24] sm:$0xf]
        %v5807 = vld [vmem:[%s5 + $0x28] sm:$0xf]
        %v5808 = vld [vmem:[%s5 + $0x2c] sm:$0xf]
        %v5809 = vld [vmem:[%s5 + $0x30] sm:$0xf]
        %v5810 = vld [vmem:[%s5 + $0x34] sm:$0xf]
        %v5811 = vld [vmem:[%s5 + $0x38] sm:$0xf]
        %v5812 = vld [vmem:[%s5 + $0x3c] sm:$0xf]
        %v5813 = vld [vmem:[%s5 + $0x40] sm:$0xf]
        %v5814 = vld [vmem:[%s5 + $0x44] sm:$0xf]
        %v5815 = vld [vmem:[%s5 + $0x48] sm:$0xf]
        %v5816 = vld [vmem:[%s5 + $0x4c] sm:$0xf]
        %v5817 = vld [vmem:[%s5 + $0x50] sm:$0xf]
        %v5818 = vld [vmem:[%s5 + $0x54] sm:$0xf]
        %v5819 = vld [vmem:[%s5 + $0x58] sm:$0xf]
        %v5820 = vld [vmem:[%s5 + $0x5c] sm:$0xf]
        %v5821 = vld [vmem:[%s5 + $0x60] sm:$0xf]
        %v5822 = vld [vmem:[%s5 + $0x64] sm:$0xf]
        %v5823 = vld [vmem:[%s5 + $0x68] sm:$0xf]
        %v5824 = vld [vmem:[%s5 + $0x6c] sm:$0xf]
        %v5825 = vld [vmem:[%s5 + $0x70] sm:$0xf]
        %v5826 = vld [vmem:[%s5 + $0x74] sm:$0xf]
        %v5827 = vld [vmem:[%s5 + $0x78] sm:$0xf]
        %v5828 = vld [vmem:[%s5 + $0x7c] sm:$0xf]
        %v5829 = vld [vmem:[%s2] sm:$0xff]
        %v5830 = vld [vmem:[%s2 + $0x8] sm:$0xff]
        %5832 = vset.pattern.permute.xlu0 13
        %5833 = vperm.xlu0 %5832, %v5829
        %v5834 = vpop.permute.xlu0 %5833
        %5837 = vset.pattern.permute.xlu0 13
        %5838 = vperm.xlu0 %5837, %v5830
        %v5839 = vpop.permute.xlu0 %5838
        %v5873 = vunpack.c.l.b16 %v5797
        %v5874 = vunpack.c.l.b16 %v5798
        %v5875 = vunpack.c.l.b16 %v5799
        %v5876 = vunpack.c.l.b16 %v5800
        %v5877 = vunpack.c.l.b16 %v5801
        %v5878 = vunpack.c.l.b16 %v5802
        %v5879 = vunpack.c.l.b16 %v5803
        %v5880 = vunpack.c.l.b16 %v5804
        %v5881 = vunpack.c.l.b16 %v5805
        %v5882 = vunpack.c.l.b16 %v5806
        %v5883 = vunpack.c.l.b16 %v5807
        %v5884 = vunpack.c.l.b16 %v5808
        %v5885 = vunpack.c.l.b16 %v5809
        %v5886 = vunpack.c.l.b16 %v5810
        %v5887 = vunpack.c.l.b16 %v5811
        %v5888 = vunpack.c.l.b16 %v5812
        %v5889 = vunpack.c.l.b16 %v5813
        %v5890 = vunpack.c.l.b16 %v5814
        %v5891 = vunpack.c.l.b16 %v5815
        %v5892 = vunpack.c.l.b16 %v5816
        %v5893 = vunpack.c.l.b16 %v5817
        %v5894 = vunpack.c.l.b16 %v5818
        %v5895 = vunpack.c.l.b16 %v5819
        %v5896 = vunpack.c.l.b16 %v5820
        %v5897 = vunpack.c.l.b16 %v5821
        %v5898 = vunpack.c.l.b16 %v5822
        %v5899 = vunpack.c.l.b16 %v5823
        %v5900 = vunpack.c.l.b16 %v5824
        %v5901 = vunpack.c.l.b16 %v5825
        %v5902 = vunpack.c.l.b16 %v5826
        %v5903 = vunpack.c.l.b16 %v5827
        %v5904 = vunpack.c.l.b16 %v5828
        %v5905 = vpack.c.b16 %v5874, %v5873
        %v5906 = vpack.c.b16 %v5876, %v5875
        %v5907 = vpack.c.b16 %v5878, %v5877
        %v5908 = vpack.c.b16 %v5880, %v5879
        %v5909 = vpack.c.b16 %v5882, %v5881
        %v5910 = vpack.c.b16 %v5884, %v5883
        %v5911 = vpack.c.b16 %v5886, %v5885
        %v5912 = vpack.c.b16 %v5888, %v5887
        %v5913 = vpack.c.b16 %v5890, %v5889
        %v5914 = vpack.c.b16 %v5892, %v5891
        %v5915 = vpack.c.b16 %v5894, %v5893
        %v5916 = vpack.c.b16 %v5896, %v5895
        %v5917 = vpack.c.b16 %v5898, %v5897
        %v5918 = vpack.c.b16 %v5900, %v5899
        %v5919 = vpack.c.b16 %v5902, %v5901
        %v5920 = vpack.c.b16 %v5904, %v5903
        %5937 = vmatpush.bf16.msra.mxu0 %v5912
        %5938 = vmatpush.bf16.msra.mxu0 %v5911
        %5939 = vmatpush.bf16.msra.mxu0 %v5910
        %5940 = vmatpush.bf16.msra.mxu0 %v5909
        %5941 = vmatpush.bf16.msra.mxu0 %v5908
        %5942 = vmatpush.bf16.msra.mxu0 %v5907
        %5943 = vmatpush.bf16.msra.mxu0 %v5906
        %5944 = vmatpush.bf16.msra.mxu0 %v5905
        %5945 = vmatmul.bf16.gmra.mxu0 %v5795
        %v5946 = vpop.f32.mrf.mxu0
        %v5947 = vadd.f32 %v5834, %v5946
        %v5948 = vpop.f32.mrf.mxu0
        %v5949 = vadd.f32 %v5839, %v5948
        %5950 = vdwg.mxu0
        %5951 = vmatpush.bf16.msra.mxu0 %v5920
        %5952 = vmatpush.bf16.msra.mxu0 %v5919
        %5953 = vmatpush.bf16.msra.mxu0 %v5918
        %5954 = vmatpush.bf16.msra.mxu0 %v5917
        %5955 = vmatpush.bf16.msra.mxu0 %v5916
        %5956 = vmatpush.bf16.msra.mxu0 %v5915
        %5957 = vmatpush.bf16.msra.mxu0 %v5914
        %5958 = vmatpush.bf16.msra.mxu0 %v5913
        %5959 = vmatmul.bf16.gmra.mxu0 %v5796
        %v5960 = vpop.f32.mrf.mxu0
        %v5961 = vadd.f32 %v5947, %v5960
        %v5962 = vpop.f32.mrf.mxu0
        %v5963 = vadd.f32 %v5949, %v5962
        %5964 = vdwg.mxu0
        %v5965 = vmax.f32 %v5961, 0.0
        %v5966 = vmax.f32 %v5963, 0.0
        %5967 = vrot.lane.b32.xlu0 %v5965, 1
        %v5968 = vpop.permute.xlu0 %5967
        %5969 = vrot.lane.b32.xlu0 %v5966, 1
        %v5970 = vpop.permute.xlu0 %5969
        %vm5971 = vcmp.lt.s32.totalorder %v390, 0
        %v5972 = vsub.s32 0, %v390
        %v5973 = vsel %vm5971, %v5972, %v390
        %v5974 = vshrl.u32 %v5973, 3
        %v5975 = vand.u32 %v5973, 7
        %v5976 = vsub.s32 0, %v5975
        %v5977 = vsel %vm5971, %v5976, %v5975
        %vm5978 = vcmp.ne.s32.totalorder %v5977, 0
        %vm5979 = vcmp.lt.s32.totalorder %v5977, 0
        %vm5980 = vmand %vm5979, %vm5978
        %v5981 = vadd.s32 %v5977, 8
        %v5982 = vsel %vm5980, %v5981, %v5977
        %vm5983 = vcmp.ge.s32.totalorder %v5982, 1
        %vm5984 = vcmp.lt.s32.totalorder %v5982, 8
        %vm5985 = vmand %vm5983, %vm5984
        %v5986 = vsel %vm5985, 1, 0
        %vm5987 = vcmp.eq.s32.totalorder %v5986, 1
        %v5988 = vsel %vm5987, %v5968, 0.0
        %v5989 = vsel %vm5987, %v5970, 0.0
        %v5990 = vpack.c.bf16 %v5988, %v5988
        %v5991 = vpack.c.bf16 %v5989, %v5989
        %5992 = vst [vmem:[#allocation2] sm:$0xf] %v5990
        %5993 = vst [vmem:[#allocation2 + $0x20] sm:$0xf] %v5991
        %v5994 = vpack.c.bf16 %v5965, %v5965
        %v5995 = vpack.c.bf16 %v5966, %v5966
        %5996 = vst [vmem:[#allocation2 + $0x40] sm:$0xf] %v5994
        %5997 = vst [vmem:[#allocation2 + $0x60] sm:$0xf] %v5995
        %5998 = vrot.lane.b32.xlu0 %v5965, 127
        %v5999 = vpop.permute.xlu0 %5998
        %6000 = vrot.lane.b32.xlu0 %v5966, 127
        %v6001 = vpop.permute.xlu0 %6000
        %vm6002 = vcmp.ge.s32.totalorder %v5982, 0
        %vm6003 = vcmp.lt.s32.totalorder %v5982, 7
        %vm6004 = vmand %vm6002, %vm6003
        %v6005 = vsel %vm6004, 1, 0
        %vm6006 = vcmp.eq.s32.totalorder %v6005, 1
        %v6007 = vsel %vm6006, %v5999, 0.0
        %v6008 = vsel %vm6006, %v6001, 0.0
        %v6009 = vpack.c.bf16 %v6007, %v6007
        %v6010 = vpack.c.bf16 %v6008, %v6008
        %6011 = vst [vmem:[#allocation2 + $0x80] sm:$0xf] %v6009
        %6012 = vst [vmem:[#allocation2 + $0xa0] sm:$0xf] %v6010
        %s6013 = scalar_lea.vmem %s1, 72
        %v6014 = vld [vmem:[%s6013] sm:$0xf]
        %v6015 = vld [vmem:[%s6013 + $0x4] sm:$0xf]
        %v6016 = vld [vmem:[#allocation2] sm:$0xf]
        %v6017 = vld [vmem:[#allocation2 + $0x20] sm:$0xf]
        %v6018 = vld [vmem:[#allocation2 + $0x40] sm:$0xf]
        %v6019 = vld [vmem:[#allocation2 + $0x60] sm:$0xf]
        %v6020 = vld [vmem:[#allocation2 + $0x80] sm:$0xf]
        %v6021 = vld [vmem:[#allocation2 + $0xa0] sm:$0xf]
        %v6022 = vld [vmem:[#allocation2 + $0xc0] sm:$0xf]
        %v6023 = vld [vmem:[%s2] sm:$0xff]
        %v6024 = vld [vmem:[%s2 + $0x8] sm:$0xff]
        %6026 = vset.pattern.permute.xlu0 14
        %6027 = vperm.xlu0 %6026, %v6023
        %v6028 = vpop.permute.xlu0 %6027
        %6031 = vset.pattern.permute.xlu0 14
        %6032 = vperm.xlu0 %6031, %v6024
        %v6033 = vpop.permute.xlu0 %6032
        %v6037 = vunpack.c.l.b16 %v6014
        %v6038 = vunpack.c.l.b16 %v6015
        %v6039 = vpack.c.b16 %v6038, %v6037
        %v6047 = vunpack.c.l.b16 %v6016
        %v6048 = vunpack.c.l.b16 %v6017
        %v6049 = vunpack.c.l.b16 %v6018
        %v6050 = vunpack.c.l.b16 %v6019
        %v6051 = vunpack.c.l.b16 %v6020
        %v6052 = vunpack.c.l.b16 %v6021
        %v6053 = vunpack.c.l.b16 %v6022
        %v6054 = vpack.c.b16 %v6048, %v6047
        %v6055 = vpack.c.b16 %v6050, %v6049
        %v6056 = vpack.c.b16 %v6052, %v6051
        %v6057 = vpack.c.b16 %v6053, %v6053
        %v6062 = vsel %vm1253, %v6039, 0
        %v6065 = vsel %vm1257, %v6057, 0
        %6067 = vmatpush.bf16.msra.mxu0 0
        %6068 = vmatpush.bf16.msra.mxu0 0
        %6069 = vmatpush.bf16.msra.mxu0 0
        %6070 = vmatpush.bf16.msra.mxu0 0
        %6071 = vmatpush.bf16.msra.mxu0 %v6065
        %6072 = vmatpush.bf16.msra.mxu0 %v6056
        %6073 = vmatpush.bf16.msra.mxu0 %v6055
        %6074 = vmatpush.bf16.msra.mxu0 %v6054
        %6075 = vmatmul.bf16.gmra.mxu0 %v6062
        %v6076 = vpop.f32.mrf.mxu0
        %v6077 = vadd.f32 %v6028, %v6076
        %v6078 = vpop.f32.mrf.mxu0
        %v6079 = vadd.f32 %v6033, %v6078
        %6080 = vdwg.mxu0
        %6081 = vrot.lane.b32.xlu0 %v5624, 127
        %v6082 = vpop.permute.xlu0 %6081
        %6083 = vrot.lane.b32.xlu0 %v5626, 127
        %v6084 = vpop.permute.xlu0 %6083
        %6085 = vrot.lane.b32.xlu0 %v5625, 127
        %v6086 = vpop.permute.xlu0 %6085
        %6087 = vrot.lane.b32.xlu0 %v5627, 127
        %v6088 = vpop.permute.xlu0 %6087
        %v6089 = vsel %vm821, %v6082, %v6086
        %v6090 = vsel %vm821, %v6084, %v6088
        %v6091 = vsel %vm821, %v6086, %v6082
        %v6092 = vsel %vm821, %v6088, %v6084
        %v6093 = vsel %vm4689, %v6089, 0.0
        %v6094 = vsel %vm4690, %v6091, 0.0
        %v6095 = vsel %vm4689, %v6090, 0.0
        %v6096 = vsel %vm4690, %v6092, 0.0
        %v6097 = vmax.f32 %v5624, %v6093
        %v6098 = vmax.f32 %v5625, %v6094
        %v6099 = vmax.f32 %v5626, %v6095
        %v6100 = vmax.f32 %v5627, %v6096
        %v6101 = vpack.c.bf16 %v6099, %v6097
        %v6102 = vpack.c.bf16 %v6100, %v6098
        %v6103 = vld [vmem:[%s5] sm:$0xf]
        %v6104 = vld [vmem:[%s5 + $0x4] sm:$0xf]
        %v6105 = vld [vmem:[%s5 + $0x8] sm:$0xf]
        %v6106 = vld [vmem:[%s5 + $0xc] sm:$0xf]
        %v6107 = vld [vmem:[%s5 + $0x10] sm:$0xf]
        %v6108 = vld [vmem:[%s5 + $0x14] sm:$0xf]
        %v6109 = vld [vmem:[%s5 + $0x18] sm:$0xf]
        %v6110 = vld [vmem:[%s5 + $0x1c] sm:$0xf]
        %v6111 = vld [vmem:[%s5 + $0x20] sm:$0xf]
        %v6112 = vld [vmem:[%s5 + $0x24] sm:$0xf]
        %v6113 = vld [vmem:[%s5 + $0x28] sm:$0xf]
        %v6114 = vld [vmem:[%s5 + $0x2c] sm:$0xf]
        %v6115 = vld [vmem:[%s5 + $0x30] sm:$0xf]
        %v6116 = vld [vmem:[%s5 + $0x34] sm:$0xf]
        %v6117 = vld [vmem:[%s5 + $0x38] sm:$0xf]
        %v6118 = vld [vmem:[%s5 + $0x3c] sm:$0xf]
        %v6119 = vld [vmem:[%s5 + $0x40] sm:$0xf]
        %v6120 = vld [vmem:[%s5 + $0x44] sm:$0xf]
        %v6121 = vld [vmem:[%s5 + $0x48] sm:$0xf]
        %v6122 = vld [vmem:[%s5 + $0x4c] sm:$0xf]
        %v6123 = vld [vmem:[%s5 + $0x50] sm:$0xf]
        %v6124 = vld [vmem:[%s5 + $0x54] sm:$0xf]
        %v6125 = vld [vmem:[%s5 + $0x58] sm:$0xf]
        %v6126 = vld [vmem:[%s5 + $0x5c] sm:$0xf]
        %v6127 = vld [vmem:[%s5 + $0x60] sm:$0xf]
        %v6128 = vld [vmem:[%s5 + $0x64] sm:$0xf]
        %v6129 = vld [vmem:[%s5 + $0x68] sm:$0xf]
        %v6130 = vld [vmem:[%s5 + $0x6c] sm:$0xf]
        %v6131 = vld [vmem:[%s5 + $0x70] sm:$0xf]
        %v6132 = vld [vmem:[%s5 + $0x74] sm:$0xf]
        %v6133 = vld [vmem:[%s5 + $0x78] sm:$0xf]
        %v6134 = vld [vmem:[%s5 + $0x7c] sm:$0xf]
        %v6167 = vunpack.c.l.b16 %v6103
        %v6168 = vunpack.c.l.b16 %v6104
        %v6169 = vunpack.c.l.b16 %v6105
        %v6170 = vunpack.c.l.b16 %v6106
        %v6171 = vunpack.c.l.b16 %v6107
        %v6172 = vunpack.c.l.b16 %v6108
        %v6173 = vunpack.c.l.b16 %v6109
        %v6174 = vunpack.c.l.b16 %v6110
        %v6175 = vunpack.c.l.b16 %v6111
        %v6176 = vunpack.c.l.b16 %v6112
        %v6177 = vunpack.c.l.b16 %v6113
        %v6178 = vunpack.c.l.b16 %v6114
        %v6179 = vunpack.c.l.b16 %v6115
        %v6180 = vunpack.c.l.b16 %v6116
        %v6181 = vunpack.c.l.b16 %v6117
        %v6182 = vunpack.c.l.b16 %v6118
        %v6183 = vunpack.c.l.b16 %v6119
        %v6184 = vunpack.c.l.b16 %v6120
        %v6185 = vunpack.c.l.b16 %v6121
        %v6186 = vunpack.c.l.b16 %v6122
        %v6187 = vunpack.c.l.b16 %v6123
        %v6188 = vunpack.c.l.b16 %v6124
        %v6189 = vunpack.c.l.b16 %v6125
        %v6190 = vunpack.c.l.b16 %v6126
        %v6191 = vunpack.c.l.b16 %v6127
        %v6192 = vunpack.c.l.b16 %v6128
        %v6193 = vunpack.c.l.b16 %v6129
        %v6194 = vunpack.c.l.b16 %v6130
        %v6195 = vunpack.c.l.b16 %v6131
        %v6196 = vunpack.c.l.b16 %v6132
        %v6197 = vunpack.c.l.b16 %v6133
        %v6198 = vunpack.c.l.b16 %v6134
        %v6199 = vpack.c.b16 %v6168, %v6167
        %v6200 = vpack.c.b16 %v6170, %v6169
        %v6201 = vpack.c.b16 %v6172, %v6171
        %v6202 = vpack.c.b16 %v6174, %v6173
        %v6203 = vpack.c.b16 %v6176, %v6175
        %v6204 = vpack.c.b16 %v6178, %v6177
        %v6205 = vpack.c.b16 %v6180, %v6179
        %v6206 = vpack.c.b16 %v6182, %v6181
        %v6207 = vpack.c.b16 %v6184, %v6183
        %v6208 = vpack.c.b16 %v6186, %v6185
        %v6209 = vpack.c.b16 %v6188, %v6187
        %v6210 = vpack.c.b16 %v6190, %v6189
        %v6211 = vpack.c.b16 %v6192, %v6191
        %v6212 = vpack.c.b16 %v6194, %v6193
        %v6213 = vpack.c.b16 %v6196, %v6195
        %v6214 = vpack.c.b16 %v6198, %v6197
        %6231 = vmatpush.bf16.msra.mxu0 %v6206
        %6232 = vmatpush.bf16.msra.mxu0 %v6205
        %6233 = vmatpush.bf16.msra.mxu0 %v6204
        %6234 = vmatpush.bf16.msra.mxu0 %v6203
        %6235 = vmatpush.bf16.msra.mxu0 %v6202
        %6236 = vmatpush.bf16.msra.mxu0 %v6201
        %6237 = vmatpush.bf16.msra.mxu0 %v6200
        %6238 = vmatpush.bf16.msra.mxu0 %v6199
        %6239 = vmatmul.bf16.gmra.mxu0 %v6101
        %v6240 = vpop.f32.mrf.mxu0
        %v6241 = vadd.f32 0.0, %v6240
        %v6242 = vpop.f32.mrf.mxu0
        %v6243 = vadd.f32 0.0, %v6242
        %6244 = vdwg.mxu0
        %6245 = vmatpush.bf16.msra.mxu0 %v6214
        %6246 = vmatpush.bf16.msra.mxu0 %v6213
        %6247 = vmatpush.bf16.msra.mxu0 %v6212
        %6248 = vmatpush.bf16.msra.mxu0 %v6211
        %6249 = vmatpush.bf16.msra.mxu0 %v6210
        %6250 = vmatpush.bf16.msra.mxu0 %v6209
        %6251 = vmatpush.bf16.msra.mxu0 %v6208
        %6252 = vmatpush.bf16.msra.mxu0 %v6207
        %6253 = vmatmul.bf16.gmra.mxu0 %v6102
        %v6254 = vpop.f32.mrf.mxu0
        %v6255 = vadd.f32 %v6241, %v6254
        %v6256 = vpop.f32.mrf.mxu0
        %v6257 = vadd.f32 %v6243, %v6256
        %6258 = vdwg.mxu0
        %v6259 = vadd.f32 %v6077, %v6255
        %v6260 = vadd.f32 %v6079, %v6257
        %6261 = vset.pattern.permute.xlu0 15
        %6262 = vperm.xlu0 %6261, %v6023
        %v6263 = vpop.permute.xlu0 %6262
        %6265 = vset.pattern.permute.xlu0 15
        %6266 = vperm.xlu0 %6265, %v6024
        %v6267 = vpop.permute.xlu0 %6266
        %v6269 = vmul.f32 %v6259, %v6263
        %v6270 = vmul.f32 %v6260, %v6267
        %6271 = vset.pattern.permute.xlu0 16
        %6272 = vperm.xlu0 %6271, %v6023
        %v6273 = vpop.permute.xlu0 %6272
        %6275 = vset.pattern.permute.xlu0 16
        %6276 = vperm.xlu0 %6275, %v6024
        %v6277 = vpop.permute.xlu0 %6276
        %v6279 = vadd.f32 %v6269, %v6273
        %v6280 = vadd.f32 %v6270, %v6277
        %v6281 = vmax.f32 %v6279, 0.0
        %v6282 = vmax.f32 %v6280, 0.0
        %v6283 = vpack.c.bf16 %v6282, %v6281
        %v6284 = vld [vmem:[%s6] sm:$0xf]
        %v6285 = vld [vmem:[%s6 + $0x4] sm:$0xf]
        %v6286 = vld [vmem:[%s6 + $0x8] sm:$0xf]
        %v6287 = vld [vmem:[%s6 + $0xc] sm:$0xf]
        %v6288 = vld [vmem:[%s6 + $0x10] sm:$0xf]
        %v6289 = vld [vmem:[%s6 + $0x14] sm:$0xf]
        %v6290 = vld [vmem:[%s6 + $0x18] sm:$0xf]
        %v6291 = vld [vmem:[%s6 + $0x1c] sm:$0xf]
        %v6292 = vld [vmem:[%s6 + $0x20] sm:$0xf]
        %v6293 = vld [vmem:[%s6 + $0x24] sm:$0xf]
        %v6294 = vld [vmem:[%s6 + $0x28] sm:$0xf]
        %v6295 = vld [vmem:[%s6 + $0x2c] sm:$0xf]
        %v6296 = vld [vmem:[%s6 + $0x30] sm:$0xf]
        %v6297 = vld [vmem:[%s6 + $0x34] sm:$0xf]
        %v6298 = vld [vmem:[%s6 + $0x38] sm:$0xf]
        %v6299 = vld [vmem:[%s6 + $0x3c] sm:$0xf]
        %v6316 = vunpack.c.l.b16 %v6284
        %v6317 = vunpack.c.l.b16 %v6285
        %v6318 = vunpack.c.l.b16 %v6286
        %v6319 = vunpack.c.l.b16 %v6287
        %v6320 = vunpack.c.l.b16 %v6288
        %v6321 = vunpack.c.l.b16 %v6289
        %v6322 = vunpack.c.l.b16 %v6290
        %v6323 = vunpack.c.l.b16 %v6291
        %v6324 = vunpack.c.l.b16 %v6292
        %v6325 = vunpack.c.l.b16 %v6293
        %v6326 = vunpack.c.l.b16 %v6294
        %v6327 = vunpack.c.l.b16 %v6295
        %v6328 = vunpack.c.l.b16 %v6296
        %v6329 = vunpack.c.l.b16 %v6297
        %v6330 = vunpack.c.l.b16 %v6298
        %v6331 = vunpack.c.l.b16 %v6299
        %v6332 = vpack.c.b16 %v6317, %v6316
        %v6333 = vpack.c.b16 %v6319, %v6318
        %v6334 = vpack.c.b16 %v6321, %v6320
        %v6335 = vpack.c.b16 %v6323, %v6322
        %v6336 = vpack.c.b16 %v6325, %v6324
        %v6337 = vpack.c.b16 %v6327, %v6326
        %v6338 = vpack.c.b16 %v6329, %v6328
        %v6339 = vpack.c.b16 %v6331, %v6330
        %6348 = vmatpush.bf16.msra.mxu0 %v6339
        %6349 = vmatpush.bf16.msra.mxu0 %v6338
        %6350 = vmatpush.bf16.msra.mxu0 %v6337
        %6351 = vmatpush.bf16.msra.mxu0 %v6336
        %6352 = vmatpush.bf16.msra.mxu0 %v6335
        %6353 = vmatpush.bf16.msra.mxu0 %v6334
        %6354 = vmatpush.bf16.msra.mxu0 %v6333
        %6355 = vmatpush.bf16.msra.mxu0 %v6332
        %6356 = vmatmul.bf16.gmra.mxu0 %v6283
        %v6357 = vpop.f32.mrf.mxu0
        %v6358 = vadd.f32 0.0, %v6357
        %v6359 = vpop.f32.mrf.mxu0
        %v6360 = vadd.f32 0.0, %v6359
        %6361 = vdwg.mxu0
        %v6362 = vmul.f32 %v6358, 0.125
        %v6363 = vmul.f32 %v6360, 0.125
        %s6364 = scalar_lea.vmem %s1, 80
        %v6365 = vld [vmem:[%s6364] sm:$0xf]
        %v6366 = vpack.c.bf16 %v6363, %v6362
        %v6367 = vld [vmem:[%s2] sm:$0x1f]
        %6369 = vset.pattern.permute.xlu0 17
        %6370 = vperm.xlu0 %6369, %v6367
        %v6371 = vpop.permute.xlu0 %6370
        %vm6373 = vcmask 130048
        %v6375 = vsel %vm6373, %v6365, 0
        %6377 = vmatpush.bf16.msra.mxu0 0
        %6378 = vmatpush.bf16.msra.mxu0 0
        %6379 = vmatpush.bf16.msra.mxu0 0
        %6380 = vmatpush.bf16.msra.mxu0 0
        %6381 = vmatpush.bf16.msra.mxu0 0
        %6382 = vmatpush.bf16.msra.mxu0 0
        %6383 = vmatpush.bf16.msra.mxu0 0
        %6384 = vmatpush.bf16.msra.mxu0 %v6366
        %6385 = vmatmul.bf16.gmra.mxu0 %v6375
        %v6386 = vpop.f32.mrf.mxu0
        %v6387 = vadd.f32 %v6371, %v6386
        %v6388 = vpop.f32.mrf.mxu0
        %6389 = vdwg.mxu0
        %vm6390 = vcmask 126976
        %6391 = vst.msk [vmem:[%s312] sm:$0x1f] %vm6390, %v6387
        %p6392 = scmp.lt.s32.totalorder %s20, 1
        %s6393 = scalar_select %p6392, %s20, 1
        %s6394 = smul.addr %s6393, 8
        %s6395 = scalar_lea.vmem %s7, %s6394
        // Predicated region
        $region57: #{forward.1} parent=47 // pred_check
          %p6396 = pneg %p190
        $region58: #{forward.1} parent=47 // pred_check_branch
          %6398 = sbr.rel (%p6396) target = $region60
        $region59: #{forward.1} parent=47 // pred_region
          _
        $region60: #{forward.1} parent=47 // pred_fallthru
          _
      $region48: #{forward.1} parent=5 // pred_fallthru
        _
      %p6399 = scmp.le.s32.totalorder 2, %s15
      // Predicated region
      $region61: #{forward.1} parent=5 // pred_check
        %p6400 = pneg %p6399
      $region62: #{forward.1} parent=5 // pred_check_branch
        %6402 = sbr.rel (%p6400) target = $region64
      $region63: #{forward.1} parent=5 // pred_region
        %s6403 = ssub.s32 %s15, 2
        // Predicated region
        $region65: #{forward.1} parent=63 // pred_check
          %p6404 = pneg %p196
        $region66: #{forward.1} parent=63 // pred_check_branch
          %6406 = sbr.rel (%p6404) target = $region68
        $region67: #{forward.1} parent=63 // pred_region
          %p6407 = scmp.lt.s32.totalorder %s21, 1
          %s6408 = scalar_select %p6407, %s21, 1
          %s6409 = smul.addr %s6408, 8
          %s6410 = scalar_lea.vmem %s7, %s6409
        $region68: #{forward.1} parent=63 // pred_fallthru
          _
      $region64: #{forward.1} parent=5 // pred_fallthru
        _
    $region6: #{forward.1} parent=1 // loop_footer
      %s19 = sadd.s32 1, %s15
    $region7: #{forward.1} parent=1 // loop_footer_branch
      %14 = sbr.rel target = $region3
    $region8: #{forward.1} parent=1 // loop_exit
      _
    %6411 = vsyncpa [#allocation4], 1
    %s6412 = scalar_lea.sflag [#allocation4], 1
    %6413 = vsyncpa %s6412, 1
    %6414 = vsyncpa [#allocation6], 1

</llo_original>
